<compile_context>
chip_gen: v6e
topology: v6e:2x2x1
jax: 0.10.0
libtpu: 0.0.40
codegen_flags: <defaults>
</compile_context>

<pallas_src>
import jax
import jax.numpy as jnp
from jax.experimental import pallas as pl
from jax.experimental.pallas import tpu as pltpu

IMG_DIM = 28 * 28      # 784
OUT_PAD = 896          # 7 * 128: lane-dense padded width of the decode3 output

# Layer order used everywhere (params dict, kernel arguments).
_LAYERS = ("enc0", "enc1", "enc2", "enc3",        # encoder: 784->512->256->128->64
           "moments",                             # mu ++ log_var: 64 -> 2*latent
           "pb", "dec0", "dec1", "dec2", "dec3")  # decoder: L->64->128->256->512->784


def _layer_dims(latent_dim):
    return [(IMG_DIM, 512), (512, 256), (256, 128), (128, 64),
            (64, 2 * latent_dim),
            (latent_dim, 64), (64, 128), (128, 256), (256, 512),
            (512, IMG_DIM)]


def _relu(x):
    return jnp.maximum(x, 0.0)


def _pad_cols(a, n):
    pad = n - a.shape[-1]
    if pad > 0:
        a = jnp.pad(a, [(0, 0)] * (a.ndim - 1) + [(0, pad)])
    return a


# ---------------------------------------------------------------------------
# Fused VAE forward kernel: one row-tile of the batch per grid step.
# ---------------------------------------------------------------------------
def _make_vae_kernel(latent_dim, emit_moments):
    L = latent_dim

    def kernel(x_ref, eps_ref,
               we0, be0, we1, be1, we2, be2, we3, be3,
               wml, bml,
               wpb, bpb, wd0, bd0, wd1, bd1, wd2, bd2, wd3, bd3,
               *out_refs):
        out_ref = out_refs[0]

        def lin(h, w_ref, b_ref):
            # bf16 operands on the MXU, f32 accumulation; bias add in f32.
            return (jnp.dot(h.astype(jnp.bfloat16), w_ref[...],
                            preferred_element_type=jnp.float32)
                    + b_ref[...])

        # ---- encoder ----
        h = x_ref[...]                        # (TM, 784) f32
        h = _relu(lin(h, we0, be0))           # (TM, 512)
        h = _relu(lin(h, we1, be1))           # (TM, 256)
        h = _relu(lin(h, we2, be2))           # (TM, 128)
        enc = _relu(lin(h, we3, be3))         # (TM, 64)

        # ---- moments (mu ++ log_var fused, lane-dense 2L output) ----
        mom = lin(enc, wml, bml)              # (TM, 2L) f32
        if emit_moments:
            out_refs[1][...] = mom.astype(out_refs[1].dtype)
        mu = mom[:, :L]
        log_var = mom[:, L:]

        # ---- reparametrize: z = eps * exp(0.5*log_var) + mu (f32 VPU/EUP) ----
        z = eps_ref[...] * jnp.exp(0.5 * log_var) + mu    # (TM, L)

        # ---- decoder ----
        h = _relu(lin(z, wpb, bpb))           # (TM, 64)
        h = _relu(lin(h, wd0, bd0))           # (TM, 128)
        h = _relu(lin(h, wd1, bd1))           # (TM, 256)
        h = _relu(lin(h, wd2, bd2))           # (TM, 512)
        h = _relu(lin(h, wd3, bd3))           # (TM, OUT_PAD) lane-dense
        out_ref[...] = h.astype(out_ref.dtype)

    return kernel


def vae_forward(params, x, eps_key, *, latent_dim, return_moments=False):
    """Forward pass matching the PyTorch VAE.forward semantics."""
    x2 = x.reshape(-1, IMG_DIM).astype(jnp.float32)               # x.reshape(-1, 28**2)
    B = x2.shape[0]
    eps = jax.random.normal(eps_key, (B, latent_dim), jnp.float32)  # randn_like

    # Row tile: sublane-aligned, up to 256 rows; split into >= 2 grid steps
    # when the batch allows it (keeps both v7x TensorCores busy).
    b8 = 8 * pl.cdiv(B, 8)
    tm = min(256, b8)
    if b8 >= 16 and b8 // tm < 2:
        tm = 8 * pl.cdiv(b8 // 2, 8)
    b_pad = tm * pl.cdiv(B, tm)
    if b_pad != B:
        x2 = jnp.pad(x2, ((0, b_pad - B), (0, 0)))
        eps = jnp.pad(eps, ((0, b_pad - B), (0, 0)))
    grid = (b_pad // tm,)

    # Kernel-facing weight/bias arrays (bf16 weights, f32 biases as (1, dout);
    # decode3 padded to OUT_PAD lanes).
    weight_args = []
    for name in _LAYERS:
        w, b = params[name]
        w = w.astype(jnp.bfloat16)
        b2 = b.reshape(1, -1).astype(jnp.float32)
        if name == "dec3":
            w = _pad_cols(w, OUT_PAD)
            b2 = _pad_cols(b2, OUT_PAD)
        weight_args.append((w, b2))

    flat_args = [x2, eps]
    for w, b in weight_args:
        flat_args += [w, b]

    def build_in_specs(single_buffer_weights):
        const_kw = ({"pipeline_mode": pl.Buffered(1)}
                    if single_buffer_weights else {})
        specs = [
            pl.BlockSpec((tm, IMG_DIM), lambda i: (i, 0)),        # x
            pl.BlockSpec((tm, latent_dim), lambda i: (i, 0)),     # eps
        ]
        for w, b in weight_args:
            specs.append(pl.BlockSpec(tuple(w.shape), lambda i: (0, 0), **const_kw))
            specs.append(pl.BlockSpec(tuple(b.shape), lambda i: (0, 0), **const_kw))
        return specs

    out_shape = [jax.ShapeDtypeStruct((b_pad, OUT_PAD), jnp.float32)]
    out_specs = [pl.BlockSpec((tm, OUT_PAD), lambda i: (i, 0))]
    if return_moments:
        out_shape.append(jax.ShapeDtypeStruct((b_pad, 2 * latent_dim), jnp.float32))
        out_specs.append(pl.BlockSpec((tm, 2 * latent_dim), lambda i: (i, 0)))

    # Advisory cost estimate so XLA schedules the eps RNG / pads around us.
    dims = _layer_dims(latent_dim)
    macs = sum(din * dout for din, dout in dims)
    weight_bytes = sum(din * dout * 2 + dout * 4 for din, dout in dims)
    bytes_accessed = (weight_bytes + int(x2.size) * 4 + int(eps.size) * 4
                      + b_pad * OUT_PAD * 4
                      + (b_pad * 2 * latent_dim * 4 if return_moments else 0))
    cost = pl.CostEstimate(flops=2 * macs * b_pad,
                           transcendentals=b_pad * latent_dim,
                           bytes_accessed=bytes_accessed)

    kernel = _make_vae_kernel(latent_dim, return_moments)

    def run(single_buffer_weights):
        outs = pl.pallas_call(
            kernel,
            out_shape=tuple(out_shape),
            grid=grid,
            in_specs=build_in_specs(single_buffer_weights),
            out_specs=tuple(out_specs),
            compiler_params=pltpu.CompilerParams(
                dimension_semantics=("parallel",),
                vmem_limit_bytes=32 * 1024 * 1024),
            cost_estimate=cost,
        )(*flat_args)
        return outs

    try:
        outs = run(single_buffer_weights=True)
        jax.block_until_ready(outs)
    except Exception:
        # pipeline_mode=Buffered(1) not supported on this JAX/Mosaic version;
        # fall back to default (double-buffered) constant blocks.
        outs = run(single_buffer_weights=False)

    out = outs[0][:B, :IMG_DIM].reshape(-1, 1, 28, 28)
    if return_moments:
        mom = outs[1]
        return out, mom[:B, :latent_dim], mom[:B, latent_dim:]
    return out


# ---------------------------------------------------------------------------
# Deterministic synthetic parameters (weights stored as (in, out), bf16).
# ---------------------------------------------------------------------------
def init_params(key, latent_dim):
    dims = _layer_dims(latent_dim)
    keys = jax.random.split(key, 2 * len(dims))
    params = {}
    for idx, (name, (din, dout)) in enumerate(zip(_LAYERS, dims)):
        kw, kb = keys[2 * idx], keys[2 * idx + 1]
        scale = 1.0 / jnp.sqrt(jnp.float32(din))
        params[name] = (
            (scale * jax.random.normal(kw, (din, dout), jnp.float32)
             ).astype(jnp.bfloat16),
            scale * jax.random.normal(kb, (dout,), jnp.float32),
        )
    return params


# ---------------------------------------------------------------------------
# Pure-JAX reference (same math, f32 matmuls on the bf16-rounded weights).
# ---------------------------------------------------------------------------
def vae_forward_ref(params, x, eps_key, *, latent_dim):
    h = x.reshape(-1, IMG_DIM).astype(jnp.float32)
    B = h.shape[0]
    eps = jax.random.normal(eps_key, (B, latent_dim), jnp.float32)

    def lin(h, name):
        w, b = params[name]
        return h @ w.astype(jnp.float32) + b.astype(jnp.float32)

    for name in ("enc0", "enc1", "enc2", "enc3"):
        h = jax.nn.relu(lin(h, name))
    mom = lin(h, "moments")
    mu, log_var = mom[:, :latent_dim], mom[:, latent_dim:]
    z = eps * jnp.exp(0.5 * log_var) + mu
    h = z
    for name in ("pb", "dec0", "dec1", "dec2", "dec3"):
        h = jax.nn.relu(lin(h, name))
    return h.reshape(-1, 1, 28, 28), mu, log_var


if __name__ == "__main__":
    latent_dim = 64
    batch = 2

    key = jax.random.PRNGKey(0)
    k_x, k_p, k_eps = jax.random.split(key, 3)
    x = jax.random.uniform(k_x, (batch, 1, 28, 28), jnp.float32)
    params = init_params(k_p, latent_dim)

    out, mu, log_var = vae_forward(params, x, k_eps,
                                   latent_dim=latent_dim, return_moments=True)
    jax.block_until_ready(out)

    assert out.shape == (batch, 1, 28, 28)
    assert mu.shape == (batch, latent_dim)
    assert log_var.shape == (batch, latent_dim)
    assert bool(jnp.all(jnp.isfinite(out)))

    # Reconstruction-only path (no moments writeback) must match the fused run.
    out_only = vae_forward(params, x, k_eps, latent_dim=latent_dim)
    jax.block_until_ready(out_only)
    assert out_only.shape == (batch, 1, 28, 28)
    assert bool(jnp.allclose(out_only, out, atol=1e-5, rtol=1e-5))

    # Loose-tolerance check vs. pure-JAX reference.  bf16 MXU operands (with
    # f32 accumulation) widen the gap vs a pure-f32 reference slightly; the
    # reference here uses the same bf16-rounded weights, so 0.1 is ample.
    out_r, mu_r, lv_r = vae_forward_ref(params, x, k_eps, latent_dim=latent_dim)
    assert bool(jnp.allclose(out, out_r, atol=0.1, rtol=0.1))
    assert bool(jnp.allclose(mu, mu_r, atol=0.1, rtol=0.1))
    assert bool(jnp.allclose(log_var, lv_r, atol=0.1, rtol=0.1))

    print("KERNEL_OK")
</pallas_src>

<mosaic_0001>
module attributes {stable_mosaic.version = 11 : i64} {
  func.func @kernel(%arg0: i32, %arg1: memref<8x784xf32, #tpu.memory_space<vmem>>, %arg2: memref<8x64xf32, #tpu.memory_space<vmem>>, %arg3: memref<784x512xbf16, #tpu.memory_space<vmem>>, %arg4: memref<1x512xf32, #tpu.memory_space<vmem>>, %arg5: memref<512x256xbf16, #tpu.memory_space<vmem>>, %arg6: memref<1x256xf32, #tpu.memory_space<vmem>>, %arg7: memref<256x128xbf16, #tpu.memory_space<vmem>>, %arg8: memref<1x128xf32, #tpu.memory_space<vmem>>, %arg9: memref<128x64xbf16, #tpu.memory_space<vmem>>, %arg10: memref<1x64xf32, #tpu.memory_space<vmem>>, %arg11: memref<64x128xbf16, #tpu.memory_space<vmem>>, %arg12: memref<1x128xf32, #tpu.memory_space<vmem>>, %arg13: memref<64x64xbf16, #tpu.memory_space<vmem>>, %arg14: memref<1x64xf32, #tpu.memory_space<vmem>>, %arg15: memref<64x128xbf16, #tpu.memory_space<vmem>>, %arg16: memref<1x128xf32, #tpu.memory_space<vmem>>, %arg17: memref<128x256xbf16, #tpu.memory_space<vmem>>, %arg18: memref<1x256xf32, #tpu.memory_space<vmem>>, %arg19: memref<256x512xbf16, #tpu.memory_space<vmem>>, %arg20: memref<1x512xf32, #tpu.memory_space<vmem>>, %arg21: memref<512x896xbf16, #tpu.memory_space<vmem>>, %arg22: memref<1x896xf32, #tpu.memory_space<vmem>>, %arg23: memref<8x896xf32, #tpu.memory_space<vmem>>, %arg24: memref<8x128xf32, #tpu.memory_space<vmem>>) attributes {dimension_semantics = [#tpu.dimension_semantics<parallel>], iteration_bounds = array<i64: 1>, scalar_prefetch = 0 : i64, scratch_operands = 0 : i64, tpu.core_type = #tpu.core_type<tc>, window_params = [{transform_indices = @transform_0, window_bounds = array<i64: 8, 784>}, {transform_indices = @transform_1, window_bounds = array<i64: 8, 64>}, {pipeline_mode = #tpu.pipeline_mode<synchronous>, transform_indices = @transform_2, window_bounds = array<i64: 784, 512>}, {pipeline_mode = #tpu.pipeline_mode<synchronous>, transform_indices = @transform_3, window_bounds = array<i64: 1, 512>}, {pipeline_mode = #tpu.pipeline_mode<synchronous>, transform_indices = @transform_4, window_bounds = array<i64: 512, 256>}, {pipeline_mode = #tpu.pipeline_mode<synchronous>, transform_indices = @transform_5, window_bounds = array<i64: 1, 256>}, {pipeline_mode = #tpu.pipeline_mode<synchronous>, transform_indices = @transform_6, window_bounds = array<i64: 256, 128>}, {pipeline_mode = #tpu.pipeline_mode<synchronous>, transform_indices = @transform_7, window_bounds = array<i64: 1, 128>}, {pipeline_mode = #tpu.pipeline_mode<synchronous>, transform_indices = @transform_8, window_bounds = array<i64: 128, 64>}, {pipeline_mode = #tpu.pipeline_mode<synchronous>, transform_indices = @transform_9, window_bounds = array<i64: 1, 64>}, {pipeline_mode = #tpu.pipeline_mode<synchronous>, transform_indices = @transform_10, window_bounds = array<i64: 64, 128>}, {pipeline_mode = #tpu.pipeline_mode<synchronous>, transform_indices = @transform_11, window_bounds = array<i64: 1, 128>}, {pipeline_mode = #tpu.pipeline_mode<synchronous>, transform_indices = @transform_12, window_bounds = array<i64: 64, 64>}, {pipeline_mode = #tpu.pipeline_mode<synchronous>, transform_indices = @transform_13, window_bounds = array<i64: 1, 64>}, {pipeline_mode = #tpu.pipeline_mode<synchronous>, transform_indices = @transform_14, window_bounds = array<i64: 64, 128>}, {pipeline_mode = #tpu.pipeline_mode<synchronous>, transform_indices = @transform_15, window_bounds = array<i64: 1, 128>}, {pipeline_mode = #tpu.pipeline_mode<synchronous>, transform_indices = @transform_16, window_bounds = array<i64: 128, 256>}, {pipeline_mode = #tpu.pipeline_mode<synchronous>, transform_indices = @transform_17, window_bounds = array<i64: 1, 256>}, {pipeline_mode = #tpu.pipeline_mode<synchronous>, transform_indices = @transform_18, window_bounds = array<i64: 256, 512>}, {pipeline_mode = #tpu.pipeline_mode<synchronous>, transform_indices = @transform_19, window_bounds = array<i64: 1, 512>}, {pipeline_mode = #tpu.pipeline_mode<synchronous>, transform_indices = @transform_20, window_bounds = array<i64: 512, 896>}, {pipeline_mode = #tpu.pipeline_mode<synchronous>, transform_indices = @transform_21, window_bounds = array<i64: 1, 896>}, {transform_indices = @transform_22, window_bounds = array<i64: 8, 896>}, {transform_indices = @transform_23, window_bounds = array<i64: 8, 128>}]} {
    %c0 = arith.constant 0 : index
    %c0_0 = arith.constant 0 : index
    %0 = vector.load %arg1[%c0, %c0_0] : memref<8x784xf32, #tpu.memory_space<vmem>>, vector<8x784xf32>
    %1 = arith.truncf %0 : vector<8x784xf32> to vector<8x784xbf16>
    %c0_1 = arith.constant 0 : index
    %c0_2 = arith.constant 0 : index
    %2 = vector.load %arg3[%c0_1, %c0_2] : memref<784x512xbf16, #tpu.memory_space<vmem>>, vector<784x512xbf16>
    %cst = arith.constant dense<0.000000e+00> : vector<8x512xf32>
    %3 = tpu.matmul %1, %2, %cst {dimension_numbers = #tpu.dot_dimension_numbers<[1], [0], [0], [1], [0, 0, 1, 1], [], []>} : vector<8x784xbf16>, vector<784x512xbf16>, vector<8x512xf32> -> vector<8x512xf32>
    %c0_3 = arith.constant 0 : index
    %c0_4 = arith.constant 0 : index
    %4 = vector.load %arg4[%c0_3, %c0_4] : memref<1x512xf32, #tpu.memory_space<vmem>>, vector<1x512xf32>
    %5 = vector.broadcast %4 : vector<1x512xf32> to vector<8x512xf32>
    %6 = arith.addf %3, %5 : vector<8x512xf32>
    %cst_5 = arith.constant 0.000000e+00 : f32
    %7 = vector.broadcast %cst_5 : f32 to vector<8x512xf32>
    %8 = arith.maximumf %6, %7 : vector<8x512xf32>
    %9 = arith.truncf %8 : vector<8x512xf32> to vector<8x512xbf16>
    %c0_6 = arith.constant 0 : index
    %c0_7 = arith.constant 0 : index
    %10 = vector.load %arg5[%c0_6, %c0_7] : memref<512x256xbf16, #tpu.memory_space<vmem>>, vector<512x256xbf16>
    %cst_8 = arith.constant dense<0.000000e+00> : vector<8x256xf32>
    %11 = tpu.matmul %9, %10, %cst_8 {dimension_numbers = #tpu.dot_dimension_numbers<[1], [0], [0], [1], [0, 0, 1, 1], [], []>} : vector<8x512xbf16>, vector<512x256xbf16>, vector<8x256xf32> -> vector<8x256xf32>
    %c0_9 = arith.constant 0 : index
    %c0_10 = arith.constant 0 : index
    %12 = vector.load %arg6[%c0_9, %c0_10] : memref<1x256xf32, #tpu.memory_space<vmem>>, vector<1x256xf32>
    %13 = vector.broadcast %12 : vector<1x256xf32> to vector<8x256xf32>
    %14 = arith.addf %11, %13 : vector<8x256xf32>
    %cst_11 = arith.constant 0.000000e+00 : f32
    %15 = vector.broadcast %cst_11 : f32 to vector<8x256xf32>
    %16 = arith.maximumf %14, %15 : vector<8x256xf32>
    %17 = arith.truncf %16 : vector<8x256xf32> to vector<8x256xbf16>
    %c0_12 = arith.constant 0 : index
    %c0_13 = arith.constant 0 : index
    %18 = vector.load %arg7[%c0_12, %c0_13] : memref<256x128xbf16, #tpu.memory_space<vmem>>, vector<256x128xbf16>
    %cst_14 = arith.constant dense<0.000000e+00> : vector<8x128xf32>
    %19 = tpu.matmul %17, %18, %cst_14 {dimension_numbers = #tpu.dot_dimension_numbers<[1], [0], [0], [1], [0, 0, 1, 1], [], []>} : vector<8x256xbf16>, vector<256x128xbf16>, vector<8x128xf32> -> vector<8x128xf32>
    %c0_15 = arith.constant 0 : index
    %c0_16 = arith.constant 0 : index
    %20 = vector.load %arg8[%c0_15, %c0_16] : memref<1x128xf32, #tpu.memory_space<vmem>>, vector<1x128xf32>
    %21 = vector.broadcast %20 : vector<1x128xf32> to vector<8x128xf32>
    %22 = arith.addf %19, %21 : vector<8x128xf32>
    %cst_17 = arith.constant 0.000000e+00 : f32
    %23 = vector.broadcast %cst_17 : f32 to vector<8x128xf32>
    %24 = arith.maximumf %22, %23 : vector<8x128xf32>
    %25 = arith.truncf %24 : vector<8x128xf32> to vector<8x128xbf16>
    %c0_18 = arith.constant 0 : index
    %c0_19 = arith.constant 0 : index
    %26 = vector.load %arg9[%c0_18, %c0_19] : memref<128x64xbf16, #tpu.memory_space<vmem>>, vector<128x64xbf16>
    %cst_20 = arith.constant dense<0.000000e+00> : vector<8x64xf32>
    %27 = tpu.matmul %25, %26, %cst_20 {dimension_numbers = #tpu.dot_dimension_numbers<[1], [0], [0], [1], [0, 0, 1, 1], [], []>} : vector<8x128xbf16>, vector<128x64xbf16>, vector<8x64xf32> -> vector<8x64xf32>
    %c0_21 = arith.constant 0 : index
    %c0_22 = arith.constant 0 : index
    %28 = vector.load %arg10[%c0_21, %c0_22] : memref<1x64xf32, #tpu.memory_space<vmem>>, vector<1x64xf32>
    %29 = vector.broadcast %28 : vector<1x64xf32> to vector<8x64xf32>
    %30 = arith.addf %27, %29 : vector<8x64xf32>
    %cst_23 = arith.constant 0.000000e+00 : f32
    %31 = vector.broadcast %cst_23 : f32 to vector<8x64xf32>
    %32 = arith.maximumf %30, %31 : vector<8x64xf32>
    %33 = arith.truncf %32 : vector<8x64xf32> to vector<8x64xbf16>
    %c0_24 = arith.constant 0 : index
    %c0_25 = arith.constant 0 : index
    %34 = vector.load %arg11[%c0_24, %c0_25] : memref<64x128xbf16, #tpu.memory_space<vmem>>, vector<64x128xbf16>
    %cst_26 = arith.constant dense<0.000000e+00> : vector<8x128xf32>
    %35 = tpu.matmul %33, %34, %cst_26 {dimension_numbers = #tpu.dot_dimension_numbers<[1], [0], [0], [1], [0, 0, 1, 1], [], []>} : vector<8x64xbf16>, vector<64x128xbf16>, vector<8x128xf32> -> vector<8x128xf32>
    %c0_27 = arith.constant 0 : index
    %c0_28 = arith.constant 0 : index
    %36 = vector.load %arg12[%c0_27, %c0_28] : memref<1x128xf32, #tpu.memory_space<vmem>>, vector<1x128xf32>
    %37 = vector.broadcast %36 : vector<1x128xf32> to vector<8x128xf32>
    %38 = arith.addf %35, %37 : vector<8x128xf32>
    %c0_29 = arith.constant 0 : index
    %c0_30 = arith.constant 0 : index
    %39 = vector.load %arg24[%c0_29, %c0_30] : memref<8x128xf32, #tpu.memory_space<vmem>>, vector<8x128xf32>
    tpu.vector_store %arg24[%c0_29, %c0_30], %38 {strides = array<i32>} : memref<8x128xf32, #tpu.memory_space<vmem>>, vector<8x128xf32>,
    %40 = vector.extract_strided_slice %38 {offsets = [0, 0], sizes = [8, 64], strides = [1, 1]} : vector<8x128xf32> to vector<8x64xf32>
    %41 = vector.extract_strided_slice %38 {offsets = [0, 64], sizes = [8, 64], strides = [1, 1]} : vector<8x128xf32> to vector<8x64xf32>
    %c0_31 = arith.constant 0 : index
    %c0_32 = arith.constant 0 : index
    %42 = vector.load %arg2[%c0_31, %c0_32] : memref<8x64xf32, #tpu.memory_space<vmem>>, vector<8x64xf32>
    %cst_33 = arith.constant 5.000000e-01 : f32
    %43 = vector.broadcast %cst_33 : f32 to vector<8x64xf32>
    %44 = arith.mulf %43, %41 : vector<8x64xf32>
    %45 = math.exp %44 : vector<8x64xf32>
    %46 = arith.mulf %42, %45 : vector<8x64xf32>
    %47 = arith.addf %46, %40 : vector<8x64xf32>
    %48 = arith.truncf %47 : vector<8x64xf32> to vector<8x64xbf16>
    %c0_34 = arith.constant 0 : index
    %c0_35 = arith.constant 0 : index
    %49 = vector.load %arg13[%c0_34, %c0_35] : memref<64x64xbf16, #tpu.memory_space<vmem>>, vector<64x64xbf16>
    %cst_36 = arith.constant dense<0.000000e+00> : vector<8x64xf32>
    %50 = tpu.matmul %48, %49, %cst_36 {dimension_numbers = #tpu.dot_dimension_numbers<[1], [0], [0], [1], [0, 0, 1, 1], [], []>} : vector<8x64xbf16>, vector<64x64xbf16>, vector<8x64xf32> -> vector<8x64xf32>
    %c0_37 = arith.constant 0 : index
    %c0_38 = arith.constant 0 : index
    %51 = vector.load %arg14[%c0_37, %c0_38] : memref<1x64xf32, #tpu.memory_space<vmem>>, vector<1x64xf32>
    %52 = vector.broadcast %51 : vector<1x64xf32> to vector<8x64xf32>
    %53 = arith.addf %50, %52 : vector<8x64xf32>
    %cst_39 = arith.constant 0.000000e+00 : f32
    %54 = vector.broadcast %cst_39 : f32 to vector<8x64xf32>
    %55 = arith.maximumf %53, %54 : vector<8x64xf32>
    %56 = arith.truncf %55 : vector<8x64xf32> to vector<8x64xbf16>
    %c0_40 = arith.constant 0 : index
    %c0_41 = arith.constant 0 : index
    %57 = vector.load %arg15[%c0_40, %c0_41] : memref<64x128xbf16, #tpu.memory_space<vmem>>, vector<64x128xbf16>
    %cst_42 = arith.constant dense<0.000000e+00> : vector<8x128xf32>
    %58 = tpu.matmul %56, %57, %cst_42 {dimension_numbers = #tpu.dot_dimension_numbers<[1], [0], [0], [1], [0, 0, 1, 1], [], []>} : vector<8x64xbf16>, vector<64x128xbf16>, vector<8x128xf32> -> vector<8x128xf32>
    %c0_43 = arith.constant 0 : index
    %c0_44 = arith.constant 0 : index
    %59 = vector.load %arg16[%c0_43, %c0_44] : memref<1x128xf32, #tpu.memory_space<vmem>>, vector<1x128xf32>
    %60 = vector.broadcast %59 : vector<1x128xf32> to vector<8x128xf32>
    %61 = arith.addf %58, %60 : vector<8x128xf32>
    %cst_45 = arith.constant 0.000000e+00 : f32
    %62 = vector.broadcast %cst_45 : f32 to vector<8x128xf32>
    %63 = arith.maximumf %61, %62 : vector<8x128xf32>
    %64 = arith.truncf %63 : vector<8x128xf32> to vector<8x128xbf16>
    %c0_46 = arith.constant 0 : index
    %c0_47 = arith.constant 0 : index
    %65 = vector.load %arg17[%c0_46, %c0_47] : memref<128x256xbf16, #tpu.memory_space<vmem>>, vector<128x256xbf16>
    %cst_48 = arith.constant dense<0.000000e+00> : vector<8x256xf32>
    %66 = tpu.matmul %64, %65, %cst_48 {dimension_numbers = #tpu.dot_dimension_numbers<[1], [0], [0], [1], [0, 0, 1, 1], [], []>} : vector<8x128xbf16>, vector<128x256xbf16>, vector<8x256xf32> -> vector<8x256xf32>
    %c0_49 = arith.constant 0 : index
    %c0_50 = arith.constant 0 : index
    %67 = vector.load %arg18[%c0_49, %c0_50] : memref<1x256xf32, #tpu.memory_space<vmem>>, vector<1x256xf32>
    %68 = vector.broadcast %67 : vector<1x256xf32> to vector<8x256xf32>
    %69 = arith.addf %66, %68 : vector<8x256xf32>
    %cst_51 = arith.constant 0.000000e+00 : f32
    %70 = vector.broadcast %cst_51 : f32 to vector<8x256xf32>
    %71 = arith.maximumf %69, %70 : vector<8x256xf32>
    %72 = arith.truncf %71 : vector<8x256xf32> to vector<8x256xbf16>
    %c0_52 = arith.constant 0 : index
    %c0_53 = arith.constant 0 : index
    %73 = vector.load %arg19[%c0_52, %c0_53] : memref<256x512xbf16, #tpu.memory_space<vmem>>, vector<256x512xbf16>
    %cst_54 = arith.constant dense<0.000000e+00> : vector<8x512xf32>
    %74 = tpu.matmul %72, %73, %cst_54 {dimension_numbers = #tpu.dot_dimension_numbers<[1], [0], [0], [1], [0, 0, 1, 1], [], []>} : vector<8x256xbf16>, vector<256x512xbf16>, vector<8x512xf32> -> vector<8x512xf32>
    %c0_55 = arith.constant 0 : index
    %c0_56 = arith.constant 0 : index
    %75 = vector.load %arg20[%c0_55, %c0_56] : memref<1x512xf32, #tpu.memory_space<vmem>>, vector<1x512xf32>
    %76 = vector.broadcast %75 : vector<1x512xf32> to vector<8x512xf32>
    %77 = arith.addf %74, %76 : vector<8x512xf32>
    %cst_57 = arith.constant 0.000000e+00 : f32
    %78 = vector.broadcast %cst_57 : f32 to vector<8x512xf32>
    %79 = arith.maximumf %77, %78 : vector<8x512xf32>
    %80 = arith.truncf %79 : vector<8x512xf32> to vector<8x512xbf16>
    %c0_58 = arith.constant 0 : index
    %c0_59 = arith.constant 0 : index
    %81 = vector.load %arg21[%c0_58, %c0_59] : memref<512x896xbf16, #tpu.memory_space<vmem>>, vector<512x896xbf16>
    %cst_60 = arith.constant dense<0.000000e+00> : vector<8x896xf32>
    %82 = tpu.matmul %80, %81, %cst_60 {dimension_numbers = #tpu.dot_dimension_numbers<[1], [0], [0], [1], [0, 0, 1, 1], [], []>} : vector<8x512xbf16>, vector<512x896xbf16>, vector<8x896xf32> -> vector<8x896xf32>
    %c0_61 = arith.constant 0 : index
    %c0_62 = arith.constant 0 : index
    %83 = vector.load %arg22[%c0_61, %c0_62] : memref<1x896xf32, #tpu.memory_space<vmem>>, vector<1x896xf32>
    %84 = vector.broadcast %83 : vector<1x896xf32> to vector<8x896xf32>
    %85 = arith.addf %82, %84 : vector<8x896xf32>
    %cst_63 = arith.constant 0.000000e+00 : f32
    %86 = vector.broadcast %cst_63 : f32 to vector<8x896xf32>
    %87 = arith.maximumf %85, %86 : vector<8x896xf32>
    %c0_64 = arith.constant 0 : index
    %c0_65 = arith.constant 0 : index
    %88 = vector.load %arg23[%c0_64, %c0_65] : memref<8x896xf32, #tpu.memory_space<vmem>>, vector<8x896xf32>
    tpu.vector_store %arg23[%c0_64, %c0_65], %87 {strides = array<i32>} : memref<8x896xf32, #tpu.memory_space<vmem>>, vector<8x896xf32>,
    return
  }
  func.func @transform_0(%arg0: i32) -> (i32, i32) {
    %c0_i32 = arith.constant 0 : i32
    %c0_i32_0 = arith.constant 0 : i32
    return %arg0, %c0_i32 : i32, i32
  }
  func.func @transform_1(%arg0: i32) -> (i32, i32) {
    %c0_i32 = arith.constant 0 : i32
    %c0_i32_0 = arith.constant 0 : i32
    return %arg0, %c0_i32 : i32, i32
  }
  func.func @transform_2(%arg0: i32) -> (i32, i32) {
    %c0_i32 = arith.constant 0 : i32
    %c0_i32_0 = arith.constant 0 : i32
    %c0_i32_1 = arith.constant 0 : i32
    return %c0_i32, %c0_i32_0 : i32, i32
  }
  func.func @transform_3(%arg0: i32) -> (i32, i32) {
    %c0_i32 = arith.constant 0 : i32
    %c0_i32_0 = arith.constant 0 : i32
    %c0_i32_1 = arith.constant 0 : i32
    return %c0_i32, %c0_i32_0 : i32, i32
  }
  func.func @transform_4(%arg0: i32) -> (i32, i32) {
    %c0_i32 = arith.constant 0 : i32
    %c0_i32_0 = arith.constant 0 : i32
    %c0_i32_1 = arith.constant 0 : i32
    return %c0_i32, %c0_i32_0 : i32, i32
  }
  func.func @transform_5(%arg0: i32) -> (i32, i32) {
    %c0_i32 = arith.constant 0 : i32
    %c0_i32_0 = arith.constant 0 : i32
    %c0_i32_1 = arith.constant 0 : i32
    return %c0_i32, %c0_i32_0 : i32, i32
  }
  func.func @transform_6(%arg0: i32) -> (i32, i32) {
    %c0_i32 = arith.constant 0 : i32
    %c0_i32_0 = arith.constant 0 : i32
    %c0_i32_1 = arith.constant 0 : i32
    return %c0_i32, %c0_i32_0 : i32, i32
  }
  func.func @transform_7(%arg0: i32) -> (i32, i32) {
    %c0_i32 = arith.constant 0 : i32
    %c0_i32_0 = arith.constant 0 : i32
    %c0_i32_1 = arith.constant 0 : i32
    return %c0_i32, %c0_i32_0 : i32, i32
  }
  func.func @transform_8(%arg0: i32) -> (i32, i32) {
    %c0_i32 = arith.constant 0 : i32
    %c0_i32_0 = arith.constant 0 : i32
    %c0_i32_1 = arith.constant 0 : i32
    return %c0_i32, %c0_i32_0 : i32, i32
  }
  func.func @transform_9(%arg0: i32) -> (i32, i32) {
    %c0_i32 = arith.constant 0 : i32
    %c0_i32_0 = arith.constant 0 : i32
    %c0_i32_1 = arith.constant 0 : i32
    return %c0_i32, %c0_i32_0 : i32, i32
  }
  func.func @transform_10(%arg0: i32) -> (i32, i32) {
    %c0_i32 = arith.constant 0 : i32
    %c0_i32_0 = arith.constant 0 : i32
    %c0_i32_1 = arith.constant 0 : i32
    return %c0_i32, %c0_i32_0 : i32, i32
  }
  func.func @transform_11(%arg0: i32) -> (i32, i32) {
    %c0_i32 = arith.constant 0 : i32
    %c0_i32_0 = arith.constant 0 : i32
    %c0_i32_1 = arith.constant 0 : i32
    return %c0_i32, %c0_i32_0 : i32, i32
  }
  func.func @transform_12(%arg0: i32) -> (i32, i32) {
    %c0_i32 = arith.constant 0 : i32
    %c0_i32_0 = arith.constant 0 : i32
    %c0_i32_1 = arith.constant 0 : i32
    return %c0_i32, %c0_i32_0 : i32, i32
  }
  func.func @transform_13(%arg0: i32) -> (i32, i32) {
    %c0_i32 = arith.constant 0 : i32
    %c0_i32_0 = arith.constant 0 : i32
    %c0_i32_1 = arith.constant 0 : i32
    return %c0_i32, %c0_i32_0 : i32, i32
  }
  func.func @transform_14(%arg0: i32) -> (i32, i32) {
    %c0_i32 = arith.constant 0 : i32
    %c0_i32_0 = arith.constant 0 : i32
    %c0_i32_1 = arith.constant 0 : i32
    return %c0_i32, %c0_i32_0 : i32, i32
  }
  func.func @transform_15(%arg0: i32) -> (i32, i32) {
    %c0_i32 = arith.constant 0 : i32
    %c0_i32_0 = arith.constant 0 : i32
    %c0_i32_1 = arith.constant 0 : i32
    return %c0_i32, %c0_i32_0 : i32, i32
  }
  func.func @transform_16(%arg0: i32) -> (i32, i32) {
    %c0_i32 = arith.constant 0 : i32
    %c0_i32_0 = arith.constant 0 : i32
    %c0_i32_1 = arith.constant 0 : i32
    return %c0_i32, %c0_i32_0 : i32, i32
  }
  func.func @transform_17(%arg0: i32) -> (i32, i32) {
    %c0_i32 = arith.constant 0 : i32
    %c0_i32_0 = arith.constant 0 : i32
    %c0_i32_1 = arith.constant 0 : i32
    return %c0_i32, %c0_i32_0 : i32, i32
  }
  func.func @transform_18(%arg0: i32) -> (i32, i32) {
    %c0_i32 = arith.constant 0 : i32
    %c0_i32_0 = arith.constant 0 : i32
    %c0_i32_1 = arith.constant 0 : i32
    return %c0_i32, %c0_i32_0 : i32, i32
  }
  func.func @transform_19(%arg0: i32) -> (i32, i32) {
    %c0_i32 = arith.constant 0 : i32
    %c0_i32_0 = arith.constant 0 : i32
    %c0_i32_1 = arith.constant 0 : i32
    return %c0_i32, %c0_i32_0 : i32, i32
  }
  func.func @transform_20(%arg0: i32) -> (i32, i32) {
    %c0_i32 = arith.constant 0 : i32
    %c0_i32_0 = arith.constant 0 : i32
    %c0_i32_1 = arith.constant 0 : i32
    return %c0_i32, %c0_i32_0 : i32, i32
  }
  func.func @transform_21(%arg0: i32) -> (i32, i32) {
    %c0_i32 = arith.constant 0 : i32
    %c0_i32_0 = arith.constant 0 : i32
    %c0_i32_1 = arith.constant 0 : i32
    return %c0_i32, %c0_i32_0 : i32, i32
  }
  func.func @transform_22(%arg0: i32) -> (i32, i32) {
    %c0_i32 = arith.constant 0 : i32
    %c0_i32_0 = arith.constant 0 : i32
    return %arg0, %c0_i32 : i32, i32
  }
  func.func @transform_23(%arg0: i32) -> (i32, i32) {
    %c0_i32 = arith.constant 0 : i32
    %c0_i32_0 = arith.constant 0 : i32
    return %arg0, %c0_i32 : i32, i32
  }
}

module attributes {stable_mosaic.version = 11 : i64} {
  func.func @kernel(%arg0: i32, %arg1: memref<8x784xf32, #tpu.memory_space<vmem>>, %arg2: memref<8x64xf32, #tpu.memory_space<vmem>>, %arg3: memref<784x512xbf16, #tpu.memory_space<vmem>>, %arg4: memref<1x512xf32, #tpu.memory_space<vmem>>, %arg5: memref<512x256xbf16, #tpu.memory_space<vmem>>, %arg6: memref<1x256xf32, #tpu.memory_space<vmem>>, %arg7: memref<256x128xbf16, #tpu.memory_space<vmem>>, %arg8: memref<1x128xf32, #tpu.memory_space<vmem>>, %arg9: memref<128x64xbf16, #tpu.memory_space<vmem>>, %arg10: memref<1x64xf32, #tpu.memory_space<vmem>>, %arg11: memref<64x128xbf16, #tpu.memory_space<vmem>>, %arg12: memref<1x128xf32, #tpu.memory_space<vmem>>, %arg13: memref<64x64xbf16, #tpu.memory_space<vmem>>, %arg14: memref<1x64xf32, #tpu.memory_space<vmem>>, %arg15: memref<64x128xbf16, #tpu.memory_space<vmem>>, %arg16: memref<1x128xf32, #tpu.memory_space<vmem>>, %arg17: memref<128x256xbf16, #tpu.memory_space<vmem>>, %arg18: memref<1x256xf32, #tpu.memory_space<vmem>>, %arg19: memref<256x512xbf16, #tpu.memory_space<vmem>>, %arg20: memref<1x512xf32, #tpu.memory_space<vmem>>, %arg21: memref<512x896xbf16, #tpu.memory_space<vmem>>, %arg22: memref<1x896xf32, #tpu.memory_space<vmem>>, %arg23: memref<8x896xf32, #tpu.memory_space<vmem>>, %arg24: memref<8x128xf32, #tpu.memory_space<vmem>>) attributes {dimension_semantics = [#tpu.dimension_semantics<parallel>], iteration_bounds = array<i64: 1>, scalar_prefetch = 0 : i64, scratch_operands = 0 : i64, tpu.core_type = #tpu.core_type<tc>, window_params = [{transform_indices = @transform_0, window_bounds = array<i64: 8, 784>}, {transform_indices = @transform_1, window_bounds = array<i64: 8, 64>}, {pipeline_mode = #tpu.pipeline_mode<synchronous>, transform_indices = @transform_2, window_bounds = array<i64: 784, 512>}, {pipeline_mode = #tpu.pipeline_mode<synchronous>, transform_indices = @transform_3, window_bounds = array<i64: 1, 512>}, {pipeline_mode = #tpu.pipeline_mode<synchronous>, transform_indices = @transform_4, window_bounds = array<i64: 512, 256>}, {pipeline_mode = #tpu.pipeline_mode<synchronous>, transform_indices = @transform_5, window_bounds = array<i64: 1, 256>}, {pipeline_mode = #tpu.pipeline_mode<synchronous>, transform_indices = @transform_6, window_bounds = array<i64: 256, 128>}, {pipeline_mode = #tpu.pipeline_mode<synchronous>, transform_indices = @transform_7, window_bounds = array<i64: 1, 128>}, {pipeline_mode = #tpu.pipeline_mode<synchronous>, transform_indices = @transform_8, window_bounds = array<i64: 128, 64>}, {pipeline_mode = #tpu.pipeline_mode<synchronous>, transform_indices = @transform_9, window_bounds = array<i64: 1, 64>}, {pipeline_mode = #tpu.pipeline_mode<synchronous>, transform_indices = @transform_10, window_bounds = array<i64: 64, 128>}, {pipeline_mode = #tpu.pipeline_mode<synchronous>, transform_indices = @transform_11, window_bounds = array<i64: 1, 128>}, {pipeline_mode = #tpu.pipeline_mode<synchronous>, transform_indices = @transform_12, window_bounds = array<i64: 64, 64>}, {pipeline_mode = #tpu.pipeline_mode<synchronous>, transform_indices = @transform_13, window_bounds = array<i64: 1, 64>}, {pipeline_mode = #tpu.pipeline_mode<synchronous>, transform_indices = @transform_14, window_bounds = array<i64: 64, 128>}, {pipeline_mode = #tpu.pipeline_mode<synchronous>, transform_indices = @transform_15, window_bounds = array<i64: 1, 128>}, {pipeline_mode = #tpu.pipeline_mode<synchronous>, transform_indices = @transform_16, window_bounds = array<i64: 128, 256>}, {pipeline_mode = #tpu.pipeline_mode<synchronous>, transform_indices = @transform_17, window_bounds = array<i64: 1, 256>}, {pipeline_mode = #tpu.pipeline_mode<synchronous>, transform_indices = @transform_18, window_bounds = array<i64: 256, 512>}, {pipeline_mode = #tpu.pipeline_mode<synchronous>, transform_indices = @transform_19, window_bounds = array<i64: 1, 512>}, {pipeline_mode = #tpu.pipeline_mode<synchronous>, transform_indices = @transform_20, window_bounds = array<i64: 512, 896>}, {pipeline_mode = #tpu.pipeline_mode<synchronous>, transform_indices = @transform_21, window_bounds = array<i64: 1, 896>}, {transform_indices = @transform_22, window_bounds = array<i64: 8, 896>}, {transform_indices = @transform_23, window_bounds = array<i64: 8, 128>}]} {
    %c0 = arith.constant 0 : index
    %c0_0 = arith.constant 0 : index
    %0 = vector.load %arg1[%c0, %c0_0] : memref<8x784xf32, #tpu.memory_space<vmem>>, vector<8x784xf32>
    %1 = arith.truncf %0 : vector<8x784xf32> to vector<8x784xbf16>
    %c0_1 = arith.constant 0 : index
    %c0_2 = arith.constant 0 : index
    %2 = vector.load %arg3[%c0_1, %c0_2] : memref<784x512xbf16, #tpu.memory_space<vmem>>, vector<784x512xbf16>
    %cst = arith.constant dense<0.000000e+00> : vector<8x512xf32>
    %3 = tpu.matmul %1, %2, %cst {dimension_numbers = #tpu.dot_dimension_numbers<[1], [0], [0], [1], [0, 0, 1, 1], [], []>} : vector<8x784xbf16>, vector<784x512xbf16>, vector<8x512xf32> -> vector<8x512xf32>
    %c0_3 = arith.constant 0 : index
    %c0_4 = arith.constant 0 : index
    %4 = vector.load %arg4[%c0_3, %c0_4] : memref<1x512xf32, #tpu.memory_space<vmem>>, vector<1x512xf32>
    %5 = vector.broadcast %4 : vector<1x512xf32> to vector<8x512xf32>
    %6 = arith.addf %3, %5 : vector<8x512xf32>
    %cst_5 = arith.constant 0.000000e+00 : f32
    %7 = vector.broadcast %cst_5 : f32 to vector<8x512xf32>
    %8 = arith.maximumf %6, %7 : vector<8x512xf32>
    %9 = arith.truncf %8 : vector<8x512xf32> to vector<8x512xbf16>
    %c0_6 = arith.constant 0 : index
    %c0_7 = arith.constant 0 : index
    %10 = vector.load %arg5[%c0_6, %c0_7] : memref<512x256xbf16, #tpu.memory_space<vmem>>, vector<512x256xbf16>
    %cst_8 = arith.constant dense<0.000000e+00> : vector<8x256xf32>
    %11 = tpu.matmul %9, %10, %cst_8 {dimension_numbers = #tpu.dot_dimension_numbers<[1], [0], [0], [1], [0, 0, 1, 1], [], []>} : vector<8x512xbf16>, vector<512x256xbf16>, vector<8x256xf32> -> vector<8x256xf32>
    %c0_9 = arith.constant 0 : index
    %c0_10 = arith.constant 0 : index
    %12 = vector.load %arg6[%c0_9, %c0_10] : memref<1x256xf32, #tpu.memory_space<vmem>>, vector<1x256xf32>
    %13 = vector.broadcast %12 : vector<1x256xf32> to vector<8x256xf32>
    %14 = arith.addf %11, %13 : vector<8x256xf32>
    %cst_11 = arith.constant 0.000000e+00 : f32
    %15 = vector.broadcast %cst_11 : f32 to vector<8x256xf32>
    %16 = arith.maximumf %14, %15 : vector<8x256xf32>
    %17 = arith.truncf %16 : vector<8x256xf32> to vector<8x256xbf16>
    %c0_12 = arith.constant 0 : index
    %c0_13 = arith.constant 0 : index
    %18 = vector.load %arg7[%c0_12, %c0_13] : memref<256x128xbf16, #tpu.memory_space<vmem>>, vector<256x128xbf16>
    %cst_14 = arith.constant dense<0.000000e+00> : vector<8x128xf32>
    %19 = tpu.matmul %17, %18, %cst_14 {dimension_numbers = #tpu.dot_dimension_numbers<[1], [0], [0], [1], [0, 0, 1, 1], [], []>} : vector<8x256xbf16>, vector<256x128xbf16>, vector<8x128xf32> -> vector<8x128xf32>
    %c0_15 = arith.constant 0 : index
    %c0_16 = arith.constant 0 : index
    %20 = vector.load %arg8[%c0_15, %c0_16] : memref<1x128xf32, #tpu.memory_space<vmem>>, vector<1x128xf32>
    %21 = vector.broadcast %20 : vector<1x128xf32> to vector<8x128xf32>
    %22 = arith.addf %19, %21 : vector<8x128xf32>
    %cst_17 = arith.constant 0.000000e+00 : f32
    %23 = vector.broadcast %cst_17 : f32 to vector<8x128xf32>
    %24 = arith.maximumf %22, %23 : vector<8x128xf32>
    %25 = arith.truncf %24 : vector<8x128xf32> to vector<8x128xbf16>
    %c0_18 = arith.constant 0 : index
    %c0_19 = arith.constant 0 : index
    %26 = vector.load %arg9[%c0_18, %c0_19] : memref<128x64xbf16, #tpu.memory_space<vmem>>, vector<128x64xbf16>
    %cst_20 = arith.constant dense<0.000000e+00> : vector<8x64xf32>
    %27 = tpu.matmul %25, %26, %cst_20 {dimension_numbers = #tpu.dot_dimension_numbers<[1], [0], [0], [1], [0, 0, 1, 1], [], []>} : vector<8x128xbf16>, vector<128x64xbf16>, vector<8x64xf32> -> vector<8x64xf32>
    %c0_21 = arith.constant 0 : index
    %c0_22 = arith.constant 0 : index
    %28 = vector.load %arg10[%c0_21, %c0_22] : memref<1x64xf32, #tpu.memory_space<vmem>>, vector<1x64xf32>
    %29 = vector.broadcast %28 : vector<1x64xf32> to vector<8x64xf32>
    %30 = arith.addf %27, %29 : vector<8x64xf32>
    %cst_23 = arith.constant 0.000000e+00 : f32
    %31 = vector.broadcast %cst_23 : f32 to vector<8x64xf32>
    %32 = arith.maximumf %30, %31 : vector<8x64xf32>
    %33 = arith.truncf %32 : vector<8x64xf32> to vector<8x64xbf16>
    %c0_24 = arith.constant 0 : index
    %c0_25 = arith.constant 0 : index
    %34 = vector.load %arg11[%c0_24, %c0_25] : memref<64x128xbf16, #tpu.memory_space<vmem>>, vector<64x128xbf16>
    %cst_26 = arith.constant dense<0.000000e+00> : vector<8x128xf32>
    %35 = tpu.matmul %33, %34, %cst_26 {dimension_numbers = #tpu.dot_dimension_numbers<[1], [0], [0], [1], [0, 0, 1, 1], [], []>} : vector<8x64xbf16>, vector<64x128xbf16>, vector<8x128xf32> -> vector<8x128xf32>
    %c0_27 = arith.constant 0 : index
    %c0_28 = arith.constant 0 : index
    %36 = vector.load %arg12[%c0_27, %c0_28] : memref<1x128xf32, #tpu.memory_space<vmem>>, vector<1x128xf32>
    %37 = vector.broadcast %36 : vector<1x128xf32> to vector<8x128xf32>
    %38 = arith.addf %35, %37 : vector<8x128xf32>
    %c0_29 = arith.constant 0 : index
    %c0_30 = arith.constant 0 : index
    %39 = vector.load %arg24[%c0_29, %c0_30] : memref<8x128xf32, #tpu.memory_space<vmem>>, vector<8x128xf32>
    tpu.vector_store %arg24[%c0_29, %c0_30], %38 {strides = array<i32>} : memref<8x128xf32, #tpu.memory_space<vmem>>, vector<8x128xf32>,
    %40 = vector.extract_strided_slice %38 {offsets = [0, 0], sizes = [8, 64], strides = [1, 1]} : vector<8x128xf32> to vector<8x64xf32>
    %41 = vector.extract_strided_slice %38 {offsets = [0, 64], sizes = [8, 64], strides = [1, 1]} : vector<8x128xf32> to vector<8x64xf32>
    %c0_31 = arith.constant 0 : index
    %c0_32 = arith.constant 0 : index
    %42 = vector.load %arg2[%c0_31, %c0_32] : memref<8x64xf32, #tpu.memory_space<vmem>>, vector<8x64xf32>
    %cst_33 = arith.constant 5.000000e-01 : f32
    %43 = vector.broadcast %cst_33 : f32 to vector<8x64xf32>
    %44 = arith.mulf %43, %41 : vector<8x64xf32>
    %45 = math.exp %44 : vector<8x64xf32>
    %46 = arith.mulf %42, %45 : vector<8x64xf32>
    %47 = arith.addf %46, %40 : vector<8x64xf32>
    %48 = arith.truncf %47 : vector<8x64xf32> to vector<8x64xbf16>
    %c0_34 = arith.constant 0 : index
    %c0_35 = arith.constant 0 : index
    %49 = vector.load %arg13[%c0_34, %c0_35] : memref<64x64xbf16, #tpu.memory_space<vmem>>, vector<64x64xbf16>
    %cst_36 = arith.constant dense<0.000000e+00> : vector<8x64xf32>
    %50 = tpu.matmul %48, %49, %cst_36 {dimension_numbers = #tpu.dot_dimension_numbers<[1], [0], [0], [1], [0, 0, 1, 1], [], []>} : vector<8x64xbf16>, vector<64x64xbf16>, vector<8x64xf32> -> vector<8x64xf32>
    %c0_37 = arith.constant 0 : index
    %c0_38 = arith.constant 0 : index
    %51 = vector.load %arg14[%c0_37, %c0_38] : memref<1x64xf32, #tpu.memory_space<vmem>>, vector<1x64xf32>
    %52 = vector.broadcast %51 : vector<1x64xf32> to vector<8x64xf32>
    %53 = arith.addf %50, %52 : vector<8x64xf32>
    %cst_39 = arith.constant 0.000000e+00 : f32
    %54 = vector.broadcast %cst_39 : f32 to vector<8x64xf32>
    %55 = arith.maximumf %53, %54 : vector<8x64xf32>
    %56 = arith.truncf %55 : vector<8x64xf32> to vector<8x64xbf16>
    %c0_40 = arith.constant 0 : index
    %c0_41 = arith.constant 0 : index
    %57 = vector.load %arg15[%c0_40, %c0_41] : memref<64x128xbf16, #tpu.memory_space<vmem>>, vector<64x128xbf16>
    %cst_42 = arith.constant dense<0.000000e+00> : vector<8x128xf32>
    %58 = tpu.matmul %56, %57, %cst_42 {dimension_numbers = #tpu.dot_dimension_numbers<[1], [0], [0], [1], [0, 0, 1, 1], [], []>} : vector<8x64xbf16>, vector<64x128xbf16>, vector<8x128xf32> -> vector<8x128xf32>
    %c0_43 = arith.constant 0 : index
    %c0_44 = arith.constant 0 : index
    %59 = vector.load %arg16[%c0_43, %c0_44] : memref<1x128xf32, #tpu.memory_space<vmem>>, vector<1x128xf32>
    %60 = vector.broadcast %59 : vector<1x128xf32> to vector<8x128xf32>
    %61 = arith.addf %58, %60 : vector<8x128xf32>
    %cst_45 = arith.constant 0.000000e+00 : f32
    %62 = vector.broadcast %cst_45 : f32 to vector<8x128xf32>
    %63 = arith.maximumf %61, %62 : vector<8x128xf32>
    %64 = arith.truncf %63 : vector<8x128xf32> to vector<8x128xbf16>
    %c0_46 = arith.constant 0 : index
    %c0_47 = arith.constant 0 : index
    %65 = vector.load %arg17[%c0_46, %c0_47] : memref<128x256xbf16, #tpu.memory_space<vmem>>, vector<128x256xbf16>
    %cst_48 = arith.constant dense<0.000000e+00> : vector<8x256xf32>
    %66 = tpu.matmul %64, %65, %cst_48 {dimension_numbers = #tpu.dot_dimension_numbers<[1], [0], [0], [1], [0, 0, 1, 1], [], []>} : vector<8x128xbf16>, vector<128x256xbf16>, vector<8x256xf32> -> vector<8x256xf32>
    %c0_49 = arith.constant 0 : index
    %c0_50 = arith.constant 0 : index
    %67 = vector.load %arg18[%c0_49, %c0_50] : memref<1x256xf32, #tpu.memory_space<vmem>>, vector<1x256xf32>
    %68 = vector.broadcast %67 : vector<1x256xf32> to vector<8x256xf32>
    %69 = arith.addf %66, %68 : vector<8x256xf32>
    %cst_51 = arith.constant 0.000000e+00 : f32
    %70 = vector.broadcast %cst_51 : f32 to vector<8x256xf32>
    %71 = arith.maximumf %69, %70 : vector<8x256xf32>
    %72 = arith.truncf %71 : vector<8x256xf32> to vector<8x256xbf16>
    %c0_52 = arith.constant 0 : index
    %c0_53 = arith.constant 0 : index
    %73 = vector.load %arg19[%c0_52, %c0_53] : memref<256x512xbf16, #tpu.memory_space<vmem>>, vector<256x512xbf16>
    %cst_54 = arith.constant dense<0.000000e+00> : vector<8x512xf32>
    %74 = tpu.matmul %72, %73, %cst_54 {dimension_numbers = #tpu.dot_dimension_numbers<[1], [0], [0], [1], [0, 0, 1, 1], [], []>} : vector<8x256xbf16>, vector<256x512xbf16>, vector<8x512xf32> -> vector<8x512xf32>
    %c0_55 = arith.constant 0 : index
    %c0_56 = arith.constant 0 : index
    %75 = vector.load %arg20[%c0_55, %c0_56] : memref<1x512xf32, #tpu.memory_space<vmem>>, vector<1x512xf32>
    %76 = vector.broadcast %75 : vector<1x512xf32> to vector<8x512xf32>
    %77 = arith.addf %74, %76 : vector<8x512xf32>
    %cst_57 = arith.constant 0.000000e+00 : f32
    %78 = vector.broadcast %cst_57 : f32 to vector<8x512xf32>
    %79 = arith.maximumf %77, %78 : vector<8x512xf32>
    %80 = arith.truncf %79 : vector<8x512xf32> to vector<8x512xbf16>
    %c0_58 = arith.constant 0 : index
    %c0_59 = arith.constant 0 : index
    %81 = vector.load %arg21[%c0_58, %c0_59] : memref<512x896xbf16, #tpu.memory_space<vmem>>, vector<512x896xbf16>
    %cst_60 = arith.constant dense<0.000000e+00> : vector<8x896xf32>
    %82 = tpu.matmul %80, %81, %cst_60 {dimension_numbers = #tpu.dot_dimension_numbers<[1], [0], [0], [1], [0, 0, 1, 1], [], []>} : vector<8x512xbf16>, vector<512x896xbf16>, vector<8x896xf32> -> vector<8x896xf32>
    %c0_61 = arith.constant 0 : index
    %c0_62 = arith.constant 0 : index
    %83 = vector.load %arg22[%c0_61, %c0_62] : memref<1x896xf32, #tpu.memory_space<vmem>>, vector<1x896xf32>
    %84 = vector.broadcast %83 : vector<1x896xf32> to vector<8x896xf32>
    %85 = arith.addf %82, %84 : vector<8x896xf32>
    %cst_63 = arith.constant 0.000000e+00 : f32
    %86 = vector.broadcast %cst_63 : f32 to vector<8x896xf32>
    %87 = arith.maximumf %85, %86 : vector<8x896xf32>
    %c0_64 = arith.constant 0 : index
    %c0_65 = arith.constant 0 : index
    %88 = vector.load %arg23[%c0_64, %c0_65] : memref<8x896xf32, #tpu.memory_space<vmem>>, vector<8x896xf32>
    tpu.vector_store %arg23[%c0_64, %c0_65], %87 {strides = array<i32>} : memref<8x896xf32, #tpu.memory_space<vmem>>, vector<8x896xf32>,
    return
  }
  func.func @transform_0(%arg0: i32) -> (i32, i32) {
    %c0_i32 = arith.constant 0 : i32
    %c0_i32_0 = arith.constant 0 : i32
    return %arg0, %c0_i32 : i32, i32
  }
  func.func @transform_1(%arg0: i32) -> (i32, i32) {
    %c0_i32 = arith.constant 0 : i32
    %c0_i32_0 = arith.constant 0 : i32
    return %arg0, %c0_i32 : i32, i32
  }
  func.func @transform_2(%arg0: i32) -> (i32, i32) {
    %c0_i32 = arith.constant 0 : i32
    %c0_i32_0 = arith.constant 0 : i32
    %c0_i32_1 = arith.constant 0 : i32
    return %c0_i32, %c0_i32_0 : i32, i32
  }
  func.func @transform_3(%arg0: i32) -> (i32, i32) {
    %c0_i32 = arith.constant 0 : i32
    %c0_i32_0 = arith.constant 0 : i32
    %c0_i32_1 = arith.constant 0 : i32
    return %c0_i32, %c0_i32_0 : i32, i32
  }
  func.func @transform_4(%arg0: i32) -> (i32, i32) {
    %c0_i32 = arith.constant 0 : i32
    %c0_i32_0 = arith.constant 0 : i32
    %c0_i32_1 = arith.constant 0 : i32
    return %c0_i32, %c0_i32_0 : i32, i32
  }
  func.func @transform_5(%arg0: i32) -> (i32, i32) {
    %c0_i32 = arith.constant 0 : i32
    %c0_i32_0 = arith.constant 0 : i32
    %c0_i32_1 = arith.constant 0 : i32
    return %c0_i32, %c0_i32_0 : i32, i32
  }
  func.func @transform_6(%arg0: i32) -> (i32, i32) {
    %c0_i32 = arith.constant 0 : i32
    %c0_i32_0 = arith.constant 0 : i32
    %c0_i32_1 = arith.constant 0 : i32
    return %c0_i32, %c0_i32_0 : i32, i32
  }
  func.func @transform_7(%arg0: i32) -> (i32, i32) {
    %c0_i32 = arith.constant 0 : i32
    %c0_i32_0 = arith.constant 0 : i32
    %c0_i32_1 = arith.constant 0 : i32
    return %c0_i32, %c0_i32_0 : i32, i32
  }
  func.func @transform_8(%arg0: i32) -> (i32, i32) {
    %c0_i32 = arith.constant 0 : i32
    %c0_i32_0 = arith.constant 0 : i32
    %c0_i32_1 = arith.constant 0 : i32
    return %c0_i32, %c0_i32_0 : i32, i32
  }
  func.func @transform_9(%arg0: i32) -> (i32, i32) {
    %c0_i32 = arith.constant 0 : i32
    %c0_i32_0 = arith.constant 0 : i32
    %c0_i32_1 = arith.constant 0 : i32
    return %c0_i32, %c0_i32_0 : i32, i32
  }
  func.func @transform_10(%arg0: i32) -> (i32, i32) {
    %c0_i32 = arith.constant 0 : i32
    %c0_i32_0 = arith.constant 0 : i32
    %c0_i32_1 = arith.constant 0 : i32
    return %c0_i32, %c0_i32_0 : i32, i32
  }
  func.func @transform_11(%arg0: i32) -> (i32, i32) {
    %c0_i32 = arith.constant 0 : i32
    %c0_i32_0 = arith.constant 0 : i32
    %c0_i32_1 = arith.constant 0 : i32
    return %c0_i32, %c0_i32_0 : i32, i32
  }
  func.func @transform_12(%arg0: i32) -> (i32, i32) {
    %c0_i32 = arith.constant 0 : i32
    %c0_i32_0 = arith.constant 0 : i32
    %c0_i32_1 = arith.constant 0 : i32
    return %c0_i32, %c0_i32_0 : i32, i32
  }
  func.func @transform_13(%arg0: i32) -> (i32, i32) {
    %c0_i32 = arith.constant 0 : i32
    %c0_i32_0 = arith.constant 0 : i32
    %c0_i32_1 = arith.constant 0 : i32
    return %c0_i32, %c0_i32_0 : i32, i32
  }
  func.func @transform_14(%arg0: i32) -> (i32, i32) {
    %c0_i32 = arith.constant 0 : i32
    %c0_i32_0 = arith.constant 0 : i32
    %c0_i32_1 = arith.constant 0 : i32
    return %c0_i32, %c0_i32_0 : i32, i32
  }
  func.func @transform_15(%arg0: i32) -> (i32, i32) {
    %c0_i32 = arith.constant 0 : i32
    %c0_i32_0 = arith.constant 0 : i32
    %c0_i32_1 = arith.constant 0 : i32
    return %c0_i32, %c0_i32_0 : i32, i32
  }
  func.func @transform_16(%arg0: i32) -> (i32, i32) {
    %c0_i32 = arith.constant 0 : i32
    %c0_i32_0 = arith.constant 0 : i32
    %c0_i32_1 = arith.constant 0 : i32
    return %c0_i32, %c0_i32_0 : i32, i32
  }
  func.func @transform_17(%arg0: i32) -> (i32, i32) {
    %c0_i32 = arith.constant 0 : i32
    %c0_i32_0 = arith.constant 0 : i32
    %c0_i32_1 = arith.constant 0 : i32
    return %c0_i32, %c0_i32_0 : i32, i32
  }
  func.func @transform_18(%arg0: i32) -> (i32, i32) {
    %c0_i32 = arith.constant 0 : i32
    %c0_i32_0 = arith.constant 0 : i32
    %c0_i32_1 = arith.constant 0 : i32
    return %c0_i32, %c0_i32_0 : i32, i32
  }
  func.func @transform_19(%arg0: i32) -> (i32, i32) {
    %c0_i32 = arith.constant 0 : i32
    %c0_i32_0 = arith.constant 0 : i32
    %c0_i32_1 = arith.constant 0 : i32
    return %c0_i32, %c0_i32_0 : i32, i32
  }
  func.func @transform_20(%arg0: i32) -> (i32, i32) {
    %c0_i32 = arith.constant 0 : i32
    %c0_i32_0 = arith.constant 0 : i32
    %c0_i32_1 = arith.constant 0 : i32
    return %c0_i32, %c0_i32_0 : i32, i32
  }
  func.func @transform_21(%arg0: i32) -> (i32, i32) {
    %c0_i32 = arith.constant 0 : i32
    %c0_i32_0 = arith.constant 0 : i32
    %c0_i32_1 = arith.constant 0 : i32
    return %c0_i32, %c0_i32_0 : i32, i32
  }
  func.func @transform_22(%arg0: i32) -> (i32, i32) {
    %c0_i32 = arith.constant 0 : i32
    %c0_i32_0 = arith.constant 0 : i32
    return %arg0, %c0_i32 : i32, i32
  }
  func.func @transform_23(%arg0: i32) -> (i32, i32) {
    %c0_i32 = arith.constant 0 : i32
    %c0_i32_0 = arith.constant 0 : i32
    return %arg0, %c0_i32 : i32, i32
  }
}

</mosaic_0001>

<llo_original>
// kernel: tpu_custom_call.1
$region0: #{tpu_custom_call.1}
  #allocation0 [shape = 'u32[]', space=smem, size = 0x4, offset = 0x4, fixed_abs, tag = 'smem constant byte address 0x4 - core index']
  #allocation1 [shape = 'u32[144,128]{1,0:T(1,128)}', space=vmem, size = 0x12000, scoped, tag = 'internal scratch']
  %s0 = inlined_call_operand.vmem [shape: f32[8,784], index: 0, kind: input, shape index: {}]
  %s1 = inlined_call_operand.hbm [shape: f32[8,64], index: 1, kind: input, shape index: {}]
  %s2 = inlined_call_operand.hbm [shape: bf16[784,512], index: 2, kind: input, shape index: {}]
  %s3 = inlined_call_operand.hbm [shape: f32[1,512], index: 3, kind: input, shape index: {}]
  %s4 = inlined_call_operand.hbm [shape: bf16[512,256], index: 4, kind: input, shape index: {}]
  %s5 = inlined_call_operand.hbm [shape: f32[1,256], index: 5, kind: input, shape index: {}]
  %s6 = inlined_call_operand.hbm [shape: bf16[256,128], index: 6, kind: input, shape index: {}]
  %s7 = inlined_call_operand.hbm [shape: f32[1,128], index: 7, kind: input, shape index: {}]
  %s8 = inlined_call_operand.vmem [shape: bf16[128,64], index: 8, kind: input, shape index: {}]
  %s9 = inlined_call_operand.hbm [shape: f32[1,64], index: 9, kind: input, shape index: {}]
  %s10 = inlined_call_operand.vmem [shape: bf16[64,128], index: 10, kind: input, shape index: {}]
  %s11 = inlined_call_operand.hbm [shape: f32[1,128], index: 11, kind: input, shape index: {}]
  %s12 = inlined_call_operand.hbm [shape: bf16[64,64], index: 12, kind: input, shape index: {}]
  %s13 = inlined_call_operand.hbm [shape: f32[1,64], index: 13, kind: input, shape index: {}]
  %s14 = inlined_call_operand.vmem [shape: bf16[64,128], index: 14, kind: input, shape index: {}]
  %s15 = inlined_call_operand.hbm [shape: f32[1,128], index: 15, kind: input, shape index: {}]
  %s16 = inlined_call_operand.hbm [shape: bf16[128,256], index: 16, kind: input, shape index: {}]
  %s17 = inlined_call_operand.hbm [shape: f32[1,256], index: 17, kind: input, shape index: {}]
  %s18 = inlined_call_operand.hbm [shape: bf16[256,512], index: 18, kind: input, shape index: {}]
  %s19 = inlined_call_operand.hbm [shape: f32[1,512], index: 19, kind: input, shape index: {}]
  %s20 = inlined_call_operand.hbm [shape: bf16[512,896], index: 20, kind: input, shape index: {}]
  %s21 = inlined_call_operand.vmem [shape: f32[1,896], index: 21, kind: input, shape index: {}]
  %s22 = inlined_call_operand.hbm [shape: f32[8,896], index: 22, kind: output, shape index: {0}]
  %s23 = inlined_call_operand.hbm [shape: f32[8,128], index: 23, kind: output, shape index: {1}]
  %24 = xla_tuple %s22, %s23
  %s25 = sld [smem:[#allocation0]]
  $region174: #{tpu_custom_call.1} parent=0
    _
  %s27 = ssub.s32 1, %s25
  %s28 = scalar_select 0, %s27, %s25
  $region1: #{tpu_custom_call.1} parent=0
    #allocation2 [shape = 'u8[4096]{0}', space=vmem, size = 0x1000, scoped, tag = 'input window, operand 1, single buffered']
    #allocation3 [shape = 's32[1]{0}', space=sflag, size = 0x4, scoped, tag = 'scoped memory for tpu_custom_call.1']
    #allocation4 [shape = 's32[1]{0}', space=sflag, size = 0x4, scoped, tag = 'scoped memory for tpu_custom_call.1']
    #allocation5 [shape = 'u8[802816]{0}', space=vmem, size = 0xc4000, scoped, tag = 'input window, operand 2, single buffered']
    #allocation6 [shape = 's32[1]{0}', space=sflag, size = 0x4, scoped, tag = 'scoped memory for tpu_custom_call.1']
    #allocation7 [shape = 'u8[2048]{0}', space=vmem, size = 0x800, scoped, tag = 'input window, operand 3, single buffered']
    #allocation8 [shape = 'u8[262144]{0}', space=vmem, size = 0x40000, scoped, tag = 'input window, operand 4, single buffered']
    #allocation9 [shape = 's32[1]{0}', space=sflag, size = 0x4, scoped, tag = 'scoped memory for tpu_custom_call.1']
    #allocation10 [shape = 'u8[1024]{0}', space=vmem, size = 0x400, scoped, tag = 'input window, operand 5, single buffered']
    #allocation11 [shape = 'u8[65536]{0}', space=vmem, size = 0x10000, scoped, tag = 'input window, operand 6, single buffered']
    #allocation12 [shape = 's32[1]{0}', space=sflag, size = 0x4, scoped, tag = 'scoped memory for tpu_custom_call.1']
    #allocation13 [shape = 'u8[512]{0}', space=vmem, size = 0x400, scoped, tag = 'input window, operand 7, single buffered']
    #allocation14 [shape = 'u8[512]{0}', space=vmem, size = 0x400, scoped, tag = 'input window, operand 9, single buffered']
    #allocation15 [shape = 's32[1]{0}', space=sflag, size = 0x4, scoped, tag = 'scoped memory for tpu_custom_call.1']
    #allocation16 [shape = 'u8[512]{0}', space=vmem, size = 0x400, scoped, tag = 'input window, operand 11, single buffered']
    #allocation17 [shape = 'u8[16384]{0}', space=vmem, size = 0x4000, scoped, tag = 'input window, operand 12, single buffered']
    #allocation18 [shape = 's32[1]{0}', space=sflag, size = 0x4, scoped, tag = 'scoped memory for tpu_custom_call.1']
    #allocation19 [shape = 'u8[512]{0}', space=vmem, size = 0x400, scoped, tag = 'input window, operand 13, single buffered']
    #allocation20 [shape = 'u8[512]{0}', space=vmem, size = 0x400, scoped, tag = 'input window, operand 15, single buffered']
    #allocation21 [shape = 's32[1]{0}', space=sflag, size = 0x4, scoped, tag = 'scoped memory for tpu_custom_call.1']
    #allocation22 [shape = 'u8[65536]{0}', space=vmem, size = 0x10000, scoped, tag = 'input window, operand 16, single buffered']
    #allocation23 [shape = 'u8[1024]{0}', space=vmem, size = 0x400, scoped, tag = 'input window, operand 17, single buffered']
    #allocation24 [shape = 's32[1]{0}', space=sflag, size = 0x4, scoped, tag = 'scoped memory for tpu_custom_call.1']
    #allocation25 [shape = 'u8[262144]{0}', space=vmem, size = 0x40000, scoped, tag = 'input window, operand 18, single buffered']
    #allocation26 [shape = 'u8[2048]{0}', space=vmem, size = 0x800, scoped, tag = 'input window, operand 19, single buffered']
    #allocation27 [shape = 's32[1]{0}', space=sflag, size = 0x4, scoped, tag = 'scoped memory for tpu_custom_call.1']
    #allocation28 [shape = 'u8[917504]{0}', space=vmem, size = 0xe0000, scoped, tag = 'input window, operand 20, single buffered']
    #allocation29 [shape = 'u8[28672]{0}', space=vmem, size = 0x7000, scoped, tag = 'output window, operand 0, single buffered']
    #allocation30 [shape = 'u8[4096]{0}', space=vmem, size = 0x1000, scoped, tag = 'output window, operand 1, single buffered']
    #allocation31 [shape = 's32[1]{0}', space=sflag, size = 0x4, scoped, tag = 'scoped memory for tpu_custom_call.1']
    %29 = vsyncpa [#allocation3], 0
    %30 = vsyncpa [#allocation6], 0
    %31 = vsyncpa [#allocation9], 0
    %32 = vsyncpa [#allocation12], 0
    %33 = vsyncpa [#allocation15], 0
    %34 = vsyncpa [#allocation18], 0
    %35 = vsyncpa [#allocation21], 0
    %36 = vsyncpa [#allocation24], 0
    %37 = vsyncpa [#allocation27], 0
    %38 = vsyncpa [#allocation4], 0
    %39 = vsyncpa [#allocation31], 0
    // Predicated region
    $region2: #{tpu_custom_call.1} parent=1 // pred_check
      _
    $region3: #{tpu_custom_call.1} parent=1 // pred_check_branch
      %41 = sbr.rel (0) target = $region5
    $region4: #{tpu_custom_call.1} parent=1 // pred_region
      _
    $region5: #{tpu_custom_call.1} parent=1 // pred_fallthru
      _
    // Predicated region
    $region6: #{tpu_custom_call.1} parent=1 // pred_check
      _
    $region7: #{tpu_custom_call.1} parent=1 // pred_check_branch
      %43 = sbr.rel (0) target = $region9
    $region8: #{tpu_custom_call.1} parent=1 // pred_region
      %s45 = ssub.s32 128, 128
      %46 = vsyncadd [#allocation3], %s45
      %s48 = sshll.u32 [#allocation2], 4
      %s49 = int_to_ptr.vmem [resolvable:$true] %s48
      %51 = dma.hbm_to_vmem [thread:$0]  %s1, 128, %s49, [#allocation3]
    $region9: #{tpu_custom_call.1} parent=1 // pred_fallthru
      _
    // Predicated region
    $region10: #{tpu_custom_call.1} parent=1 // pred_check
      _
    $region11: #{tpu_custom_call.1} parent=1 // pred_check_branch
      %53 = sbr.rel (0) target = $region13
    $region12: #{tpu_custom_call.1} parent=1 // pred_region
      %s55 = ssub.s32 25088, 25088
      %56 = vsyncadd [#allocation6], %s55
      %s57 = sshll.u32 [#allocation5], 4
      %s58 = int_to_ptr.vmem [resolvable:$true] %s57
      %63 = dma.hbm_to_vmem [thread:$0]  %s2, 25088, %s58, [#allocation6], 256, 256, 16
    $region13: #{tpu_custom_call.1} parent=1 // pred_fallthru
      _
    // Predicated region
    $region14: #{tpu_custom_call.1} parent=1 // pred_check
      _
    $region15: #{tpu_custom_call.1} parent=1 // pred_check_branch
      %65 = sbr.rel (0) target = $region17
    $region16: #{tpu_custom_call.1} parent=1 // pred_region
      %s67 = ssub.s32 64, 64
      %68 = vsyncadd [#allocation6], %s67
      %s70 = sshll.u32 [#allocation7], 4
      %s71 = int_to_ptr.vmem [resolvable:$true] %s70
      %73 = dma.hbm_to_vmem [thread:$0]  %s3, 64, %s71, [#allocation6]
    $region17: #{tpu_custom_call.1} parent=1 // pred_fallthru
      _
    // Predicated region
    $region18: #{tpu_custom_call.1} parent=1 // pred_check
      _
    $region19: #{tpu_custom_call.1} parent=1 // pred_check_branch
      %75 = sbr.rel (0) target = $region21
    $region20: #{tpu_custom_call.1} parent=1 // pred_region
      %s77 = ssub.s32 8192, 8192
      %78 = vsyncadd [#allocation9], %s77
      %s79 = sshll.u32 [#allocation8], 4
      %s80 = int_to_ptr.vmem [resolvable:$true] %s79
      %85 = dma.hbm_to_vmem [thread:$0]  %s4, 8192, %s80, [#allocation9], 128, 128, 8
    $region21: #{tpu_custom_call.1} parent=1 // pred_fallthru
      _
    // Predicated region
    $region22: #{tpu_custom_call.1} parent=1 // pred_check
      _
    $region23: #{tpu_custom_call.1} parent=1 // pred_check_branch
      %87 = sbr.rel (0) target = $region25
    $region24: #{tpu_custom_call.1} parent=1 // pred_region
      %s89 = ssub.s32 32, 32
      %90 = vsyncadd [#allocation9], %s89
      %s92 = sshll.u32 [#allocation10], 4
      %s93 = int_to_ptr.vmem [resolvable:$true] %s92
      %95 = dma.hbm_to_vmem [thread:$0]  %s5, 32, %s93, [#allocation9]
    $region25: #{tpu_custom_call.1} parent=1 // pred_fallthru
      _
    // Predicated region
    $region26: #{tpu_custom_call.1} parent=1 // pred_check
      _
    $region27: #{tpu_custom_call.1} parent=1 // pred_check_branch
      %97 = sbr.rel (0) target = $region29
    $region28: #{tpu_custom_call.1} parent=1 // pred_region
      %s99 = ssub.s32 2048, 2048
      %100 = vsyncadd [#allocation12], %s99
      %s101 = sshll.u32 [#allocation11], 4
      %s102 = int_to_ptr.vmem [resolvable:$true] %s101
      %107 = dma.hbm_to_vmem [thread:$0]  %s6, 2048, %s102, [#allocation12], 64, 64, 4
    $region29: #{tpu_custom_call.1} parent=1 // pred_fallthru
      _
    // Predicated region
    $region30: #{tpu_custom_call.1} parent=1 // pred_check
      _
    $region31: #{tpu_custom_call.1} parent=1 // pred_check_branch
      %109 = sbr.rel (0) target = $region33
    $region32: #{tpu_custom_call.1} parent=1 // pred_region
      %s111 = ssub.s32 16, 16
      %112 = vsyncadd [#allocation12], %s111
      %s114 = sshll.u32 [#allocation13], 4
      %s115 = int_to_ptr.vmem [resolvable:$true] %s114
      %117 = dma.hbm_to_vmem [thread:$0]  %s7, 16, %s115, [#allocation12]
    $region33: #{tpu_custom_call.1} parent=1 // pred_fallthru
      _
    // Predicated region
    $region34: #{tpu_custom_call.1} parent=1 // pred_check
      _
    $region35: #{tpu_custom_call.1} parent=1 // pred_check_branch
      %119 = sbr.rel (0) target = $region37
    $region36: #{tpu_custom_call.1} parent=1 // pred_region
      _
    $region37: #{tpu_custom_call.1} parent=1 // pred_fallthru
      _
    // Predicated region
    $region38: #{tpu_custom_call.1} parent=1 // pred_check
      _
    $region39: #{tpu_custom_call.1} parent=1 // pred_check_branch
      %121 = sbr.rel (0) target = $region41
    $region40: #{tpu_custom_call.1} parent=1 // pred_region
      %s123 = ssub.s32 16, 16
      %124 = vsyncadd [#allocation15], %s123
      %s126 = sshll.u32 [#allocation14], 4
      %s127 = int_to_ptr.vmem [resolvable:$true] %s126
      %129 = dma.hbm_to_vmem [thread:$0]  %s9, 16, %s127, [#allocation15]
    $region41: #{tpu_custom_call.1} parent=1 // pred_fallthru
      _
    // Predicated region
    $region42: #{tpu_custom_call.1} parent=1 // pred_check
      _
    $region43: #{tpu_custom_call.1} parent=1 // pred_check_branch
      %131 = sbr.rel (0) target = $region45
    $region44: #{tpu_custom_call.1} parent=1 // pred_region
      _
    $region45: #{tpu_custom_call.1} parent=1 // pred_fallthru
      _
    // Predicated region
    $region46: #{tpu_custom_call.1} parent=1 // pred_check
      _
    $region47: #{tpu_custom_call.1} parent=1 // pred_check_branch
      %133 = sbr.rel (0) target = $region49
    $region48: #{tpu_custom_call.1} parent=1 // pred_region
      %s135 = ssub.s32 16, 16
      %136 = vsyncadd [#allocation15], %s135
      %s138 = sshll.u32 [#allocation16], 4
      %s139 = int_to_ptr.vmem [resolvable:$true] %s138
      %141 = dma.hbm_to_vmem [thread:$0]  %s11, 16, %s139, [#allocation15]
    $region49: #{tpu_custom_call.1} parent=1 // pred_fallthru
      _
    // Predicated region
    $region50: #{tpu_custom_call.1} parent=1 // pred_check
      _
    $region51: #{tpu_custom_call.1} parent=1 // pred_check_branch
      %143 = sbr.rel (0) target = $region53
    $region52: #{tpu_custom_call.1} parent=1 // pred_region
      %s145 = ssub.s32 512, 512
      %146 = vsyncadd [#allocation18], %s145
      %s147 = sshll.u32 [#allocation17], 4
      %s148 = int_to_ptr.vmem [resolvable:$true] %s147
      %153 = dma.hbm_to_vmem [thread:$0]  %s12, 512, %s148, [#allocation18], 64, 64, 4
    $region53: #{tpu_custom_call.1} parent=1 // pred_fallthru
      _
    // Predicated region
    $region54: #{tpu_custom_call.1} parent=1 // pred_check
      _
    $region55: #{tpu_custom_call.1} parent=1 // pred_check_branch
      %155 = sbr.rel (0) target = $region57
    $region56: #{tpu_custom_call.1} parent=1 // pred_region
      %s157 = ssub.s32 16, 16
      %158 = vsyncadd [#allocation18], %s157
      %s160 = sshll.u32 [#allocation19], 4
      %s161 = int_to_ptr.vmem [resolvable:$true] %s160
      %163 = dma.hbm_to_vmem [thread:$0]  %s13, 16, %s161, [#allocation18]
    $region57: #{tpu_custom_call.1} parent=1 // pred_fallthru
      _
    // Predicated region
    $region58: #{tpu_custom_call.1} parent=1 // pred_check
      _
    $region59: #{tpu_custom_call.1} parent=1 // pred_check_branch
      %165 = sbr.rel (0) target = $region61
    $region60: #{tpu_custom_call.1} parent=1 // pred_region
      _
    $region61: #{tpu_custom_call.1} parent=1 // pred_fallthru
      _
    // Predicated region
    $region62: #{tpu_custom_call.1} parent=1 // pred_check
      _
    $region63: #{tpu_custom_call.1} parent=1 // pred_check_branch
      %167 = sbr.rel (0) target = $region65
    $region64: #{tpu_custom_call.1} parent=1 // pred_region
      %s169 = ssub.s32 16, 16
      %170 = vsyncadd [#allocation21], %s169
      %s172 = sshll.u32 [#allocation20], 4
      %s173 = int_to_ptr.vmem [resolvable:$true] %s172
      %175 = dma.hbm_to_vmem [thread:$0]  %s15, 16, %s173, [#allocation21]
    $region65: #{tpu_custom_call.1} parent=1 // pred_fallthru
      _
    // Predicated region
    $region66: #{tpu_custom_call.1} parent=1 // pred_check
      _
    $region67: #{tpu_custom_call.1} parent=1 // pred_check_branch
      %177 = sbr.rel (0) target = $region69
    $region68: #{tpu_custom_call.1} parent=1 // pred_region
      %s179 = ssub.s32 2048, 2048
      %180 = vsyncadd [#allocation21], %s179
      %s181 = sshll.u32 [#allocation22], 4
      %s182 = int_to_ptr.vmem [resolvable:$true] %s181
      %187 = dma.hbm_to_vmem [thread:$0]  %s16, 2048, %s182, [#allocation21], 128, 128, 8
    $region69: #{tpu_custom_call.1} parent=1 // pred_fallthru
      _
    // Predicated region
    $region70: #{tpu_custom_call.1} parent=1 // pred_check
      _
    $region71: #{tpu_custom_call.1} parent=1 // pred_check_branch
      %189 = sbr.rel (0) target = $region73
    $region72: #{tpu_custom_call.1} parent=1 // pred_region
      %s191 = ssub.s32 32, 32
      %192 = vsyncadd [#allocation24], %s191
      %s194 = sshll.u32 [#allocation23], 4
      %s195 = int_to_ptr.vmem [resolvable:$true] %s194
      %197 = dma.hbm_to_vmem [thread:$0]  %s17, 32, %s195, [#allocation24]
    $region73: #{tpu_custom_call.1} parent=1 // pred_fallthru
      _
    // Predicated region
    $region74: #{tpu_custom_call.1} parent=1 // pred_check
      _
    $region75: #{tpu_custom_call.1} parent=1 // pred_check_branch
      %199 = sbr.rel (0) target = $region77
    $region76: #{tpu_custom_call.1} parent=1 // pred_region
      %s201 = ssub.s32 8192, 8192
      %202 = vsyncadd [#allocation24], %s201
      %s203 = sshll.u32 [#allocation25], 4
      %s204 = int_to_ptr.vmem [resolvable:$true] %s203
      %209 = dma.hbm_to_vmem [thread:$0]  %s18, 8192, %s204, [#allocation24], 256, 256, 16
    $region77: #{tpu_custom_call.1} parent=1 // pred_fallthru
      _
    // Predicated region
    $region78: #{tpu_custom_call.1} parent=1 // pred_check
      _
    $region79: #{tpu_custom_call.1} parent=1 // pred_check_branch
      %211 = sbr.rel (0) target = $region81
    $region80: #{tpu_custom_call.1} parent=1 // pred_region
      %s213 = ssub.s32 64, 64
      %214 = vsyncadd [#allocation27], %s213
      %s216 = sshll.u32 [#allocation26], 4
      %s217 = int_to_ptr.vmem [resolvable:$true] %s216
      %219 = dma.hbm_to_vmem [thread:$0]  %s19, 64, %s217, [#allocation27]
    $region81: #{tpu_custom_call.1} parent=1 // pred_fallthru
      _
    // Predicated region
    $region82: #{tpu_custom_call.1} parent=1 // pred_check
      _
    $region83: #{tpu_custom_call.1} parent=1 // pred_check_branch
      %221 = sbr.rel (0) target = $region85
    $region84: #{tpu_custom_call.1} parent=1 // pred_region
      %s223 = ssub.s32 28672, 28672
      %224 = vsyncadd [#allocation27], %s223
      %s225 = sshll.u32 [#allocation28], 4
      %s226 = int_to_ptr.vmem [resolvable:$true] %s225
      %231 = dma.hbm_to_vmem [thread:$0]  %s20, 28672, %s226, [#allocation27], 448, 448, 28
    $region85: #{tpu_custom_call.1} parent=1 // pred_fallthru
      _
    // Predicated region
    $region86: #{tpu_custom_call.1} parent=1 // pred_check
      _
    $region87: #{tpu_custom_call.1} parent=1 // pred_check_branch
      %233 = sbr.rel (0) target = $region89
    $region88: #{tpu_custom_call.1} parent=1 // pred_region
      _
    $region89: #{tpu_custom_call.1} parent=1 // pred_fallthru
      _
    // Predicated region
    $region90: #{tpu_custom_call.1} parent=1 // pred_check
      _
    $region91: #{tpu_custom_call.1} parent=1 // pred_check_branch
      %235 = sbr.rel (0) target = $region93
    $region92: #{tpu_custom_call.1} parent=1 // pred_region
      %236 = dma.done [#allocation3], 128
    $region93: #{tpu_custom_call.1} parent=1 // pred_fallthru
      _
    // Predicated region
    $region94: #{tpu_custom_call.1} parent=1 // pred_check
      _
    $region95: #{tpu_custom_call.1} parent=1 // pred_check_branch
      %238 = sbr.rel (0) target = $region97
    $region96: #{tpu_custom_call.1} parent=1 // pred_region
      %239 = dma.done [#allocation6], 25088
    $region97: #{tpu_custom_call.1} parent=1 // pred_fallthru
      _
    // Predicated region
    $region98: #{tpu_custom_call.1} parent=1 // pred_check
      _
    $region99: #{tpu_custom_call.1} parent=1 // pred_check_branch
      %241 = sbr.rel (0) target = $region101
    $region100: #{tpu_custom_call.1} parent=1 // pred_region
      %242 = dma.done [#allocation6], 64
    $region101: #{tpu_custom_call.1} parent=1 // pred_fallthru
      _
    // Predicated region
    $region102: #{tpu_custom_call.1} parent=1 // pred_check
      _
    $region103: #{tpu_custom_call.1} parent=1 // pred_check_branch
      %244 = sbr.rel (0) target = $region105
    $region104: #{tpu_custom_call.1} parent=1 // pred_region
      %245 = dma.done [#allocation9], 8192
    $region105: #{tpu_custom_call.1} parent=1 // pred_fallthru
      _
    // Predicated region
    $region106: #{tpu_custom_call.1} parent=1 // pred_check
      _
    $region107: #{tpu_custom_call.1} parent=1 // pred_check_branch
      %247 = sbr.rel (0) target = $region109
    $region108: #{tpu_custom_call.1} parent=1 // pred_region
      %248 = dma.done [#allocation9], 32
    $region109: #{tpu_custom_call.1} parent=1 // pred_fallthru
      _
    // Predicated region
    $region110: #{tpu_custom_call.1} parent=1 // pred_check
      _
    $region111: #{tpu_custom_call.1} parent=1 // pred_check_branch
      %250 = sbr.rel (0) target = $region113
    $region112: #{tpu_custom_call.1} parent=1 // pred_region
      %251 = dma.done [#allocation12], 2048
    $region113: #{tpu_custom_call.1} parent=1 // pred_fallthru
      _
    // Predicated region
    $region114: #{tpu_custom_call.1} parent=1 // pred_check
      _
    $region115: #{tpu_custom_call.1} parent=1 // pred_check_branch
      %253 = sbr.rel (0) target = $region117
    $region116: #{tpu_custom_call.1} parent=1 // pred_region
      %254 = dma.done [#allocation12], 16
    $region117: #{tpu_custom_call.1} parent=1 // pred_fallthru
      _
    // Predicated region
    $region118: #{tpu_custom_call.1} parent=1 // pred_check
      _
    $region119: #{tpu_custom_call.1} parent=1 // pred_check_branch
      %256 = sbr.rel (0) target = $region121
    $region120: #{tpu_custom_call.1} parent=1 // pred_region
      %257 = dma.done [#allocation15], 16
    $region121: #{tpu_custom_call.1} parent=1 // pred_fallthru
      _
    // Predicated region
    $region122: #{tpu_custom_call.1} parent=1 // pred_check
      _
    $region123: #{tpu_custom_call.1} parent=1 // pred_check_branch
      %259 = sbr.rel (0) target = $region125
    $region124: #{tpu_custom_call.1} parent=1 // pred_region
      %260 = dma.done [#allocation15], 16
    $region125: #{tpu_custom_call.1} parent=1 // pred_fallthru
      _
    // Predicated region
    $region126: #{tpu_custom_call.1} parent=1 // pred_check
      _
    $region127: #{tpu_custom_call.1} parent=1 // pred_check_branch
      %262 = sbr.rel (0) target = $region129
    $region128: #{tpu_custom_call.1} parent=1 // pred_region
      %263 = dma.done [#allocation18], 512
    $region129: #{tpu_custom_call.1} parent=1 // pred_fallthru
      _
    // Predicated region
    $region130: #{tpu_custom_call.1} parent=1 // pred_check
      _
    $region131: #{tpu_custom_call.1} parent=1 // pred_check_branch
      %265 = sbr.rel (0) target = $region133
    $region132: #{tpu_custom_call.1} parent=1 // pred_region
      %266 = dma.done [#allocation18], 16
    $region133: #{tpu_custom_call.1} parent=1 // pred_fallthru
      _
    // Predicated region
    $region134: #{tpu_custom_call.1} parent=1 // pred_check
      _
    $region135: #{tpu_custom_call.1} parent=1 // pred_check_branch
      %268 = sbr.rel (0) target = $region137
    $region136: #{tpu_custom_call.1} parent=1 // pred_region
      %269 = dma.done [#allocation21], 16
    $region137: #{tpu_custom_call.1} parent=1 // pred_fallthru
      _
    // Predicated region
    $region138: #{tpu_custom_call.1} parent=1 // pred_check
      _
    $region139: #{tpu_custom_call.1} parent=1 // pred_check_branch
      %271 = sbr.rel (0) target = $region141
    $region140: #{tpu_custom_call.1} parent=1 // pred_region
      %272 = dma.done [#allocation21], 2048
    $region141: #{tpu_custom_call.1} parent=1 // pred_fallthru
      _
    // Predicated region
    $region142: #{tpu_custom_call.1} parent=1 // pred_check
      _
    $region143: #{tpu_custom_call.1} parent=1 // pred_check_branch
      %274 = sbr.rel (0) target = $region145
    $region144: #{tpu_custom_call.1} parent=1 // pred_region
      %275 = dma.done [#allocation24], 32
    $region145: #{tpu_custom_call.1} parent=1 // pred_fallthru
      _
    // Predicated region
    $region146: #{tpu_custom_call.1} parent=1 // pred_check
      _
    $region147: #{tpu_custom_call.1} parent=1 // pred_check_branch
      %277 = sbr.rel (0) target = $region149
    $region148: #{tpu_custom_call.1} parent=1 // pred_region
      %278 = dma.done [#allocation24], 8192
    $region149: #{tpu_custom_call.1} parent=1 // pred_fallthru
      _
    // Predicated region
    $region150: #{tpu_custom_call.1} parent=1 // pred_check
      _
    $region151: #{tpu_custom_call.1} parent=1 // pred_check_branch
      %280 = sbr.rel (0) target = $region153
    $region152: #{tpu_custom_call.1} parent=1 // pred_region
      %281 = dma.done [#allocation27], 64
    $region153: #{tpu_custom_call.1} parent=1 // pred_fallthru
      _
    // Predicated region
    $region154: #{tpu_custom_call.1} parent=1 // pred_check
      _
    $region155: #{tpu_custom_call.1} parent=1 // pred_check_branch
      %283 = sbr.rel (0) target = $region157
    $region156: #{tpu_custom_call.1} parent=1 // pred_region
      %284 = dma.done [#allocation27], 28672
    $region157: #{tpu_custom_call.1} parent=1 // pred_fallthru
      _
    %v286 = vld [vmem:[%s0] sm:$0xff]
    %v287 = vld [vmem:[%s0 + $0x8] sm:$0xff]
    %v288 = vld [vmem:[%s0 + $0x10] sm:$0xff]
    %v289 = vld [vmem:[%s0 + $0x18] sm:$0xff]
    %v290 = vld [vmem:[%s0 + $0x20] sm:$0xff]
    %v291 = vld [vmem:[%s0 + $0x28] sm:$0xff]
    %v292 = vld [vmem:[%s0 + $0x30] sm:$0xff]
    %v293 = vpack.c.bf16 %v286, %v286
    %v294 = vpack.c.bf16 %v287, %v287
    %v295 = vpack.c.bf16 %v288, %v288
    %v296 = vpack.c.bf16 %v289, %v289
    %v297 = vpack.c.bf16 %v290, %v290
    %v298 = vpack.c.bf16 %v291, %v291
    %v299 = vpack.c.bf16 %v292, %v292
    %v300 = vld [vmem:[#allocation5] sm:$0xff]
    %v301 = vld [vmem:[#allocation5 + $0x8] sm:$0xff]
    %v302 = vld [vmem:[#allocation5 + $0x10] sm:$0xff]
    %v303 = vld [vmem:[#allocation5 + $0x18] sm:$0xff]
    %v304 = vld [vmem:[#allocation5 + $0x20] sm:$0xff]
    %v305 = vld [vmem:[#allocation5 + $0x28] sm:$0xff]
    %v306 = vld [vmem:[#allocation5 + $0x30] sm:$0xff]
    %v307 = vld [vmem:[#allocation5 + $0x38] sm:$0xff]
    %v308 = vld [vmem:[#allocation5 + $0x40] sm:$0xff]
    %v309 = vld [vmem:[#allocation5 + $0x48] sm:$0xff]
    %v310 = vld [vmem:[#allocation5 + $0x50] sm:$0xff]
    %v311 = vld [vmem:[#allocation5 + $0x58] sm:$0xff]
    %v312 = vld [vmem:[#allocation5 + $0x60] sm:$0xff]
    %v313 = vld [vmem:[#allocation5 + $0x68] sm:$0xff]
    %v314 = vld [vmem:[#allocation5 + $0x70] sm:$0xff]
    %v315 = vld [vmem:[#allocation5 + $0x78] sm:$0xff]
    %v316 = vld [vmem:[#allocation5 + $0x80] sm:$0xff]
    %v317 = vld [vmem:[#allocation5 + $0x88] sm:$0xff]
    %v318 = vld [vmem:[#allocation5 + $0x90] sm:$0xff]
    %v319 = vld [vmem:[#allocation5 + $0x98] sm:$0xff]
    %v320 = vld [vmem:[#allocation5 + $0xa0] sm:$0xff]
    %v321 = vld [vmem:[#allocation5 + $0xa8] sm:$0xff]
    %v322 = vld [vmem:[#allocation5 + $0xb0] sm:$0xff]
    %v323 = vld [vmem:[#allocation5 + $0xb8] sm:$0xff]
    %v324 = vld [vmem:[#allocation5 + $0xc0] sm:$0xff]
    %v325 = vld [vmem:[#allocation5 + $0xc8] sm:$0xff]
    %v326 = vld [vmem:[#allocation5 + $0xd0] sm:$0xff]
    %v327 = vld [vmem:[#allocation5 + $0xd8] sm:$0xff]
    %v328 = vld [vmem:[#allocation5 + $0xe0] sm:$0xff]
    %v329 = vld [vmem:[#allocation5 + $0xe8] sm:$0xff]
    %v330 = vld [vmem:[#allocation5 + $0xf0] sm:$0xff]
    %v331 = vld [vmem:[#allocation5 + $0xf8] sm:$0xff]
    %v332 = vld [vmem:[#allocation5 + $0x100] sm:$0xff]
    %v333 = vld [vmem:[#allocation5 + $0x108] sm:$0xff]
    %v334 = vld [vmem:[#allocation5 + $0x110] sm:$0xff]
    %v335 = vld [vmem:[#allocation5 + $0x118] sm:$0xff]
    %v336 = vld [vmem:[#allocation5 + $0x120] sm:$0xff]
    %v337 = vld [vmem:[#allocation5 + $0x128] sm:$0xff]
    %v338 = vld [vmem:[#allocation5 + $0x130] sm:$0xff]
    %v339 = vld [vmem:[#allocation5 + $0x138] sm:$0xff]
    %v340 = vld [vmem:[#allocation5 + $0x140] sm:$0xff]
    %v341 = vld [vmem:[#allocation5 + $0x148] sm:$0xff]
    %v342 = vld [vmem:[#allocation5 + $0x150] sm:$0xff]
    %v343 = vld [vmem:[#allocation5 + $0x158] sm:$0xff]
    %v344 = vld [vmem:[#allocation5 + $0x160] sm:$0xff]
    %v345 = vld [vmem:[#allocation5 + $0x168] sm:$0xff]
    %v346 = vld [vmem:[#allocation5 + $0x170] sm:$0xff]
    %v347 = vld [vmem:[#allocation5 + $0x178] sm:$0xff]
    %v348 = vld [vmem:[#allocation5 + $0x180] sm:$0xff]
    %v349 = vld [vmem:[#allocation5 + $0x188] sm:$0xff]
    %v350 = vld [vmem:[#allocation5 + $0x190] sm:$0xff]
    %v351 = vld [vmem:[#allocation5 + $0x198] sm:$0xff]
    %v352 = vld [vmem:[#allocation5 + $0x1a0] sm:$0xff]
    %v353 = vld [vmem:[#allocation5 + $0x1a8] sm:$0xff]
    %v354 = vld [vmem:[#allocation5 + $0x1b0] sm:$0xff]
    %v355 = vld [vmem:[#allocation5 + $0x1b8] sm:$0xff]
    %v356 = vld [vmem:[#allocation5 + $0x1c0] sm:$0xff]
    %v357 = vld [vmem:[#allocation5 + $0x1c8] sm:$0xff]
    %v358 = vld [vmem:[#allocation5 + $0x1d0] sm:$0xff]
    %v359 = vld [vmem:[#allocation5 + $0x1d8] sm:$0xff]
    %v360 = vld [vmem:[#allocation5 + $0x1e0] sm:$0xff]
    %v361 = vld [vmem:[#allocation5 + $0x1e8] sm:$0xff]
    %v362 = vld [vmem:[#allocation5 + $0x1f0] sm:$0xff]
    %v363 = vld [vmem:[#allocation5 + $0x1f8] sm:$0xff]
    %v364 = vld [vmem:[#allocation5 + $0x200] sm:$0xff]
    %v365 = vld [vmem:[#allocation5 + $0x208] sm:$0xff]
    %v366 = vld [vmem:[#allocation5 + $0x210] sm:$0xff]
    %v367 = vld [vmem:[#allocation5 + $0x218] sm:$0xff]
    %v368 = vld [vmem:[#allocation5 + $0x220] sm:$0xff]
    %v369 = vld [vmem:[#allocation5 + $0x228] sm:$0xff]
    %v370 = vld [vmem:[#allocation5 + $0x230] sm:$0xff]
    %v371 = vld [vmem:[#allocation5 + $0x238] sm:$0xff]
    %v372 = vld [vmem:[#allocation5 + $0x240] sm:$0xff]
    %v373 = vld [vmem:[#allocation5 + $0x248] sm:$0xff]
    %v374 = vld [vmem:[#allocation5 + $0x250] sm:$0xff]
    %v375 = vld [vmem:[#allocation5 + $0x258] sm:$0xff]
    %v376 = vld [vmem:[#allocation5 + $0x260] sm:$0xff]
    %v377 = vld [vmem:[#allocation5 + $0x268] sm:$0xff]
    %v378 = vld [vmem:[#allocation5 + $0x270] sm:$0xff]
    %v379 = vld [vmem:[#allocation5 + $0x278] sm:$0xff]
    %v380 = vld [vmem:[#allocation5 + $0x280] sm:$0xff]
    %v381 = vld [vmem:[#allocation5 + $0x288] sm:$0xff]
    %v382 = vld [vmem:[#allocation5 + $0x290] sm:$0xff]
    %v383 = vld [vmem:[#allocation5 + $0x298] sm:$0xff]
    %v384 = vld [vmem:[#allocation5 + $0x2a0] sm:$0xff]
    %v385 = vld [vmem:[#allocation5 + $0x2a8] sm:$0xff]
    %v386 = vld [vmem:[#allocation5 + $0x2b0] sm:$0xff]
    %v387 = vld [vmem:[#allocation5 + $0x2b8] sm:$0xff]
    %v388 = vld [vmem:[#allocation5 + $0x2c0] sm:$0xff]
    %v389 = vld [vmem:[#allocation5 + $0x2c8] sm:$0xff]
    %v390 = vld [vmem:[#allocation5 + $0x2d0] sm:$0xff]
    %v391 = vld [vmem:[#allocation5 + $0x2d8] sm:$0xff]
    %v392 = vld [vmem:[#allocation5 + $0x2e0] sm:$0xff]
    %v393 = vld [vmem:[#allocation5 + $0x2e8] sm:$0xff]
    %v394 = vld [vmem:[#allocation5 + $0x2f0] sm:$0xff]
    %v395 = vld [vmem:[#allocation5 + $0x2f8] sm:$0xff]
    %v396 = vld [vmem:[#allocation5 + $0x300] sm:$0xff]
    %v397 = vld [vmem:[#allocation5 + $0x308] sm:$0xff]
    %v398 = vld [vmem:[#allocation5 + $0x310] sm:$0xff]
    %v399 = vld [vmem:[#allocation5 + $0x318] sm:$0xff]
    %v400 = vld [vmem:[#allocation5 + $0x320] sm:$0xff]
    %v401 = vld [vmem:[#allocation5 + $0x328] sm:$0xff]
    %v402 = vld [vmem:[#allocation5 + $0x330] sm:$0xff]
    %v403 = vld [vmem:[#allocation5 + $0x338] sm:$0xff]
    %v404 = vld [vmem:[#allocation5 + $0x340] sm:$0xff]
    %v405 = vld [vmem:[#allocation5 + $0x348] sm:$0xff]
    %v406 = vld [vmem:[#allocation5 + $0x350] sm:$0xff]
    %v407 = vld [vmem:[#allocation5 + $0x358] sm:$0xff]
    %v408 = vld [vmem:[#allocation5 + $0x360] sm:$0xff]
    %v409 = vld [vmem:[#allocation5 + $0x368] sm:$0xff]
    %v410 = vld [vmem:[#allocation5 + $0x370] sm:$0xff]
    %v411 = vld [vmem:[#allocation5 + $0x378] sm:$0xff]
    %v412 = vld [vmem:[#allocation5 + $0x380] sm:$0xff]
    %v413 = vld [vmem:[#allocation5 + $0x388] sm:$0xff]
    %v414 = vld [vmem:[#allocation5 + $0x390] sm:$0xff]
    %v415 = vld [vmem:[#allocation5 + $0x398] sm:$0xff]
    %v416 = vld [vmem:[#allocation5 + $0x3a0] sm:$0xff]
    %v417 = vld [vmem:[#allocation5 + $0x3a8] sm:$0xff]
    %v418 = vld [vmem:[#allocation5 + $0x3b0] sm:$0xff]
    %v419 = vld [vmem:[#allocation5 + $0x3b8] sm:$0xff]
    %v420 = vld [vmem:[#allocation5 + $0x3c0] sm:$0xff]
    %v421 = vld [vmem:[#allocation5 + $0x3c8] sm:$0xff]
    %v422 = vld [vmem:[#allocation5 + $0x3d0] sm:$0xff]
    %v423 = vld [vmem:[#allocation5 + $0x3d8] sm:$0xff]
    %v424 = vld [vmem:[#allocation5 + $0x3e0] sm:$0xff]
    %v425 = vld [vmem:[#allocation5 + $0x3e8] sm:$0xff]
    %v426 = vld [vmem:[#allocation5 + $0x3f0] sm:$0xff]
    %v427 = vld [vmem:[#allocation5 + $0x3f8] sm:$0xff]
    %v428 = vld [vmem:[#allocation5 + $0x400] sm:$0xff]
    %v429 = vld [vmem:[#allocation5 + $0x408] sm:$0xff]
    %v430 = vld [vmem:[#allocation5 + $0x410] sm:$0xff]
    %v431 = vld [vmem:[#allocation5 + $0x418] sm:$0xff]
    %v432 = vld [vmem:[#allocation5 + $0x420] sm:$0xff]
    %v433 = vld [vmem:[#allocation5 + $0x428] sm:$0xff]
    %v434 = vld [vmem:[#allocation5 + $0x430] sm:$0xff]
    %v435 = vld [vmem:[#allocation5 + $0x438] sm:$0xff]
    %v436 = vld [vmem:[#allocation5 + $0x440] sm:$0xff]
    %v437 = vld [vmem:[#allocation5 + $0x448] sm:$0xff]
    %v438 = vld [vmem:[#allocation5 + $0x450] sm:$0xff]
    %v439 = vld [vmem:[#allocation5 + $0x458] sm:$0xff]
    %v440 = vld [vmem:[#allocation5 + $0x460] sm:$0xff]
    %v441 = vld [vmem:[#allocation5 + $0x468] sm:$0xff]
    %v442 = vld [vmem:[#allocation5 + $0x470] sm:$0xff]
    %v443 = vld [vmem:[#allocation5 + $0x478] sm:$0xff]
    %v444 = vld [vmem:[#allocation5 + $0x480] sm:$0xff]
    %v445 = vld [vmem:[#allocation5 + $0x488] sm:$0xff]
    %v446 = vld [vmem:[#allocation5 + $0x490] sm:$0xff]
    %v447 = vld [vmem:[#allocation5 + $0x498] sm:$0xff]
    %v448 = vld [vmem:[#allocation5 + $0x4a0] sm:$0xff]
    %v449 = vld [vmem:[#allocation5 + $0x4a8] sm:$0xff]
    %v450 = vld [vmem:[#allocation5 + $0x4b0] sm:$0xff]
    %v451 = vld [vmem:[#allocation5 + $0x4b8] sm:$0xff]
    %v452 = vld [vmem:[#allocation5 + $0x4c0] sm:$0xff]
    %v453 = vld [vmem:[#allocation5 + $0x4c8] sm:$0xff]
    %v454 = vld [vmem:[#allocation5 + $0x4d0] sm:$0xff]
    %v455 = vld [vmem:[#allocation5 + $0x4d8] sm:$0xff]
    %v456 = vld [vmem:[#allocation5 + $0x4e0] sm:$0xff]
    %v457 = vld [vmem:[#allocation5 + $0x4e8] sm:$0xff]
    %v458 = vld [vmem:[#allocation5 + $0x4f0] sm:$0xff]
    %v459 = vld [vmem:[#allocation5 + $0x4f8] sm:$0xff]
    %v460 = vld [vmem:[#allocation5 + $0x500] sm:$0xff]
    %v461 = vld [vmem:[#allocation5 + $0x508] sm:$0xff]
    %v462 = vld [vmem:[#allocation5 + $0x510] sm:$0xff]
    %v463 = vld [vmem:[#allocation5 + $0x518] sm:$0xff]
    %v464 = vld [vmem:[#allocation5 + $0x520] sm:$0xff]
    %v465 = vld [vmem:[#allocation5 + $0x528] sm:$0xff]
    %v466 = vld [vmem:[#allocation5 + $0x530] sm:$0xff]
    %v467 = vld [vmem:[#allocation5 + $0x538] sm:$0xff]
    %v468 = vld [vmem:[#allocation5 + $0x540] sm:$0xff]
    %v469 = vld [vmem:[#allocation5 + $0x548] sm:$0xff]
    %v470 = vld [vmem:[#allocation5 + $0x550] sm:$0xff]
    %v471 = vld [vmem:[#allocation5 + $0x558] sm:$0xff]
    %v472 = vld [vmem:[#allocation5 + $0x560] sm:$0xff]
    %v473 = vld [vmem:[#allocation5 + $0x568] sm:$0xff]
    %v474 = vld [vmem:[#allocation5 + $0x570] sm:$0xff]
    %v475 = vld [vmem:[#allocation5 + $0x578] sm:$0xff]
    %v476 = vld [vmem:[#allocation5 + $0x580] sm:$0xff]
    %v477 = vld [vmem:[#allocation5 + $0x588] sm:$0xff]
    %v478 = vld [vmem:[#allocation5 + $0x590] sm:$0xff]
    %v479 = vld [vmem:[#allocation5 + $0x598] sm:$0xff]
    %v480 = vld [vmem:[#allocation5 + $0x5a0] sm:$0xff]
    %v481 = vld [vmem:[#allocation5 + $0x5a8] sm:$0xff]
    %v482 = vld [vmem:[#allocation5 + $0x5b0] sm:$0xff]
    %v483 = vld [vmem:[#allocation5 + $0x5b8] sm:$0xff]
    %v484 = vld [vmem:[#allocation5 + $0x5c0] sm:$0xff]
    %v485 = vld [vmem:[#allocation5 + $0x5c8] sm:$0xff]
    %v486 = vld [vmem:[#allocation5 + $0x5d0] sm:$0xff]
    %v487 = vld [vmem:[#allocation5 + $0x5d8] sm:$0xff]
    %v488 = vld [vmem:[#allocation5 + $0x5e0] sm:$0xff]
    %v489 = vld [vmem:[#allocation5 + $0x5e8] sm:$0xff]
    %v490 = vld [vmem:[#allocation5 + $0x5f0] sm:$0xff]
    %v491 = vld [vmem:[#allocation5 + $0x5f8] sm:$0xff]
    %v492 = vld [vmem:[#allocation5 + $0x600] sm:$0xff]
    %v493 = vld [vmem:[#allocation5 + $0x608] sm:$0xff]
    %v494 = vld [vmem:[#allocation5 + $0x610] sm:$0xff]
    %v495 = vld [vmem:[#allocation5 + $0x618] sm:$0xff]
    %v496 = vld [vmem:[#allocation7] sm:$0xf]
    %v498 = vlaneseq
    %v499 = vshrl.u32 %v498, 7
    %v500 = vsub.s32 0, %v499
    %v501 = vrot.slane %v496, %v500
    %v502 = vlaneseq
    %v503 = vshrl.u32 %v502, 7
    %v504 = vsub.s32 1, %v503
    %v505 = vrot.slane %v496, %v504
    %v506 = vlaneseq
    %v507 = vshrl.u32 %v506, 7
    %v508 = vsub.s32 2, %v507
    %v509 = vrot.slane %v496, %v508
    %v510 = vlaneseq
    %v511 = vshrl.u32 %v510, 7
    %v512 = vsub.s32 3, %v511
    %v513 = vrot.slane %v496, %v512
    %v714 = vunpack.c.l.b16 %v300
    %v715 = vunpack.c.h.b16 %v300
    %v716 = vunpack.c.l.b16 %v301
    %v717 = vunpack.c.h.b16 %v301
    %v718 = vunpack.c.l.b16 %v302
    %v719 = vunpack.c.h.b16 %v302
    %v720 = vunpack.c.l.b16 %v303
    %v721 = vunpack.c.h.b16 %v303
    %v722 = vunpack.c.l.b16 %v304
    %v723 = vunpack.c.h.b16 %v304
    %v724 = vunpack.c.l.b16 %v305
    %v725 = vunpack.c.h.b16 %v305
    %v726 = vunpack.c.l.b16 %v306
    %v727 = vunpack.c.h.b16 %v306
    %v728 = vunpack.c.l.b16 %v307
    %v729 = vunpack.c.h.b16 %v307
    %v730 = vunpack.c.l.b16 %v308
    %v731 = vunpack.c.h.b16 %v308
    %v732 = vunpack.c.l.b16 %v309
    %v733 = vunpack.c.h.b16 %v309
    %v734 = vunpack.c.l.b16 %v310
    %v735 = vunpack.c.h.b16 %v310
    %v736 = vunpack.c.l.b16 %v311
    %v737 = vunpack.c.h.b16 %v311
    %v738 = vunpack.c.l.b16 %v312
    %v739 = vunpack.c.h.b16 %v312
    %v740 = vunpack.c.l.b16 %v313
    %v741 = vunpack.c.h.b16 %v313
    %v742 = vunpack.c.l.b16 %v314
    %v743 = vunpack.c.h.b16 %v314
    %v744 = vunpack.c.l.b16 %v315
    %v745 = vunpack.c.h.b16 %v315
    %v746 = vunpack.c.l.b16 %v316
    %v747 = vunpack.c.h.b16 %v316
    %v748 = vunpack.c.l.b16 %v317
    %v749 = vunpack.c.h.b16 %v317
    %v750 = vunpack.c.l.b16 %v318
    %v751 = vunpack.c.h.b16 %v318
    %v752 = vunpack.c.l.b16 %v319
    %v753 = vunpack.c.h.b16 %v319
    %v754 = vunpack.c.l.b16 %v320
    %v755 = vunpack.c.h.b16 %v320
    %v756 = vunpack.c.l.b16 %v321
    %v757 = vunpack.c.h.b16 %v321
    %v758 = vunpack.c.l.b16 %v322
    %v759 = vunpack.c.h.b16 %v322
    %v760 = vunpack.c.l.b16 %v323
    %v761 = vunpack.c.h.b16 %v323
    %v762 = vunpack.c.l.b16 %v324
    %v763 = vunpack.c.h.b16 %v324
    %v764 = vunpack.c.l.b16 %v325
    %v765 = vunpack.c.h.b16 %v325
    %v766 = vunpack.c.l.b16 %v326
    %v767 = vunpack.c.h.b16 %v326
    %v768 = vunpack.c.l.b16 %v327
    %v769 = vunpack.c.h.b16 %v327
    %v770 = vunpack.c.l.b16 %v328
    %v771 = vunpack.c.h.b16 %v328
    %v772 = vunpack.c.l.b16 %v329
    %v773 = vunpack.c.h.b16 %v329
    %v774 = vunpack.c.l.b16 %v330
    %v775 = vunpack.c.h.b16 %v330
    %v776 = vunpack.c.l.b16 %v331
    %v777 = vunpack.c.h.b16 %v331
    %v778 = vunpack.c.l.b16 %v332
    %v779 = vunpack.c.h.b16 %v332
    %v780 = vunpack.c.l.b16 %v333
    %v781 = vunpack.c.h.b16 %v333
    %v782 = vunpack.c.l.b16 %v334
    %v783 = vunpack.c.h.b16 %v334
    %v784 = vunpack.c.l.b16 %v335
    %v785 = vunpack.c.h.b16 %v335
    %v786 = vunpack.c.l.b16 %v336
    %v787 = vunpack.c.h.b16 %v336
    %v788 = vunpack.c.l.b16 %v337
    %v789 = vunpack.c.h.b16 %v337
    %v790 = vunpack.c.l.b16 %v338
    %v791 = vunpack.c.h.b16 %v338
    %v792 = vunpack.c.l.b16 %v339
    %v793 = vunpack.c.h.b16 %v339
    %v794 = vunpack.c.l.b16 %v340
    %v795 = vunpack.c.h.b16 %v340
    %v796 = vunpack.c.l.b16 %v341
    %v797 = vunpack.c.h.b16 %v341
    %v798 = vunpack.c.l.b16 %v342
    %v799 = vunpack.c.h.b16 %v342
    %v800 = vunpack.c.l.b16 %v343
    %v801 = vunpack.c.h.b16 %v343
    %v802 = vunpack.c.l.b16 %v344
    %v803 = vunpack.c.h.b16 %v344
    %v804 = vunpack.c.l.b16 %v345
    %v805 = vunpack.c.h.b16 %v345
    %v806 = vunpack.c.l.b16 %v346
    %v807 = vunpack.c.h.b16 %v346
    %v808 = vunpack.c.l.b16 %v347
    %v809 = vunpack.c.h.b16 %v347
    %v810 = vunpack.c.l.b16 %v348
    %v811 = vunpack.c.h.b16 %v348
    %v812 = vunpack.c.l.b16 %v349
    %v813 = vunpack.c.h.b16 %v349
    %v814 = vunpack.c.l.b16 %v350
    %v815 = vunpack.c.h.b16 %v350
    %v816 = vunpack.c.l.b16 %v351
    %v817 = vunpack.c.h.b16 %v351
    %v818 = vunpack.c.l.b16 %v352
    %v819 = vunpack.c.h.b16 %v352
    %v820 = vunpack.c.l.b16 %v353
    %v821 = vunpack.c.h.b16 %v353
    %v822 = vunpack.c.l.b16 %v354
    %v823 = vunpack.c.h.b16 %v354
    %v824 = vunpack.c.l.b16 %v355
    %v825 = vunpack.c.h.b16 %v355
    %v826 = vunpack.c.l.b16 %v356
    %v827 = vunpack.c.h.b16 %v356
    %v828 = vunpack.c.l.b16 %v357
    %v829 = vunpack.c.h.b16 %v357
    %v830 = vunpack.c.l.b16 %v358
    %v831 = vunpack.c.h.b16 %v358
    %v832 = vunpack.c.l.b16 %v359
    %v833 = vunpack.c.h.b16 %v359
    %v834 = vunpack.c.l.b16 %v360
    %v835 = vunpack.c.h.b16 %v360
    %v836 = vunpack.c.l.b16 %v361
    %v837 = vunpack.c.h.b16 %v361
    %v838 = vunpack.c.l.b16 %v362
    %v839 = vunpack.c.h.b16 %v362
    %v840 = vunpack.c.l.b16 %v363
    %v841 = vunpack.c.h.b16 %v363
    %v842 = vunpack.c.l.b16 %v364
    %v843 = vunpack.c.h.b16 %v364
    %v844 = vunpack.c.l.b16 %v365
    %v845 = vunpack.c.h.b16 %v365
    %v846 = vunpack.c.l.b16 %v366
    %v847 = vunpack.c.h.b16 %v366
    %v848 = vunpack.c.l.b16 %v367
    %v849 = vunpack.c.h.b16 %v367
    %v850 = vunpack.c.l.b16 %v368
    %v851 = vunpack.c.h.b16 %v368
    %v852 = vunpack.c.l.b16 %v369
    %v853 = vunpack.c.h.b16 %v369
    %v854 = vunpack.c.l.b16 %v370
    %v855 = vunpack.c.h.b16 %v370
    %v856 = vunpack.c.l.b16 %v371
    %v857 = vunpack.c.h.b16 %v371
    %v858 = vunpack.c.l.b16 %v372
    %v859 = vunpack.c.h.b16 %v372
    %v860 = vunpack.c.l.b16 %v373
    %v861 = vunpack.c.h.b16 %v373
    %v862 = vunpack.c.l.b16 %v374
    %v863 = vunpack.c.h.b16 %v374
    %v864 = vunpack.c.l.b16 %v375
    %v865 = vunpack.c.h.b16 %v375
    %v866 = vunpack.c.l.b16 %v376
    %v867 = vunpack.c.h.b16 %v376
    %v868 = vunpack.c.l.b16 %v377
    %v869 = vunpack.c.h.b16 %v377
    %v870 = vunpack.c.l.b16 %v378
    %v871 = vunpack.c.h.b16 %v378
    %v872 = vunpack.c.l.b16 %v379
    %v873 = vunpack.c.h.b16 %v379
    %v874 = vunpack.c.l.b16 %v380
    %v875 = vunpack.c.h.b16 %v380
    %v876 = vunpack.c.l.b16 %v381
    %v877 = vunpack.c.h.b16 %v381
    %v878 = vunpack.c.l.b16 %v382
    %v879 = vunpack.c.h.b16 %v382
    %v880 = vunpack.c.l.b16 %v383
    %v881 = vunpack.c.h.b16 %v383
    %v882 = vunpack.c.l.b16 %v384
    %v883 = vunpack.c.h.b16 %v384
    %v884 = vunpack.c.l.b16 %v385
    %v885 = vunpack.c.h.b16 %v385
    %v886 = vunpack.c.l.b16 %v386
    %v887 = vunpack.c.h.b16 %v386
    %v888 = vunpack.c.l.b16 %v387
    %v889 = vunpack.c.h.b16 %v387
    %v890 = vunpack.c.l.b16 %v388
    %v891 = vunpack.c.h.b16 %v388
    %v892 = vunpack.c.l.b16 %v389
    %v893 = vunpack.c.h.b16 %v389
    %v894 = vunpack.c.l.b16 %v390
    %v895 = vunpack.c.h.b16 %v390
    %v896 = vunpack.c.l.b16 %v391
    %v897 = vunpack.c.h.b16 %v391
    %v898 = vunpack.c.l.b16 %v392
    %v899 = vunpack.c.h.b16 %v392
    %v900 = vunpack.c.l.b16 %v393
    %v901 = vunpack.c.h.b16 %v393
    %v902 = vunpack.c.l.b16 %v394
    %v903 = vunpack.c.h.b16 %v394
    %v904 = vunpack.c.l.b16 %v395
    %v905 = vunpack.c.h.b16 %v395
    %v906 = vunpack.c.l.b16 %v396
    %v907 = vunpack.c.h.b16 %v396
    %v908 = vunpack.c.l.b16 %v397
    %v909 = vunpack.c.h.b16 %v397
    %v910 = vunpack.c.l.b16 %v398
    %v911 = vunpack.c.h.b16 %v398
    %v912 = vunpack.c.l.b16 %v399
    %v913 = vunpack.c.h.b16 %v399
    %v914 = vunpack.c.l.b16 %v400
    %v915 = vunpack.c.h.b16 %v400
    %v916 = vunpack.c.l.b16 %v401
    %v917 = vunpack.c.h.b16 %v401
    %v918 = vunpack.c.l.b16 %v402
    %v919 = vunpack.c.h.b16 %v402
    %v920 = vunpack.c.l.b16 %v403
    %v921 = vunpack.c.h.b16 %v403
    %v922 = vunpack.c.l.b16 %v404
    %v923 = vunpack.c.h.b16 %v404
    %v924 = vunpack.c.l.b16 %v405
    %v925 = vunpack.c.h.b16 %v405
    %v926 = vunpack.c.l.b16 %v406
    %v927 = vunpack.c.h.b16 %v406
    %v928 = vunpack.c.l.b16 %v407
    %v929 = vunpack.c.h.b16 %v407
    %v930 = vunpack.c.l.b16 %v408
    %v931 = vunpack.c.h.b16 %v408
    %v932 = vunpack.c.l.b16 %v409
    %v933 = vunpack.c.h.b16 %v409
    %v934 = vunpack.c.l.b16 %v410
    %v935 = vunpack.c.h.b16 %v410
    %v936 = vunpack.c.l.b16 %v411
    %v937 = vunpack.c.h.b16 %v411
    %v938 = vunpack.c.l.b16 %v412
    %v939 = vunpack.c.h.b16 %v412
    %v940 = vunpack.c.l.b16 %v413
    %v941 = vunpack.c.h.b16 %v413
    %v942 = vunpack.c.l.b16 %v414
    %v943 = vunpack.c.h.b16 %v414
    %v944 = vunpack.c.l.b16 %v415
    %v945 = vunpack.c.h.b16 %v415
    %v946 = vunpack.c.l.b16 %v416
    %v947 = vunpack.c.h.b16 %v416
    %v948 = vunpack.c.l.b16 %v417
    %v949 = vunpack.c.h.b16 %v417
    %v950 = vunpack.c.l.b16 %v418
    %v951 = vunpack.c.h.b16 %v418
    %v952 = vunpack.c.l.b16 %v419
    %v953 = vunpack.c.h.b16 %v419
    %v954 = vunpack.c.l.b16 %v420
    %v955 = vunpack.c.h.b16 %v420
    %v956 = vunpack.c.l.b16 %v421
    %v957 = vunpack.c.h.b16 %v421
    %v958 = vunpack.c.l.b16 %v422
    %v959 = vunpack.c.h.b16 %v422
    %v960 = vunpack.c.l.b16 %v423
    %v961 = vunpack.c.h.b16 %v423
    %v962 = vunpack.c.l.b16 %v424
    %v963 = vunpack.c.h.b16 %v424
    %v964 = vunpack.c.l.b16 %v425
    %v965 = vunpack.c.h.b16 %v425
    %v966 = vunpack.c.l.b16 %v426
    %v967 = vunpack.c.h.b16 %v426
    %v968 = vunpack.c.l.b16 %v427
    %v969 = vunpack.c.h.b16 %v427
    %v970 = vunpack.c.l.b16 %v428
    %v971 = vunpack.c.h.b16 %v428
    %v972 = vunpack.c.l.b16 %v429
    %v973 = vunpack.c.h.b16 %v429
    %v974 = vunpack.c.l.b16 %v430
    %v975 = vunpack.c.h.b16 %v430
    %v976 = vunpack.c.l.b16 %v431
    %v977 = vunpack.c.h.b16 %v431
    %v978 = vunpack.c.l.b16 %v432
    %v979 = vunpack.c.h.b16 %v432
    %v980 = vunpack.c.l.b16 %v433
    %v981 = vunpack.c.h.b16 %v433
    %v982 = vunpack.c.l.b16 %v434
    %v983 = vunpack.c.h.b16 %v434
    %v984 = vunpack.c.l.b16 %v435
    %v985 = vunpack.c.h.b16 %v435
    %v986 = vunpack.c.l.b16 %v436
    %v987 = vunpack.c.h.b16 %v436
    %v988 = vunpack.c.l.b16 %v437
    %v989 = vunpack.c.h.b16 %v437
    %v990 = vunpack.c.l.b16 %v438
    %v991 = vunpack.c.h.b16 %v438
    %v992 = vunpack.c.l.b16 %v439
    %v993 = vunpack.c.h.b16 %v439
    %v994 = vunpack.c.l.b16 %v440
    %v995 = vunpack.c.h.b16 %v440
    %v996 = vunpack.c.l.b16 %v441
    %v997 = vunpack.c.h.b16 %v441
    %v998 = vunpack.c.l.b16 %v442
    %v999 = vunpack.c.h.b16 %v442
    %v1000 = vunpack.c.l.b16 %v443
    %v1001 = vunpack.c.h.b16 %v443
    %v1002 = vunpack.c.l.b16 %v444
    %v1003 = vunpack.c.h.b16 %v444
    %v1004 = vunpack.c.l.b16 %v445
    %v1005 = vunpack.c.h.b16 %v445
    %v1006 = vunpack.c.l.b16 %v446
    %v1007 = vunpack.c.h.b16 %v446
    %v1008 = vunpack.c.l.b16 %v447
    %v1009 = vunpack.c.h.b16 %v447
    %v1010 = vunpack.c.l.b16 %v448
    %v1011 = vunpack.c.h.b16 %v448
    %v1012 = vunpack.c.l.b16 %v449
    %v1013 = vunpack.c.h.b16 %v449
    %v1014 = vunpack.c.l.b16 %v450
    %v1015 = vunpack.c.h.b16 %v450
    %v1016 = vunpack.c.l.b16 %v451
    %v1017 = vunpack.c.h.b16 %v451
    %v1018 = vunpack.c.l.b16 %v452
    %v1019 = vunpack.c.h.b16 %v452
    %v1020 = vunpack.c.l.b16 %v453
    %v1021 = vunpack.c.h.b16 %v453
    %v1022 = vunpack.c.l.b16 %v454
    %v1023 = vunpack.c.h.b16 %v454
    %v1024 = vunpack.c.l.b16 %v455
    %v1025 = vunpack.c.h.b16 %v455
    %v1026 = vunpack.c.l.b16 %v456
    %v1027 = vunpack.c.h.b16 %v456
    %v1028 = vunpack.c.l.b16 %v457
    %v1029 = vunpack.c.h.b16 %v457
    %v1030 = vunpack.c.l.b16 %v458
    %v1031 = vunpack.c.h.b16 %v458
    %v1032 = vunpack.c.l.b16 %v459
    %v1033 = vunpack.c.h.b16 %v459
    %v1034 = vunpack.c.l.b16 %v460
    %v1035 = vunpack.c.h.b16 %v460
    %v1036 = vunpack.c.l.b16 %v461
    %v1037 = vunpack.c.h.b16 %v461
    %v1038 = vunpack.c.l.b16 %v462
    %v1039 = vunpack.c.h.b16 %v462
    %v1040 = vunpack.c.l.b16 %v463
    %v1041 = vunpack.c.h.b16 %v463
    %v1042 = vunpack.c.l.b16 %v464
    %v1043 = vunpack.c.h.b16 %v464
    %v1044 = vunpack.c.l.b16 %v465
    %v1045 = vunpack.c.h.b16 %v465
    %v1046 = vunpack.c.l.b16 %v466
    %v1047 = vunpack.c.h.b16 %v466
    %v1048 = vunpack.c.l.b16 %v467
    %v1049 = vunpack.c.h.b16 %v467
    %v1050 = vunpack.c.l.b16 %v468
    %v1051 = vunpack.c.h.b16 %v468
    %v1052 = vunpack.c.l.b16 %v469
    %v1053 = vunpack.c.h.b16 %v469
    %v1054 = vunpack.c.l.b16 %v470
    %v1055 = vunpack.c.h.b16 %v470
    %v1056 = vunpack.c.l.b16 %v471
    %v1057 = vunpack.c.h.b16 %v471
    %v1058 = vunpack.c.l.b16 %v472
    %v1059 = vunpack.c.h.b16 %v472
    %v1060 = vunpack.c.l.b16 %v473
    %v1061 = vunpack.c.h.b16 %v473
    %v1062 = vunpack.c.l.b16 %v474
    %v1063 = vunpack.c.h.b16 %v474
    %v1064 = vunpack.c.l.b16 %v475
    %v1065 = vunpack.c.h.b16 %v475
    %v1066 = vunpack.c.l.b16 %v476
    %v1067 = vunpack.c.h.b16 %v476
    %v1068 = vunpack.c.l.b16 %v477
    %v1069 = vunpack.c.h.b16 %v477
    %v1070 = vunpack.c.l.b16 %v478
    %v1071 = vunpack.c.h.b16 %v478
    %v1072 = vunpack.c.l.b16 %v479
    %v1073 = vunpack.c.h.b16 %v479
    %v1074 = vunpack.c.l.b16 %v480
    %v1075 = vunpack.c.h.b16 %v480
    %v1076 = vunpack.c.l.b16 %v481
    %v1077 = vunpack.c.h.b16 %v481
    %v1078 = vunpack.c.l.b16 %v482
    %v1079 = vunpack.c.h.b16 %v482
    %v1080 = vunpack.c.l.b16 %v483
    %v1081 = vunpack.c.h.b16 %v483
    %v1082 = vunpack.c.l.b16 %v484
    %v1083 = vunpack.c.h.b16 %v484
    %v1084 = vunpack.c.l.b16 %v485
    %v1085 = vunpack.c.h.b16 %v485
    %v1086 = vunpack.c.l.b16 %v486
    %v1087 = vunpack.c.h.b16 %v486
    %v1088 = vunpack.c.l.b16 %v487
    %v1089 = vunpack.c.h.b16 %v487
    %v1090 = vunpack.c.l.b16 %v488
    %v1091 = vunpack.c.h.b16 %v488
    %v1092 = vunpack.c.l.b16 %v489
    %v1093 = vunpack.c.h.b16 %v489
    %v1094 = vunpack.c.l.b16 %v490
    %v1095 = vunpack.c.h.b16 %v490
    %v1096 = vunpack.c.l.b16 %v491
    %v1097 = vunpack.c.h.b16 %v491
    %v1098 = vunpack.c.l.b16 %v492
    %v1099 = vunpack.c.h.b16 %v492
    %v1100 = vunpack.c.l.b16 %v493
    %v1101 = vunpack.c.h.b16 %v493
    %v1102 = vunpack.c.l.b16 %v494
    %v1103 = vunpack.c.h.b16 %v494
    %v1104 = vunpack.c.l.b16 %v495
    %v1105 = vunpack.c.h.b16 %v495
    %v1106 = vpack.c.b16 %v718, %v714
    %v1107 = vpack.c.b16 %v719, %v715
    %v1108 = vpack.c.b16 %v720, %v716
    %v1109 = vpack.c.b16 %v721, %v717
    %v1110 = vpack.c.b16 %v726, %v722
    %v1111 = vpack.c.b16 %v727, %v723
    %v1112 = vpack.c.b16 %v728, %v724
    %v1113 = vpack.c.b16 %v729, %v725
    %v1114 = vpack.c.b16 %v734, %v730
    %v1115 = vpack.c.b16 %v735, %v731
    %v1116 = vpack.c.b16 %v736, %v732
    %v1117 = vpack.c.b16 %v737, %v733
    %v1118 = vpack.c.b16 %v742, %v738
    %v1119 = vpack.c.b16 %v743, %v739
    %v1120 = vpack.c.b16 %v744, %v740
    %v1121 = vpack.c.b16 %v745, %v741
    %v1122 = vpack.c.b16 %v750, %v746
    %v1123 = vpack.c.b16 %v751, %v747
    %v1124 = vpack.c.b16 %v752, %v748
    %v1125 = vpack.c.b16 %v753, %v749
    %v1126 = vpack.c.b16 %v758, %v754
    %v1127 = vpack.c.b16 %v759, %v755
    %v1128 = vpack.c.b16 %v760, %v756
    %v1129 = vpack.c.b16 %v761, %v757
    %v1130 = vpack.c.b16 %v766, %v762
    %v1131 = vpack.c.b16 %v767, %v763
    %v1132 = vpack.c.b16 %v768, %v764
    %v1133 = vpack.c.b16 %v769, %v765
    %v1134 = vpack.c.b16 %v774, %v770
    %v1135 = vpack.c.b16 %v775, %v771
    %v1136 = vpack.c.b16 %v776, %v772
    %v1137 = vpack.c.b16 %v777, %v773
    %v1138 = vpack.c.b16 %v782, %v778
    %v1139 = vpack.c.b16 %v783, %v779
    %v1140 = vpack.c.b16 %v784, %v780
    %v1141 = vpack.c.b16 %v785, %v781
    %v1142 = vpack.c.b16 %v790, %v786
    %v1143 = vpack.c.b16 %v791, %v787
    %v1144 = vpack.c.b16 %v792, %v788
    %v1145 = vpack.c.b16 %v793, %v789
    %v1146 = vpack.c.b16 %v798, %v794
    %v1147 = vpack.c.b16 %v799, %v795
    %v1148 = vpack.c.b16 %v800, %v796
    %v1149 = vpack.c.b16 %v801, %v797
    %v1150 = vpack.c.b16 %v806, %v802
    %v1151 = vpack.c.b16 %v807, %v803
    %v1152 = vpack.c.b16 %v808, %v804
    %v1153 = vpack.c.b16 %v809, %v805
    %v1154 = vpack.c.b16 %v814, %v810
    %v1155 = vpack.c.b16 %v815, %v811
    %v1156 = vpack.c.b16 %v816, %v812
    %v1157 = vpack.c.b16 %v817, %v813
    %v1158 = vpack.c.b16 %v822, %v818
    %v1159 = vpack.c.b16 %v823, %v819
    %v1160 = vpack.c.b16 %v824, %v820
    %v1161 = vpack.c.b16 %v825, %v821
    %v1162 = vpack.c.b16 %v830, %v826
    %v1163 = vpack.c.b16 %v831, %v827
    %v1164 = vpack.c.b16 %v832, %v828
    %v1165 = vpack.c.b16 %v833, %v829
    %v1166 = vpack.c.b16 %v838, %v834
    %v1167 = vpack.c.b16 %v839, %v835
    %v1168 = vpack.c.b16 %v840, %v836
    %v1169 = vpack.c.b16 %v841, %v837
    %v1170 = vpack.c.b16 %v846, %v842
    %v1171 = vpack.c.b16 %v847, %v843
    %v1172 = vpack.c.b16 %v848, %v844
    %v1173 = vpack.c.b16 %v849, %v845
    %v1174 = vpack.c.b16 %v854, %v850
    %v1175 = vpack.c.b16 %v855, %v851
    %v1176 = vpack.c.b16 %v856, %v852
    %v1177 = vpack.c.b16 %v857, %v853
    %v1178 = vpack.c.b16 %v862, %v858
    %v1179 = vpack.c.b16 %v863, %v859
    %v1180 = vpack.c.b16 %v864, %v860
    %v1181 = vpack.c.b16 %v865, %v861
    %v1182 = vpack.c.b16 %v870, %v866
    %v1183 = vpack.c.b16 %v871, %v867
    %v1184 = vpack.c.b16 %v872, %v868
    %v1185 = vpack.c.b16 %v873, %v869
    %v1186 = vpack.c.b16 %v878, %v874
    %v1187 = vpack.c.b16 %v879, %v875
    %v1188 = vpack.c.b16 %v880, %v876
    %v1189 = vpack.c.b16 %v881, %v877
    %v1190 = vpack.c.b16 %v886, %v882
    %v1191 = vpack.c.b16 %v887, %v883
    %v1192 = vpack.c.b16 %v888, %v884
    %v1193 = vpack.c.b16 %v889, %v885
    %v1194 = vpack.c.b16 %v894, %v890
    %v1195 = vpack.c.b16 %v895, %v891
    %v1196 = vpack.c.b16 %v896, %v892
    %v1197 = vpack.c.b16 %v897, %v893
    %v1198 = vpack.c.b16 %v902, %v898
    %v1199 = vpack.c.b16 %v903, %v899
    %v1200 = vpack.c.b16 %v904, %v900
    %v1201 = vpack.c.b16 %v905, %v901
    %v1202 = vpack.c.b16 %v910, %v906
    %v1203 = vpack.c.b16 %v911, %v907
    %v1204 = vpack.c.b16 %v912, %v908
    %v1205 = vpack.c.b16 %v913, %v909
    %v1206 = vpack.c.b16 %v918, %v914
    %v1207 = vpack.c.b16 %v919, %v915
    %v1208 = vpack.c.b16 %v920, %v916
    %v1209 = vpack.c.b16 %v921, %v917
    %v1210 = vpack.c.b16 %v926, %v922
    %v1211 = vpack.c.b16 %v927, %v923
    %v1212 = vpack.c.b16 %v928, %v924
    %v1213 = vpack.c.b16 %v929, %v925
    %v1214 = vpack.c.b16 %v934, %v930
    %v1215 = vpack.c.b16 %v935, %v931
    %v1216 = vpack.c.b16 %v936, %v932
    %v1217 = vpack.c.b16 %v937, %v933
    %v1218 = vpack.c.b16 %v942, %v938
    %v1219 = vpack.c.b16 %v943, %v939
    %v1220 = vpack.c.b16 %v944, %v940
    %v1221 = vpack.c.b16 %v945, %v941
    %v1222 = vpack.c.b16 %v950, %v946
    %v1223 = vpack.c.b16 %v951, %v947
    %v1224 = vpack.c.b16 %v952, %v948
    %v1225 = vpack.c.b16 %v953, %v949
    %v1226 = vpack.c.b16 %v958, %v954
    %v1227 = vpack.c.b16 %v959, %v955
    %v1228 = vpack.c.b16 %v960, %v956
    %v1229 = vpack.c.b16 %v961, %v957
    %v1230 = vpack.c.b16 %v966, %v962
    %v1231 = vpack.c.b16 %v967, %v963
    %v1232 = vpack.c.b16 %v968, %v964
    %v1233 = vpack.c.b16 %v969, %v965
    %v1234 = vpack.c.b16 %v974, %v970
    %v1235 = vpack.c.b16 %v975, %v971
    %v1236 = vpack.c.b16 %v976, %v972
    %v1237 = vpack.c.b16 %v977, %v973
    %v1238 = vpack.c.b16 %v982, %v978
    %v1239 = vpack.c.b16 %v983, %v979
    %v1240 = vpack.c.b16 %v984, %v980
    %v1241 = vpack.c.b16 %v985, %v981
    %v1242 = vpack.c.b16 %v990, %v986
    %v1243 = vpack.c.b16 %v991, %v987
    %v1244 = vpack.c.b16 %v992, %v988
    %v1245 = vpack.c.b16 %v993, %v989
    %v1246 = vpack.c.b16 %v998, %v994
    %v1247 = vpack.c.b16 %v999, %v995
    %v1248 = vpack.c.b16 %v1000, %v996
    %v1249 = vpack.c.b16 %v1001, %v997
    %v1250 = vpack.c.b16 %v1006, %v1002
    %v1251 = vpack.c.b16 %v1007, %v1003
    %v1252 = vpack.c.b16 %v1008, %v1004
    %v1253 = vpack.c.b16 %v1009, %v1005
    %v1254 = vpack.c.b16 %v1014, %v1010
    %v1255 = vpack.c.b16 %v1015, %v1011
    %v1256 = vpack.c.b16 %v1016, %v1012
    %v1257 = vpack.c.b16 %v1017, %v1013
    %v1258 = vpack.c.b16 %v1022, %v1018
    %v1259 = vpack.c.b16 %v1023, %v1019
    %v1260 = vpack.c.b16 %v1024, %v1020
    %v1261 = vpack.c.b16 %v1025, %v1021
    %v1262 = vpack.c.b16 %v1030, %v1026
    %v1263 = vpack.c.b16 %v1031, %v1027
    %v1264 = vpack.c.b16 %v1032, %v1028
    %v1265 = vpack.c.b16 %v1033, %v1029
    %v1266 = vpack.c.b16 %v1038, %v1034
    %v1267 = vpack.c.b16 %v1039, %v1035
    %v1268 = vpack.c.b16 %v1040, %v1036
    %v1269 = vpack.c.b16 %v1041, %v1037
    %v1270 = vpack.c.b16 %v1046, %v1042
    %v1271 = vpack.c.b16 %v1047, %v1043
    %v1272 = vpack.c.b16 %v1048, %v1044
    %v1273 = vpack.c.b16 %v1049, %v1045
    %v1274 = vpack.c.b16 %v1054, %v1050
    %v1275 = vpack.c.b16 %v1055, %v1051
    %v1276 = vpack.c.b16 %v1056, %v1052
    %v1277 = vpack.c.b16 %v1057, %v1053
    %v1278 = vpack.c.b16 %v1062, %v1058
    %v1279 = vpack.c.b16 %v1063, %v1059
    %v1280 = vpack.c.b16 %v1064, %v1060
    %v1281 = vpack.c.b16 %v1065, %v1061
    %v1282 = vpack.c.b16 %v1070, %v1066
    %v1283 = vpack.c.b16 %v1071, %v1067
    %v1284 = vpack.c.b16 %v1072, %v1068
    %v1285 = vpack.c.b16 %v1073, %v1069
    %v1286 = vpack.c.b16 %v1078, %v1074
    %v1287 = vpack.c.b16 %v1079, %v1075
    %v1288 = vpack.c.b16 %v1080, %v1076
    %v1289 = vpack.c.b16 %v1081, %v1077
    %v1290 = vpack.c.b16 %v1086, %v1082
    %v1291 = vpack.c.b16 %v1087, %v1083
    %v1292 = vpack.c.b16 %v1088, %v1084
    %v1293 = vpack.c.b16 %v1089, %v1085
    %v1294 = vpack.c.b16 %v1094, %v1090
    %v1295 = vpack.c.b16 %v1095, %v1091
    %v1296 = vpack.c.b16 %v1096, %v1092
    %v1297 = vpack.c.b16 %v1097, %v1093
    %v1298 = vpack.c.b16 %v1102, %v1098
    %v1299 = vpack.c.b16 %v1103, %v1099
    %v1300 = vpack.c.b16 %v1104, %v1100
    %v1301 = vpack.c.b16 %v1105, %v1101
    %vm1498 = vcmask 130048
    %v1500 = vsel %vm1498, %v299, 0
    %1502 = vmatprep.subr.bf16.mxu0 %v1135
    %1503 = vmatpush1.bf16.msra.mxu0 %v1134
    %1504 = vmatprep.subr.bf16.mxu0 %v1131
    %1505 = vmatpush1.bf16.msra.mxu0 %v1130
    %1506 = vmatprep.subr.bf16.mxu0 %v1127
    %1507 = vmatpush1.bf16.msra.mxu0 %v1126
    %1508 = vmatprep.subr.bf16.mxu0 %v1123
    %1509 = vmatpush1.bf16.msra.mxu0 %v1122
    %1510 = vmatprep.subr.bf16.mxu0 %v1119
    %1511 = vmatpush1.bf16.msra.mxu0 %v1118
    %1512 = vmatprep.subr.bf16.mxu0 %v1115
    %1513 = vmatpush1.bf16.msra.mxu0 %v1114
    %1514 = vmatprep.subr.bf16.mxu0 %v1111
    %1515 = vmatpush1.bf16.msra.mxu0 %v1110
    %1516 = vmatprep.subr.bf16.mxu0 %v1107
    %1517 = vmatpush1.bf16.msra.mxu0 %v1106
    %1518 = vmatprep.subr.bf16.mxu0 %v1167
    %1519 = vmatpush2.bf16.msra.mxu0 %v1166
    %1520 = vmatprep.subr.bf16.mxu0 %v1163
    %1521 = vmatpush2.bf16.msra.mxu0 %v1162
    %1522 = vmatprep.subr.bf16.mxu0 %v1159
    %1523 = vmatpush2.bf16.msra.mxu0 %v1158
    %1524 = vmatprep.subr.bf16.mxu0 %v1155
    %1525 = vmatpush2.bf16.msra.mxu0 %v1154
    %1526 = vmatprep.subr.bf16.mxu0 %v1151
    %1527 = vmatpush2.bf16.msra.mxu0 %v1150
    %1528 = vmatprep.subr.bf16.mxu0 %v1147
    %1529 = vmatpush2.bf16.msra.mxu0 %v1146
    %1530 = vmatprep.subr.bf16.mxu0 %v1143
    %1531 = vmatpush2.bf16.msra.mxu0 %v1142
    %1532 = vmatprep.subr.bf16.mxu0 %v1139
    %1533 = vmatpush2.bf16.msra.mxu0 %v1138
    %1534 = vmatprep.mubr.bf16.mxu0 %v294
    %1535 = vmatmul.mubr.bf16.gmra.mxu0 %v293
    %v1536 = vpop.f32.mrf.mxu0
    %v1537 = vadd.f32 %v501, %v1536
    %v1538 = vpop.f32.mrf.mxu0
    %v1539 = vadd.f32 %v505, %v1538
    %v1540 = vpop.f32.mrf.mxu0
    %v1541 = vpop.f32.mrf.mxu0
    %1542 = vdwg.mxu0
    %1543 = vmatprep.subr.bf16.mxu0 %v1199
    %1544 = vmatpush1.bf16.msra.mxu0 %v1198
    %1545 = vmatprep.subr.bf16.mxu0 %v1195
    %1546 = vmatpush1.bf16.msra.mxu0 %v1194
    %1547 = vmatprep.subr.bf16.mxu0 %v1191
    %1548 = vmatpush1.bf16.msra.mxu0 %v1190
    %1549 = vmatprep.subr.bf16.mxu0 %v1187
    %1550 = vmatpush1.bf16.msra.mxu0 %v1186
    %1551 = vmatprep.subr.bf16.mxu0 %v1183
    %1552 = vmatpush1.bf16.msra.mxu0 %v1182
    %1553 = vmatprep.subr.bf16.mxu0 %v1179
    %1554 = vmatpush1.bf16.msra.mxu0 %v1178
    %1555 = vmatprep.subr.bf16.mxu0 %v1175
    %1556 = vmatpush1.bf16.msra.mxu0 %v1174
    %1557 = vmatprep.subr.bf16.mxu0 %v1171
    %1558 = vmatpush1.bf16.msra.mxu0 %v1170
    %1559 = vmatprep.subr.bf16.mxu0 %v1231
    %1560 = vmatpush2.bf16.msra.mxu0 %v1230
    %1561 = vmatprep.subr.bf16.mxu0 %v1227
    %1562 = vmatpush2.bf16.msra.mxu0 %v1226
    %1563 = vmatprep.subr.bf16.mxu0 %v1223
    %1564 = vmatpush2.bf16.msra.mxu0 %v1222
    %1565 = vmatprep.subr.bf16.mxu0 %v1219
    %1566 = vmatpush2.bf16.msra.mxu0 %v1218
    %1567 = vmatprep.subr.bf16.mxu0 %v1215
    %1568 = vmatpush2.bf16.msra.mxu0 %v1214
    %1569 = vmatprep.subr.bf16.mxu0 %v1211
    %1570 = vmatpush2.bf16.msra.mxu0 %v1210
    %1571 = vmatprep.subr.bf16.mxu0 %v1207
    %1572 = vmatpush2.bf16.msra.mxu0 %v1206
    %1573 = vmatprep.subr.bf16.mxu0 %v1203
    %1574 = vmatpush2.bf16.msra.mxu0 %v1202
    %1575 = vmatprep.mubr.bf16.mxu0 %v296
    %1576 = vmatmul.mubr.bf16.gmra.mxu0 %v295
    %v1577 = vpop.f32.mrf.mxu0
    %v1578 = vadd.f32 %v1537, %v1577
    %v1579 = vpop.f32.mrf.mxu0
    %v1580 = vadd.f32 %v1539, %v1579
    %v1581 = vpop.f32.mrf.mxu0
    %v1582 = vpop.f32.mrf.mxu0
    %1583 = vdwg.mxu0
    %1584 = vmatprep.subr.bf16.mxu0 %v1263
    %1585 = vmatpush1.bf16.msra.mxu0 %v1262
    %1586 = vmatprep.subr.bf16.mxu0 %v1259
    %1587 = vmatpush1.bf16.msra.mxu0 %v1258
    %1588 = vmatprep.subr.bf16.mxu0 %v1255
    %1589 = vmatpush1.bf16.msra.mxu0 %v1254
    %1590 = vmatprep.subr.bf16.mxu0 %v1251
    %1591 = vmatpush1.bf16.msra.mxu0 %v1250
    %1592 = vmatprep.subr.bf16.mxu0 %v1247
    %1593 = vmatpush1.bf16.msra.mxu0 %v1246
    %1594 = vmatprep.subr.bf16.mxu0 %v1243
    %1595 = vmatpush1.bf16.msra.mxu0 %v1242
    %1596 = vmatprep.subr.bf16.mxu0 %v1239
    %1597 = vmatpush1.bf16.msra.mxu0 %v1238
    %1598 = vmatprep.subr.bf16.mxu0 %v1235
    %1599 = vmatpush1.bf16.msra.mxu0 %v1234
    %1600 = vmatprep.subr.bf16.mxu0 %v1295
    %1601 = vmatpush2.bf16.msra.mxu0 %v1294
    %1602 = vmatprep.subr.bf16.mxu0 %v1291
    %1603 = vmatpush2.bf16.msra.mxu0 %v1290
    %1604 = vmatprep.subr.bf16.mxu0 %v1287
    %1605 = vmatpush2.bf16.msra.mxu0 %v1286
    %1606 = vmatprep.subr.bf16.mxu0 %v1283
    %1607 = vmatpush2.bf16.msra.mxu0 %v1282
    %1608 = vmatprep.subr.bf16.mxu0 %v1279
    %1609 = vmatpush2.bf16.msra.mxu0 %v1278
    %1610 = vmatprep.subr.bf16.mxu0 %v1275
    %1611 = vmatpush2.bf16.msra.mxu0 %v1274
    %1612 = vmatprep.subr.bf16.mxu0 %v1271
    %1613 = vmatpush2.bf16.msra.mxu0 %v1270
    %1614 = vmatprep.subr.bf16.mxu0 %v1267
    %1615 = vmatpush2.bf16.msra.mxu0 %v1266
    %1616 = vmatprep.mubr.bf16.mxu0 %v298
    %1617 = vmatmul.mubr.bf16.gmra.mxu0 %v297
    %v1618 = vpop.f32.mrf.mxu0
    %v1619 = vadd.f32 %v1578, %v1618
    %v1620 = vpop.f32.mrf.mxu0
    %v1621 = vadd.f32 %v1580, %v1620
    %v1622 = vpop.f32.mrf.mxu0
    %v1623 = vpop.f32.mrf.mxu0
    %1624 = vdwg.mxu0
    %1625 = vmatprep.subr.bf16.mxu0 0
    %1626 = vmatpush1.bf16.msra.mxu0 0
    %1627 = vmatprep.subr.bf16.mxu0 0
    %1628 = vmatpush1.bf16.msra.mxu0 0
    %1629 = vmatprep.subr.bf16.mxu0 0
    %1630 = vmatpush1.bf16.msra.mxu0 0
    %1631 = vmatprep.subr.bf16.mxu0 0
    %1632 = vmatpush1.bf16.msra.mxu0 0
    %1633 = vmatprep.subr.bf16.mxu0 0
    %1634 = vmatpush1.bf16.msra.mxu0 0
    %1635 = vmatprep.subr.bf16.mxu0 0
    %1636 = vmatpush1.bf16.msra.mxu0 0
    %1637 = vmatprep.subr.bf16.mxu0 0
    %1638 = vmatpush1.bf16.msra.mxu0 0
    %1639 = vmatprep.subr.bf16.mxu0 %v1299
    %1640 = vmatpush1.bf16.msra.mxu0 %v1298
    %1641 = vmatprep.subr.bf16.mxu0 0
    %1642 = vmatpush2.bf16.msra.mxu0 0
    %1643 = vmatprep.subr.bf16.mxu0 0
    %1644 = vmatpush2.bf16.msra.mxu0 0
    %1645 = vmatprep.subr.bf16.mxu0 0
    %1646 = vmatpush2.bf16.msra.mxu0 0
    %1647 = vmatprep.subr.bf16.mxu0 0
    %1648 = vmatpush2.bf16.msra.mxu0 0
    %1649 = vmatprep.subr.bf16.mxu0 0
    %1650 = vmatpush2.bf16.msra.mxu0 0
    %1651 = vmatprep.subr.bf16.mxu0 0
    %1652 = vmatpush2.bf16.msra.mxu0 0
    %1653 = vmatprep.subr.bf16.mxu0 0
    %1654 = vmatpush2.bf16.msra.mxu0 0
    %1655 = vmatprep.subr.bf16.mxu0 0
    %1656 = vmatpush2.bf16.msra.mxu0 0
    %1657 = vmatprep.mubr.bf16.mxu0 0
    %1658 = vmatmul.mubr.bf16.gmra.mxu0 %v1500
    %v1659 = vpop.f32.mrf.mxu0
    %v1660 = vadd.f32 %v1619, %v1659
    %v1661 = vpop.f32.mrf.mxu0
    %v1662 = vadd.f32 %v1621, %v1661
    %v1663 = vpop.f32.mrf.mxu0
    %v1664 = vpop.f32.mrf.mxu0
    %1665 = vdwg.mxu0
    %1666 = vmatprep.subr.bf16.mxu0 %v1137
    %1667 = vmatpush1.bf16.msra.mxu0 %v1136
    %1668 = vmatprep.subr.bf16.mxu0 %v1133
    %1669 = vmatpush1.bf16.msra.mxu0 %v1132
    %1670 = vmatprep.subr.bf16.mxu0 %v1129
    %1671 = vmatpush1.bf16.msra.mxu0 %v1128
    %1672 = vmatprep.subr.bf16.mxu0 %v1125
    %1673 = vmatpush1.bf16.msra.mxu0 %v1124
    %1674 = vmatprep.subr.bf16.mxu0 %v1121
    %1675 = vmatpush1.bf16.msra.mxu0 %v1120
    %1676 = vmatprep.subr.bf16.mxu0 %v1117
    %1677 = vmatpush1.bf16.msra.mxu0 %v1116
    %1678 = vmatprep.subr.bf16.mxu0 %v1113
    %1679 = vmatpush1.bf16.msra.mxu0 %v1112
    %1680 = vmatprep.subr.bf16.mxu0 %v1109
    %1681 = vmatpush1.bf16.msra.mxu0 %v1108
    %1682 = vmatprep.subr.bf16.mxu0 %v1169
    %1683 = vmatpush2.bf16.msra.mxu0 %v1168
    %1684 = vmatprep.subr.bf16.mxu0 %v1165
    %1685 = vmatpush2.bf16.msra.mxu0 %v1164
    %1686 = vmatprep.subr.bf16.mxu0 %v1161
    %1687 = vmatpush2.bf16.msra.mxu0 %v1160
    %1688 = vmatprep.subr.bf16.mxu0 %v1157
    %1689 = vmatpush2.bf16.msra.mxu0 %v1156
    %1690 = vmatprep.subr.bf16.mxu0 %v1153
    %1691 = vmatpush2.bf16.msra.mxu0 %v1152
    %1692 = vmatprep.subr.bf16.mxu0 %v1149
    %1693 = vmatpush2.bf16.msra.mxu0 %v1148
    %1694 = vmatprep.subr.bf16.mxu0 %v1145
    %1695 = vmatpush2.bf16.msra.mxu0 %v1144
    %1696 = vmatprep.subr.bf16.mxu0 %v1141
    %1697 = vmatpush2.bf16.msra.mxu0 %v1140
    %1698 = vmatprep.mubr.bf16.mxu0 %v294
    %1699 = vmatmul.mubr.bf16.gmra.mxu0 %v293
    %v1700 = vpop.f32.mrf.mxu0
    %v1701 = vadd.f32 %v509, %v1700
    %v1702 = vpop.f32.mrf.mxu0
    %v1703 = vadd.f32 %v513, %v1702
    %v1704 = vpop.f32.mrf.mxu0
    %v1705 = vpop.f32.mrf.mxu0
    %1706 = vdwg.mxu0
    %1707 = vmatprep.subr.bf16.mxu0 %v1201
    %1708 = vmatpush1.bf16.msra.mxu0 %v1200
    %1709 = vmatprep.subr.bf16.mxu0 %v1197
    %1710 = vmatpush1.bf16.msra.mxu0 %v1196
    %1711 = vmatprep.subr.bf16.mxu0 %v1193
    %1712 = vmatpush1.bf16.msra.mxu0 %v1192
    %1713 = vmatprep.subr.bf16.mxu0 %v1189
    %1714 = vmatpush1.bf16.msra.mxu0 %v1188
    %1715 = vmatprep.subr.bf16.mxu0 %v1185
    %1716 = vmatpush1.bf16.msra.mxu0 %v1184
    %1717 = vmatprep.subr.bf16.mxu0 %v1181
    %1718 = vmatpush1.bf16.msra.mxu0 %v1180
    %1719 = vmatprep.subr.bf16.mxu0 %v1177
    %1720 = vmatpush1.bf16.msra.mxu0 %v1176
    %1721 = vmatprep.subr.bf16.mxu0 %v1173
    %1722 = vmatpush1.bf16.msra.mxu0 %v1172
    %1723 = vmatprep.subr.bf16.mxu0 %v1233
    %1724 = vmatpush2.bf16.msra.mxu0 %v1232
    %1725 = vmatprep.subr.bf16.mxu0 %v1229
    %1726 = vmatpush2.bf16.msra.mxu0 %v1228
    %1727 = vmatprep.subr.bf16.mxu0 %v1225
    %1728 = vmatpush2.bf16.msra.mxu0 %v1224
    %1729 = vmatprep.subr.bf16.mxu0 %v1221
    %1730 = vmatpush2.bf16.msra.mxu0 %v1220
    %1731 = vmatprep.subr.bf16.mxu0 %v1217
    %1732 = vmatpush2.bf16.msra.mxu0 %v1216
    %1733 = vmatprep.subr.bf16.mxu0 %v1213
    %1734 = vmatpush2.bf16.msra.mxu0 %v1212
    %1735 = vmatprep.subr.bf16.mxu0 %v1209
    %1736 = vmatpush2.bf16.msra.mxu0 %v1208
    %1737 = vmatprep.subr.bf16.mxu0 %v1205
    %1738 = vmatpush2.bf16.msra.mxu0 %v1204
    %1739 = vmatprep.mubr.bf16.mxu0 %v296
    %1740 = vmatmul.mubr.bf16.gmra.mxu0 %v295
    %v1741 = vpop.f32.mrf.mxu0
    %v1742 = vadd.f32 %v1701, %v1741
    %v1743 = vpop.f32.mrf.mxu0
    %v1744 = vadd.f32 %v1703, %v1743
    %v1745 = vpop.f32.mrf.mxu0
    %v1746 = vpop.f32.mrf.mxu0
    %1747 = vdwg.mxu0
    %1748 = vmatprep.subr.bf16.mxu0 %v1265
    %1749 = vmatpush1.bf16.msra.mxu0 %v1264
    %1750 = vmatprep.subr.bf16.mxu0 %v1261
    %1751 = vmatpush1.bf16.msra.mxu0 %v1260
    %1752 = vmatprep.subr.bf16.mxu0 %v1257
    %1753 = vmatpush1.bf16.msra.mxu0 %v1256
    %1754 = vmatprep.subr.bf16.mxu0 %v1253
    %1755 = vmatpush1.bf16.msra.mxu0 %v1252
    %1756 = vmatprep.subr.bf16.mxu0 %v1249
    %1757 = vmatpush1.bf16.msra.mxu0 %v1248
    %1758 = vmatprep.subr.bf16.mxu0 %v1245
    %1759 = vmatpush1.bf16.msra.mxu0 %v1244
    %1760 = vmatprep.subr.bf16.mxu0 %v1241
    %1761 = vmatpush1.bf16.msra.mxu0 %v1240
    %1762 = vmatprep.subr.bf16.mxu0 %v1237
    %1763 = vmatpush1.bf16.msra.mxu0 %v1236
    %1764 = vmatprep.subr.bf16.mxu0 %v1297
    %1765 = vmatpush2.bf16.msra.mxu0 %v1296
    %1766 = vmatprep.subr.bf16.mxu0 %v1293
    %1767 = vmatpush2.bf16.msra.mxu0 %v1292
    %1768 = vmatprep.subr.bf16.mxu0 %v1289
    %1769 = vmatpush2.bf16.msra.mxu0 %v1288
    %1770 = vmatprep.subr.bf16.mxu0 %v1285
    %1771 = vmatpush2.bf16.msra.mxu0 %v1284
    %1772 = vmatprep.subr.bf16.mxu0 %v1281
    %1773 = vmatpush2.bf16.msra.mxu0 %v1280
    %1774 = vmatprep.subr.bf16.mxu0 %v1277
    %1775 = vmatpush2.bf16.msra.mxu0 %v1276
    %1776 = vmatprep.subr.bf16.mxu0 %v1273
    %1777 = vmatpush2.bf16.msra.mxu0 %v1272
    %1778 = vmatprep.subr.bf16.mxu0 %v1269
    %1779 = vmatpush2.bf16.msra.mxu0 %v1268
    %1780 = vmatprep.mubr.bf16.mxu0 %v298
    %1781 = vmatmul.mubr.bf16.gmra.mxu0 %v297
    %v1782 = vpop.f32.mrf.mxu0
    %v1783 = vadd.f32 %v1742, %v1782
    %v1784 = vpop.f32.mrf.mxu0
    %v1785 = vadd.f32 %v1744, %v1784
    %v1786 = vpop.f32.mrf.mxu0
    %v1787 = vpop.f32.mrf.mxu0
    %1788 = vdwg.mxu0
    %1789 = vmatprep.subr.bf16.mxu0 0
    %1790 = vmatpush1.bf16.msra.mxu0 0
    %1791 = vmatprep.subr.bf16.mxu0 0
    %1792 = vmatpush1.bf16.msra.mxu0 0
    %1793 = vmatprep.subr.bf16.mxu0 0
    %1794 = vmatpush1.bf16.msra.mxu0 0
    %1795 = vmatprep.subr.bf16.mxu0 0
    %1796 = vmatpush1.bf16.msra.mxu0 0
    %1797 = vmatprep.subr.bf16.mxu0 0
    %1798 = vmatpush1.bf16.msra.mxu0 0
    %1799 = vmatprep.subr.bf16.mxu0 0
    %1800 = vmatpush1.bf16.msra.mxu0 0
    %1801 = vmatprep.subr.bf16.mxu0 0
    %1802 = vmatpush1.bf16.msra.mxu0 0
    %1803 = vmatprep.subr.bf16.mxu0 %v1301
    %1804 = vmatpush1.bf16.msra.mxu0 %v1300
    %1805 = vmatprep.subr.bf16.mxu0 0
    %1806 = vmatpush2.bf16.msra.mxu0 0
    %1807 = vmatprep.subr.bf16.mxu0 0
    %1808 = vmatpush2.bf16.msra.mxu0 0
    %1809 = vmatprep.subr.bf16.mxu0 0
    %1810 = vmatpush2.bf16.msra.mxu0 0
    %1811 = vmatprep.subr.bf16.mxu0 0
    %1812 = vmatpush2.bf16.msra.mxu0 0
    %1813 = vmatprep.subr.bf16.mxu0 0
    %1814 = vmatpush2.bf16.msra.mxu0 0
    %1815 = vmatprep.subr.bf16.mxu0 0
    %1816 = vmatpush2.bf16.msra.mxu0 0
    %1817 = vmatprep.subr.bf16.mxu0 0
    %1818 = vmatpush2.bf16.msra.mxu0 0
    %1819 = vmatprep.subr.bf16.mxu0 0
    %1820 = vmatpush2.bf16.msra.mxu0 0
    %1821 = vmatprep.mubr.bf16.mxu0 0
    %1822 = vmatmul.mubr.bf16.gmra.mxu0 %v1500
    %v1823 = vpop.f32.mrf.mxu0
    %v1824 = vadd.f32 %v1783, %v1823
    %v1825 = vpop.f32.mrf.mxu0
    %v1826 = vadd.f32 %v1785, %v1825
    %v1827 = vpop.f32.mrf.mxu0
    %v1828 = vpop.f32.mrf.mxu0
    %1829 = vdwg.mxu0
    %v1830 = vmax.f32 %v1660, 0.0
    %v1831 = vmax.f32 %v1662, 0.0
    %v1832 = vmax.f32 %v1824, 0.0
    %v1833 = vmax.f32 %v1826, 0.0
    %v1834 = vpack.c.bf16 %v1830, %v1830
    %v1835 = vpack.c.bf16 %v1831, %v1831
    %v1836 = vpack.c.bf16 %v1832, %v1832
    %v1837 = vpack.c.bf16 %v1833, %v1833
    %v1838 = vld [vmem:[#allocation8] sm:$0xff]
    %v1839 = vld [vmem:[#allocation8 + $0x8] sm:$0xff]
    %v1840 = vld [vmem:[#allocation8 + $0x10] sm:$0xff]
    %v1841 = vld [vmem:[#allocation8 + $0x18] sm:$0xff]
    %v1842 = vld [vmem:[#allocation8 + $0x20] sm:$0xff]
    %v1843 = vld [vmem:[#allocation8 + $0x28] sm:$0xff]
    %v1844 = vld [vmem:[#allocation8 + $0x30] sm:$0xff]
    %v1845 = vld [vmem:[#allocation8 + $0x38] sm:$0xff]
    %v1846 = vld [vmem:[#allocation8 + $0x40] sm:$0xff]
    %v1847 = vld [vmem:[#allocation8 + $0x48] sm:$0xff]
    %v1848 = vld [vmem:[#allocation8 + $0x50] sm:$0xff]
    %v1849 = vld [vmem:[#allocation8 + $0x58] sm:$0xff]
    %v1850 = vld [vmem:[#allocation8 + $0x60] sm:$0xff]
    %v1851 = vld [vmem:[#allocation8 + $0x68] sm:$0xff]
    %v1852 = vld [vmem:[#allocation8 + $0x70] sm:$0xff]
    %v1853 = vld [vmem:[#allocation8 + $0x78] sm:$0xff]
    %v1854 = vld [vmem:[#allocation8 + $0x80] sm:$0xff]
    %v1855 = vld [vmem:[#allocation8 + $0x88] sm:$0xff]
    %v1856 = vld [vmem:[#allocation8 + $0x90] sm:$0xff]
    %v1857 = vld [vmem:[#allocation8 + $0x98] sm:$0xff]
    %v1858 = vld [vmem:[#allocation8 + $0xa0] sm:$0xff]
    %v1859 = vld [vmem:[#allocation8 + $0xa8] sm:$0xff]
    %v1860 = vld [vmem:[#allocation8 + $0xb0] sm:$0xff]
    %v1861 = vld [vmem:[#allocation8 + $0xb8] sm:$0xff]
    %v1862 = vld [vmem:[#allocation8 + $0xc0] sm:$0xff]
    %v1863 = vld [vmem:[#allocation8 + $0xc8] sm:$0xff]
    %v1864 = vld [vmem:[#allocation8 + $0xd0] sm:$0xff]
    %v1865 = vld [vmem:[#allocation8 + $0xd8] sm:$0xff]
    %v1866 = vld [vmem:[#allocation8 + $0xe0] sm:$0xff]
    %v1867 = vld [vmem:[#allocation8 + $0xe8] sm:$0xff]
    %v1868 = vld [vmem:[#allocation8 + $0xf0] sm:$0xff]
    %v1869 = vld [vmem:[#allocation8 + $0xf8] sm:$0xff]
    %v1870 = vld [vmem:[#allocation8 + $0x100] sm:$0xff]
    %v1871 = vld [vmem:[#allocation8 + $0x108] sm:$0xff]
    %v1872 = vld [vmem:[#allocation8 + $0x110] sm:$0xff]
    %v1873 = vld [vmem:[#allocation8 + $0x118] sm:$0xff]
    %v1874 = vld [vmem:[#allocation8 + $0x120] sm:$0xff]
    %v1875 = vld [vmem:[#allocation8 + $0x128] sm:$0xff]
    %v1876 = vld [vmem:[#allocation8 + $0x130] sm:$0xff]
    %v1877 = vld [vmem:[#allocation8 + $0x138] sm:$0xff]
    %v1878 = vld [vmem:[#allocation8 + $0x140] sm:$0xff]
    %v1879 = vld [vmem:[#allocation8 + $0x148] sm:$0xff]
    %v1880 = vld [vmem:[#allocation8 + $0x150] sm:$0xff]
    %v1881 = vld [vmem:[#allocation8 + $0x158] sm:$0xff]
    %v1882 = vld [vmem:[#allocation8 + $0x160] sm:$0xff]
    %v1883 = vld [vmem:[#allocation8 + $0x168] sm:$0xff]
    %v1884 = vld [vmem:[#allocation8 + $0x170] sm:$0xff]
    %v1885 = vld [vmem:[#allocation8 + $0x178] sm:$0xff]
    %v1886 = vld [vmem:[#allocation8 + $0x180] sm:$0xff]
    %v1887 = vld [vmem:[#allocation8 + $0x188] sm:$0xff]
    %v1888 = vld [vmem:[#allocation8 + $0x190] sm:$0xff]
    %v1889 = vld [vmem:[#allocation8 + $0x198] sm:$0xff]
    %v1890 = vld [vmem:[#allocation8 + $0x1a0] sm:$0xff]
    %v1891 = vld [vmem:[#allocation8 + $0x1a8] sm:$0xff]
    %v1892 = vld [vmem:[#allocation8 + $0x1b0] sm:$0xff]
    %v1893 = vld [vmem:[#allocation8 + $0x1b8] sm:$0xff]
    %v1894 = vld [vmem:[#allocation8 + $0x1c0] sm:$0xff]
    %v1895 = vld [vmem:[#allocation8 + $0x1c8] sm:$0xff]
    %v1896 = vld [vmem:[#allocation8 + $0x1d0] sm:$0xff]
    %v1897 = vld [vmem:[#allocation8 + $0x1d8] sm:$0xff]
    %v1898 = vld [vmem:[#allocation8 + $0x1e0] sm:$0xff]
    %v1899 = vld [vmem:[#allocation8 + $0x1e8] sm:$0xff]
    %v1900 = vld [vmem:[#allocation8 + $0x1f0] sm:$0xff]
    %v1901 = vld [vmem:[#allocation8 + $0x1f8] sm:$0xff]
    %v1902 = vld [vmem:[#allocation10] sm:$0x3]
    %v1904 = vlaneseq
    %v1905 = vshrl.u32 %v1904, 7
    %v1906 = vsub.s32 0, %v1905
    %v1907 = vrot.slane %v1902, %v1906
    %v1908 = vlaneseq
    %v1909 = vshrl.u32 %v1908, 7
    %v1910 = vsub.s32 1, %v1909
    %v1911 = vrot.slane %v1902, %v1910
    %v1978 = vunpack.c.l.b16 %v1838
    %v1979 = vunpack.c.h.b16 %v1838
    %v1980 = vunpack.c.l.b16 %v1839
    %v1981 = vunpack.c.h.b16 %v1839
    %v1982 = vunpack.c.l.b16 %v1840
    %v1983 = vunpack.c.h.b16 %v1840
    %v1984 = vunpack.c.l.b16 %v1841
    %v1985 = vunpack.c.h.b16 %v1841
    %v1986 = vunpack.c.l.b16 %v1842
    %v1987 = vunpack.c.h.b16 %v1842
    %v1988 = vunpack.c.l.b16 %v1843
    %v1989 = vunpack.c.h.b16 %v1843
    %v1990 = vunpack.c.l.b16 %v1844
    %v1991 = vunpack.c.h.b16 %v1844
    %v1992 = vunpack.c.l.b16 %v1845
    %v1993 = vunpack.c.h.b16 %v1845
    %v1994 = vunpack.c.l.b16 %v1846
    %v1995 = vunpack.c.h.b16 %v1846
    %v1996 = vunpack.c.l.b16 %v1847
    %v1997 = vunpack.c.h.b16 %v1847
    %v1998 = vunpack.c.l.b16 %v1848
    %v1999 = vunpack.c.h.b16 %v1848
    %v2000 = vunpack.c.l.b16 %v1849
    %v2001 = vunpack.c.h.b16 %v1849
    %v2002 = vunpack.c.l.b16 %v1850
    %v2003 = vunpack.c.h.b16 %v1850
    %v2004 = vunpack.c.l.b16 %v1851
    %v2005 = vunpack.c.h.b16 %v1851
    %v2006 = vunpack.c.l.b16 %v1852
    %v2007 = vunpack.c.h.b16 %v1852
    %v2008 = vunpack.c.l.b16 %v1853
    %v2009 = vunpack.c.h.b16 %v1853
    %v2010 = vunpack.c.l.b16 %v1854
    %v2011 = vunpack.c.h.b16 %v1854
    %v2012 = vunpack.c.l.b16 %v1855
    %v2013 = vunpack.c.h.b16 %v1855
    %v2014 = vunpack.c.l.b16 %v1856
    %v2015 = vunpack.c.h.b16 %v1856
    %v2016 = vunpack.c.l.b16 %v1857
    %v2017 = vunpack.c.h.b16 %v1857
    %v2018 = vunpack.c.l.b16 %v1858
    %v2019 = vunpack.c.h.b16 %v1858
    %v2020 = vunpack.c.l.b16 %v1859
    %v2021 = vunpack.c.h.b16 %v1859
    %v2022 = vunpack.c.l.b16 %v1860
    %v2023 = vunpack.c.h.b16 %v1860
    %v2024 = vunpack.c.l.b16 %v1861
    %v2025 = vunpack.c.h.b16 %v1861
    %v2026 = vunpack.c.l.b16 %v1862
    %v2027 = vunpack.c.h.b16 %v1862
    %v2028 = vunpack.c.l.b16 %v1863
    %v2029 = vunpack.c.h.b16 %v1863
    %v2030 = vunpack.c.l.b16 %v1864
    %v2031 = vunpack.c.h.b16 %v1864
    %v2032 = vunpack.c.l.b16 %v1865
    %v2033 = vunpack.c.h.b16 %v1865
    %v2034 = vunpack.c.l.b16 %v1866
    %v2035 = vunpack.c.h.b16 %v1866
    %v2036 = vunpack.c.l.b16 %v1867
    %v2037 = vunpack.c.h.b16 %v1867
    %v2038 = vunpack.c.l.b16 %v1868
    %v2039 = vunpack.c.h.b16 %v1868
    %v2040 = vunpack.c.l.b16 %v1869
    %v2041 = vunpack.c.h.b16 %v1869
    %v2042 = vunpack.c.l.b16 %v1870
    %v2043 = vunpack.c.h.b16 %v1870
    %v2044 = vunpack.c.l.b16 %v1871
    %v2045 = vunpack.c.h.b16 %v1871
    %v2046 = vunpack.c.l.b16 %v1872
    %v2047 = vunpack.c.h.b16 %v1872
    %v2048 = vunpack.c.l.b16 %v1873
    %v2049 = vunpack.c.h.b16 %v1873
    %v2050 = vunpack.c.l.b16 %v1874
    %v2051 = vunpack.c.h.b16 %v1874
    %v2052 = vunpack.c.l.b16 %v1875
    %v2053 = vunpack.c.h.b16 %v1875
    %v2054 = vunpack.c.l.b16 %v1876
    %v2055 = vunpack.c.h.b16 %v1876
    %v2056 = vunpack.c.l.b16 %v1877
    %v2057 = vunpack.c.h.b16 %v1877
    %v2058 = vunpack.c.l.b16 %v1878
    %v2059 = vunpack.c.h.b16 %v1878
    %v2060 = vunpack.c.l.b16 %v1879
    %v2061 = vunpack.c.h.b16 %v1879
    %v2062 = vunpack.c.l.b16 %v1880
    %v2063 = vunpack.c.h.b16 %v1880
    %v2064 = vunpack.c.l.b16 %v1881
    %v2065 = vunpack.c.h.b16 %v1881
    %v2066 = vunpack.c.l.b16 %v1882
    %v2067 = vunpack.c.h.b16 %v1882
    %v2068 = vunpack.c.l.b16 %v1883
    %v2069 = vunpack.c.h.b16 %v1883
    %v2070 = vunpack.c.l.b16 %v1884
    %v2071 = vunpack.c.h.b16 %v1884
    %v2072 = vunpack.c.l.b16 %v1885
    %v2073 = vunpack.c.h.b16 %v1885
    %v2074 = vunpack.c.l.b16 %v1886
    %v2075 = vunpack.c.h.b16 %v1886
    %v2076 = vunpack.c.l.b16 %v1887
    %v2077 = vunpack.c.h.b16 %v1887
    %v2078 = vunpack.c.l.b16 %v1888
    %v2079 = vunpack.c.h.b16 %v1888
    %v2080 = vunpack.c.l.b16 %v1889
    %v2081 = vunpack.c.h.b16 %v1889
    %v2082 = vunpack.c.l.b16 %v1890
    %v2083 = vunpack.c.h.b16 %v1890
    %v2084 = vunpack.c.l.b16 %v1891
    %v2085 = vunpack.c.h.b16 %v1891
    %v2086 = vunpack.c.l.b16 %v1892
    %v2087 = vunpack.c.h.b16 %v1892
    %v2088 = vunpack.c.l.b16 %v1893
    %v2089 = vunpack.c.h.b16 %v1893
    %v2090 = vunpack.c.l.b16 %v1894
    %v2091 = vunpack.c.h.b16 %v1894
    %v2092 = vunpack.c.l.b16 %v1895
    %v2093 = vunpack.c.h.b16 %v1895
    %v2094 = vunpack.c.l.b16 %v1896
    %v2095 = vunpack.c.h.b16 %v1896
    %v2096 = vunpack.c.l.b16 %v1897
    %v2097 = vunpack.c.h.b16 %v1897
    %v2098 = vunpack.c.l.b16 %v1898
    %v2099 = vunpack.c.h.b16 %v1898
    %v2100 = vunpack.c.l.b16 %v1899
    %v2101 = vunpack.c.h.b16 %v1899
    %v2102 = vunpack.c.l.b16 %v1900
    %v2103 = vunpack.c.h.b16 %v1900
    %v2104 = vunpack.c.l.b16 %v1901
    %v2105 = vunpack.c.h.b16 %v1901
    %v2106 = vpack.c.b16 %v1980, %v1978
    %v2107 = vpack.c.b16 %v1981, %v1979
    %v2108 = vpack.c.b16 %v1984, %v1982
    %v2109 = vpack.c.b16 %v1985, %v1983
    %v2110 = vpack.c.b16 %v1988, %v1986
    %v2111 = vpack.c.b16 %v1989, %v1987
    %v2112 = vpack.c.b16 %v1992, %v1990
    %v2113 = vpack.c.b16 %v1993, %v1991
    %v2114 = vpack.c.b16 %v1996, %v1994
    %v2115 = vpack.c.b16 %v1997, %v1995
    %v2116 = vpack.c.b16 %v2000, %v1998
    %v2117 = vpack.c.b16 %v2001, %v1999
    %v2118 = vpack.c.b16 %v2004, %v2002
    %v2119 = vpack.c.b16 %v2005, %v2003
    %v2120 = vpack.c.b16 %v2008, %v2006
    %v2121 = vpack.c.b16 %v2009, %v2007
    %v2122 = vpack.c.b16 %v2012, %v2010
    %v2123 = vpack.c.b16 %v2013, %v2011
    %v2124 = vpack.c.b16 %v2016, %v2014
    %v2125 = vpack.c.b16 %v2017, %v2015
    %v2126 = vpack.c.b16 %v2020, %v2018
    %v2127 = vpack.c.b16 %v2021, %v2019
    %v2128 = vpack.c.b16 %v2024, %v2022
    %v2129 = vpack.c.b16 %v2025, %v2023
    %v2130 = vpack.c.b16 %v2028, %v2026
    %v2131 = vpack.c.b16 %v2029, %v2027
    %v2132 = vpack.c.b16 %v2032, %v2030
    %v2133 = vpack.c.b16 %v2033, %v2031
    %v2134 = vpack.c.b16 %v2036, %v2034
    %v2135 = vpack.c.b16 %v2037, %v2035
    %v2136 = vpack.c.b16 %v2040, %v2038
    %v2137 = vpack.c.b16 %v2041, %v2039
    %v2138 = vpack.c.b16 %v2044, %v2042
    %v2139 = vpack.c.b16 %v2045, %v2043
    %v2140 = vpack.c.b16 %v2048, %v2046
    %v2141 = vpack.c.b16 %v2049, %v2047
    %v2142 = vpack.c.b16 %v2052, %v2050
    %v2143 = vpack.c.b16 %v2053, %v2051
    %v2144 = vpack.c.b16 %v2056, %v2054
    %v2145 = vpack.c.b16 %v2057, %v2055
    %v2146 = vpack.c.b16 %v2060, %v2058
    %v2147 = vpack.c.b16 %v2061, %v2059
    %v2148 = vpack.c.b16 %v2064, %v2062
    %v2149 = vpack.c.b16 %v2065, %v2063
    %v2150 = vpack.c.b16 %v2068, %v2066
    %v2151 = vpack.c.b16 %v2069, %v2067
    %v2152 = vpack.c.b16 %v2072, %v2070
    %v2153 = vpack.c.b16 %v2073, %v2071
    %v2154 = vpack.c.b16 %v2076, %v2074
    %v2155 = vpack.c.b16 %v2077, %v2075
    %v2156 = vpack.c.b16 %v2080, %v2078
    %v2157 = vpack.c.b16 %v2081, %v2079
    %v2158 = vpack.c.b16 %v2084, %v2082
    %v2159 = vpack.c.b16 %v2085, %v2083
    %v2160 = vpack.c.b16 %v2088, %v2086
    %v2161 = vpack.c.b16 %v2089, %v2087
    %v2162 = vpack.c.b16 %v2092, %v2090
    %v2163 = vpack.c.b16 %v2093, %v2091
    %v2164 = vpack.c.b16 %v2096, %v2094
    %v2165 = vpack.c.b16 %v2097, %v2095
    %v2166 = vpack.c.b16 %v2100, %v2098
    %v2167 = vpack.c.b16 %v2101, %v2099
    %v2168 = vpack.c.b16 %v2104, %v2102
    %v2169 = vpack.c.b16 %v2105, %v2103
    %2234 = vmatprep.subr.bf16.mxu0 %v2121
    %2235 = vmatpush1.bf16.msra.mxu0 %v2120
    %2236 = vmatprep.subr.bf16.mxu0 %v2119
    %2237 = vmatpush1.bf16.msra.mxu0 %v2118
    %2238 = vmatprep.subr.bf16.mxu0 %v2117
    %2239 = vmatpush1.bf16.msra.mxu0 %v2116
    %2240 = vmatprep.subr.bf16.mxu0 %v2115
    %2241 = vmatpush1.bf16.msra.mxu0 %v2114
    %2242 = vmatprep.subr.bf16.mxu0 %v2113
    %2243 = vmatpush1.bf16.msra.mxu0 %v2112
    %2244 = vmatprep.subr.bf16.mxu0 %v2111
    %2245 = vmatpush1.bf16.msra.mxu0 %v2110
    %2246 = vmatprep.subr.bf16.mxu0 %v2109
    %2247 = vmatpush1.bf16.msra.mxu0 %v2108
    %2248 = vmatprep.subr.bf16.mxu0 %v2107
    %2249 = vmatpush1.bf16.msra.mxu0 %v2106
    %2250 = vmatprep.subr.bf16.mxu0 %v2137
    %2251 = vmatpush2.bf16.msra.mxu0 %v2136
    %2252 = vmatprep.subr.bf16.mxu0 %v2135
    %2253 = vmatpush2.bf16.msra.mxu0 %v2134
    %2254 = vmatprep.subr.bf16.mxu0 %v2133
    %2255 = vmatpush2.bf16.msra.mxu0 %v2132
    %2256 = vmatprep.subr.bf16.mxu0 %v2131
    %2257 = vmatpush2.bf16.msra.mxu0 %v2130
    %2258 = vmatprep.subr.bf16.mxu0 %v2129
    %2259 = vmatpush2.bf16.msra.mxu0 %v2128
    %2260 = vmatprep.subr.bf16.mxu0 %v2127
    %2261 = vmatpush2.bf16.msra.mxu0 %v2126
    %2262 = vmatprep.subr.bf16.mxu0 %v2125
    %2263 = vmatpush2.bf16.msra.mxu0 %v2124
    %2264 = vmatprep.subr.bf16.mxu0 %v2123
    %2265 = vmatpush2.bf16.msra.mxu0 %v2122
    %2266 = vmatprep.mubr.bf16.mxu0 %v1835
    %2267 = vmatmul.mubr.bf16.gmra.mxu0 %v1834
    %v2268 = vpop.f32.mrf.mxu0
    %v2269 = vadd.f32 %v1907, %v2268
    %v2270 = vpop.f32.mrf.mxu0
    %v2271 = vadd.f32 %v1911, %v2270
    %v2272 = vpop.f32.mrf.mxu0
    %v2273 = vpop.f32.mrf.mxu0
    %2274 = vdwg.mxu0
    %2275 = vmatprep.subr.bf16.mxu0 %v2153
    %2276 = vmatpush1.bf16.msra.mxu0 %v2152
    %2277 = vmatprep.subr.bf16.mxu0 %v2151
    %2278 = vmatpush1.bf16.msra.mxu0 %v2150
    %2279 = vmatprep.subr.bf16.mxu0 %v2149
    %2280 = vmatpush1.bf16.msra.mxu0 %v2148
    %2281 = vmatprep.subr.bf16.mxu0 %v2147
    %2282 = vmatpush1.bf16.msra.mxu0 %v2146
    %2283 = vmatprep.subr.bf16.mxu0 %v2145
    %2284 = vmatpush1.bf16.msra.mxu0 %v2144
    %2285 = vmatprep.subr.bf16.mxu0 %v2143
    %2286 = vmatpush1.bf16.msra.mxu0 %v2142
    %2287 = vmatprep.subr.bf16.mxu0 %v2141
    %2288 = vmatpush1.bf16.msra.mxu0 %v2140
    %2289 = vmatprep.subr.bf16.mxu0 %v2139
    %2290 = vmatpush1.bf16.msra.mxu0 %v2138
    %2291 = vmatprep.subr.bf16.mxu0 %v2169
    %2292 = vmatpush2.bf16.msra.mxu0 %v2168
    %2293 = vmatprep.subr.bf16.mxu0 %v2167
    %2294 = vmatpush2.bf16.msra.mxu0 %v2166
    %2295 = vmatprep.subr.bf16.mxu0 %v2165
    %2296 = vmatpush2.bf16.msra.mxu0 %v2164
    %2297 = vmatprep.subr.bf16.mxu0 %v2163
    %2298 = vmatpush2.bf16.msra.mxu0 %v2162
    %2299 = vmatprep.subr.bf16.mxu0 %v2161
    %2300 = vmatpush2.bf16.msra.mxu0 %v2160
    %2301 = vmatprep.subr.bf16.mxu0 %v2159
    %2302 = vmatpush2.bf16.msra.mxu0 %v2158
    %2303 = vmatprep.subr.bf16.mxu0 %v2157
    %2304 = vmatpush2.bf16.msra.mxu0 %v2156
    %2305 = vmatprep.subr.bf16.mxu0 %v2155
    %2306 = vmatpush2.bf16.msra.mxu0 %v2154
    %2307 = vmatprep.mubr.bf16.mxu0 %v1837
    %2308 = vmatmul.mubr.bf16.gmra.mxu0 %v1836
    %v2309 = vpop.f32.mrf.mxu0
    %v2310 = vadd.f32 %v2269, %v2309
    %v2311 = vpop.f32.mrf.mxu0
    %v2312 = vadd.f32 %v2271, %v2311
    %v2313 = vpop.f32.mrf.mxu0
    %v2314 = vpop.f32.mrf.mxu0
    %2315 = vdwg.mxu0
    %v2316 = vmax.f32 %v2310, 0.0
    %v2317 = vmax.f32 %v2312, 0.0
    %v2318 = vpack.c.bf16 %v2316, %v2316
    %v2319 = vpack.c.bf16 %v2317, %v2317
    %v2320 = vld [vmem:[#allocation11] sm:$0xf]
    %v2321 = vld [vmem:[#allocation11 + $0x4] sm:$0xf]
    %v2322 = vld [vmem:[#allocation11 + $0x8] sm:$0xf]
    %v2323 = vld [vmem:[#allocation11 + $0xc] sm:$0xf]
    %v2324 = vld [vmem:[#allocation11 + $0x10] sm:$0xf]
    %v2325 = vld [vmem:[#allocation11 + $0x14] sm:$0xf]
    %v2326 = vld [vmem:[#allocation11 + $0x18] sm:$0xf]
    %v2327 = vld [vmem:[#allocation11 + $0x1c] sm:$0xf]
    %v2328 = vld [vmem:[#allocation11 + $0x20] sm:$0xf]
    %v2329 = vld [vmem:[#allocation11 + $0x24] sm:$0xf]
    %v2330 = vld [vmem:[#allocation11 + $0x28] sm:$0xf]
    %v2331 = vld [vmem:[#allocation11 + $0x2c] sm:$0xf]
    %v2332 = vld [vmem:[#allocation11 + $0x30] sm:$0xf]
    %v2333 = vld [vmem:[#allocation11 + $0x34] sm:$0xf]
    %v2334 = vld [vmem:[#allocation11 + $0x38] sm:$0xf]
    %v2335 = vld [vmem:[#allocation11 + $0x3c] sm:$0xf]
    %v2336 = vld [vmem:[#allocation11 + $0x40] sm:$0xf]
    %v2337 = vld [vmem:[#allocation11 + $0x44] sm:$0xf]
    %v2338 = vld [vmem:[#allocation11 + $0x48] sm:$0xf]
    %v2339 = vld [vmem:[#allocation11 + $0x4c] sm:$0xf]
    %v2340 = vld [vmem:[#allocation11 + $0x50] sm:$0xf]
    %v2341 = vld [vmem:[#allocation11 + $0x54] sm:$0xf]
    %v2342 = vld [vmem:[#allocation11 + $0x58] sm:$0xf]
    %v2343 = vld [vmem:[#allocation11 + $0x5c] sm:$0xf]
    %v2344 = vld [vmem:[#allocation11 + $0x60] sm:$0xf]
    %v2345 = vld [vmem:[#allocation11 + $0x64] sm:$0xf]
    %v2346 = vld [vmem:[#allocation11 + $0x68] sm:$0xf]
    %v2347 = vld [vmem:[#allocation11 + $0x6c] sm:$0xf]
    %v2348 = vld [vmem:[#allocation11 + $0x70] sm:$0xf]
    %v2349 = vld [vmem:[#allocation11 + $0x74] sm:$0xf]
    %v2350 = vld [vmem:[#allocation11 + $0x78] sm:$0xf]
    %v2351 = vld [vmem:[#allocation11 + $0x7c] sm:$0xf]
    %v2352 = vld [vmem:[#allocation13] sm:$0x1]
    %v2354 = vlaneseq
    %v2355 = vshrl.u32 %v2354, 7
    %v2356 = vsub.s32 0, %v2355
    %v2357 = vrot.slane %v2352, %v2356
    %v2391 = vunpack.c.l.b16 %v2320
    %v2392 = vunpack.c.l.b16 %v2321
    %v2393 = vunpack.c.l.b16 %v2322
    %v2394 = vunpack.c.l.b16 %v2323
    %v2395 = vunpack.c.l.b16 %v2324
    %v2396 = vunpack.c.l.b16 %v2325
    %v2397 = vunpack.c.l.b16 %v2326
    %v2398 = vunpack.c.l.b16 %v2327
    %v2399 = vunpack.c.l.b16 %v2328
    %v2400 = vunpack.c.l.b16 %v2329
    %v2401 = vunpack.c.l.b16 %v2330
    %v2402 = vunpack.c.l.b16 %v2331
    %v2403 = vunpack.c.l.b16 %v2332
    %v2404 = vunpack.c.l.b16 %v2333
    %v2405 = vunpack.c.l.b16 %v2334
    %v2406 = vunpack.c.l.b16 %v2335
    %v2407 = vunpack.c.l.b16 %v2336
    %v2408 = vunpack.c.l.b16 %v2337
    %v2409 = vunpack.c.l.b16 %v2338
    %v2410 = vunpack.c.l.b16 %v2339
    %v2411 = vunpack.c.l.b16 %v2340
    %v2412 = vunpack.c.l.b16 %v2341
    %v2413 = vunpack.c.l.b16 %v2342
    %v2414 = vunpack.c.l.b16 %v2343
    %v2415 = vunpack.c.l.b16 %v2344
    %v2416 = vunpack.c.l.b16 %v2345
    %v2417 = vunpack.c.l.b16 %v2346
    %v2418 = vunpack.c.l.b16 %v2347
    %v2419 = vunpack.c.l.b16 %v2348
    %v2420 = vunpack.c.l.b16 %v2349
    %v2421 = vunpack.c.l.b16 %v2350
    %v2422 = vunpack.c.l.b16 %v2351
    %v2423 = vpack.c.b16 %v2392, %v2391
    %v2424 = vpack.c.b16 %v2394, %v2393
    %v2425 = vpack.c.b16 %v2396, %v2395
    %v2426 = vpack.c.b16 %v2398, %v2397
    %v2427 = vpack.c.b16 %v2400, %v2399
    %v2428 = vpack.c.b16 %v2402, %v2401
    %v2429 = vpack.c.b16 %v2404, %v2403
    %v2430 = vpack.c.b16 %v2406, %v2405
    %v2431 = vpack.c.b16 %v2408, %v2407
    %v2432 = vpack.c.b16 %v2410, %v2409
    %v2433 = vpack.c.b16 %v2412, %v2411
    %v2434 = vpack.c.b16 %v2414, %v2413
    %v2435 = vpack.c.b16 %v2416, %v2415
    %v2436 = vpack.c.b16 %v2418, %v2417
    %v2437 = vpack.c.b16 %v2420, %v2419
    %v2438 = vpack.c.b16 %v2422, %v2421
    %2455 = vmatprep.subr.bf16.mxu0 0
    %2456 = vmatpush1.bf16.msra.mxu0 %v2430
    %2457 = vmatprep.subr.bf16.mxu0 0
    %2458 = vmatpush1.bf16.msra.mxu0 %v2429
    %2459 = vmatprep.subr.bf16.mxu0 0
    %2460 = vmatpush1.bf16.msra.mxu0 %v2428
    %2461 = vmatprep.subr.bf16.mxu0 0
    %2462 = vmatpush1.bf16.msra.mxu0 %v2427
    %2463 = vmatprep.subr.bf16.mxu0 0
    %2464 = vmatpush1.bf16.msra.mxu0 %v2426
    %2465 = vmatprep.subr.bf16.mxu0 0
    %2466 = vmatpush1.bf16.msra.mxu0 %v2425
    %2467 = vmatprep.subr.bf16.mxu0 0
    %2468 = vmatpush1.bf16.msra.mxu0 %v2424
    %2469 = vmatprep.subr.bf16.mxu0 0
    %2470 = vmatpush1.bf16.msra.mxu0 %v2423
    %2471 = vmatprep.subr.bf16.mxu0 0
    %2472 = vmatpush2.bf16.msra.mxu0 %v2438
    %2473 = vmatprep.subr.bf16.mxu0 0
    %2474 = vmatpush2.bf16.msra.mxu0 %v2437
    %2475 = vmatprep.subr.bf16.mxu0 0
    %2476 = vmatpush2.bf16.msra.mxu0 %v2436
    %2477 = vmatprep.subr.bf16.mxu0 0
    %2478 = vmatpush2.bf16.msra.mxu0 %v2435
    %2479 = vmatprep.subr.bf16.mxu0 0
    %2480 = vmatpush2.bf16.msra.mxu0 %v2434
    %2481 = vmatprep.subr.bf16.mxu0 0
    %2482 = vmatpush2.bf16.msra.mxu0 %v2433
    %2483 = vmatprep.subr.bf16.mxu0 0
    %2484 = vmatpush2.bf16.msra.mxu0 %v2432
    %2485 = vmatprep.subr.bf16.mxu0 0
    %2486 = vmatpush2.bf16.msra.mxu0 %v2431
    %2487 = vmatprep.mubr.bf16.mxu0 %v2319
    %2488 = vmatmul.mubr.bf16.gmra.mxu0 %v2318
    %v2489 = vpop.f32.mrf.mxu0
    %v2490 = vadd.f32 %v2357, %v2489
    %v2491 = vpop.f32.mrf.mxu0
    %v2492 = vpop.f32.mrf.mxu0
    %v2493 = vpop.f32.mrf.mxu0
    %2494 = vdwg.mxu0
    %v2495 = vmax.f32 %v2490, 0.0
    %v2496 = vpack.c.bf16 %v2495, %v2495
    %v2497 = vld [vmem:[%s8] sm:$0xf]
    %v2498 = vld [vmem:[%s8 + $0x4] sm:$0xf]
    %v2499 = vld [vmem:[%s8 + $0x8] sm:$0xf]
    %v2500 = vld [vmem:[%s8 + $0xc] sm:$0xf]
    %v2501 = vld [vmem:[%s8 + $0x10] sm:$0xf]
    %v2502 = vld [vmem:[%s8 + $0x14] sm:$0xf]
    %v2503 = vld [vmem:[%s8 + $0x18] sm:$0xf]
    %v2504 = vld [vmem:[%s8 + $0x1c] sm:$0xf]
    %v2505 = vld [vmem:[%s8 + $0x20] sm:$0xf]
    %v2506 = vld [vmem:[%s8 + $0x24] sm:$0xf]
    %v2507 = vld [vmem:[%s8 + $0x28] sm:$0xf]
    %v2508 = vld [vmem:[%s8 + $0x2c] sm:$0xf]
    %v2509 = vld [vmem:[%s8 + $0x30] sm:$0xf]
    %v2510 = vld [vmem:[%s8 + $0x34] sm:$0xf]
    %v2511 = vld [vmem:[%s8 + $0x38] sm:$0xf]
    %v2512 = vld [vmem:[%s8 + $0x3c] sm:$0xf]
    %v2513 = vld [vmem:[#allocation14] sm:$0x1]
    %v2515 = vlaneseq
    %v2516 = vshrl.u32 %v2515, 7
    %v2517 = vsub.s32 0, %v2516
    %v2518 = vrot.slane %v2513, %v2517
    %v2536 = vunpack.c.l.b16 %v2497
    %v2537 = vunpack.c.l.b16 %v2498
    %v2538 = vunpack.c.l.b16 %v2499
    %v2539 = vunpack.c.l.b16 %v2500
    %v2540 = vunpack.c.l.b16 %v2501
    %v2541 = vunpack.c.l.b16 %v2502
    %v2542 = vunpack.c.l.b16 %v2503
    %v2543 = vunpack.c.l.b16 %v2504
    %v2544 = vunpack.c.l.b16 %v2505
    %v2545 = vunpack.c.l.b16 %v2506
    %v2546 = vunpack.c.l.b16 %v2507
    %v2547 = vunpack.c.l.b16 %v2508
    %v2548 = vunpack.c.l.b16 %v2509
    %v2549 = vunpack.c.l.b16 %v2510
    %v2550 = vunpack.c.l.b16 %v2511
    %v2551 = vunpack.c.l.b16 %v2512
    %v2552 = vpack.c.b16 %v2537, %v2536
    %v2553 = vpack.c.b16 %v2539, %v2538
    %v2554 = vpack.c.b16 %v2541, %v2540
    %v2555 = vpack.c.b16 %v2543, %v2542
    %v2556 = vpack.c.b16 %v2545, %v2544
    %v2557 = vpack.c.b16 %v2547, %v2546
    %v2558 = vpack.c.b16 %v2549, %v2548
    %v2559 = vpack.c.b16 %v2551, %v2550
    %2568 = vmatprep.subr.bf16.mxu0 0
    %2569 = vmatpush1.bf16.msra.mxu0 %v2559
    %2570 = vmatprep.subr.bf16.mxu0 0
    %2571 = vmatpush1.bf16.msra.mxu0 %v2558
    %2572 = vmatprep.subr.bf16.mxu0 0
    %2573 = vmatpush1.bf16.msra.mxu0 %v2557
    %2574 = vmatprep.subr.bf16.mxu0 0
    %2575 = vmatpush1.bf16.msra.mxu0 %v2556
    %2576 = vmatprep.subr.bf16.mxu0 0
    %2577 = vmatpush1.bf16.msra.mxu0 %v2555
    %2578 = vmatprep.subr.bf16.mxu0 0
    %2579 = vmatpush1.bf16.msra.mxu0 %v2554
    %2580 = vmatprep.subr.bf16.mxu0 0
    %2581 = vmatpush1.bf16.msra.mxu0 %v2553
    %2582 = vmatprep.subr.bf16.mxu0 0
    %2583 = vmatpush1.bf16.msra.mxu0 %v2552
    %2584 = vmatprep.subr.bf16.mxu0 0
    %2585 = vmatpush2.bf16.msra.mxu0 0
    %2586 = vmatprep.subr.bf16.mxu0 0
    %2587 = vmatpush2.bf16.msra.mxu0 0
    %2588 = vmatprep.subr.bf16.mxu0 0
    %2589 = vmatpush2.bf16.msra.mxu0 0
    %2590 = vmatprep.subr.bf16.mxu0 0
    %2591 = vmatpush2.bf16.msra.mxu0 0
    %2592 = vmatprep.subr.bf16.mxu0 0
    %2593 = vmatpush2.bf16.msra.mxu0 0
    %2594 = vmatprep.subr.bf16.mxu0 0
    %2595 = vmatpush2.bf16.msra.mxu0 0
    %2596 = vmatprep.subr.bf16.mxu0 0
    %2597 = vmatpush2.bf16.msra.mxu0 0
    %2598 = vmatprep.subr.bf16.mxu0 0
    %2599 = vmatpush2.bf16.msra.mxu0 0
    %2600 = vmatprep.mubr.bf16.mxu0 0
    %2601 = vmatmul.mubr.bf16.gmra.mxu0 %v2496
    %v2602 = vpop.f32.mrf.mxu0
    %v2603 = vadd.f32 %v2518, %v2602
    %v2604 = vpop.f32.mrf.mxu0
    %v2605 = vpop.f32.mrf.mxu0
    %v2606 = vpop.f32.mrf.mxu0
    %2607 = vdwg.mxu0
    %v2608 = vmax.f32 %v2603, 0.0
    %v2609 = vpack.c.bf16 %v2608, %v2608
    %v2610 = vld [vmem:[%s10] sm:$0xf]
    %v2611 = vld [vmem:[%s10 + $0x4] sm:$0xf]
    %v2612 = vld [vmem:[%s10 + $0x8] sm:$0xf]
    %v2613 = vld [vmem:[%s10 + $0xc] sm:$0xf]
    %v2614 = vld [vmem:[%s10 + $0x10] sm:$0xf]
    %v2615 = vld [vmem:[%s10 + $0x14] sm:$0xf]
    %v2616 = vld [vmem:[%s10 + $0x18] sm:$0xf]
    %v2617 = vld [vmem:[%s10 + $0x1c] sm:$0xf]
    %v2618 = vld [vmem:[#allocation16] sm:$0x1]
    %v2620 = vlaneseq
    %v2621 = vshrl.u32 %v2620, 7
    %v2622 = vsub.s32 0, %v2621
    %v2623 = vrot.slane %v2618, %v2622
    %v2633 = vunpack.c.l.b16 %v2610
    %v2634 = vunpack.c.l.b16 %v2611
    %v2635 = vunpack.c.l.b16 %v2612
    %v2636 = vunpack.c.l.b16 %v2613
    %v2637 = vunpack.c.l.b16 %v2614
    %v2638 = vunpack.c.l.b16 %v2615
    %v2639 = vunpack.c.l.b16 %v2616
    %v2640 = vunpack.c.l.b16 %v2617
    %v2641 = vpack.c.b16 %v2634, %v2633
    %v2642 = vpack.c.b16 %v2636, %v2635
    %v2643 = vpack.c.b16 %v2638, %v2637
    %v2644 = vpack.c.b16 %v2640, %v2639
    %vm2649 = vcmask 523264
    %v2651 = vsel %vm2649, %v2609, 0
    %2653 = vmatprep.subr.bf16.mxu0 0
    %2654 = vmatpush1.bf16.msra.mxu0 0
    %2655 = vmatprep.subr.bf16.mxu0 0
    %2656 = vmatpush1.bf16.msra.mxu0 0
    %2657 = vmatprep.subr.bf16.mxu0 0
    %2658 = vmatpush1.bf16.msra.mxu0 0
    %2659 = vmatprep.subr.bf16.mxu0 0
    %2660 = vmatpush1.bf16.msra.mxu0 0
    %2661 = vmatprep.subr.bf16.mxu0 0
    %2662 = vmatpush1.bf16.msra.mxu0 %v2644
    %2663 = vmatprep.subr.bf16.mxu0 0
    %2664 = vmatpush1.bf16.msra.mxu0 %v2643
    %2665 = vmatprep.subr.bf16.mxu0 0
    %2666 = vmatpush1.bf16.msra.mxu0 %v2642
    %2667 = vmatprep.subr.bf16.mxu0 0
    %2668 = vmatpush1.bf16.msra.mxu0 %v2641
    %2669 = vmatprep.subr.bf16.mxu0 0
    %2670 = vmatpush2.bf16.msra.mxu0 0
    %2671 = vmatprep.subr.bf16.mxu0 0
    %2672 = vmatpush2.bf16.msra.mxu0 0
    %2673 = vmatprep.subr.bf16.mxu0 0
    %2674 = vmatpush2.bf16.msra.mxu0 0
    %2675 = vmatprep.subr.bf16.mxu0 0
    %2676 = vmatpush2.bf16.msra.mxu0 0
    %2677 = vmatprep.subr.bf16.mxu0 0
    %2678 = vmatpush2.bf16.msra.mxu0 0
    %2679 = vmatprep.subr.bf16.mxu0 0
    %2680 = vmatpush2.bf16.msra.mxu0 0
    %2681 = vmatprep.subr.bf16.mxu0 0
    %2682 = vmatpush2.bf16.msra.mxu0 0
    %2683 = vmatprep.subr.bf16.mxu0 0
    %2684 = vmatpush2.bf16.msra.mxu0 0
    %2685 = vmatprep.mubr.bf16.mxu0 0
    %2686 = vmatmul.mubr.bf16.gmra.mxu0 %v2651
    %v2687 = vpop.f32.mrf.mxu0
    %v2688 = vadd.f32 %v2623, %v2687
    %v2689 = vpop.f32.mrf.mxu0
    %v2690 = vpop.f32.mrf.mxu0
    %v2691 = vpop.f32.mrf.mxu0
    %2692 = vdwg.mxu0
    %2693 = vst [vmem:[#allocation30] sm:$0xff] %v2688
    %v2694 = vld [vmem:[#allocation2] sm:$0xff]
    %v2695 = vmul.f32 %v2688, 0.5
    %v2696 = vmul.f32 %v2695, 1.442695
    %v2697 = vpow.pop %v2696
    %2699 = vrot.lane.b32.xlu0 %v2697, 64
    %v2700 = vpop.permute.xlu0 %2699
    %v2702 = vmul.f32 %v2694, %v2700
    %v2703 = vadd.f32 %v2702, %v2688
    %v2704 = vpack.c.bf16 %v2703, %v2703
    %v2705 = vld [vmem:[#allocation17] sm:$0xf]
    %v2706 = vld [vmem:[#allocation17 + $0x4] sm:$0xf]
    %v2707 = vld [vmem:[#allocation17 + $0x8] sm:$0xf]
    %v2708 = vld [vmem:[#allocation17 + $0xc] sm:$0xf]
    %v2709 = vld [vmem:[#allocation17 + $0x10] sm:$0xf]
    %v2710 = vld [vmem:[#allocation17 + $0x14] sm:$0xf]
    %v2711 = vld [vmem:[#allocation17 + $0x18] sm:$0xf]
    %v2712 = vld [vmem:[#allocation17 + $0x1c] sm:$0xf]
    %v2713 = vld [vmem:[#allocation19] sm:$0x1]
    %v2715 = vlaneseq
    %v2716 = vshrl.u32 %v2715, 7
    %v2717 = vsub.s32 0, %v2716
    %v2718 = vrot.slane %v2713, %v2717
    %v2728 = vunpack.c.l.b16 %v2705
    %v2729 = vunpack.c.l.b16 %v2706
    %v2730 = vunpack.c.l.b16 %v2707
    %v2731 = vunpack.c.l.b16 %v2708
    %v2732 = vunpack.c.l.b16 %v2709
    %v2733 = vunpack.c.l.b16 %v2710
    %v2734 = vunpack.c.l.b16 %v2711
    %v2735 = vunpack.c.l.b16 %v2712
    %v2736 = vpack.c.b16 %v2729, %v2728
    %v2737 = vpack.c.b16 %v2731, %v2730
    %v2738 = vpack.c.b16 %v2733, %v2732
    %v2739 = vpack.c.b16 %v2735, %v2734
    %v2745 = vsel %vm2649, %v2704, 0
    %2747 = vmatprep.subr.bf16.mxu0 0
    %2748 = vmatpush1.bf16.msra.mxu0 0
    %2749 = vmatprep.subr.bf16.mxu0 0
    %2750 = vmatpush1.bf16.msra.mxu0 0
    %2751 = vmatprep.subr.bf16.mxu0 0
    %2752 = vmatpush1.bf16.msra.mxu0 0
    %2753 = vmatprep.subr.bf16.mxu0 0
    %2754 = vmatpush1.bf16.msra.mxu0 0
    %2755 = vmatprep.subr.bf16.mxu0 0
    %2756 = vmatpush1.bf16.msra.mxu0 %v2739
    %2757 = vmatprep.subr.bf16.mxu0 0
    %2758 = vmatpush1.bf16.msra.mxu0 %v2738
    %2759 = vmatprep.subr.bf16.mxu0 0
    %2760 = vmatpush1.bf16.msra.mxu0 %v2737
    %2761 = vmatprep.subr.bf16.mxu0 0
    %2762 = vmatpush1.bf16.msra.mxu0 %v2736
    %2763 = vmatprep.subr.bf16.mxu0 0
    %2764 = vmatpush2.bf16.msra.mxu0 0
    %2765 = vmatprep.subr.bf16.mxu0 0
    %2766 = vmatpush2.bf16.msra.mxu0 0
    %2767 = vmatprep.subr.bf16.mxu0 0
    %2768 = vmatpush2.bf16.msra.mxu0 0
    %2769 = vmatprep.subr.bf16.mxu0 0
    %2770 = vmatpush2.bf16.msra.mxu0 0
    %2771 = vmatprep.subr.bf16.mxu0 0
    %2772 = vmatpush2.bf16.msra.mxu0 0
    %2773 = vmatprep.subr.bf16.mxu0 0
    %2774 = vmatpush2.bf16.msra.mxu0 0
    %2775 = vmatprep.subr.bf16.mxu0 0
    %2776 = vmatpush2.bf16.msra.mxu0 0
    %2777 = vmatprep.subr.bf16.mxu0 0
    %2778 = vmatpush2.bf16.msra.mxu0 0
    %2779 = vmatprep.mubr.bf16.mxu0 0
    %2780 = vmatmul.mubr.bf16.gmra.mxu0 %v2745
    %v2781 = vpop.f32.mrf.mxu0
    %v2782 = vadd.f32 %v2718, %v2781
    %v2783 = vpop.f32.mrf.mxu0
    %v2784 = vpop.f32.mrf.mxu0
    %v2785 = vpop.f32.mrf.mxu0
    %2786 = vdwg.mxu0
    %v2787 = vmax.f32 %v2782, 0.0
    %v2788 = vpack.c.bf16 %v2787, %v2787
    %v2789 = vld [vmem:[%s14] sm:$0xf]
    %v2790 = vld [vmem:[%s14 + $0x4] sm:$0xf]
    %v2791 = vld [vmem:[%s14 + $0x8] sm:$0xf]
    %v2792 = vld [vmem:[%s14 + $0xc] sm:$0xf]
    %v2793 = vld [vmem:[%s14 + $0x10] sm:$0xf]
    %v2794 = vld [vmem:[%s14 + $0x14] sm:$0xf]
    %v2795 = vld [vmem:[%s14 + $0x18] sm:$0xf]
    %v2796 = vld [vmem:[%s14 + $0x1c] sm:$0xf]
    %v2797 = vld [vmem:[#allocation20] sm:$0x1]
    %v2799 = vlaneseq
    %v2800 = vshrl.u32 %v2799, 7
    %v2801 = vsub.s32 0, %v2800
    %v2802 = vrot.slane %v2797, %v2801
    %v2812 = vunpack.c.l.b16 %v2789
    %v2813 = vunpack.c.l.b16 %v2790
    %v2814 = vunpack.c.l.b16 %v2791
    %v2815 = vunpack.c.l.b16 %v2792
    %v2816 = vunpack.c.l.b16 %v2793
    %v2817 = vunpack.c.l.b16 %v2794
    %v2818 = vunpack.c.l.b16 %v2795
    %v2819 = vunpack.c.l.b16 %v2796
    %v2820 = vpack.c.b16 %v2813, %v2812
    %v2821 = vpack.c.b16 %v2815, %v2814
    %v2822 = vpack.c.b16 %v2817, %v2816
    %v2823 = vpack.c.b16 %v2819, %v2818
    %v2829 = vsel %vm2649, %v2788, 0
    %2831 = vmatprep.subr.bf16.mxu0 0
    %2832 = vmatpush1.bf16.msra.mxu0 0
    %2833 = vmatprep.subr.bf16.mxu0 0
    %2834 = vmatpush1.bf16.msra.mxu0 0
    %2835 = vmatprep.subr.bf16.mxu0 0
    %2836 = vmatpush1.bf16.msra.mxu0 0
    %2837 = vmatprep.subr.bf16.mxu0 0
    %2838 = vmatpush1.bf16.msra.mxu0 0
    %2839 = vmatprep.subr.bf16.mxu0 0
    %2840 = vmatpush1.bf16.msra.mxu0 %v2823
    %2841 = vmatprep.subr.bf16.mxu0 0
    %2842 = vmatpush1.bf16.msra.mxu0 %v2822
    %2843 = vmatprep.subr.bf16.mxu0 0
    %2844 = vmatpush1.bf16.msra.mxu0 %v2821
    %2845 = vmatprep.subr.bf16.mxu0 0
    %2846 = vmatpush1.bf16.msra.mxu0 %v2820
    %2847 = vmatprep.subr.bf16.mxu0 0
    %2848 = vmatpush2.bf16.msra.mxu0 0
    %2849 = vmatprep.subr.bf16.mxu0 0
    %2850 = vmatpush2.bf16.msra.mxu0 0
    %2851 = vmatprep.subr.bf16.mxu0 0
    %2852 = vmatpush2.bf16.msra.mxu0 0
    %2853 = vmatprep.subr.bf16.mxu0 0
    %2854 = vmatpush2.bf16.msra.mxu0 0
    %2855 = vmatprep.subr.bf16.mxu0 0
    %2856 = vmatpush2.bf16.msra.mxu0 0
    %2857 = vmatprep.subr.bf16.mxu0 0
    %2858 = vmatpush2.bf16.msra.mxu0 0
    %2859 = vmatprep.subr.bf16.mxu0 0
    %2860 = vmatpush2.bf16.msra.mxu0 0
    %2861 = vmatprep.subr.bf16.mxu0 0
    %2862 = vmatpush2.bf16.msra.mxu0 0
    %2863 = vmatprep.mubr.bf16.mxu0 0
    %2864 = vmatmul.mubr.bf16.gmra.mxu0 %v2829
    %v2865 = vpop.f32.mrf.mxu0
    %v2866 = vadd.f32 %v2802, %v2865
    %v2867 = vpop.f32.mrf.mxu0
    %v2868 = vpop.f32.mrf.mxu0
    %v2869 = vpop.f32.mrf.mxu0
    %2870 = vdwg.mxu0
    %v2871 = vmax.f32 %v2866, 0.0
    %v2872 = vpack.c.bf16 %v2871, %v2871
    %v2873 = vld [vmem:[#allocation22] sm:$0xff]
    %v2874 = vld [vmem:[#allocation22 + $0x8] sm:$0xff]
    %v2875 = vld [vmem:[#allocation22 + $0x10] sm:$0xff]
    %v2876 = vld [vmem:[#allocation22 + $0x18] sm:$0xff]
    %v2877 = vld [vmem:[#allocation22 + $0x20] sm:$0xff]
    %v2878 = vld [vmem:[#allocation22 + $0x28] sm:$0xff]
    %v2879 = vld [vmem:[#allocation22 + $0x30] sm:$0xff]
    %v2880 = vld [vmem:[#allocation22 + $0x38] sm:$0xff]
    %v2881 = vld [vmem:[#allocation22 + $0x40] sm:$0xff]
    %v2882 = vld [vmem:[#allocation22 + $0x48] sm:$0xff]
    %v2883 = vld [vmem:[#allocation22 + $0x50] sm:$0xff]
    %v2884 = vld [vmem:[#allocation22 + $0x58] sm:$0xff]
    %v2885 = vld [vmem:[#allocation22 + $0x60] sm:$0xff]
    %v2886 = vld [vmem:[#allocation22 + $0x68] sm:$0xff]
    %v2887 = vld [vmem:[#allocation22 + $0x70] sm:$0xff]
    %v2888 = vld [vmem:[#allocation22 + $0x78] sm:$0xff]
    %v2889 = vld [vmem:[#allocation23] sm:$0x3]
    %v2891 = vlaneseq
    %v2892 = vshrl.u32 %v2891, 7
    %v2893 = vsub.s32 0, %v2892
    %v2894 = vrot.slane %v2889, %v2893
    %v2895 = vlaneseq
    %v2896 = vshrl.u32 %v2895, 7
    %v2897 = vsub.s32 1, %v2896
    %v2898 = vrot.slane %v2889, %v2897
    %v2917 = vunpack.c.l.b16 %v2873
    %v2918 = vunpack.c.h.b16 %v2873
    %v2919 = vunpack.c.l.b16 %v2874
    %v2920 = vunpack.c.h.b16 %v2874
    %v2921 = vunpack.c.l.b16 %v2875
    %v2922 = vunpack.c.h.b16 %v2875
    %v2923 = vunpack.c.l.b16 %v2876
    %v2924 = vunpack.c.h.b16 %v2876
    %v2925 = vunpack.c.l.b16 %v2877
    %v2926 = vunpack.c.h.b16 %v2877
    %v2927 = vunpack.c.l.b16 %v2878
    %v2928 = vunpack.c.h.b16 %v2878
    %v2929 = vunpack.c.l.b16 %v2879
    %v2930 = vunpack.c.h.b16 %v2879
    %v2931 = vunpack.c.l.b16 %v2880
    %v2932 = vunpack.c.h.b16 %v2880
    %v2933 = vunpack.c.l.b16 %v2881
    %v2934 = vunpack.c.h.b16 %v2881
    %v2935 = vunpack.c.l.b16 %v2882
    %v2936 = vunpack.c.h.b16 %v2882
    %v2937 = vunpack.c.l.b16 %v2883
    %v2938 = vunpack.c.h.b16 %v2883
    %v2939 = vunpack.c.l.b16 %v2884
    %v2940 = vunpack.c.h.b16 %v2884
    %v2941 = vunpack.c.l.b16 %v2885
    %v2942 = vunpack.c.h.b16 %v2885
    %v2943 = vunpack.c.l.b16 %v2886
    %v2944 = vunpack.c.h.b16 %v2886
    %v2945 = vunpack.c.l.b16 %v2887
    %v2946 = vunpack.c.h.b16 %v2887
    %v2947 = vunpack.c.l.b16 %v2888
    %v2948 = vunpack.c.h.b16 %v2888
    %v2949 = vpack.c.b16 %v2919, %v2917
    %v2950 = vpack.c.b16 %v2920, %v2918
    %v2951 = vpack.c.b16 %v2923, %v2921
    %v2952 = vpack.c.b16 %v2924, %v2922
    %v2953 = vpack.c.b16 %v2927, %v2925
    %v2954 = vpack.c.b16 %v2928, %v2926
    %v2955 = vpack.c.b16 %v2931, %v2929
    %v2956 = vpack.c.b16 %v2932, %v2930
    %v2957 = vpack.c.b16 %v2935, %v2933
    %v2958 = vpack.c.b16 %v2936, %v2934
    %v2959 = vpack.c.b16 %v2939, %v2937
    %v2960 = vpack.c.b16 %v2940, %v2938
    %v2961 = vpack.c.b16 %v2943, %v2941
    %v2962 = vpack.c.b16 %v2944, %v2942
    %v2963 = vpack.c.b16 %v2947, %v2945
    %v2964 = vpack.c.b16 %v2948, %v2946
    %2981 = vmatprep.subr.bf16.mxu0 %v2964
    %2982 = vmatpush1.bf16.msra.mxu0 %v2963
    %2983 = vmatprep.subr.bf16.mxu0 %v2962
    %2984 = vmatpush1.bf16.msra.mxu0 %v2961
    %2985 = vmatprep.subr.bf16.mxu0 %v2960
    %2986 = vmatpush1.bf16.msra.mxu0 %v2959
    %2987 = vmatprep.subr.bf16.mxu0 %v2958
    %2988 = vmatpush1.bf16.msra.mxu0 %v2957
    %2989 = vmatprep.subr.bf16.mxu0 %v2956
    %2990 = vmatpush1.bf16.msra.mxu0 %v2955
    %2991 = vmatprep.subr.bf16.mxu0 %v2954
    %2992 = vmatpush1.bf16.msra.mxu0 %v2953
    %2993 = vmatprep.subr.bf16.mxu0 %v2952
    %2994 = vmatpush1.bf16.msra.mxu0 %v2951
    %2995 = vmatprep.subr.bf16.mxu0 %v2950
    %2996 = vmatpush1.bf16.msra.mxu0 %v2949
    %2997 = vmatprep.subr.bf16.mxu0 0
    %2998 = vmatpush2.bf16.msra.mxu0 0
    %2999 = vmatprep.subr.bf16.mxu0 0
    %3000 = vmatpush2.bf16.msra.mxu0 0
    %3001 = vmatprep.subr.bf16.mxu0 0
    %3002 = vmatpush2.bf16.msra.mxu0 0
    %3003 = vmatprep.subr.bf16.mxu0 0
    %3004 = vmatpush2.bf16.msra.mxu0 0
    %3005 = vmatprep.subr.bf16.mxu0 0
    %3006 = vmatpush2.bf16.msra.mxu0 0
    %3007 = vmatprep.subr.bf16.mxu0 0
    %3008 = vmatpush2.bf16.msra.mxu0 0
    %3009 = vmatprep.subr.bf16.mxu0 0
    %3010 = vmatpush2.bf16.msra.mxu0 0
    %3011 = vmatprep.subr.bf16.mxu0 0
    %3012 = vmatpush2.bf16.msra.mxu0 0
    %3013 = vmatprep.mubr.bf16.mxu0 0
    %3014 = vmatmul.mubr.bf16.gmra.mxu0 %v2872
    %v3015 = vpop.f32.mrf.mxu0
    %v3016 = vadd.f32 %v2894, %v3015
    %v3017 = vpop.f32.mrf.mxu0
    %v3018 = vadd.f32 %v2898, %v3017
    %v3019 = vpop.f32.mrf.mxu0
    %v3020 = vpop.f32.mrf.mxu0
    %3021 = vdwg.mxu0
    %v3022 = vmax.f32 %v3016, 0.0
    %v3023 = vmax.f32 %v3018, 0.0
    %v3024 = vpack.c.bf16 %v3022, %v3022
    %v3025 = vpack.c.bf16 %v3023, %v3023
    %v3026 = vld [vmem:[#allocation25] sm:$0xff]
    %v3027 = vld [vmem:[#allocation25 + $0x8] sm:$0xff]
    %v3028 = vld [vmem:[#allocation25 + $0x10] sm:$0xff]
    %v3029 = vld [vmem:[#allocation25 + $0x18] sm:$0xff]
    %v3030 = vld [vmem:[#allocation25 + $0x20] sm:$0xff]
    %v3031 = vld [vmem:[#allocation25 + $0x28] sm:$0xff]
    %v3032 = vld [vmem:[#allocation25 + $0x30] sm:$0xff]
    %v3033 = vld [vmem:[#allocation25 + $0x38] sm:$0xff]
    %v3034 = vld [vmem:[#allocation25 + $0x40] sm:$0xff]
    %v3035 = vld [vmem:[#allocation25 + $0x48] sm:$0xff]
    %v3036 = vld [vmem:[#allocation25 + $0x50] sm:$0xff]
    %v3037 = vld [vmem:[#allocation25 + $0x58] sm:$0xff]
    %v3038 = vld [vmem:[#allocation25 + $0x60] sm:$0xff]
    %v3039 = vld [vmem:[#allocation25 + $0x68] sm:$0xff]
    %v3040 = vld [vmem:[#allocation25 + $0x70] sm:$0xff]
    %v3041 = vld [vmem:[#allocation25 + $0x78] sm:$0xff]
    %v3042 = vld [vmem:[#allocation25 + $0x80] sm:$0xff]
    %v3043 = vld [vmem:[#allocation25 + $0x88] sm:$0xff]
    %v3044 = vld [vmem:[#allocation25 + $0x90] sm:$0xff]
    %v3045 = vld [vmem:[#allocation25 + $0x98] sm:$0xff]
    %v3046 = vld [vmem:[#allocation25 + $0xa0] sm:$0xff]
    %v3047 = vld [vmem:[#allocation25 + $0xa8] sm:$0xff]
    %v3048 = vld [vmem:[#allocation25 + $0xb0] sm:$0xff]
    %v3049 = vld [vmem:[#allocation25 + $0xb8] sm:$0xff]
    %v3050 = vld [vmem:[#allocation25 + $0xc0] sm:$0xff]
    %v3051 = vld [vmem:[#allocation25 + $0xc8] sm:$0xff]
    %v3052 = vld [vmem:[#allocation25 + $0xd0] sm:$0xff]
    %v3053 = vld [vmem:[#allocation25 + $0xd8] sm:$0xff]
    %v3054 = vld [vmem:[#allocation25 + $0xe0] sm:$0xff]
    %v3055 = vld [vmem:[#allocation25 + $0xe8] sm:$0xff]
    %v3056 = vld [vmem:[#allocation25 + $0xf0] sm:$0xff]
    %v3057 = vld [vmem:[#allocation25 + $0xf8] sm:$0xff]
    %v3058 = vld [vmem:[#allocation25 + $0x100] sm:$0xff]
    %v3059 = vld [vmem:[#allocation25 + $0x108] sm:$0xff]
    %v3060 = vld [vmem:[#allocation25 + $0x110] sm:$0xff]
    %v3061 = vld [vmem:[#allocation25 + $0x118] sm:$0xff]
    %v3062 = vld [vmem:[#allocation25 + $0x120] sm:$0xff]
    %v3063 = vld [vmem:[#allocation25 + $0x128] sm:$0xff]
    %v3064 = vld [vmem:[#allocation25 + $0x130] sm:$0xff]
    %v3065 = vld [vmem:[#allocation25 + $0x138] sm:$0xff]
    %v3066 = vld [vmem:[#allocation25 + $0x140] sm:$0xff]
    %v3067 = vld [vmem:[#allocation25 + $0x148] sm:$0xff]
    %v3068 = vld [vmem:[#allocation25 + $0x150] sm:$0xff]
    %v3069 = vld [vmem:[#allocation25 + $0x158] sm:$0xff]
    %v3070 = vld [vmem:[#allocation25 + $0x160] sm:$0xff]
    %v3071 = vld [vmem:[#allocation25 + $0x168] sm:$0xff]
    %v3072 = vld [vmem:[#allocation25 + $0x170] sm:$0xff]
    %v3073 = vld [vmem:[#allocation25 + $0x178] sm:$0xff]
    %v3074 = vld [vmem:[#allocation25 + $0x180] sm:$0xff]
    %v3075 = vld [vmem:[#allocation25 + $0x188] sm:$0xff]
    %v3076 = vld [vmem:[#allocation25 + $0x190] sm:$0xff]
    %v3077 = vld [vmem:[#allocation25 + $0x198] sm:$0xff]
    %v3078 = vld [vmem:[#allocation25 + $0x1a0] sm:$0xff]
    %v3079 = vld [vmem:[#allocation25 + $0x1a8] sm:$0xff]
    %v3080 = vld [vmem:[#allocation25 + $0x1b0] sm:$0xff]
    %v3081 = vld [vmem:[#allocation25 + $0x1b8] sm:$0xff]
    %v3082 = vld [vmem:[#allocation25 + $0x1c0] sm:$0xff]
    %v3083 = vld [vmem:[#allocation25 + $0x1c8] sm:$0xff]
    %v3084 = vld [vmem:[#allocation25 + $0x1d0] sm:$0xff]
    %v3085 = vld [vmem:[#allocation25 + $0x1d8] sm:$0xff]
    %v3086 = vld [vmem:[#allocation25 + $0x1e0] sm:$0xff]
    %v3087 = vld [vmem:[#allocation25 + $0x1e8] sm:$0xff]
    %v3088 = vld [vmem:[#allocation25 + $0x1f0] sm:$0xff]
    %v3089 = vld [vmem:[#allocation25 + $0x1f8] sm:$0xff]
    %v3090 = vld [vmem:[#allocation26] sm:$0xf]
    %v3092 = vlaneseq
    %v3093 = vshrl.u32 %v3092, 7
    %v3094 = vsub.s32 0, %v3093
    %v3095 = vrot.slane %v3090, %v3094
    %v3096 = vlaneseq
    %v3097 = vshrl.u32 %v3096, 7
    %v3098 = vsub.s32 1, %v3097
    %v3099 = vrot.slane %v3090, %v3098
    %v3100 = vlaneseq
    %v3101 = vshrl.u32 %v3100, 7
    %v3102 = vsub.s32 2, %v3101
    %v3103 = vrot.slane %v3090, %v3102
    %v3104 = vlaneseq
    %v3105 = vshrl.u32 %v3104, 7
    %v3106 = vsub.s32 3, %v3105
    %v3107 = vrot.slane %v3090, %v3106
    %v3176 = vunpack.c.l.b16 %v3026
    %v3177 = vunpack.c.h.b16 %v3026
    %v3178 = vunpack.c.l.b16 %v3027
    %v3179 = vunpack.c.h.b16 %v3027
    %v3180 = vunpack.c.l.b16 %v3028
    %v3181 = vunpack.c.h.b16 %v3028
    %v3182 = vunpack.c.l.b16 %v3029
    %v3183 = vunpack.c.h.b16 %v3029
    %v3184 = vunpack.c.l.b16 %v3030
    %v3185 = vunpack.c.h.b16 %v3030
    %v3186 = vunpack.c.l.b16 %v3031
    %v3187 = vunpack.c.h.b16 %v3031
    %v3188 = vunpack.c.l.b16 %v3032
    %v3189 = vunpack.c.h.b16 %v3032
    %v3190 = vunpack.c.l.b16 %v3033
    %v3191 = vunpack.c.h.b16 %v3033
    %v3192 = vunpack.c.l.b16 %v3034
    %v3193 = vunpack.c.h.b16 %v3034
    %v3194 = vunpack.c.l.b16 %v3035
    %v3195 = vunpack.c.h.b16 %v3035
    %v3196 = vunpack.c.l.b16 %v3036
    %v3197 = vunpack.c.h.b16 %v3036
    %v3198 = vunpack.c.l.b16 %v3037
    %v3199 = vunpack.c.h.b16 %v3037
    %v3200 = vunpack.c.l.b16 %v3038
    %v3201 = vunpack.c.h.b16 %v3038
    %v3202 = vunpack.c.l.b16 %v3039
    %v3203 = vunpack.c.h.b16 %v3039
    %v3204 = vunpack.c.l.b16 %v3040
    %v3205 = vunpack.c.h.b16 %v3040
    %v3206 = vunpack.c.l.b16 %v3041
    %v3207 = vunpack.c.h.b16 %v3041
    %v3208 = vunpack.c.l.b16 %v3042
    %v3209 = vunpack.c.h.b16 %v3042
    %v3210 = vunpack.c.l.b16 %v3043
    %v3211 = vunpack.c.h.b16 %v3043
    %v3212 = vunpack.c.l.b16 %v3044
    %v3213 = vunpack.c.h.b16 %v3044
    %v3214 = vunpack.c.l.b16 %v3045
    %v3215 = vunpack.c.h.b16 %v3045
    %v3216 = vunpack.c.l.b16 %v3046
    %v3217 = vunpack.c.h.b16 %v3046
    %v3218 = vunpack.c.l.b16 %v3047
    %v3219 = vunpack.c.h.b16 %v3047
    %v3220 = vunpack.c.l.b16 %v3048
    %v3221 = vunpack.c.h.b16 %v3048
    %v3222 = vunpack.c.l.b16 %v3049
    %v3223 = vunpack.c.h.b16 %v3049
    %v3224 = vunpack.c.l.b16 %v3050
    %v3225 = vunpack.c.h.b16 %v3050
    %v3226 = vunpack.c.l.b16 %v3051
    %v3227 = vunpack.c.h.b16 %v3051
    %v3228 = vunpack.c.l.b16 %v3052
    %v3229 = vunpack.c.h.b16 %v3052
    %v3230 = vunpack.c.l.b16 %v3053
    %v3231 = vunpack.c.h.b16 %v3053
    %v3232 = vunpack.c.l.b16 %v3054
    %v3233 = vunpack.c.h.b16 %v3054
    %v3234 = vunpack.c.l.b16 %v3055
    %v3235 = vunpack.c.h.b16 %v3055
    %v3236 = vunpack.c.l.b16 %v3056
    %v3237 = vunpack.c.h.b16 %v3056
    %v3238 = vunpack.c.l.b16 %v3057
    %v3239 = vunpack.c.h.b16 %v3057
    %v3240 = vunpack.c.l.b16 %v3058
    %v3241 = vunpack.c.h.b16 %v3058
    %v3242 = vunpack.c.l.b16 %v3059
    %v3243 = vunpack.c.h.b16 %v3059
    %v3244 = vunpack.c.l.b16 %v3060
    %v3245 = vunpack.c.h.b16 %v3060
    %v3246 = vunpack.c.l.b16 %v3061
    %v3247 = vunpack.c.h.b16 %v3061
    %v3248 = vunpack.c.l.b16 %v3062
    %v3249 = vunpack.c.h.b16 %v3062
    %v3250 = vunpack.c.l.b16 %v3063
    %v3251 = vunpack.c.h.b16 %v3063
    %v3252 = vunpack.c.l.b16 %v3064
    %v3253 = vunpack.c.h.b16 %v3064
    %v3254 = vunpack.c.l.b16 %v3065
    %v3255 = vunpack.c.h.b16 %v3065
    %v3256 = vunpack.c.l.b16 %v3066
    %v3257 = vunpack.c.h.b16 %v3066
    %v3258 = vunpack.c.l.b16 %v3067
    %v3259 = vunpack.c.h.b16 %v3067
    %v3260 = vunpack.c.l.b16 %v3068
    %v3261 = vunpack.c.h.b16 %v3068
    %v3262 = vunpack.c.l.b16 %v3069
    %v3263 = vunpack.c.h.b16 %v3069
    %v3264 = vunpack.c.l.b16 %v3070
    %v3265 = vunpack.c.h.b16 %v3070
    %v3266 = vunpack.c.l.b16 %v3071
    %v3267 = vunpack.c.h.b16 %v3071
    %v3268 = vunpack.c.l.b16 %v3072
    %v3269 = vunpack.c.h.b16 %v3072
    %v3270 = vunpack.c.l.b16 %v3073
    %v3271 = vunpack.c.h.b16 %v3073
    %v3272 = vunpack.c.l.b16 %v3074
    %v3273 = vunpack.c.h.b16 %v3074
    %v3274 = vunpack.c.l.b16 %v3075
    %v3275 = vunpack.c.h.b16 %v3075
    %v3276 = vunpack.c.l.b16 %v3076
    %v3277 = vunpack.c.h.b16 %v3076
    %v3278 = vunpack.c.l.b16 %v3077
    %v3279 = vunpack.c.h.b16 %v3077
    %v3280 = vunpack.c.l.b16 %v3078
    %v3281 = vunpack.c.h.b16 %v3078
    %v3282 = vunpack.c.l.b16 %v3079
    %v3283 = vunpack.c.h.b16 %v3079
    %v3284 = vunpack.c.l.b16 %v3080
    %v3285 = vunpack.c.h.b16 %v3080
    %v3286 = vunpack.c.l.b16 %v3081
    %v3287 = vunpack.c.h.b16 %v3081
    %v3288 = vunpack.c.l.b16 %v3082
    %v3289 = vunpack.c.h.b16 %v3082
    %v3290 = vunpack.c.l.b16 %v3083
    %v3291 = vunpack.c.h.b16 %v3083
    %v3292 = vunpack.c.l.b16 %v3084
    %v3293 = vunpack.c.h.b16 %v3084
    %v3294 = vunpack.c.l.b16 %v3085
    %v3295 = vunpack.c.h.b16 %v3085
    %v3296 = vunpack.c.l.b16 %v3086
    %v3297 = vunpack.c.h.b16 %v3086
    %v3298 = vunpack.c.l.b16 %v3087
    %v3299 = vunpack.c.h.b16 %v3087
    %v3300 = vunpack.c.l.b16 %v3088
    %v3301 = vunpack.c.h.b16 %v3088
    %v3302 = vunpack.c.l.b16 %v3089
    %v3303 = vunpack.c.h.b16 %v3089
    %v3304 = vpack.c.b16 %v3180, %v3176
    %v3305 = vpack.c.b16 %v3181, %v3177
    %v3306 = vpack.c.b16 %v3182, %v3178
    %v3307 = vpack.c.b16 %v3183, %v3179
    %v3308 = vpack.c.b16 %v3188, %v3184
    %v3309 = vpack.c.b16 %v3189, %v3185
    %v3310 = vpack.c.b16 %v3190, %v3186
    %v3311 = vpack.c.b16 %v3191, %v3187
    %v3312 = vpack.c.b16 %v3196, %v3192
    %v3313 = vpack.c.b16 %v3197, %v3193
    %v3314 = vpack.c.b16 %v3198, %v3194
    %v3315 = vpack.c.b16 %v3199, %v3195
    %v3316 = vpack.c.b16 %v3204, %v3200
    %v3317 = vpack.c.b16 %v3205, %v3201
    %v3318 = vpack.c.b16 %v3206, %v3202
    %v3319 = vpack.c.b16 %v3207, %v3203
    %v3320 = vpack.c.b16 %v3212, %v3208
    %v3321 = vpack.c.b16 %v3213, %v3209
    %v3322 = vpack.c.b16 %v3214, %v3210
    %v3323 = vpack.c.b16 %v3215, %v3211
    %v3324 = vpack.c.b16 %v3220, %v3216
    %v3325 = vpack.c.b16 %v3221, %v3217
    %v3326 = vpack.c.b16 %v3222, %v3218
    %v3327 = vpack.c.b16 %v3223, %v3219
    %v3328 = vpack.c.b16 %v3228, %v3224
    %v3329 = vpack.c.b16 %v3229, %v3225
    %v3330 = vpack.c.b16 %v3230, %v3226
    %v3331 = vpack.c.b16 %v3231, %v3227
    %v3332 = vpack.c.b16 %v3236, %v3232
    %v3333 = vpack.c.b16 %v3237, %v3233
    %v3334 = vpack.c.b16 %v3238, %v3234
    %v3335 = vpack.c.b16 %v3239, %v3235
    %v3336 = vpack.c.b16 %v3244, %v3240
    %v3337 = vpack.c.b16 %v3245, %v3241
    %v3338 = vpack.c.b16 %v3246, %v3242
    %v3339 = vpack.c.b16 %v3247, %v3243
    %v3340 = vpack.c.b16 %v3252, %v3248
    %v3341 = vpack.c.b16 %v3253, %v3249
    %v3342 = vpack.c.b16 %v3254, %v3250
    %v3343 = vpack.c.b16 %v3255, %v3251
    %v3344 = vpack.c.b16 %v3260, %v3256
    %v3345 = vpack.c.b16 %v3261, %v3257
    %v3346 = vpack.c.b16 %v3262, %v3258
    %v3347 = vpack.c.b16 %v3263, %v3259
    %v3348 = vpack.c.b16 %v3268, %v3264
    %v3349 = vpack.c.b16 %v3269, %v3265
    %v3350 = vpack.c.b16 %v3270, %v3266
    %v3351 = vpack.c.b16 %v3271, %v3267
    %v3352 = vpack.c.b16 %v3276, %v3272
    %v3353 = vpack.c.b16 %v3277, %v3273
    %v3354 = vpack.c.b16 %v3278, %v3274
    %v3355 = vpack.c.b16 %v3279, %v3275
    %v3356 = vpack.c.b16 %v3284, %v3280
    %v3357 = vpack.c.b16 %v3285, %v3281
    %v3358 = vpack.c.b16 %v3286, %v3282
    %v3359 = vpack.c.b16 %v3287, %v3283
    %v3360 = vpack.c.b16 %v3292, %v3288
    %v3361 = vpack.c.b16 %v3293, %v3289
    %v3362 = vpack.c.b16 %v3294, %v3290
    %v3363 = vpack.c.b16 %v3295, %v3291
    %v3364 = vpack.c.b16 %v3300, %v3296
    %v3365 = vpack.c.b16 %v3301, %v3297
    %v3366 = vpack.c.b16 %v3302, %v3298
    %v3367 = vpack.c.b16 %v3303, %v3299
    %3432 = vmatprep.subr.bf16.mxu0 %v3333
    %3433 = vmatpush1.bf16.msra.mxu0 %v3332
    %3434 = vmatprep.subr.bf16.mxu0 %v3329
    %3435 = vmatpush1.bf16.msra.mxu0 %v3328
    %3436 = vmatprep.subr.bf16.mxu0 %v3325
    %3437 = vmatpush1.bf16.msra.mxu0 %v3324
    %3438 = vmatprep.subr.bf16.mxu0 %v3321
    %3439 = vmatpush1.bf16.msra.mxu0 %v3320
    %3440 = vmatprep.subr.bf16.mxu0 %v3317
    %3441 = vmatpush1.bf16.msra.mxu0 %v3316
    %3442 = vmatprep.subr.bf16.mxu0 %v3313
    %3443 = vmatpush1.bf16.msra.mxu0 %v3312
    %3444 = vmatprep.subr.bf16.mxu0 %v3309
    %3445 = vmatpush1.bf16.msra.mxu0 %v3308
    %3446 = vmatprep.subr.bf16.mxu0 %v3305
    %3447 = vmatpush1.bf16.msra.mxu0 %v3304
    %3448 = vmatprep.subr.bf16.mxu0 %v3365
    %3449 = vmatpush2.bf16.msra.mxu0 %v3364
    %3450 = vmatprep.subr.bf16.mxu0 %v3361
    %3451 = vmatpush2.bf16.msra.mxu0 %v3360
    %3452 = vmatprep.subr.bf16.mxu0 %v3357
    %3453 = vmatpush2.bf16.msra.mxu0 %v3356
    %3454 = vmatprep.subr.bf16.mxu0 %v3353
    %3455 = vmatpush2.bf16.msra.mxu0 %v3352
    %3456 = vmatprep.subr.bf16.mxu0 %v3349
    %3457 = vmatpush2.bf16.msra.mxu0 %v3348
    %3458 = vmatprep.subr.bf16.mxu0 %v3345
    %3459 = vmatpush2.bf16.msra.mxu0 %v3344
    %3460 = vmatprep.subr.bf16.mxu0 %v3341
    %3461 = vmatpush2.bf16.msra.mxu0 %v3340
    %3462 = vmatprep.subr.bf16.mxu0 %v3337
    %3463 = vmatpush2.bf16.msra.mxu0 %v3336
    %3464 = vmatprep.mubr.bf16.mxu0 %v3025
    %3465 = vmatmul.mubr.bf16.gmra.mxu0 %v3024
    %v3466 = vpop.f32.mrf.mxu0
    %v3467 = vadd.f32 %v3095, %v3466
    %v3468 = vpop.f32.mrf.mxu0
    %v3469 = vadd.f32 %v3099, %v3468
    %v3470 = vpop.f32.mrf.mxu0
    %v3471 = vpop.f32.mrf.mxu0
    %3472 = vdwg.mxu0
    %3473 = vmatprep.subr.bf16.mxu0 %v3335
    %3474 = vmatpush1.bf16.msra.mxu0 %v3334
    %3475 = vmatprep.subr.bf16.mxu0 %v3331
    %3476 = vmatpush1.bf16.msra.mxu0 %v3330
    %3477 = vmatprep.subr.bf16.mxu0 %v3327
    %3478 = vmatpush1.bf16.msra.mxu0 %v3326
    %3479 = vmatprep.subr.bf16.mxu0 %v3323
    %3480 = vmatpush1.bf16.msra.mxu0 %v3322
    %3481 = vmatprep.subr.bf16.mxu0 %v3319
    %3482 = vmatpush1.bf16.msra.mxu0 %v3318
    %3483 = vmatprep.subr.bf16.mxu0 %v3315
    %3484 = vmatpush1.bf16.msra.mxu0 %v3314
    %3485 = vmatprep.subr.bf16.mxu0 %v3311
    %3486 = vmatpush1.bf16.msra.mxu0 %v3310
    %3487 = vmatprep.subr.bf16.mxu0 %v3307
    %3488 = vmatpush1.bf16.msra.mxu0 %v3306
    %3489 = vmatprep.subr.bf16.mxu0 %v3367
    %3490 = vmatpush2.bf16.msra.mxu0 %v3366
    %3491 = vmatprep.subr.bf16.mxu0 %v3363
    %3492 = vmatpush2.bf16.msra.mxu0 %v3362
    %3493 = vmatprep.subr.bf16.mxu0 %v3359
    %3494 = vmatpush2.bf16.msra.mxu0 %v3358
    %3495 = vmatprep.subr.bf16.mxu0 %v3355
    %3496 = vmatpush2.bf16.msra.mxu0 %v3354
    %3497 = vmatprep.subr.bf16.mxu0 %v3351
    %3498 = vmatpush2.bf16.msra.mxu0 %v3350
    %3499 = vmatprep.subr.bf16.mxu0 %v3347
    %3500 = vmatpush2.bf16.msra.mxu0 %v3346
    %3501 = vmatprep.subr.bf16.mxu0 %v3343
    %3502 = vmatpush2.bf16.msra.mxu0 %v3342
    %3503 = vmatprep.subr.bf16.mxu0 %v3339
    %3504 = vmatpush2.bf16.msra.mxu0 %v3338
    %3505 = vmatprep.mubr.bf16.mxu0 %v3025
    %3506 = vmatmul.mubr.bf16.gmra.mxu0 %v3024
    %v3507 = vpop.f32.mrf.mxu0
    %v3508 = vadd.f32 %v3103, %v3507
    %v3509 = vpop.f32.mrf.mxu0
    %v3510 = vadd.f32 %v3107, %v3509
    %v3511 = vpop.f32.mrf.mxu0
    %v3512 = vpop.f32.mrf.mxu0
    %3513 = vdwg.mxu0
    %v3514 = vmax.f32 %v3467, 0.0
    %v3515 = vmax.f32 %v3469, 0.0
    %v3516 = vmax.f32 %v3508, 0.0
    %v3517 = vmax.f32 %v3510, 0.0
    %v3518 = vpack.c.bf16 %v3514, %v3514
    %v3519 = vpack.c.bf16 %v3515, %v3515
    %v3520 = vpack.c.bf16 %v3516, %v3516
    %v3521 = vpack.c.bf16 %v3517, %v3517
    %v3522 = vld [vmem:[#allocation28] sm:$0xff]
    %v3523 = vld [vmem:[#allocation28 + $0x8] sm:$0xff]
    %v3524 = vld [vmem:[#allocation28 + $0x10] sm:$0xff]
    %v3525 = vld [vmem:[#allocation28 + $0x18] sm:$0xf]
    %v3526 = vld [vmem:[#allocation28 + $0x1c] sm:$0xff]
    %v3527 = vld [vmem:[#allocation28 + $0x24] sm:$0xff]
    %v3528 = vld [vmem:[#allocation28 + $0x2c] sm:$0xff]
    %v3529 = vld [vmem:[#allocation28 + $0x34] sm:$0xf]
    %v3530 = vld [vmem:[#allocation28 + $0x38] sm:$0xff]
    %v3531 = vld [vmem:[#allocation28 + $0x40] sm:$0xff]
    %v3532 = vld [vmem:[#allocation28 + $0x48] sm:$0xff]
    %v3533 = vld [vmem:[#allocation28 + $0x50] sm:$0xf]
    %v3534 = vld [vmem:[#allocation28 + $0x54] sm:$0xff]
    %v3535 = vld [vmem:[#allocation28 + $0x5c] sm:$0xff]
    %v3536 = vld [vmem:[#allocation28 + $0x64] sm:$0xff]
    %v3537 = vld [vmem:[#allocation28 + $0x6c] sm:$0xf]
    %v3538 = vld [vmem:[#allocation28 + $0x70] sm:$0xff]
    %v3539 = vld [vmem:[#allocation28 + $0x78] sm:$0xff]
    %v3540 = vld [vmem:[#allocation28 + $0x80] sm:$0xff]
    %v3541 = vld [vmem:[#allocation28 + $0x88] sm:$0xf]
    %v3542 = vld [vmem:[#allocation28 + $0x8c] sm:$0xff]
    %v3543 = vld [vmem:[#allocation28 + $0x94] sm:$0xff]
    %v3544 = vld [vmem:[#allocation28 + $0x9c] sm:$0xff]
    %v3545 = vld [vmem:[#allocation28 + $0xa4] sm:$0xf]
    %v3546 = vld [vmem:[#allocation28 + $0xa8] sm:$0xff]
    %v3547 = vld [vmem:[#allocation28 + $0xb0] sm:$0xff]
    %v3548 = vld [vmem:[#allocation28 + $0xb8] sm:$0xff]
    %v3549 = vld [vmem:[#allocation28 + $0xc0] sm:$0xf]
    %v3550 = vld [vmem:[#allocation28 + $0xc4] sm:$0xff]
    %v3551 = vld [vmem:[#allocation28 + $0xcc] sm:$0xff]
    %v3552 = vld [vmem:[#allocation28 + $0xd4] sm:$0xff]
    %v3553 = vld [vmem:[#allocation28 + $0xdc] sm:$0xf]
    %v3554 = vld [vmem:[#allocation28 + $0xe0] sm:$0xff]
    %v3555 = vld [vmem:[#allocation28 + $0xe8] sm:$0xff]
    %v3556 = vld [vmem:[#allocation28 + $0xf0] sm:$0xff]
    %v3557 = vld [vmem:[#allocation28 + $0xf8] sm:$0xf]
    %v3558 = vld [vmem:[#allocation28 + $0xfc] sm:$0xff]
    %v3559 = vld [vmem:[#allocation28 + $0x104] sm:$0xff]
    %v3560 = vld [vmem:[#allocation28 + $0x10c] sm:$0xff]
    %v3561 = vld [vmem:[#allocation28 + $0x114] sm:$0xf]
    %v3562 = vld [vmem:[#allocation28 + $0x118] sm:$0xff]
    %v3563 = vld [vmem:[#allocation28 + $0x120] sm:$0xff]
    %v3564 = vld [vmem:[#allocation28 + $0x128] sm:$0xff]
    %v3565 = vld [vmem:[#allocation28 + $0x130] sm:$0xf]
    %v3566 = vld [vmem:[#allocation28 + $0x134] sm:$0xff]
    %v3567 = vld [vmem:[#allocation28 + $0x13c] sm:$0xff]
    %v3568 = vld [vmem:[#allocation28 + $0x144] sm:$0xff]
    %v3569 = vld [vmem:[#allocation28 + $0x14c] sm:$0xf]
    %v3570 = vld [vmem:[#allocation28 + $0x150] sm:$0xff]
    %v3571 = vld [vmem:[#allocation28 + $0x158] sm:$0xff]
    %v3572 = vld [vmem:[#allocation28 + $0x160] sm:$0xff]
    %v3573 = vld [vmem:[#allocation28 + $0x168] sm:$0xf]
    %v3574 = vld [vmem:[#allocation28 + $0x16c] sm:$0xff]
    %v3575 = vld [vmem:[#allocation28 + $0x174] sm:$0xff]
    %v3576 = vld [vmem:[#allocation28 + $0x17c] sm:$0xff]
    %v3577 = vld [vmem:[#allocation28 + $0x184] sm:$0xf]
    %v3578 = vld [vmem:[#allocation28 + $0x188] sm:$0xff]
    %v3579 = vld [vmem:[#allocation28 + $0x190] sm:$0xff]
    %v3580 = vld [vmem:[#allocation28 + $0x198] sm:$0xff]
    %v3581 = vld [vmem:[#allocation28 + $0x1a0] sm:$0xf]
    %v3582 = vld [vmem:[#allocation28 + $0x1a4] sm:$0xff]
    %v3583 = vld [vmem:[#allocation28 + $0x1ac] sm:$0xff]
    %v3584 = vld [vmem:[#allocation28 + $0x1b4] sm:$0xff]
    %v3585 = vld [vmem:[#allocation28 + $0x1bc] sm:$0xf]
    %v3586 = vld [vmem:[#allocation28 + $0x1c0] sm:$0xff]
    %v3587 = vld [vmem:[#allocation28 + $0x1c8] sm:$0xff]
    %v3588 = vld [vmem:[#allocation28 + $0x1d0] sm:$0xff]
    %v3589 = vld [vmem:[#allocation28 + $0x1d8] sm:$0xf]
    %v3590 = vld [vmem:[#allocation28 + $0x1dc] sm:$0xff]
    %v3591 = vld [vmem:[#allocation28 + $0x1e4] sm:$0xff]
    %v3592 = vld [vmem:[#allocation28 + $0x1ec] sm:$0xff]
    %v3593 = vld [vmem:[#allocation28 + $0x1f4] sm:$0xf]
    %v3594 = vld [vmem:[#allocation28 + $0x1f8] sm:$0xff]
    %v3595 = vld [vmem:[#allocation28 + $0x200] sm:$0xff]
    %v3596 = vld [vmem:[#allocation28 + $0x208] sm:$0xff]
    %v3597 = vld [vmem:[#allocation28 + $0x210] sm:$0xf]
    %v3598 = vld [vmem:[#allocation28 + $0x214] sm:$0xff]
    %v3599 = vld [vmem:[#allocation28 + $0x21c] sm:$0xff]
    %v3600 = vld [vmem:[#allocation28 + $0x224] sm:$0xff]
    %v3601 = vld [vmem:[#allocation28 + $0x22c] sm:$0xf]
    %v3602 = vld [vmem:[#allocation28 + $0x230] sm:$0xff]
    %v3603 = vld [vmem:[#allocation28 + $0x238] sm:$0xff]
    %v3604 = vld [vmem:[#allocation28 + $0x240] sm:$0xff]
    %v3605 = vld [vmem:[#allocation28 + $0x248] sm:$0xf]
    %v3606 = vld [vmem:[#allocation28 + $0x24c] sm:$0xff]
    %v3607 = vld [vmem:[#allocation28 + $0x254] sm:$0xff]
    %v3608 = vld [vmem:[#allocation28 + $0x25c] sm:$0xff]
    %v3609 = vld [vmem:[#allocation28 + $0x264] sm:$0xf]
    %v3610 = vld [vmem:[#allocation28 + $0x268] sm:$0xff]
    %v3611 = vld [vmem:[#allocation28 + $0x270] sm:$0xff]
    %v3612 = vld [vmem:[#allocation28 + $0x278] sm:$0xff]
    %v3613 = vld [vmem:[#allocation28 + $0x280] sm:$0xf]
    %v3614 = vld [vmem:[#allocation28 + $0x284] sm:$0xff]
    %v3615 = vld [vmem:[#allocation28 + $0x28c] sm:$0xff]
    %v3616 = vld [vmem:[#allocation28 + $0x294] sm:$0xff]
    %v3617 = vld [vmem:[#allocation28 + $0x29c] sm:$0xf]
    %v3618 = vld [vmem:[#allocation28 + $0x2a0] sm:$0xff]
    %v3619 = vld [vmem:[#allocation28 + $0x2a8] sm:$0xff]
    %v3620 = vld [vmem:[#allocation28 + $0x2b0] sm:$0xff]
    %v3621 = vld [vmem:[#allocation28 + $0x2b8] sm:$0xf]
    %v3622 = vld [vmem:[#allocation28 + $0x2bc] sm:$0xff]
    %v3623 = vld [vmem:[#allocation28 + $0x2c4] sm:$0xff]
    %v3624 = vld [vmem:[#allocation28 + $0x2cc] sm:$0xff]
    %v3625 = vld [vmem:[#allocation28 + $0x2d4] sm:$0xf]
    %v3626 = vld [vmem:[#allocation28 + $0x2d8] sm:$0xff]
    %v3627 = vld [vmem:[#allocation28 + $0x2e0] sm:$0xff]
    %v3628 = vld [vmem:[#allocation28 + $0x2e8] sm:$0xff]
    %v3629 = vld [vmem:[#allocation28 + $0x2f0] sm:$0xf]
    %v3630 = vld [vmem:[#allocation28 + $0x2f4] sm:$0xff]
    %v3631 = vld [vmem:[#allocation28 + $0x2fc] sm:$0xff]
    %v3632 = vld [vmem:[#allocation28 + $0x304] sm:$0xff]
    %v3633 = vld [vmem:[#allocation28 + $0x30c] sm:$0xf]
    %v3634 = vld [vmem:[#allocation28 + $0x310] sm:$0xff]
    %v3635 = vld [vmem:[#allocation28 + $0x318] sm:$0xff]
    %v3636 = vld [vmem:[#allocation28 + $0x320] sm:$0xff]
    %v3637 = vld [vmem:[#allocation28 + $0x328] sm:$0xf]
    %v3638 = vld [vmem:[#allocation28 + $0x32c] sm:$0xff]
    %v3639 = vld [vmem:[#allocation28 + $0x334] sm:$0xff]
    %v3640 = vld [vmem:[#allocation28 + $0x33c] sm:$0xff]
    %v3641 = vld [vmem:[#allocation28 + $0x344] sm:$0xf]
    %v3642 = vld [vmem:[#allocation28 + $0x348] sm:$0xff]
    %v3643 = vld [vmem:[#allocation28 + $0x350] sm:$0xff]
    %v3644 = vld [vmem:[#allocation28 + $0x358] sm:$0xff]
    %v3645 = vld [vmem:[#allocation28 + $0x360] sm:$0xf]
    %v3646 = vld [vmem:[#allocation28 + $0x364] sm:$0xff]
    %v3647 = vld [vmem:[#allocation28 + $0x36c] sm:$0xff]
    %v3648 = vld [vmem:[#allocation28 + $0x374] sm:$0xff]
    %v3649 = vld [vmem:[#allocation28 + $0x37c] sm:$0xf]
    %v3650 = vld [vmem:[#allocation28 + $0x380] sm:$0xff]
    %v3651 = vld [vmem:[#allocation28 + $0x388] sm:$0xff]
    %v3652 = vld [vmem:[#allocation28 + $0x390] sm:$0xff]
    %v3653 = vld [vmem:[#allocation28 + $0x398] sm:$0xf]
    %v3654 = vld [vmem:[#allocation28 + $0x39c] sm:$0xff]
    %v3655 = vld [vmem:[#allocation28 + $0x3a4] sm:$0xff]
    %v3656 = vld [vmem:[#allocation28 + $0x3ac] sm:$0xff]
    %v3657 = vld [vmem:[#allocation28 + $0x3b4] sm:$0xf]
    %v3658 = vld [vmem:[#allocation28 + $0x3b8] sm:$0xff]
    %v3659 = vld [vmem:[#allocation28 + $0x3c0] sm:$0xff]
    %v3660 = vld [vmem:[#allocation28 + $0x3c8] sm:$0xff]
    %v3661 = vld [vmem:[#allocation28 + $0x3d0] sm:$0xf]
    %v3662 = vld [vmem:[#allocation28 + $0x3d4] sm:$0xff]
    %v3663 = vld [vmem:[#allocation28 + $0x3dc] sm:$0xff]
    %v3664 = vld [vmem:[#allocation28 + $0x3e4] sm:$0xff]
    %v3665 = vld [vmem:[#allocation28 + $0x3ec] sm:$0xf]
    %v3666 = vld [vmem:[#allocation28 + $0x3f0] sm:$0xff]
    %v3667 = vld [vmem:[#allocation28 + $0x3f8] sm:$0xff]
    %v3668 = vld [vmem:[#allocation28 + $0x400] sm:$0xff]
    %v3669 = vld [vmem:[#allocation28 + $0x408] sm:$0xf]
    %v3670 = vld [vmem:[#allocation28 + $0x40c] sm:$0xff]
    %v3671 = vld [vmem:[#allocation28 + $0x414] sm:$0xff]
    %v3672 = vld [vmem:[#allocation28 + $0x41c] sm:$0xff]
    %v3673 = vld [vmem:[#allocation28 + $0x424] sm:$0xf]
    %v3674 = vld [vmem:[#allocation28 + $0x428] sm:$0xff]
    %v3675 = vld [vmem:[#allocation28 + $0x430] sm:$0xff]
    %v3676 = vld [vmem:[#allocation28 + $0x438] sm:$0xff]
    %v3677 = vld [vmem:[#allocation28 + $0x440] sm:$0xf]
    %v3678 = vld [vmem:[#allocation28 + $0x444] sm:$0xff]
    %v3679 = vld [vmem:[#allocation28 + $0x44c] sm:$0xff]
    %v3680 = vld [vmem:[#allocation28 + $0x454] sm:$0xff]
    %v3681 = vld [vmem:[#allocation28 + $0x45c] sm:$0xf]
    %v3682 = vld [vmem:[#allocation28 + $0x460] sm:$0xff]
    %v3683 = vld [vmem:[#allocation28 + $0x468] sm:$0xff]
    %v3684 = vld [vmem:[#allocation28 + $0x470] sm:$0xff]
    %v3685 = vld [vmem:[#allocation28 + $0x478] sm:$0xf]
    %v3686 = vld [vmem:[#allocation28 + $0x47c] sm:$0xff]
    %v3687 = vld [vmem:[#allocation28 + $0x484] sm:$0xff]
    %v3688 = vld [vmem:[#allocation28 + $0x48c] sm:$0xff]
    %v3689 = vld [vmem:[#allocation28 + $0x494] sm:$0xf]
    %v3690 = vld [vmem:[#allocation28 + $0x498] sm:$0xff]
    %v3691 = vld [vmem:[#allocation28 + $0x4a0] sm:$0xff]
    %v3692 = vld [vmem:[#allocation28 + $0x4a8] sm:$0xff]
    %v3693 = vld [vmem:[#allocation28 + $0x4b0] sm:$0xf]
    %v3694 = vld [vmem:[#allocation28 + $0x4b4] sm:$0xff]
    %v3695 = vld [vmem:[#allocation28 + $0x4bc] sm:$0xff]
    %v3696 = vld [vmem:[#allocation28 + $0x4c4] sm:$0xff]
    %v3697 = vld [vmem:[#allocation28 + $0x4cc] sm:$0xf]
    %v3698 = vld [vmem:[#allocation28 + $0x4d0] sm:$0xff]
    %v3699 = vld [vmem:[#allocation28 + $0x4d8] sm:$0xff]
    %v3700 = vld [vmem:[#allocation28 + $0x4e0] sm:$0xff]
    %v3701 = vld [vmem:[#allocation28 + $0x4e8] sm:$0xf]
    %v3702 = vld [vmem:[#allocation28 + $0x4ec] sm:$0xff]
    %v3703 = vld [vmem:[#allocation28 + $0x4f4] sm:$0xff]
    %v3704 = vld [vmem:[#allocation28 + $0x4fc] sm:$0xff]
    %v3705 = vld [vmem:[#allocation28 + $0x504] sm:$0xf]
    %v3706 = vld [vmem:[#allocation28 + $0x508] sm:$0xff]
    %v3707 = vld [vmem:[#allocation28 + $0x510] sm:$0xff]
    %v3708 = vld [vmem:[#allocation28 + $0x518] sm:$0xff]
    %v3709 = vld [vmem:[#allocation28 + $0x520] sm:$0xf]
    %v3710 = vld [vmem:[#allocation28 + $0x524] sm:$0xff]
    %v3711 = vld [vmem:[#allocation28 + $0x52c] sm:$0xff]
    %v3712 = vld [vmem:[#allocation28 + $0x534] sm:$0xff]
    %v3713 = vld [vmem:[#allocation28 + $0x53c] sm:$0xf]
    %v3714 = vld [vmem:[#allocation28 + $0x540] sm:$0xff]
    %v3715 = vld [vmem:[#allocation28 + $0x548] sm:$0xff]
    %v3716 = vld [vmem:[#allocation28 + $0x550] sm:$0xff]
    %v3717 = vld [vmem:[#allocation28 + $0x558] sm:$0xf]
    %v3718 = vld [vmem:[#allocation28 + $0x55c] sm:$0xff]
    %v3719 = vld [vmem:[#allocation28 + $0x564] sm:$0xff]
    %v3720 = vld [vmem:[#allocation28 + $0x56c] sm:$0xff]
    %v3721 = vld [vmem:[#allocation28 + $0x574] sm:$0xf]
    %v3722 = vld [vmem:[#allocation28 + $0x578] sm:$0xff]
    %v3723 = vld [vmem:[#allocation28 + $0x580] sm:$0xff]
    %v3724 = vld [vmem:[#allocation28 + $0x588] sm:$0xff]
    %v3725 = vld [vmem:[#allocation28 + $0x590] sm:$0xf]
    %v3726 = vld [vmem:[#allocation28 + $0x594] sm:$0xff]
    %v3727 = vld [vmem:[#allocation28 + $0x59c] sm:$0xff]
    %v3728 = vld [vmem:[#allocation28 + $0x5a4] sm:$0xff]
    %v3729 = vld [vmem:[#allocation28 + $0x5ac] sm:$0xf]
    %v3730 = vld [vmem:[#allocation28 + $0x5b0] sm:$0xff]
    %v3731 = vld [vmem:[#allocation28 + $0x5b8] sm:$0xff]
    %v3732 = vld [vmem:[#allocation28 + $0x5c0] sm:$0xff]
    %v3733 = vld [vmem:[#allocation28 + $0x5c8] sm:$0xf]
    %v3734 = vld [vmem:[#allocation28 + $0x5cc] sm:$0xff]
    %v3735 = vld [vmem:[#allocation28 + $0x5d4] sm:$0xff]
    %v3736 = vld [vmem:[#allocation28 + $0x5dc] sm:$0xff]
    %v3737 = vld [vmem:[#allocation28 + $0x5e4] sm:$0xf]
    %v3738 = vld [vmem:[#allocation28 + $0x5e8] sm:$0xff]
    %v3739 = vld [vmem:[#allocation28 + $0x5f0] sm:$0xff]
    %v3740 = vld [vmem:[#allocation28 + $0x5f8] sm:$0xff]
    %v3741 = vld [vmem:[#allocation28 + $0x600] sm:$0xf]
    %v3742 = vld [vmem:[#allocation28 + $0x604] sm:$0xff]
    %v3743 = vld [vmem:[#allocation28 + $0x60c] sm:$0xff]
    %v3744 = vld [vmem:[#allocation28 + $0x614] sm:$0xff]
    %v3745 = vld [vmem:[#allocation28 + $0x61c] sm:$0xf]
    %v3746 = vld [vmem:[#allocation28 + $0x620] sm:$0xff]
    %v3747 = vld [vmem:[#allocation28 + $0x628] sm:$0xff]
    %v3748 = vld [vmem:[#allocation28 + $0x630] sm:$0xff]
    %v3749 = vld [vmem:[#allocation28 + $0x638] sm:$0xf]
    %v3750 = vld [vmem:[#allocation28 + $0x63c] sm:$0xff]
    %v3751 = vld [vmem:[#allocation28 + $0x644] sm:$0xff]
    %v3752 = vld [vmem:[#allocation28 + $0x64c] sm:$0xff]
    %v3753 = vld [vmem:[#allocation28 + $0x654] sm:$0xf]
    %v3754 = vld [vmem:[#allocation28 + $0x658] sm:$0xff]
    %v3755 = vld [vmem:[#allocation28 + $0x660] sm:$0xff]
    %v3756 = vld [vmem:[#allocation28 + $0x668] sm:$0xff]
    %v3757 = vld [vmem:[#allocation28 + $0x670] sm:$0xf]
    %v3758 = vld [vmem:[#allocation28 + $0x674] sm:$0xff]
    %v3759 = vld [vmem:[#allocation28 + $0x67c] sm:$0xff]
    %v3760 = vld [vmem:[#allocation28 + $0x684] sm:$0xff]
    %v3761 = vld [vmem:[#allocation28 + $0x68c] sm:$0xf]
    %v3762 = vld [vmem:[#allocation28 + $0x690] sm:$0xff]
    %v3763 = vld [vmem:[#allocation28 + $0x698] sm:$0xff]
    %v3764 = vld [vmem:[#allocation28 + $0x6a0] sm:$0xff]
    %v3765 = vld [vmem:[#allocation28 + $0x6a8] sm:$0xf]
    %v3766 = vld [vmem:[#allocation28 + $0x6ac] sm:$0xff]
    %v3767 = vld [vmem:[#allocation28 + $0x6b4] sm:$0xff]
    %v3768 = vld [vmem:[#allocation28 + $0x6bc] sm:$0xff]
    %v3769 = vld [vmem:[#allocation28 + $0x6c4] sm:$0xf]
    %v3770 = vld [vmem:[#allocation28 + $0x6c8] sm:$0xff]
    %v3771 = vld [vmem:[#allocation28 + $0x6d0] sm:$0xff]
    %v3772 = vld [vmem:[#allocation28 + $0x6d8] sm:$0xff]
    %v3773 = vld [vmem:[#allocation28 + $0x6e0] sm:$0xf]
    %v3774 = vld [vmem:[#allocation28 + $0x6e4] sm:$0xff]
    %v3775 = vld [vmem:[#allocation28 + $0x6ec] sm:$0xff]
    %v3776 = vld [vmem:[#allocation28 + $0x6f4] sm:$0xff]
    %v3777 = vld [vmem:[#allocation28 + $0x6fc] sm:$0xf]
    %v3778 = vld [vmem:[%s21] sm:$0xff]
    %v3780 = vlaneseq
    %v3781 = vshrl.u32 %v3780, 7
    %v3782 = vsub.s32 0, %v3781
    %v3783 = vrot.slane %v3778, %v3782
    %v3784 = vlaneseq
    %v3785 = vshrl.u32 %v3784, 7
    %v3786 = vsub.s32 1, %v3785
    %v3787 = vrot.slane %v3778, %v3786
    %v3788 = vlaneseq
    %v3789 = vshrl.u32 %v3788, 7
    %v3790 = vsub.s32 2, %v3789
    %v3791 = vrot.slane %v3778, %v3790
    %v3792 = vlaneseq
    %v3793 = vshrl.u32 %v3792, 7
    %v3794 = vsub.s32 3, %v3793
    %v3795 = vrot.slane %v3778, %v3794
    %v3796 = vlaneseq
    %v3797 = vshrl.u32 %v3796, 7
    %v3798 = vsub.s32 4, %v3797
    %v3799 = vrot.slane %v3778, %v3798
    %v3800 = vlaneseq
    %v3801 = vshrl.u32 %v3800, 7
    %v3802 = vsub.s32 5, %v3801
    %v3803 = vrot.slane %v3778, %v3802
    %v3804 = vlaneseq
    %v3805 = vshrl.u32 %v3804, 7
    %v3806 = vsub.s32 6, %v3805
    %v3807 = vrot.slane %v3778, %v3806
    %v4071 = vunpack.c.l.b16 %v3522
    %v4072 = vunpack.c.h.b16 %v3522
    %v4073 = vunpack.c.l.b16 %v3523
    %v4074 = vunpack.c.h.b16 %v3523
    %v4075 = vunpack.c.l.b16 %v3524
    %v4076 = vunpack.c.h.b16 %v3524
    %v4077 = vunpack.c.l.b16 %v3525
    %v4078 = vunpack.c.l.b16 %v3526
    %v4079 = vunpack.c.h.b16 %v3526
    %v4080 = vunpack.c.l.b16 %v3527
    %v4081 = vunpack.c.h.b16 %v3527
    %v4082 = vunpack.c.l.b16 %v3528
    %v4083 = vunpack.c.h.b16 %v3528
    %v4084 = vunpack.c.l.b16 %v3529
    %v4085 = vunpack.c.l.b16 %v3530
    %v4086 = vunpack.c.h.b16 %v3530
    %v4087 = vunpack.c.l.b16 %v3531
    %v4088 = vunpack.c.h.b16 %v3531
    %v4089 = vunpack.c.l.b16 %v3532
    %v4090 = vunpack.c.h.b16 %v3532
    %v4091 = vunpack.c.l.b16 %v3533
    %v4092 = vunpack.c.l.b16 %v3534
    %v4093 = vunpack.c.h.b16 %v3534
    %v4094 = vunpack.c.l.b16 %v3535
    %v4095 = vunpack.c.h.b16 %v3535
    %v4096 = vunpack.c.l.b16 %v3536
    %v4097 = vunpack.c.h.b16 %v3536
    %v4098 = vunpack.c.l.b16 %v3537
    %v4099 = vunpack.c.l.b16 %v3538
    %v4100 = vunpack.c.h.b16 %v3538
    %v4101 = vunpack.c.l.b16 %v3539
    %v4102 = vunpack.c.h.b16 %v3539
    %v4103 = vunpack.c.l.b16 %v3540
    %v4104 = vunpack.c.h.b16 %v3540
    %v4105 = vunpack.c.l.b16 %v3541
    %v4106 = vunpack.c.l.b16 %v3542
    %v4107 = vunpack.c.h.b16 %v3542
    %v4108 = vunpack.c.l.b16 %v3543
    %v4109 = vunpack.c.h.b16 %v3543
    %v4110 = vunpack.c.l.b16 %v3544
    %v4111 = vunpack.c.h.b16 %v3544
    %v4112 = vunpack.c.l.b16 %v3545
    %v4113 = vunpack.c.l.b16 %v3546
    %v4114 = vunpack.c.h.b16 %v3546
    %v4115 = vunpack.c.l.b16 %v3547
    %v4116 = vunpack.c.h.b16 %v3547
    %v4117 = vunpack.c.l.b16 %v3548
    %v4118 = vunpack.c.h.b16 %v3548
    %v4119 = vunpack.c.l.b16 %v3549
    %v4120 = vunpack.c.l.b16 %v3550
    %v4121 = vunpack.c.h.b16 %v3550
    %v4122 = vunpack.c.l.b16 %v3551
    %v4123 = vunpack.c.h.b16 %v3551
    %v4124 = vunpack.c.l.b16 %v3552
    %v4125 = vunpack.c.h.b16 %v3552
    %v4126 = vunpack.c.l.b16 %v3553
    %v4127 = vunpack.c.l.b16 %v3554
    %v4128 = vunpack.c.h.b16 %v3554
    %v4129 = vunpack.c.l.b16 %v3555
    %v4130 = vunpack.c.h.b16 %v3555
    %v4131 = vunpack.c.l.b16 %v3556
    %v4132 = vunpack.c.h.b16 %v3556
    %v4133 = vunpack.c.l.b16 %v3557
    %v4134 = vunpack.c.l.b16 %v3558
    %v4135 = vunpack.c.h.b16 %v3558
    %v4136 = vunpack.c.l.b16 %v3559
    %v4137 = vunpack.c.h.b16 %v3559
    %v4138 = vunpack.c.l.b16 %v3560
    %v4139 = vunpack.c.h.b16 %v3560
    %v4140 = vunpack.c.l.b16 %v3561
    %v4141 = vunpack.c.l.b16 %v3562
    %v4142 = vunpack.c.h.b16 %v3562
    %v4143 = vunpack.c.l.b16 %v3563
    %v4144 = vunpack.c.h.b16 %v3563
    %v4145 = vunpack.c.l.b16 %v3564
    %v4146 = vunpack.c.h.b16 %v3564
    %v4147 = vunpack.c.l.b16 %v3565
    %v4148 = vunpack.c.l.b16 %v3566
    %v4149 = vunpack.c.h.b16 %v3566
    %v4150 = vunpack.c.l.b16 %v3567
    %v4151 = vunpack.c.h.b16 %v3567
    %v4152 = vunpack.c.l.b16 %v3568
    %v4153 = vunpack.c.h.b16 %v3568
    %v4154 = vunpack.c.l.b16 %v3569
    %v4155 = vunpack.c.l.b16 %v3570
    %v4156 = vunpack.c.h.b16 %v3570
    %v4157 = vunpack.c.l.b16 %v3571
    %v4158 = vunpack.c.h.b16 %v3571
    %v4159 = vunpack.c.l.b16 %v3572
    %v4160 = vunpack.c.h.b16 %v3572
    %v4161 = vunpack.c.l.b16 %v3573
    %v4162 = vunpack.c.l.b16 %v3574
    %v4163 = vunpack.c.h.b16 %v3574
    %v4164 = vunpack.c.l.b16 %v3575
    %v4165 = vunpack.c.h.b16 %v3575
    %v4166 = vunpack.c.l.b16 %v3576
    %v4167 = vunpack.c.h.b16 %v3576
    %v4168 = vunpack.c.l.b16 %v3577
    %v4169 = vunpack.c.l.b16 %v3578
    %v4170 = vunpack.c.h.b16 %v3578
    %v4171 = vunpack.c.l.b16 %v3579
    %v4172 = vunpack.c.h.b16 %v3579
    %v4173 = vunpack.c.l.b16 %v3580
    %v4174 = vunpack.c.h.b16 %v3580
    %v4175 = vunpack.c.l.b16 %v3581
    %v4176 = vunpack.c.l.b16 %v3582
    %v4177 = vunpack.c.h.b16 %v3582
    %v4178 = vunpack.c.l.b16 %v3583
    %v4179 = vunpack.c.h.b16 %v3583
    %v4180 = vunpack.c.l.b16 %v3584
    %v4181 = vunpack.c.h.b16 %v3584
    %v4182 = vunpack.c.l.b16 %v3585
    %v4183 = vunpack.c.l.b16 %v3586
    %v4184 = vunpack.c.h.b16 %v3586
    %v4185 = vunpack.c.l.b16 %v3587
    %v4186 = vunpack.c.h.b16 %v3587
    %v4187 = vunpack.c.l.b16 %v3588
    %v4188 = vunpack.c.h.b16 %v3588
    %v4189 = vunpack.c.l.b16 %v3589
    %v4190 = vunpack.c.l.b16 %v3590
    %v4191 = vunpack.c.h.b16 %v3590
    %v4192 = vunpack.c.l.b16 %v3591
    %v4193 = vunpack.c.h.b16 %v3591
    %v4194 = vunpack.c.l.b16 %v3592
    %v4195 = vunpack.c.h.b16 %v3592
    %v4196 = vunpack.c.l.b16 %v3593
    %v4197 = vunpack.c.l.b16 %v3594
    %v4198 = vunpack.c.h.b16 %v3594
    %v4199 = vunpack.c.l.b16 %v3595
    %v4200 = vunpack.c.h.b16 %v3595
    %v4201 = vunpack.c.l.b16 %v3596
    %v4202 = vunpack.c.h.b16 %v3596
    %v4203 = vunpack.c.l.b16 %v3597
    %v4204 = vunpack.c.l.b16 %v3598
    %v4205 = vunpack.c.h.b16 %v3598
    %v4206 = vunpack.c.l.b16 %v3599
    %v4207 = vunpack.c.h.b16 %v3599
    %v4208 = vunpack.c.l.b16 %v3600
    %v4209 = vunpack.c.h.b16 %v3600
    %v4210 = vunpack.c.l.b16 %v3601
    %v4211 = vunpack.c.l.b16 %v3602
    %v4212 = vunpack.c.h.b16 %v3602
    %v4213 = vunpack.c.l.b16 %v3603
    %v4214 = vunpack.c.h.b16 %v3603
    %v4215 = vunpack.c.l.b16 %v3604
    %v4216 = vunpack.c.h.b16 %v3604
    %v4217 = vunpack.c.l.b16 %v3605
    %v4218 = vunpack.c.l.b16 %v3606
    %v4219 = vunpack.c.h.b16 %v3606
    %v4220 = vunpack.c.l.b16 %v3607
    %v4221 = vunpack.c.h.b16 %v3607
    %v4222 = vunpack.c.l.b16 %v3608
    %v4223 = vunpack.c.h.b16 %v3608
    %v4224 = vunpack.c.l.b16 %v3609
    %v4225 = vunpack.c.l.b16 %v3610
    %v4226 = vunpack.c.h.b16 %v3610
    %v4227 = vunpack.c.l.b16 %v3611
    %v4228 = vunpack.c.h.b16 %v3611
    %v4229 = vunpack.c.l.b16 %v3612
    %v4230 = vunpack.c.h.b16 %v3612
    %v4231 = vunpack.c.l.b16 %v3613
    %v4232 = vunpack.c.l.b16 %v3614
    %v4233 = vunpack.c.h.b16 %v3614
    %v4234 = vunpack.c.l.b16 %v3615
    %v4235 = vunpack.c.h.b16 %v3615
    %v4236 = vunpack.c.l.b16 %v3616
    %v4237 = vunpack.c.h.b16 %v3616
    %v4238 = vunpack.c.l.b16 %v3617
    %v4239 = vunpack.c.l.b16 %v3618
    %v4240 = vunpack.c.h.b16 %v3618
    %v4241 = vunpack.c.l.b16 %v3619
    %v4242 = vunpack.c.h.b16 %v3619
    %v4243 = vunpack.c.l.b16 %v3620
    %v4244 = vunpack.c.h.b16 %v3620
    %v4245 = vunpack.c.l.b16 %v3621
    %v4246 = vunpack.c.l.b16 %v3622
    %v4247 = vunpack.c.h.b16 %v3622
    %v4248 = vunpack.c.l.b16 %v3623
    %v4249 = vunpack.c.h.b16 %v3623
    %v4250 = vunpack.c.l.b16 %v3624
    %v4251 = vunpack.c.h.b16 %v3624
    %v4252 = vunpack.c.l.b16 %v3625
    %v4253 = vunpack.c.l.b16 %v3626
    %v4254 = vunpack.c.h.b16 %v3626
    %v4255 = vunpack.c.l.b16 %v3627
    %v4256 = vunpack.c.h.b16 %v3627
    %v4257 = vunpack.c.l.b16 %v3628
    %v4258 = vunpack.c.h.b16 %v3628
    %v4259 = vunpack.c.l.b16 %v3629
    %v4260 = vunpack.c.l.b16 %v3630
    %v4261 = vunpack.c.h.b16 %v3630
    %v4262 = vunpack.c.l.b16 %v3631
    %v4263 = vunpack.c.h.b16 %v3631
    %v4264 = vunpack.c.l.b16 %v3632
    %v4265 = vunpack.c.h.b16 %v3632
    %v4266 = vunpack.c.l.b16 %v3633
    %v4267 = vunpack.c.l.b16 %v3634
    %v4268 = vunpack.c.h.b16 %v3634
    %v4269 = vunpack.c.l.b16 %v3635
    %v4270 = vunpack.c.h.b16 %v3635
    %v4271 = vunpack.c.l.b16 %v3636
    %v4272 = vunpack.c.h.b16 %v3636
    %v4273 = vunpack.c.l.b16 %v3637
    %v4274 = vunpack.c.l.b16 %v3638
    %v4275 = vunpack.c.h.b16 %v3638
    %v4276 = vunpack.c.l.b16 %v3639
    %v4277 = vunpack.c.h.b16 %v3639
    %v4278 = vunpack.c.l.b16 %v3640
    %v4279 = vunpack.c.h.b16 %v3640
    %v4280 = vunpack.c.l.b16 %v3641
    %v4281 = vunpack.c.l.b16 %v3642
    %v4282 = vunpack.c.h.b16 %v3642
    %v4283 = vunpack.c.l.b16 %v3643
    %v4284 = vunpack.c.h.b16 %v3643
    %v4285 = vunpack.c.l.b16 %v3644
    %v4286 = vunpack.c.h.b16 %v3644
    %v4287 = vunpack.c.l.b16 %v3645
    %v4288 = vunpack.c.l.b16 %v3646
    %v4289 = vunpack.c.h.b16 %v3646
    %v4290 = vunpack.c.l.b16 %v3647
    %v4291 = vunpack.c.h.b16 %v3647
    %v4292 = vunpack.c.l.b16 %v3648
    %v4293 = vunpack.c.h.b16 %v3648
    %v4294 = vunpack.c.l.b16 %v3649
    %v4295 = vunpack.c.l.b16 %v3650
    %v4296 = vunpack.c.h.b16 %v3650
    %v4297 = vunpack.c.l.b16 %v3651
    %v4298 = vunpack.c.h.b16 %v3651
    %v4299 = vunpack.c.l.b16 %v3652
    %v4300 = vunpack.c.h.b16 %v3652
    %v4301 = vunpack.c.l.b16 %v3653
    %v4302 = vunpack.c.l.b16 %v3654
    %v4303 = vunpack.c.h.b16 %v3654
    %v4304 = vunpack.c.l.b16 %v3655
    %v4305 = vunpack.c.h.b16 %v3655
    %v4306 = vunpack.c.l.b16 %v3656
    %v4307 = vunpack.c.h.b16 %v3656
    %v4308 = vunpack.c.l.b16 %v3657
    %v4309 = vunpack.c.l.b16 %v3658
    %v4310 = vunpack.c.h.b16 %v3658
    %v4311 = vunpack.c.l.b16 %v3659
    %v4312 = vunpack.c.h.b16 %v3659
    %v4313 = vunpack.c.l.b16 %v3660
    %v4314 = vunpack.c.h.b16 %v3660
    %v4315 = vunpack.c.l.b16 %v3661
    %v4316 = vunpack.c.l.b16 %v3662
    %v4317 = vunpack.c.h.b16 %v3662
    %v4318 = vunpack.c.l.b16 %v3663
    %v4319 = vunpack.c.h.b16 %v3663
    %v4320 = vunpack.c.l.b16 %v3664
    %v4321 = vunpack.c.h.b16 %v3664
    %v4322 = vunpack.c.l.b16 %v3665
    %v4323 = vunpack.c.l.b16 %v3666
    %v4324 = vunpack.c.h.b16 %v3666
    %v4325 = vunpack.c.l.b16 %v3667
    %v4326 = vunpack.c.h.b16 %v3667
    %v4327 = vunpack.c.l.b16 %v3668
    %v4328 = vunpack.c.h.b16 %v3668
    %v4329 = vunpack.c.l.b16 %v3669
    %v4330 = vunpack.c.l.b16 %v3670
    %v4331 = vunpack.c.h.b16 %v3670
    %v4332 = vunpack.c.l.b16 %v3671
    %v4333 = vunpack.c.h.b16 %v3671
    %v4334 = vunpack.c.l.b16 %v3672
    %v4335 = vunpack.c.h.b16 %v3672
    %v4336 = vunpack.c.l.b16 %v3673
    %v4337 = vunpack.c.l.b16 %v3674
    %v4338 = vunpack.c.h.b16 %v3674
    %v4339 = vunpack.c.l.b16 %v3675
    %v4340 = vunpack.c.h.b16 %v3675
    %v4341 = vunpack.c.l.b16 %v3676
    %v4342 = vunpack.c.h.b16 %v3676
    %v4343 = vunpack.c.l.b16 %v3677
    %v4344 = vunpack.c.l.b16 %v3678
    %v4345 = vunpack.c.h.b16 %v3678
    %v4346 = vunpack.c.l.b16 %v3679
    %v4347 = vunpack.c.h.b16 %v3679
    %v4348 = vunpack.c.l.b16 %v3680
    %v4349 = vunpack.c.h.b16 %v3680
    %v4350 = vunpack.c.l.b16 %v3681
    %v4351 = vunpack.c.l.b16 %v3682
    %v4352 = vunpack.c.h.b16 %v3682
    %v4353 = vunpack.c.l.b16 %v3683
    %v4354 = vunpack.c.h.b16 %v3683
    %v4355 = vunpack.c.l.b16 %v3684
    %v4356 = vunpack.c.h.b16 %v3684
    %v4357 = vunpack.c.l.b16 %v3685
    %v4358 = vunpack.c.l.b16 %v3686
    %v4359 = vunpack.c.h.b16 %v3686
    %v4360 = vunpack.c.l.b16 %v3687
    %v4361 = vunpack.c.h.b16 %v3687
    %v4362 = vunpack.c.l.b16 %v3688
    %v4363 = vunpack.c.h.b16 %v3688
    %v4364 = vunpack.c.l.b16 %v3689
    %v4365 = vunpack.c.l.b16 %v3690
    %v4366 = vunpack.c.h.b16 %v3690
    %v4367 = vunpack.c.l.b16 %v3691
    %v4368 = vunpack.c.h.b16 %v3691
    %v4369 = vunpack.c.l.b16 %v3692
    %v4370 = vunpack.c.h.b16 %v3692
    %v4371 = vunpack.c.l.b16 %v3693
    %v4372 = vunpack.c.l.b16 %v3694
    %v4373 = vunpack.c.h.b16 %v3694
    %v4374 = vunpack.c.l.b16 %v3695
    %v4375 = vunpack.c.h.b16 %v3695
    %v4376 = vunpack.c.l.b16 %v3696
    %v4377 = vunpack.c.h.b16 %v3696
    %v4378 = vunpack.c.l.b16 %v3697
    %v4379 = vunpack.c.l.b16 %v3698
    %v4380 = vunpack.c.h.b16 %v3698
    %v4381 = vunpack.c.l.b16 %v3699
    %v4382 = vunpack.c.h.b16 %v3699
    %v4383 = vunpack.c.l.b16 %v3700
    %v4384 = vunpack.c.h.b16 %v3700
    %v4385 = vunpack.c.l.b16 %v3701
    %v4386 = vunpack.c.l.b16 %v3702
    %v4387 = vunpack.c.h.b16 %v3702
    %v4388 = vunpack.c.l.b16 %v3703
    %v4389 = vunpack.c.h.b16 %v3703
    %v4390 = vunpack.c.l.b16 %v3704
    %v4391 = vunpack.c.h.b16 %v3704
    %v4392 = vunpack.c.l.b16 %v3705
    %v4393 = vunpack.c.l.b16 %v3706
    %v4394 = vunpack.c.h.b16 %v3706
    %v4395 = vunpack.c.l.b16 %v3707
    %v4396 = vunpack.c.h.b16 %v3707
    %v4397 = vunpack.c.l.b16 %v3708
    %v4398 = vunpack.c.h.b16 %v3708
    %v4399 = vunpack.c.l.b16 %v3709
    %v4400 = vunpack.c.l.b16 %v3710
    %v4401 = vunpack.c.h.b16 %v3710
    %v4402 = vunpack.c.l.b16 %v3711
    %v4403 = vunpack.c.h.b16 %v3711
    %v4404 = vunpack.c.l.b16 %v3712
    %v4405 = vunpack.c.h.b16 %v3712
    %v4406 = vunpack.c.l.b16 %v3713
    %v4407 = vunpack.c.l.b16 %v3714
    %v4408 = vunpack.c.h.b16 %v3714
    %v4409 = vunpack.c.l.b16 %v3715
    %v4410 = vunpack.c.h.b16 %v3715
    %v4411 = vunpack.c.l.b16 %v3716
    %v4412 = vunpack.c.h.b16 %v3716
    %v4413 = vunpack.c.l.b16 %v3717
    %v4414 = vunpack.c.l.b16 %v3718
    %v4415 = vunpack.c.h.b16 %v3718
    %v4416 = vunpack.c.l.b16 %v3719
    %v4417 = vunpack.c.h.b16 %v3719
    %v4418 = vunpack.c.l.b16 %v3720
    %v4419 = vunpack.c.h.b16 %v3720
    %v4420 = vunpack.c.l.b16 %v3721
    %v4421 = vunpack.c.l.b16 %v3722
    %v4422 = vunpack.c.h.b16 %v3722
    %v4423 = vunpack.c.l.b16 %v3723
    %v4424 = vunpack.c.h.b16 %v3723
    %v4425 = vunpack.c.l.b16 %v3724
    %v4426 = vunpack.c.h.b16 %v3724
    %v4427 = vunpack.c.l.b16 %v3725
    %v4428 = vunpack.c.l.b16 %v3726
    %v4429 = vunpack.c.h.b16 %v3726
    %v4430 = vunpack.c.l.b16 %v3727
    %v4431 = vunpack.c.h.b16 %v3727
    %v4432 = vunpack.c.l.b16 %v3728
    %v4433 = vunpack.c.h.b16 %v3728
    %v4434 = vunpack.c.l.b16 %v3729
    %v4435 = vunpack.c.l.b16 %v3730
    %v4436 = vunpack.c.h.b16 %v3730
    %v4437 = vunpack.c.l.b16 %v3731
    %v4438 = vunpack.c.h.b16 %v3731
    %v4439 = vunpack.c.l.b16 %v3732
    %v4440 = vunpack.c.h.b16 %v3732
    %v4441 = vunpack.c.l.b16 %v3733
    %v4442 = vunpack.c.l.b16 %v3734
    %v4443 = vunpack.c.h.b16 %v3734
    %v4444 = vunpack.c.l.b16 %v3735
    %v4445 = vunpack.c.h.b16 %v3735
    %v4446 = vunpack.c.l.b16 %v3736
    %v4447 = vunpack.c.h.b16 %v3736
    %v4448 = vunpack.c.l.b16 %v3737
    %v4449 = vunpack.c.l.b16 %v3738
    %v4450 = vunpack.c.h.b16 %v3738
    %v4451 = vunpack.c.l.b16 %v3739
    %v4452 = vunpack.c.h.b16 %v3739
    %v4453 = vunpack.c.l.b16 %v3740
    %v4454 = vunpack.c.h.b16 %v3740
    %v4455 = vunpack.c.l.b16 %v3741
    %v4456 = vunpack.c.l.b16 %v3742
    %v4457 = vunpack.c.h.b16 %v3742
    %v4458 = vunpack.c.l.b16 %v3743
    %v4459 = vunpack.c.h.b16 %v3743
    %v4460 = vunpack.c.l.b16 %v3744
    %v4461 = vunpack.c.h.b16 %v3744
    %v4462 = vunpack.c.l.b16 %v3745
    %v4463 = vunpack.c.l.b16 %v3746
    %v4464 = vunpack.c.h.b16 %v3746
    %v4465 = vunpack.c.l.b16 %v3747
    %v4466 = vunpack.c.h.b16 %v3747
    %v4467 = vunpack.c.l.b16 %v3748
    %v4468 = vunpack.c.h.b16 %v3748
    %v4469 = vunpack.c.l.b16 %v3749
    %v4470 = vunpack.c.l.b16 %v3750
    %v4471 = vunpack.c.h.b16 %v3750
    %v4472 = vunpack.c.l.b16 %v3751
    %v4473 = vunpack.c.h.b16 %v3751
    %v4474 = vunpack.c.l.b16 %v3752
    %v4475 = vunpack.c.h.b16 %v3752
    %v4476 = vunpack.c.l.b16 %v3753
    %v4477 = vunpack.c.l.b16 %v3754
    %v4478 = vunpack.c.h.b16 %v3754
    %v4479 = vunpack.c.l.b16 %v3755
    %v4480 = vunpack.c.h.b16 %v3755
    %v4481 = vunpack.c.l.b16 %v3756
    %v4482 = vunpack.c.h.b16 %v3756
    %v4483 = vunpack.c.l.b16 %v3757
    %v4484 = vunpack.c.l.b16 %v3758
    %v4485 = vunpack.c.h.b16 %v3758
    %v4486 = vunpack.c.l.b16 %v3759
    %v4487 = vunpack.c.h.b16 %v3759
    %v4488 = vunpack.c.l.b16 %v3760
    %v4489 = vunpack.c.h.b16 %v3760
    %v4490 = vunpack.c.l.b16 %v3761
    %v4491 = vunpack.c.l.b16 %v3762
    %v4492 = vunpack.c.h.b16 %v3762
    %v4493 = vunpack.c.l.b16 %v3763
    %v4494 = vunpack.c.h.b16 %v3763
    %v4495 = vunpack.c.l.b16 %v3764
    %v4496 = vunpack.c.h.b16 %v3764
    %v4497 = vunpack.c.l.b16 %v3765
    %v4498 = vunpack.c.l.b16 %v3766
    %v4499 = vunpack.c.h.b16 %v3766
    %v4500 = vunpack.c.l.b16 %v3767
    %v4501 = vunpack.c.h.b16 %v3767
    %v4502 = vunpack.c.l.b16 %v3768
    %v4503 = vunpack.c.h.b16 %v3768
    %v4504 = vunpack.c.l.b16 %v3769
    %v4505 = vunpack.c.l.b16 %v3770
    %v4506 = vunpack.c.h.b16 %v3770
    %v4507 = vunpack.c.l.b16 %v3771
    %v4508 = vunpack.c.h.b16 %v3771
    %v4509 = vunpack.c.l.b16 %v3772
    %v4510 = vunpack.c.h.b16 %v3772
    %v4511 = vunpack.c.l.b16 %v3773
    %v4512 = vunpack.c.l.b16 %v3774
    %v4513 = vunpack.c.h.b16 %v3774
    %v4514 = vunpack.c.l.b16 %v3775
    %v4515 = vunpack.c.h.b16 %v3775
    %v4516 = vunpack.c.l.b16 %v3776
    %v4517 = vunpack.c.h.b16 %v3776
    %v4518 = vunpack.c.l.b16 %v3777
    %v4519 = vpack.c.b16 %v4078, %v4071
    %v4520 = vpack.c.b16 %v4079, %v4072
    %v4521 = vpack.c.b16 %v4080, %v4073
    %v4522 = vpack.c.b16 %v4081, %v4074
    %v4523 = vpack.c.b16 %v4082, %v4075
    %v4524 = vpack.c.b16 %v4083, %v4076
    %v4525 = vpack.c.b16 %v4084, %v4077
    %v4526 = vpack.c.b16 %v4092, %v4085
    %v4527 = vpack.c.b16 %v4093, %v4086
    %v4528 = vpack.c.b16 %v4094, %v4087
    %v4529 = vpack.c.b16 %v4095, %v4088
    %v4530 = vpack.c.b16 %v4096, %v4089
    %v4531 = vpack.c.b16 %v4097, %v4090
    %v4532 = vpack.c.b16 %v4098, %v4091
    %v4533 = vpack.c.b16 %v4106, %v4099
    %v4534 = vpack.c.b16 %v4107, %v4100
    %v4535 = vpack.c.b16 %v4108, %v4101
    %v4536 = vpack.c.b16 %v4109, %v4102
    %v4537 = vpack.c.b16 %v4110, %v4103
    %v4538 = vpack.c.b16 %v4111, %v4104
    %v4539 = vpack.c.b16 %v4112, %v4105
    %v4540 = vpack.c.b16 %v4120, %v4113
    %v4541 = vpack.c.b16 %v4121, %v4114
    %v4542 = vpack.c.b16 %v4122, %v4115
    %v4543 = vpack.c.b16 %v4123, %v4116
    %v4544 = vpack.c.b16 %v4124, %v4117
    %v4545 = vpack.c.b16 %v4125, %v4118
    %v4546 = vpack.c.b16 %v4126, %v4119
    %v4547 = vpack.c.b16 %v4134, %v4127
    %v4548 = vpack.c.b16 %v4135, %v4128
    %v4549 = vpack.c.b16 %v4136, %v4129
    %v4550 = vpack.c.b16 %v4137, %v4130
    %v4551 = vpack.c.b16 %v4138, %v4131
    %v4552 = vpack.c.b16 %v4139, %v4132
    %v4553 = vpack.c.b16 %v4140, %v4133
    %v4554 = vpack.c.b16 %v4148, %v4141
    %v4555 = vpack.c.b16 %v4149, %v4142
    %v4556 = vpack.c.b16 %v4150, %v4143
    %v4557 = vpack.c.b16 %v4151, %v4144
    %v4558 = vpack.c.b16 %v4152, %v4145
    %v4559 = vpack.c.b16 %v4153, %v4146
    %v4560 = vpack.c.b16 %v4154, %v4147
    %v4561 = vpack.c.b16 %v4162, %v4155
    %v4562 = vpack.c.b16 %v4163, %v4156
    %v4563 = vpack.c.b16 %v4164, %v4157
    %v4564 = vpack.c.b16 %v4165, %v4158
    %v4565 = vpack.c.b16 %v4166, %v4159
    %v4566 = vpack.c.b16 %v4167, %v4160
    %v4567 = vpack.c.b16 %v4168, %v4161
    %v4568 = vpack.c.b16 %v4176, %v4169
    %v4569 = vpack.c.b16 %v4177, %v4170
    %v4570 = vpack.c.b16 %v4178, %v4171
    %v4571 = vpack.c.b16 %v4179, %v4172
    %v4572 = vpack.c.b16 %v4180, %v4173
    %v4573 = vpack.c.b16 %v4181, %v4174
    %v4574 = vpack.c.b16 %v4182, %v4175
    %v4575 = vpack.c.b16 %v4190, %v4183
    %v4576 = vpack.c.b16 %v4191, %v4184
    %v4577 = vpack.c.b16 %v4192, %v4185
    %v4578 = vpack.c.b16 %v4193, %v4186
    %v4579 = vpack.c.b16 %v4194, %v4187
    %v4580 = vpack.c.b16 %v4195, %v4188
    %v4581 = vpack.c.b16 %v4196, %v4189
    %v4582 = vpack.c.b16 %v4204, %v4197
    %v4583 = vpack.c.b16 %v4205, %v4198
    %v4584 = vpack.c.b16 %v4206, %v4199
    %v4585 = vpack.c.b16 %v4207, %v4200
    %v4586 = vpack.c.b16 %v4208, %v4201
    %v4587 = vpack.c.b16 %v4209, %v4202
    %v4588 = vpack.c.b16 %v4210, %v4203
    %v4589 = vpack.c.b16 %v4218, %v4211
    %v4590 = vpack.c.b16 %v4219, %v4212
    %v4591 = vpack.c.b16 %v4220, %v4213
    %v4592 = vpack.c.b16 %v4221, %v4214
    %v4593 = vpack.c.b16 %v4222, %v4215
    %v4594 = vpack.c.b16 %v4223, %v4216
    %v4595 = vpack.c.b16 %v4224, %v4217
    %v4596 = vpack.c.b16 %v4232, %v4225
    %v4597 = vpack.c.b16 %v4233, %v4226
    %v4598 = vpack.c.b16 %v4234, %v4227
    %v4599 = vpack.c.b16 %v4235, %v4228
    %v4600 = vpack.c.b16 %v4236, %v4229
    %v4601 = vpack.c.b16 %v4237, %v4230
    %v4602 = vpack.c.b16 %v4238, %v4231
    %v4603 = vpack.c.b16 %v4246, %v4239
    %v4604 = vpack.c.b16 %v4247, %v4240
    %v4605 = vpack.c.b16 %v4248, %v4241
    %v4606 = vpack.c.b16 %v4249, %v4242
    %v4607 = vpack.c.b16 %v4250, %v4243
    %v4608 = vpack.c.b16 %v4251, %v4244
    %v4609 = vpack.c.b16 %v4252, %v4245
    %v4610 = vpack.c.b16 %v4260, %v4253
    %v4611 = vpack.c.b16 %v4261, %v4254
    %v4612 = vpack.c.b16 %v4262, %v4255
    %v4613 = vpack.c.b16 %v4263, %v4256
    %v4614 = vpack.c.b16 %v4264, %v4257
    %v4615 = vpack.c.b16 %v4265, %v4258
    %v4616 = vpack.c.b16 %v4266, %v4259
    %v4617 = vpack.c.b16 %v4274, %v4267
    %v4618 = vpack.c.b16 %v4275, %v4268
    %v4619 = vpack.c.b16 %v4276, %v4269
    %v4620 = vpack.c.b16 %v4277, %v4270
    %v4621 = vpack.c.b16 %v4278, %v4271
    %v4622 = vpack.c.b16 %v4279, %v4272
    %v4623 = vpack.c.b16 %v4280, %v4273
    %v4624 = vpack.c.b16 %v4288, %v4281
    %v4625 = vpack.c.b16 %v4289, %v4282
    %v4626 = vpack.c.b16 %v4290, %v4283
    %v4627 = vpack.c.b16 %v4291, %v4284
    %v4628 = vpack.c.b16 %v4292, %v4285
    %v4629 = vpack.c.b16 %v4293, %v4286
    %v4630 = vpack.c.b16 %v4294, %v4287
    %v4631 = vpack.c.b16 %v4302, %v4295
    %v4632 = vpack.c.b16 %v4303, %v4296
    %v4633 = vpack.c.b16 %v4304, %v4297
    %v4634 = vpack.c.b16 %v4305, %v4298
    %v4635 = vpack.c.b16 %v4306, %v4299
    %v4636 = vpack.c.b16 %v4307, %v4300
    %v4637 = vpack.c.b16 %v4308, %v4301
    %v4638 = vpack.c.b16 %v4316, %v4309
    %v4639 = vpack.c.b16 %v4317, %v4310
    %v4640 = vpack.c.b16 %v4318, %v4311
    %v4641 = vpack.c.b16 %v4319, %v4312
    %v4642 = vpack.c.b16 %v4320, %v4313
    %v4643 = vpack.c.b16 %v4321, %v4314
    %v4644 = vpack.c.b16 %v4322, %v4315
    %v4645 = vpack.c.b16 %v4330, %v4323
    %v4646 = vpack.c.b16 %v4331, %v4324
    %v4647 = vpack.c.b16 %v4332, %v4325
    %v4648 = vpack.c.b16 %v4333, %v4326
    %v4649 = vpack.c.b16 %v4334, %v4327
    %v4650 = vpack.c.b16 %v4335, %v4328
    %v4651 = vpack.c.b16 %v4336, %v4329
    %v4652 = vpack.c.b16 %v4344, %v4337
    %v4653 = vpack.c.b16 %v4345, %v4338
    %v4654 = vpack.c.b16 %v4346, %v4339
    %v4655 = vpack.c.b16 %v4347, %v4340
    %v4656 = vpack.c.b16 %v4348, %v4341
    %v4657 = vpack.c.b16 %v4349, %v4342
    %v4658 = vpack.c.b16 %v4350, %v4343
    %v4659 = vpack.c.b16 %v4358, %v4351
    %v4660 = vpack.c.b16 %v4359, %v4352
    %v4661 = vpack.c.b16 %v4360, %v4353
    %v4662 = vpack.c.b16 %v4361, %v4354
    %v4663 = vpack.c.b16 %v4362, %v4355
    %v4664 = vpack.c.b16 %v4363, %v4356
    %v4665 = vpack.c.b16 %v4364, %v4357
    %v4666 = vpack.c.b16 %v4372, %v4365
    %v4667 = vpack.c.b16 %v4373, %v4366
    %v4668 = vpack.c.b16 %v4374, %v4367
    %v4669 = vpack.c.b16 %v4375, %v4368
    %v4670 = vpack.c.b16 %v4376, %v4369
    %v4671 = vpack.c.b16 %v4377, %v4370
    %v4672 = vpack.c.b16 %v4378, %v4371
    %v4673 = vpack.c.b16 %v4386, %v4379
    %v4674 = vpack.c.b16 %v4387, %v4380
    %v4675 = vpack.c.b16 %v4388, %v4381
    %v4676 = vpack.c.b16 %v4389, %v4382
    %v4677 = vpack.c.b16 %v4390, %v4383
    %v4678 = vpack.c.b16 %v4391, %v4384
    %v4679 = vpack.c.b16 %v4392, %v4385
    %v4680 = vpack.c.b16 %v4400, %v4393
    %v4681 = vpack.c.b16 %v4401, %v4394
    %v4682 = vpack.c.b16 %v4402, %v4395
    %v4683 = vpack.c.b16 %v4403, %v4396
    %v4684 = vpack.c.b16 %v4404, %v4397
    %v4685 = vpack.c.b16 %v4405, %v4398
    %v4686 = vpack.c.b16 %v4406, %v4399
    %v4687 = vpack.c.b16 %v4414, %v4407
    %v4688 = vpack.c.b16 %v4415, %v4408
    %v4689 = vpack.c.b16 %v4416, %v4409
    %v4690 = vpack.c.b16 %v4417, %v4410
    %v4691 = vpack.c.b16 %v4418, %v4411
    %v4692 = vpack.c.b16 %v4419, %v4412
    %v4693 = vpack.c.b16 %v4420, %v4413
    %v4694 = vpack.c.b16 %v4428, %v4421
    %v4695 = vpack.c.b16 %v4429, %v4422
    %v4696 = vpack.c.b16 %v4430, %v4423
    %v4697 = vpack.c.b16 %v4431, %v4424
    %v4698 = vpack.c.b16 %v4432, %v4425
    %v4699 = vpack.c.b16 %v4433, %v4426
    %v4700 = vpack.c.b16 %v4434, %v4427
    %v4701 = vpack.c.b16 %v4442, %v4435
    %v4702 = vpack.c.b16 %v4443, %v4436
    %v4703 = vpack.c.b16 %v4444, %v4437
    %v4704 = vpack.c.b16 %v4445, %v4438
    %v4705 = vpack.c.b16 %v4446, %v4439
    %v4706 = vpack.c.b16 %v4447, %v4440
    %v4707 = vpack.c.b16 %v4448, %v4441
    %v4708 = vpack.c.b16 %v4456, %v4449
    %v4709 = vpack.c.b16 %v4457, %v4450
    %v4710 = vpack.c.b16 %v4458, %v4451
    %v4711 = vpack.c.b16 %v4459, %v4452
    %v4712 = vpack.c.b16 %v4460, %v4453
    %v4713 = vpack.c.b16 %v4461, %v4454
    %v4714 = vpack.c.b16 %v4462, %v4455
    %v4715 = vpack.c.b16 %v4470, %v4463
    %v4716 = vpack.c.b16 %v4471, %v4464
    %v4717 = vpack.c.b16 %v4472, %v4465
    %v4718 = vpack.c.b16 %v4473, %v4466
    %v4719 = vpack.c.b16 %v4474, %v4467
    %v4720 = vpack.c.b16 %v4475, %v4468
    %v4721 = vpack.c.b16 %v4476, %v4469
    %v4722 = vpack.c.b16 %v4484, %v4477
    %v4723 = vpack.c.b16 %v4485, %v4478
    %v4724 = vpack.c.b16 %v4486, %v4479
    %v4725 = vpack.c.b16 %v4487, %v4480
    %v4726 = vpack.c.b16 %v4488, %v4481
    %v4727 = vpack.c.b16 %v4489, %v4482
    %v4728 = vpack.c.b16 %v4490, %v4483
    %v4729 = vpack.c.b16 %v4498, %v4491
    %v4730 = vpack.c.b16 %v4499, %v4492
    %v4731 = vpack.c.b16 %v4500, %v4493
    %v4732 = vpack.c.b16 %v4501, %v4494
    %v4733 = vpack.c.b16 %v4502, %v4495
    %v4734 = vpack.c.b16 %v4503, %v4496
    %v4735 = vpack.c.b16 %v4504, %v4497
    %v4736 = vpack.c.b16 %v4512, %v4505
    %v4737 = vpack.c.b16 %v4513, %v4506
    %v4738 = vpack.c.b16 %v4514, %v4507
    %v4739 = vpack.c.b16 %v4515, %v4508
    %v4740 = vpack.c.b16 %v4516, %v4509
    %v4741 = vpack.c.b16 %v4517, %v4510
    %v4742 = vpack.c.b16 %v4518, %v4511
    %4967 = vmatprep.subr.bf16.mxu0 %v4569
    %4968 = vmatpush1.bf16.msra.mxu0 %v4568
    %4969 = vmatprep.subr.bf16.mxu0 %v4562
    %4970 = vmatpush1.bf16.msra.mxu0 %v4561
    %4971 = vmatprep.subr.bf16.mxu0 %v4555
    %4972 = vmatpush1.bf16.msra.mxu0 %v4554
    %4973 = vmatprep.subr.bf16.mxu0 %v4548
    %4974 = vmatpush1.bf16.msra.mxu0 %v4547
    %4975 = vmatprep.subr.bf16.mxu0 %v4541
    %4976 = vmatpush1.bf16.msra.mxu0 %v4540
    %4977 = vmatprep.subr.bf16.mxu0 %v4534
    %4978 = vmatpush1.bf16.msra.mxu0 %v4533
    %4979 = vmatprep.subr.bf16.mxu0 %v4527
    %4980 = vmatpush1.bf16.msra.mxu0 %v4526
    %4981 = vmatprep.subr.bf16.mxu0 %v4520
    %4982 = vmatpush1.bf16.msra.mxu0 %v4519
    %4983 = vmatprep.subr.bf16.mxu0 %v4625
    %4984 = vmatpush2.bf16.msra.mxu0 %v4624
    %4985 = vmatprep.subr.bf16.mxu0 %v4618
    %4986 = vmatpush2.bf16.msra.mxu0 %v4617
    %4987 = vmatprep.subr.bf16.mxu0 %v4611
    %4988 = vmatpush2.bf16.msra.mxu0 %v4610
    %4989 = vmatprep.subr.bf16.mxu0 %v4604
    %4990 = vmatpush2.bf16.msra.mxu0 %v4603
    %4991 = vmatprep.subr.bf16.mxu0 %v4597
    %4992 = vmatpush2.bf16.msra.mxu0 %v4596
    %4993 = vmatprep.subr.bf16.mxu0 %v4590
    %4994 = vmatpush2.bf16.msra.mxu0 %v4589
    %4995 = vmatprep.subr.bf16.mxu0 %v4583
    %4996 = vmatpush2.bf16.msra.mxu0 %v4582
    %4997 = vmatprep.subr.bf16.mxu0 %v4576
    %4998 = vmatpush2.bf16.msra.mxu0 %v4575
    %4999 = vmatprep.mubr.bf16.mxu0 %v3519
    %5000 = vmatmul.mubr.bf16.gmra.mxu0 %v3518
    %v5001 = vpop.f32.mrf.mxu0
    %v5002 = vadd.f32 %v3783, %v5001
    %v5003 = vpop.f32.mrf.mxu0
    %v5004 = vadd.f32 %v3787, %v5003
    %v5005 = vpop.f32.mrf.mxu0
    %v5006 = vpop.f32.mrf.mxu0
    %5007 = vdwg.mxu0
    %5008 = vmatprep.subr.bf16.mxu0 %v4681
    %5009 = vmatpush1.bf16.msra.mxu0 %v4680
    %5010 = vmatprep.subr.bf16.mxu0 %v4674
    %5011 = vmatpush1.bf16.msra.mxu0 %v4673
    %5012 = vmatprep.subr.bf16.mxu0 %v4667
    %5013 = vmatpush1.bf16.msra.mxu0 %v4666
    %5014 = vmatprep.subr.bf16.mxu0 %v4660
    %5015 = vmatpush1.bf16.msra.mxu0 %v4659
    %5016 = vmatprep.subr.bf16.mxu0 %v4653
    %5017 = vmatpush1.bf16.msra.mxu0 %v4652
    %5018 = vmatprep.subr.bf16.mxu0 %v4646
    %5019 = vmatpush1.bf16.msra.mxu0 %v4645
    %5020 = vmatprep.subr.bf16.mxu0 %v4639
    %5021 = vmatpush1.bf16.msra.mxu0 %v4638
    %5022 = vmatprep.subr.bf16.mxu0 %v4632
    %5023 = vmatpush1.bf16.msra.mxu0 %v4631
    %5024 = vmatprep.subr.bf16.mxu0 %v4737
    %5025 = vmatpush2.bf16.msra.mxu0 %v4736
    %5026 = vmatprep.subr.bf16.mxu0 %v4730
    %5027 = vmatpush2.bf16.msra.mxu0 %v4729
    %5028 = vmatprep.subr.bf16.mxu0 %v4723
    %5029 = vmatpush2.bf16.msra.mxu0 %v4722
    %5030 = vmatprep.subr.bf16.mxu0 %v4716
    %5031 = vmatpush2.bf16.msra.mxu0 %v4715
    %5032 = vmatprep.subr.bf16.mxu0 %v4709
    %5033 = vmatpush2.bf16.msra.mxu0 %v4708
    %5034 = vmatprep.subr.bf16.mxu0 %v4702
    %5035 = vmatpush2.bf16.msra.mxu0 %v4701
    %5036 = vmatprep.subr.bf16.mxu0 %v4695
    %5037 = vmatpush2.bf16.msra.mxu0 %v4694
    %5038 = vmatprep.subr.bf16.mxu0 %v4688
    %5039 = vmatpush2.bf16.msra.mxu0 %v4687
    %5040 = vmatprep.mubr.bf16.mxu0 %v3521
    %5041 = vmatmul.mubr.bf16.gmra.mxu0 %v3520
    %v5042 = vpop.f32.mrf.mxu0
    %v5043 = vadd.f32 %v5002, %v5042
    %v5044 = vpop.f32.mrf.mxu0
    %v5045 = vadd.f32 %v5004, %v5044
    %v5046 = vpop.f32.mrf.mxu0
    %v5047 = vpop.f32.mrf.mxu0
    %5048 = vdwg.mxu0
    %5049 = vmatprep.subr.bf16.mxu0 %v4571
    %5050 = vmatpush1.bf16.msra.mxu0 %v4570
    %5051 = vmatprep.subr.bf16.mxu0 %v4564
    %5052 = vmatpush1.bf16.msra.mxu0 %v4563
    %5053 = vmatprep.subr.bf16.mxu0 %v4557
    %5054 = vmatpush1.bf16.msra.mxu0 %v4556
    %5055 = vmatprep.subr.bf16.mxu0 %v4550
    %5056 = vmatpush1.bf16.msra.mxu0 %v4549
    %5057 = vmatprep.subr.bf16.mxu0 %v4543
    %5058 = vmatpush1.bf16.msra.mxu0 %v4542
    %5059 = vmatprep.subr.bf16.mxu0 %v4536
    %5060 = vmatpush1.bf16.msra.mxu0 %v4535
    %5061 = vmatprep.subr.bf16.mxu0 %v4529
    %5062 = vmatpush1.bf16.msra.mxu0 %v4528
    %5063 = vmatprep.subr.bf16.mxu0 %v4522
    %5064 = vmatpush1.bf16.msra.mxu0 %v4521
    %5065 = vmatprep.subr.bf16.mxu0 %v4627
    %5066 = vmatpush2.bf16.msra.mxu0 %v4626
    %5067 = vmatprep.subr.bf16.mxu0 %v4620
    %5068 = vmatpush2.bf16.msra.mxu0 %v4619
    %5069 = vmatprep.subr.bf16.mxu0 %v4613
    %5070 = vmatpush2.bf16.msra.mxu0 %v4612
    %5071 = vmatprep.subr.bf16.mxu0 %v4606
    %5072 = vmatpush2.bf16.msra.mxu0 %v4605
    %5073 = vmatprep.subr.bf16.mxu0 %v4599
    %5074 = vmatpush2.bf16.msra.mxu0 %v4598
    %5075 = vmatprep.subr.bf16.mxu0 %v4592
    %5076 = vmatpush2.bf16.msra.mxu0 %v4591
    %5077 = vmatprep.subr.bf16.mxu0 %v4585
    %5078 = vmatpush2.bf16.msra.mxu0 %v4584
    %5079 = vmatprep.subr.bf16.mxu0 %v4578
    %5080 = vmatpush2.bf16.msra.mxu0 %v4577
    %5081 = vmatprep.mubr.bf16.mxu0 %v3519
    %5082 = vmatmul.mubr.bf16.gmra.mxu0 %v3518
    %v5083 = vpop.f32.mrf.mxu0
    %v5084 = vadd.f32 %v3791, %v5083
    %v5085 = vpop.f32.mrf.mxu0
    %v5086 = vadd.f32 %v3795, %v5085
    %v5087 = vpop.f32.mrf.mxu0
    %v5088 = vpop.f32.mrf.mxu0
    %5089 = vdwg.mxu0
    %5090 = vmatprep.subr.bf16.mxu0 %v4683
    %5091 = vmatpush1.bf16.msra.mxu0 %v4682
    %5092 = vmatprep.subr.bf16.mxu0 %v4676
    %5093 = vmatpush1.bf16.msra.mxu0 %v4675
    %5094 = vmatprep.subr.bf16.mxu0 %v4669
    %5095 = vmatpush1.bf16.msra.mxu0 %v4668
    %5096 = vmatprep.subr.bf16.mxu0 %v4662
    %5097 = vmatpush1.bf16.msra.mxu0 %v4661
    %5098 = vmatprep.subr.bf16.mxu0 %v4655
    %5099 = vmatpush1.bf16.msra.mxu0 %v4654
    %5100 = vmatprep.subr.bf16.mxu0 %v4648
    %5101 = vmatpush1.bf16.msra.mxu0 %v4647
    %5102 = vmatprep.subr.bf16.mxu0 %v4641
    %5103 = vmatpush1.bf16.msra.mxu0 %v4640
    %5104 = vmatprep.subr.bf16.mxu0 %v4634
    %5105 = vmatpush1.bf16.msra.mxu0 %v4633
    %5106 = vmatprep.subr.bf16.mxu0 %v4739
    %5107 = vmatpush2.bf16.msra.mxu0 %v4738
    %5108 = vmatprep.subr.bf16.mxu0 %v4732
    %5109 = vmatpush2.bf16.msra.mxu0 %v4731
    %5110 = vmatprep.subr.bf16.mxu0 %v4725
    %5111 = vmatpush2.bf16.msra.mxu0 %v4724
    %5112 = vmatprep.subr.bf16.mxu0 %v4718
    %5113 = vmatpush2.bf16.msra.mxu0 %v4717
    %5114 = vmatprep.subr.bf16.mxu0 %v4711
    %5115 = vmatpush2.bf16.msra.mxu0 %v4710
    %5116 = vmatprep.subr.bf16.mxu0 %v4704
    %5117 = vmatpush2.bf16.msra.mxu0 %v4703
    %5118 = vmatprep.subr.bf16.mxu0 %v4697
    %5119 = vmatpush2.bf16.msra.mxu0 %v4696
    %5120 = vmatprep.subr.bf16.mxu0 %v4690
    %5121 = vmatpush2.bf16.msra.mxu0 %v4689
    %5122 = vmatprep.mubr.bf16.mxu0 %v3521
    %5123 = vmatmul.mubr.bf16.gmra.mxu0 %v3520
    %v5124 = vpop.f32.mrf.mxu0
    %v5125 = vadd.f32 %v5084, %v5124
    %v5126 = vpop.f32.mrf.mxu0
    %v5127 = vadd.f32 %v5086, %v5126
    %v5128 = vpop.f32.mrf.mxu0
    %v5129 = vpop.f32.mrf.mxu0
    %5130 = vdwg.mxu0
    %5131 = vmatprep.subr.bf16.mxu0 %v4573
    %5132 = vmatpush1.bf16.msra.mxu0 %v4572
    %5133 = vmatprep.subr.bf16.mxu0 %v4566
    %5134 = vmatpush1.bf16.msra.mxu0 %v4565
    %5135 = vmatprep.subr.bf16.mxu0 %v4559
    %5136 = vmatpush1.bf16.msra.mxu0 %v4558
    %5137 = vmatprep.subr.bf16.mxu0 %v4552
    %5138 = vmatpush1.bf16.msra.mxu0 %v4551
    %5139 = vmatprep.subr.bf16.mxu0 %v4545
    %5140 = vmatpush1.bf16.msra.mxu0 %v4544
    %5141 = vmatprep.subr.bf16.mxu0 %v4538
    %5142 = vmatpush1.bf16.msra.mxu0 %v4537
    %5143 = vmatprep.subr.bf16.mxu0 %v4531
    %5144 = vmatpush1.bf16.msra.mxu0 %v4530
    %5145 = vmatprep.subr.bf16.mxu0 %v4524
    %5146 = vmatpush1.bf16.msra.mxu0 %v4523
    %5147 = vmatprep.subr.bf16.mxu0 %v4629
    %5148 = vmatpush2.bf16.msra.mxu0 %v4628
    %5149 = vmatprep.subr.bf16.mxu0 %v4622
    %5150 = vmatpush2.bf16.msra.mxu0 %v4621
    %5151 = vmatprep.subr.bf16.mxu0 %v4615
    %5152 = vmatpush2.bf16.msra.mxu0 %v4614
    %5153 = vmatprep.subr.bf16.mxu0 %v4608
    %5154 = vmatpush2.bf16.msra.mxu0 %v4607
    %5155 = vmatprep.subr.bf16.mxu0 %v4601
    %5156 = vmatpush2.bf16.msra.mxu0 %v4600
    %5157 = vmatprep.subr.bf16.mxu0 %v4594
    %5158 = vmatpush2.bf16.msra.mxu0 %v4593
    %5159 = vmatprep.subr.bf16.mxu0 %v4587
    %5160 = vmatpush2.bf16.msra.mxu0 %v4586
    %5161 = vmatprep.subr.bf16.mxu0 %v4580
    %5162 = vmatpush2.bf16.msra.mxu0 %v4579
    %5163 = vmatprep.mubr.bf16.mxu0 %v3519
    %5164 = vmatmul.mubr.bf16.gmra.mxu0 %v3518
    %v5165 = vpop.f32.mrf.mxu0
    %v5166 = vadd.f32 %v3799, %v5165
    %v5167 = vpop.f32.mrf.mxu0
    %v5168 = vadd.f32 %v3803, %v5167
    %v5169 = vpop.f32.mrf.mxu0
    %v5170 = vpop.f32.mrf.mxu0
    %5171 = vdwg.mxu0
    %5172 = vmatprep.subr.bf16.mxu0 %v4685
    %5173 = vmatpush1.bf16.msra.mxu0 %v4684
    %5174 = vmatprep.subr.bf16.mxu0 %v4678
    %5175 = vmatpush1.bf16.msra.mxu0 %v4677
    %5176 = vmatprep.subr.bf16.mxu0 %v4671
    %5177 = vmatpush1.bf16.msra.mxu0 %v4670
    %5178 = vmatprep.subr.bf16.mxu0 %v4664
    %5179 = vmatpush1.bf16.msra.mxu0 %v4663
    %5180 = vmatprep.subr.bf16.mxu0 %v4657
    %5181 = vmatpush1.bf16.msra.mxu0 %v4656
    %5182 = vmatprep.subr.bf16.mxu0 %v4650
    %5183 = vmatpush1.bf16.msra.mxu0 %v4649
    %5184 = vmatprep.subr.bf16.mxu0 %v4643
    %5185 = vmatpush1.bf16.msra.mxu0 %v4642
    %5186 = vmatprep.subr.bf16.mxu0 %v4636
    %5187 = vmatpush1.bf16.msra.mxu0 %v4635
    %5188 = vmatprep.subr.bf16.mxu0 %v4741
    %5189 = vmatpush2.bf16.msra.mxu0 %v4740
    %5190 = vmatprep.subr.bf16.mxu0 %v4734
    %5191 = vmatpush2.bf16.msra.mxu0 %v4733
    %5192 = vmatprep.subr.bf16.mxu0 %v4727
    %5193 = vmatpush2.bf16.msra.mxu0 %v4726
    %5194 = vmatprep.subr.bf16.mxu0 %v4720
    %5195 = vmatpush2.bf16.msra.mxu0 %v4719
    %5196 = vmatprep.subr.bf16.mxu0 %v4713
    %5197 = vmatpush2.bf16.msra.mxu0 %v4712
    %5198 = vmatprep.subr.bf16.mxu0 %v4706
    %5199 = vmatpush2.bf16.msra.mxu0 %v4705
    %5200 = vmatprep.subr.bf16.mxu0 %v4699
    %5201 = vmatpush2.bf16.msra.mxu0 %v4698
    %5202 = vmatprep.subr.bf16.mxu0 %v4692
    %5203 = vmatpush2.bf16.msra.mxu0 %v4691
    %5204 = vmatprep.mubr.bf16.mxu0 %v3521
    %5205 = vmatmul.mubr.bf16.gmra.mxu0 %v3520
    %v5206 = vpop.f32.mrf.mxu0
    %v5207 = vadd.f32 %v5166, %v5206
    %v5208 = vpop.f32.mrf.mxu0
    %v5209 = vadd.f32 %v5168, %v5208
    %v5210 = vpop.f32.mrf.mxu0
    %v5211 = vpop.f32.mrf.mxu0
    %5212 = vdwg.mxu0
    %5213 = vmatprep.subr.bf16.mxu0 0
    %5214 = vmatpush1.bf16.msra.mxu0 %v4574
    %5215 = vmatprep.subr.bf16.mxu0 0
    %5216 = vmatpush1.bf16.msra.mxu0 %v4567
    %5217 = vmatprep.subr.bf16.mxu0 0
    %5218 = vmatpush1.bf16.msra.mxu0 %v4560
    %5219 = vmatprep.subr.bf16.mxu0 0
    %5220 = vmatpush1.bf16.msra.mxu0 %v4553
    %5221 = vmatprep.subr.bf16.mxu0 0
    %5222 = vmatpush1.bf16.msra.mxu0 %v4546
    %5223 = vmatprep.subr.bf16.mxu0 0
    %5224 = vmatpush1.bf16.msra.mxu0 %v4539
    %5225 = vmatprep.subr.bf16.mxu0 0
    %5226 = vmatpush1.bf16.msra.mxu0 %v4532
    %5227 = vmatprep.subr.bf16.mxu0 0
    %5228 = vmatpush1.bf16.msra.mxu0 %v4525
    %5229 = vmatprep.subr.bf16.mxu0 0
    %5230 = vmatpush2.bf16.msra.mxu0 %v4630
    %5231 = vmatprep.subr.bf16.mxu0 0
    %5232 = vmatpush2.bf16.msra.mxu0 %v4623
    %5233 = vmatprep.subr.bf16.mxu0 0
    %5234 = vmatpush2.bf16.msra.mxu0 %v4616
    %5235 = vmatprep.subr.bf16.mxu0 0
    %5236 = vmatpush2.bf16.msra.mxu0 %v4609
    %5237 = vmatprep.subr.bf16.mxu0 0
    %5238 = vmatpush2.bf16.msra.mxu0 %v4602
    %5239 = vmatprep.subr.bf16.mxu0 0
    %5240 = vmatpush2.bf16.msra.mxu0 %v4595
    %5241 = vmatprep.subr.bf16.mxu0 0
    %5242 = vmatpush2.bf16.msra.mxu0 %v4588
    %5243 = vmatprep.subr.bf16.mxu0 0
    %5244 = vmatpush2.bf16.msra.mxu0 %v4581
    %5245 = vmatprep.mubr.bf16.mxu0 %v3519
    %5246 = vmatmul.mubr.bf16.gmra.mxu0 %v3518
    %v5247 = vpop.f32.mrf.mxu0
    %v5248 = vadd.f32 %v3807, %v5247
    %v5249 = vpop.f32.mrf.mxu0
    %v5250 = vpop.f32.mrf.mxu0
    %v5251 = vpop.f32.mrf.mxu0
    %5252 = vdwg.mxu0
    %5253 = vmatprep.subr.bf16.mxu0 0
    %5254 = vmatpush1.bf16.msra.mxu0 %v4686
    %5255 = vmatprep.subr.bf16.mxu0 0
    %5256 = vmatpush1.bf16.msra.mxu0 %v4679
    %5257 = vmatprep.subr.bf16.mxu0 0
    %5258 = vmatpush1.bf16.msra.mxu0 %v4672
    %5259 = vmatprep.subr.bf16.mxu0 0
    %5260 = vmatpush1.bf16.msra.mxu0 %v4665
    %5261 = vmatprep.subr.bf16.mxu0 0
    %5262 = vmatpush1.bf16.msra.mxu0 %v4658
    %5263 = vmatprep.subr.bf16.mxu0 0
    %5264 = vmatpush1.bf16.msra.mxu0 %v4651
    %5265 = vmatprep.subr.bf16.mxu0 0
    %5266 = vmatpush1.bf16.msra.mxu0 %v4644
    %5267 = vmatprep.subr.bf16.mxu0 0
    %5268 = vmatpush1.bf16.msra.mxu0 %v4637
    %5269 = vmatprep.subr.bf16.mxu0 0
    %5270 = vmatpush2.bf16.msra.mxu0 %v4742
    %5271 = vmatprep.subr.bf16.mxu0 0
    %5272 = vmatpush2.bf16.msra.mxu0 %v4735
    %5273 = vmatprep.subr.bf16.mxu0 0
    %5274 = vmatpush2.bf16.msra.mxu0 %v4728
    %5275 = vmatprep.subr.bf16.mxu0 0
    %5276 = vmatpush2.bf16.msra.mxu0 %v4721
    %5277 = vmatprep.subr.bf16.mxu0 0
    %5278 = vmatpush2.bf16.msra.mxu0 %v4714
    %5279 = vmatprep.subr.bf16.mxu0 0
    %5280 = vmatpush2.bf16.msra.mxu0 %v4707
    %5281 = vmatprep.subr.bf16.mxu0 0
    %5282 = vmatpush2.bf16.msra.mxu0 %v4700
    %5283 = vmatprep.subr.bf16.mxu0 0
    %5284 = vmatpush2.bf16.msra.mxu0 %v4693
    %5285 = vmatprep.mubr.bf16.mxu0 %v3521
    %5286 = vmatmul.mubr.bf16.gmra.mxu0 %v3520
    %v5287 = vpop.f32.mrf.mxu0
    %v5288 = vadd.f32 %v5248, %v5287
    %v5289 = vpop.f32.mrf.mxu0
    %v5290 = vpop.f32.mrf.mxu0
    %v5291 = vpop.f32.mrf.mxu0
    %5292 = vdwg.mxu0
    %v5293 = vmax.f32 %v5043, 0.0
    %v5294 = vmax.f32 %v5045, 0.0
    %v5295 = vmax.f32 %v5125, 0.0
    %v5296 = vmax.f32 %v5127, 0.0
    %v5297 = vmax.f32 %v5207, 0.0
    %v5298 = vmax.f32 %v5209, 0.0
    %v5299 = vmax.f32 %v5288, 0.0
    %5300 = vst [vmem:[#allocation29] sm:$0xff] %v5293
    %5301 = vst [vmem:[#allocation29 + $0x8] sm:$0xff] %v5294
    %5302 = vst [vmem:[#allocation29 + $0x10] sm:$0xff] %v5295
    %5303 = vst [vmem:[#allocation29 + $0x18] sm:$0xff] %v5296
    %5304 = vst [vmem:[#allocation29 + $0x20] sm:$0xff] %v5297
    %5305 = vst [vmem:[#allocation29 + $0x28] sm:$0xff] %v5298
    %5306 = vst [vmem:[#allocation29 + $0x30] sm:$0xff] %v5299
    // Predicated region
    $region158: #{tpu_custom_call.1} parent=1 // pred_check
      _
    $region159: #{tpu_custom_call.1} parent=1 // pred_check_branch
      %5308 = sbr.rel (0) target = $region161
    $region160: #{tpu_custom_call.1} parent=1 // pred_region
      %s5310 = ssub.s32 896, 896
      %5311 = vsyncadd [#allocation4], %s5310
      %s5313 = sshll.u32 [#allocation29], 4
      %s5314 = int_to_ptr.vmem [resolvable:$true] %s5313
      %5316 = dma.vmem_to_hbm [thread:$0]  %s5314, 896, %s22, [#allocation4]
    $region161: #{tpu_custom_call.1} parent=1 // pred_fallthru
      _
    // Predicated region
    $region162: #{tpu_custom_call.1} parent=1 // pred_check
      _
    $region163: #{tpu_custom_call.1} parent=1 // pred_check_branch
      %5318 = sbr.rel (0) target = $region165
    $region164: #{tpu_custom_call.1} parent=1 // pred_region
      %s5320 = ssub.s32 128, 128
      %5321 = vsyncadd [#allocation31], %s5320
      %s5323 = sshll.u32 [#allocation30], 4
      %s5324 = int_to_ptr.vmem [resolvable:$true] %s5323
      %5326 = dma.vmem_to_hbm [thread:$0]  %s5324, 128, %s23, [#allocation31]
    $region165: #{tpu_custom_call.1} parent=1 // pred_fallthru
      _
    // Predicated region
    $region166: #{tpu_custom_call.1} parent=1 // pred_check
      _
    $region167: #{tpu_custom_call.1} parent=1 // pred_check_branch
      %5328 = sbr.rel (0) target = $region169
    $region168: #{tpu_custom_call.1} parent=1 // pred_region
      %5329 = dma.done [#allocation4], 896
    $region169: #{tpu_custom_call.1} parent=1 // pred_fallthru
      _
    // Predicated region
    $region170: #{tpu_custom_call.1} parent=1 // pred_check
      _
    $region171: #{tpu_custom_call.1} parent=1 // pred_check_branch
      %5331 = sbr.rel (0) target = $region173
    $region172: #{tpu_custom_call.1} parent=1 // pred_region
      %5332 = dma.done [#allocation31], 128
    $region173: #{tpu_custom_call.1} parent=1 // pred_fallthru
      _
    %5333 = vsyncpa [#allocation3], 1
    %5334 = vsyncpa [#allocation6], 1
    %5335 = vsyncpa [#allocation9], 1
    %5336 = vsyncpa [#allocation12], 1
    %5337 = vsyncpa [#allocation15], 1
    %5338 = vsyncpa [#allocation18], 1
    %5339 = vsyncpa [#allocation21], 1
    %5340 = vsyncpa [#allocation24], 1
    %5341 = vsyncpa [#allocation27], 1
    %5342 = vsyncpa [#allocation4], 1
    %5343 = vsyncpa [#allocation31], 1

// kernel: tpu_custom_call.1
$region0: #{tpu_custom_call.1}
  #allocation0 [shape = 'u32[]', space=smem, size = 0x4, offset = 0x4, fixed_abs, tag = 'smem constant byte address 0x4 - core index']
  #allocation1 [shape = 'u32[144,128]{1,0:T(1,128)}', space=vmem, size = 0x12000, scoped, tag = 'internal scratch']
  %s0 = inlined_call_operand.vmem [shape: f32[8,784], index: 0, kind: input, shape index: {}]
  %s1 = inlined_call_operand.hbm [shape: f32[8,64], index: 1, kind: input, shape index: {}]
  %s2 = inlined_call_operand.hbm [shape: bf16[784,512], index: 2, kind: input, shape index: {}]
  %s3 = inlined_call_operand.hbm [shape: f32[1,512], index: 3, kind: input, shape index: {}]
  %s4 = inlined_call_operand.hbm [shape: bf16[512,256], index: 4, kind: input, shape index: {}]
  %s5 = inlined_call_operand.hbm [shape: f32[1,256], index: 5, kind: input, shape index: {}]
  %s6 = inlined_call_operand.hbm [shape: bf16[256,128], index: 6, kind: input, shape index: {}]
  %s7 = inlined_call_operand.hbm [shape: f32[1,128], index: 7, kind: input, shape index: {}]
  %s8 = inlined_call_operand.vmem [shape: bf16[128,64], index: 8, kind: input, shape index: {}]
  %s9 = inlined_call_operand.hbm [shape: f32[1,64], index: 9, kind: input, shape index: {}]
  %s10 = inlined_call_operand.vmem [shape: bf16[64,128], index: 10, kind: input, shape index: {}]
  %s11 = inlined_call_operand.hbm [shape: f32[1,128], index: 11, kind: input, shape index: {}]
  %s12 = inlined_call_operand.hbm [shape: bf16[64,64], index: 12, kind: input, shape index: {}]
  %s13 = inlined_call_operand.hbm [shape: f32[1,64], index: 13, kind: input, shape index: {}]
  %s14 = inlined_call_operand.vmem [shape: bf16[64,128], index: 14, kind: input, shape index: {}]
  %s15 = inlined_call_operand.hbm [shape: f32[1,128], index: 15, kind: input, shape index: {}]
  %s16 = inlined_call_operand.hbm [shape: bf16[128,256], index: 16, kind: input, shape index: {}]
  %s17 = inlined_call_operand.hbm [shape: f32[1,256], index: 17, kind: input, shape index: {}]
  %s18 = inlined_call_operand.hbm [shape: bf16[256,512], index: 18, kind: input, shape index: {}]
  %s19 = inlined_call_operand.hbm [shape: f32[1,512], index: 19, kind: input, shape index: {}]
  %s20 = inlined_call_operand.hbm [shape: bf16[512,896], index: 20, kind: input, shape index: {}]
  %s21 = inlined_call_operand.vmem [shape: f32[1,896], index: 21, kind: input, shape index: {}]
  %s22 = inlined_call_operand.hbm [shape: f32[8,896], index: 22, kind: output, shape index: {0}]
  %s23 = inlined_call_operand.hbm [shape: f32[8,128], index: 23, kind: output, shape index: {1}]
  %24 = xla_tuple %s22, %s23
  %s25 = sld [smem:[#allocation0]]
  $region174: #{tpu_custom_call.1} parent=0
    _
  %s27 = ssub.s32 1, %s25
  %s28 = scalar_select 0, %s27, %s25
  $region1: #{tpu_custom_call.1} parent=0
    #allocation2 [shape = 'u8[4096]{0}', space=vmem, size = 0x1000, scoped, tag = 'input window, operand 1, single buffered']
    #allocation3 [shape = 's32[1]{0}', space=sflag, size = 0x4, scoped, tag = 'scoped memory for tpu_custom_call.1']
    #allocation4 [shape = 's32[1]{0}', space=sflag, size = 0x4, scoped, tag = 'scoped memory for tpu_custom_call.1']
    #allocation5 [shape = 'u8[802816]{0}', space=vmem, size = 0xc4000, scoped, tag = 'input window, operand 2, single buffered']
    #allocation6 [shape = 's32[1]{0}', space=sflag, size = 0x4, scoped, tag = 'scoped memory for tpu_custom_call.1']
    #allocation7 [shape = 'u8[2048]{0}', space=vmem, size = 0x800, scoped, tag = 'input window, operand 3, single buffered']
    #allocation8 [shape = 'u8[262144]{0}', space=vmem, size = 0x40000, scoped, tag = 'input window, operand 4, single buffered']
    #allocation9 [shape = 's32[1]{0}', space=sflag, size = 0x4, scoped, tag = 'scoped memory for tpu_custom_call.1']
    #allocation10 [shape = 'u8[1024]{0}', space=vmem, size = 0x400, scoped, tag = 'input window, operand 5, single buffered']
    #allocation11 [shape = 'u8[65536]{0}', space=vmem, size = 0x10000, scoped, tag = 'input window, operand 6, single buffered']
    #allocation12 [shape = 's32[1]{0}', space=sflag, size = 0x4, scoped, tag = 'scoped memory for tpu_custom_call.1']
    #allocation13 [shape = 'u8[512]{0}', space=vmem, size = 0x400, scoped, tag = 'input window, operand 7, single buffered']
    #allocation14 [shape = 'u8[512]{0}', space=vmem, size = 0x400, scoped, tag = 'input window, operand 9, single buffered']
    #allocation15 [shape = 's32[1]{0}', space=sflag, size = 0x4, scoped, tag = 'scoped memory for tpu_custom_call.1']
    #allocation16 [shape = 'u8[512]{0}', space=vmem, size = 0x400, scoped, tag = 'input window, operand 11, single buffered']
    #allocation17 [shape = 'u8[16384]{0}', space=vmem, size = 0x4000, scoped, tag = 'input window, operand 12, single buffered']
    #allocation18 [shape = 's32[1]{0}', space=sflag, size = 0x4, scoped, tag = 'scoped memory for tpu_custom_call.1']
    #allocation19 [shape = 'u8[512]{0}', space=vmem, size = 0x400, scoped, tag = 'input window, operand 13, single buffered']
    #allocation20 [shape = 'u8[512]{0}', space=vmem, size = 0x400, scoped, tag = 'input window, operand 15, single buffered']
    #allocation21 [shape = 's32[1]{0}', space=sflag, size = 0x4, scoped, tag = 'scoped memory for tpu_custom_call.1']
    #allocation22 [shape = 'u8[65536]{0}', space=vmem, size = 0x10000, scoped, tag = 'input window, operand 16, single buffered']
    #allocation23 [shape = 'u8[1024]{0}', space=vmem, size = 0x400, scoped, tag = 'input window, operand 17, single buffered']
    #allocation24 [shape = 's32[1]{0}', space=sflag, size = 0x4, scoped, tag = 'scoped memory for tpu_custom_call.1']
    #allocation25 [shape = 'u8[262144]{0}', space=vmem, size = 0x40000, scoped, tag = 'input window, operand 18, single buffered']
    #allocation26 [shape = 'u8[2048]{0}', space=vmem, size = 0x800, scoped, tag = 'input window, operand 19, single buffered']
    #allocation27 [shape = 's32[1]{0}', space=sflag, size = 0x4, scoped, tag = 'scoped memory for tpu_custom_call.1']
    #allocation28 [shape = 'u8[917504]{0}', space=vmem, size = 0xe0000, scoped, tag = 'input window, operand 20, single buffered']
    #allocation29 [shape = 'u8[28672]{0}', space=vmem, size = 0x7000, scoped, tag = 'output window, operand 0, single buffered']
    #allocation30 [shape = 'u8[4096]{0}', space=vmem, size = 0x1000, scoped, tag = 'output window, operand 1, single buffered']
    #allocation31 [shape = 's32[1]{0}', space=sflag, size = 0x4, scoped, tag = 'scoped memory for tpu_custom_call.1']
    %29 = vsyncpa [#allocation3], 0
    %30 = vsyncpa [#allocation6], 0
    %31 = vsyncpa [#allocation9], 0
    %32 = vsyncpa [#allocation12], 0
    %33 = vsyncpa [#allocation15], 0
    %34 = vsyncpa [#allocation18], 0
    %35 = vsyncpa [#allocation21], 0
    %36 = vsyncpa [#allocation24], 0
    %37 = vsyncpa [#allocation27], 0
    %38 = vsyncpa [#allocation4], 0
    %39 = vsyncpa [#allocation31], 0
    // Predicated region
    $region2: #{tpu_custom_call.1} parent=1 // pred_check
      _
    $region3: #{tpu_custom_call.1} parent=1 // pred_check_branch
      %41 = sbr.rel (0) target = $region5
    $region4: #{tpu_custom_call.1} parent=1 // pred_region
      _
    $region5: #{tpu_custom_call.1} parent=1 // pred_fallthru
      _
    // Predicated region
    $region6: #{tpu_custom_call.1} parent=1 // pred_check
      _
    $region7: #{tpu_custom_call.1} parent=1 // pred_check_branch
      %43 = sbr.rel (0) target = $region9
    $region8: #{tpu_custom_call.1} parent=1 // pred_region
      %s45 = ssub.s32 128, 128
      %46 = vsyncadd [#allocation3], %s45
      %s48 = sshll.u32 [#allocation2], 4
      %s49 = int_to_ptr.vmem [resolvable:$true] %s48
      %51 = dma.hbm_to_vmem [thread:$0]  %s1, 128, %s49, [#allocation3]
    $region9: #{tpu_custom_call.1} parent=1 // pred_fallthru
      _
    // Predicated region
    $region10: #{tpu_custom_call.1} parent=1 // pred_check
      _
    $region11: #{tpu_custom_call.1} parent=1 // pred_check_branch
      %53 = sbr.rel (0) target = $region13
    $region12: #{tpu_custom_call.1} parent=1 // pred_region
      %s55 = ssub.s32 25088, 25088
      %56 = vsyncadd [#allocation6], %s55
      %s57 = sshll.u32 [#allocation5], 4
      %s58 = int_to_ptr.vmem [resolvable:$true] %s57
      %63 = dma.hbm_to_vmem [thread:$0]  %s2, 25088, %s58, [#allocation6], 256, 256, 16
    $region13: #{tpu_custom_call.1} parent=1 // pred_fallthru
      _
    // Predicated region
    $region14: #{tpu_custom_call.1} parent=1 // pred_check
      _
    $region15: #{tpu_custom_call.1} parent=1 // pred_check_branch
      %65 = sbr.rel (0) target = $region17
    $region16: #{tpu_custom_call.1} parent=1 // pred_region
      %s67 = ssub.s32 64, 64
      %68 = vsyncadd [#allocation6], %s67
      %s70 = sshll.u32 [#allocation7], 4
      %s71 = int_to_ptr.vmem [resolvable:$true] %s70
      %73 = dma.hbm_to_vmem [thread:$0]  %s3, 64, %s71, [#allocation6]
    $region17: #{tpu_custom_call.1} parent=1 // pred_fallthru
      _
    // Predicated region
    $region18: #{tpu_custom_call.1} parent=1 // pred_check
      _
    $region19: #{tpu_custom_call.1} parent=1 // pred_check_branch
      %75 = sbr.rel (0) target = $region21
    $region20: #{tpu_custom_call.1} parent=1 // pred_region
      %s77 = ssub.s32 8192, 8192
      %78 = vsyncadd [#allocation9], %s77
      %s79 = sshll.u32 [#allocation8], 4
      %s80 = int_to_ptr.vmem [resolvable:$true] %s79
      %85 = dma.hbm_to_vmem [thread:$0]  %s4, 8192, %s80, [#allocation9], 128, 128, 8
    $region21: #{tpu_custom_call.1} parent=1 // pred_fallthru
      _
    // Predicated region
    $region22: #{tpu_custom_call.1} parent=1 // pred_check
      _
    $region23: #{tpu_custom_call.1} parent=1 // pred_check_branch
      %87 = sbr.rel (0) target = $region25
    $region24: #{tpu_custom_call.1} parent=1 // pred_region
      %s89 = ssub.s32 32, 32
      %90 = vsyncadd [#allocation9], %s89
      %s92 = sshll.u32 [#allocation10], 4
      %s93 = int_to_ptr.vmem [resolvable:$true] %s92
      %95 = dma.hbm_to_vmem [thread:$0]  %s5, 32, %s93, [#allocation9]
    $region25: #{tpu_custom_call.1} parent=1 // pred_fallthru
      _
    // Predicated region
    $region26: #{tpu_custom_call.1} parent=1 // pred_check
      _
    $region27: #{tpu_custom_call.1} parent=1 // pred_check_branch
      %97 = sbr.rel (0) target = $region29
    $region28: #{tpu_custom_call.1} parent=1 // pred_region
      %s99 = ssub.s32 2048, 2048
      %100 = vsyncadd [#allocation12], %s99
      %s101 = sshll.u32 [#allocation11], 4
      %s102 = int_to_ptr.vmem [resolvable:$true] %s101
      %107 = dma.hbm_to_vmem [thread:$0]  %s6, 2048, %s102, [#allocation12], 64, 64, 4
    $region29: #{tpu_custom_call.1} parent=1 // pred_fallthru
      _
    // Predicated region
    $region30: #{tpu_custom_call.1} parent=1 // pred_check
      _
    $region31: #{tpu_custom_call.1} parent=1 // pred_check_branch
      %109 = sbr.rel (0) target = $region33
    $region32: #{tpu_custom_call.1} parent=1 // pred_region
      %s111 = ssub.s32 16, 16
      %112 = vsyncadd [#allocation12], %s111
      %s114 = sshll.u32 [#allocation13], 4
      %s115 = int_to_ptr.vmem [resolvable:$true] %s114
      %117 = dma.hbm_to_vmem [thread:$0]  %s7, 16, %s115, [#allocation12]
    $region33: #{tpu_custom_call.1} parent=1 // pred_fallthru
      _
    // Predicated region
    $region34: #{tpu_custom_call.1} parent=1 // pred_check
      _
    $region35: #{tpu_custom_call.1} parent=1 // pred_check_branch
      %119 = sbr.rel (0) target = $region37
    $region36: #{tpu_custom_call.1} parent=1 // pred_region
      _
    $region37: #{tpu_custom_call.1} parent=1 // pred_fallthru
      _
    // Predicated region
    $region38: #{tpu_custom_call.1} parent=1 // pred_check
      _
    $region39: #{tpu_custom_call.1} parent=1 // pred_check_branch
      %121 = sbr.rel (0) target = $region41
    $region40: #{tpu_custom_call.1} parent=1 // pred_region
      %s123 = ssub.s32 16, 16
      %124 = vsyncadd [#allocation15], %s123
      %s126 = sshll.u32 [#allocation14], 4
      %s127 = int_to_ptr.vmem [resolvable:$true] %s126
      %129 = dma.hbm_to_vmem [thread:$0]  %s9, 16, %s127, [#allocation15]
    $region41: #{tpu_custom_call.1} parent=1 // pred_fallthru
      _
    // Predicated region
    $region42: #{tpu_custom_call.1} parent=1 // pred_check
      _
    $region43: #{tpu_custom_call.1} parent=1 // pred_check_branch
      %131 = sbr.rel (0) target = $region45
    $region44: #{tpu_custom_call.1} parent=1 // pred_region
      _
    $region45: #{tpu_custom_call.1} parent=1 // pred_fallthru
      _
    // Predicated region
    $region46: #{tpu_custom_call.1} parent=1 // pred_check
      _
    $region47: #{tpu_custom_call.1} parent=1 // pred_check_branch
      %133 = sbr.rel (0) target = $region49
    $region48: #{tpu_custom_call.1} parent=1 // pred_region
      %s135 = ssub.s32 16, 16
      %136 = vsyncadd [#allocation15], %s135
      %s138 = sshll.u32 [#allocation16], 4
      %s139 = int_to_ptr.vmem [resolvable:$true] %s138
      %141 = dma.hbm_to_vmem [thread:$0]  %s11, 16, %s139, [#allocation15]
    $region49: #{tpu_custom_call.1} parent=1 // pred_fallthru
      _
    // Predicated region
    $region50: #{tpu_custom_call.1} parent=1 // pred_check
      _
    $region51: #{tpu_custom_call.1} parent=1 // pred_check_branch
      %143 = sbr.rel (0) target = $region53
    $region52: #{tpu_custom_call.1} parent=1 // pred_region
      %s145 = ssub.s32 512, 512
      %146 = vsyncadd [#allocation18], %s145
      %s147 = sshll.u32 [#allocation17], 4
      %s148 = int_to_ptr.vmem [resolvable:$true] %s147
      %153 = dma.hbm_to_vmem [thread:$0]  %s12, 512, %s148, [#allocation18], 64, 64, 4
    $region53: #{tpu_custom_call.1} parent=1 // pred_fallthru
      _
    // Predicated region
    $region54: #{tpu_custom_call.1} parent=1 // pred_check
      _
    $region55: #{tpu_custom_call.1} parent=1 // pred_check_branch
      %155 = sbr.rel (0) target = $region57
    $region56: #{tpu_custom_call.1} parent=1 // pred_region
      %s157 = ssub.s32 16, 16
      %158 = vsyncadd [#allocation18], %s157
      %s160 = sshll.u32 [#allocation19], 4
      %s161 = int_to_ptr.vmem [resolvable:$true] %s160
      %163 = dma.hbm_to_vmem [thread:$0]  %s13, 16, %s161, [#allocation18]
    $region57: #{tpu_custom_call.1} parent=1 // pred_fallthru
      _
    // Predicated region
    $region58: #{tpu_custom_call.1} parent=1 // pred_check
      _
    $region59: #{tpu_custom_call.1} parent=1 // pred_check_branch
      %165 = sbr.rel (0) target = $region61
    $region60: #{tpu_custom_call.1} parent=1 // pred_region
      _
    $region61: #{tpu_custom_call.1} parent=1 // pred_fallthru
      _
    // Predicated region
    $region62: #{tpu_custom_call.1} parent=1 // pred_check
      _
    $region63: #{tpu_custom_call.1} parent=1 // pred_check_branch
      %167 = sbr.rel (0) target = $region65
    $region64: #{tpu_custom_call.1} parent=1 // pred_region
      %s169 = ssub.s32 16, 16
      %170 = vsyncadd [#allocation21], %s169
      %s172 = sshll.u32 [#allocation20], 4
      %s173 = int_to_ptr.vmem [resolvable:$true] %s172
      %175 = dma.hbm_to_vmem [thread:$0]  %s15, 16, %s173, [#allocation21]
    $region65: #{tpu_custom_call.1} parent=1 // pred_fallthru
      _
    // Predicated region
    $region66: #{tpu_custom_call.1} parent=1 // pred_check
      _
    $region67: #{tpu_custom_call.1} parent=1 // pred_check_branch
      %177 = sbr.rel (0) target = $region69
    $region68: #{tpu_custom_call.1} parent=1 // pred_region
      %s179 = ssub.s32 2048, 2048
      %180 = vsyncadd [#allocation21], %s179
      %s181 = sshll.u32 [#allocation22], 4
      %s182 = int_to_ptr.vmem [resolvable:$true] %s181
      %187 = dma.hbm_to_vmem [thread:$0]  %s16, 2048, %s182, [#allocation21], 128, 128, 8
    $region69: #{tpu_custom_call.1} parent=1 // pred_fallthru
      _
    // Predicated region
    $region70: #{tpu_custom_call.1} parent=1 // pred_check
      _
    $region71: #{tpu_custom_call.1} parent=1 // pred_check_branch
      %189 = sbr.rel (0) target = $region73
    $region72: #{tpu_custom_call.1} parent=1 // pred_region
      %s191 = ssub.s32 32, 32
      %192 = vsyncadd [#allocation24], %s191
      %s194 = sshll.u32 [#allocation23], 4
      %s195 = int_to_ptr.vmem [resolvable:$true] %s194
      %197 = dma.hbm_to_vmem [thread:$0]  %s17, 32, %s195, [#allocation24]
    $region73: #{tpu_custom_call.1} parent=1 // pred_fallthru
      _
    // Predicated region
    $region74: #{tpu_custom_call.1} parent=1 // pred_check
      _
    $region75: #{tpu_custom_call.1} parent=1 // pred_check_branch
      %199 = sbr.rel (0) target = $region77
    $region76: #{tpu_custom_call.1} parent=1 // pred_region
      %s201 = ssub.s32 8192, 8192
      %202 = vsyncadd [#allocation24], %s201
      %s203 = sshll.u32 [#allocation25], 4
      %s204 = int_to_ptr.vmem [resolvable:$true] %s203
      %209 = dma.hbm_to_vmem [thread:$0]  %s18, 8192, %s204, [#allocation24], 256, 256, 16
    $region77: #{tpu_custom_call.1} parent=1 // pred_fallthru
      _
    // Predicated region
    $region78: #{tpu_custom_call.1} parent=1 // pred_check
      _
    $region79: #{tpu_custom_call.1} parent=1 // pred_check_branch
      %211 = sbr.rel (0) target = $region81
    $region80: #{tpu_custom_call.1} parent=1 // pred_region
      %s213 = ssub.s32 64, 64
      %214 = vsyncadd [#allocation27], %s213
      %s216 = sshll.u32 [#allocation26], 4
      %s217 = int_to_ptr.vmem [resolvable:$true] %s216
      %219 = dma.hbm_to_vmem [thread:$0]  %s19, 64, %s217, [#allocation27]
    $region81: #{tpu_custom_call.1} parent=1 // pred_fallthru
      _
    // Predicated region
    $region82: #{tpu_custom_call.1} parent=1 // pred_check
      _
    $region83: #{tpu_custom_call.1} parent=1 // pred_check_branch
      %221 = sbr.rel (0) target = $region85
    $region84: #{tpu_custom_call.1} parent=1 // pred_region
      %s223 = ssub.s32 28672, 28672
      %224 = vsyncadd [#allocation27], %s223
      %s225 = sshll.u32 [#allocation28], 4
      %s226 = int_to_ptr.vmem [resolvable:$true] %s225
      %231 = dma.hbm_to_vmem [thread:$0]  %s20, 28672, %s226, [#allocation27], 448, 448, 28
    $region85: #{tpu_custom_call.1} parent=1 // pred_fallthru
      _
    // Predicated region
    $region86: #{tpu_custom_call.1} parent=1 // pred_check
      _
    $region87: #{tpu_custom_call.1} parent=1 // pred_check_branch
      %233 = sbr.rel (0) target = $region89
    $region88: #{tpu_custom_call.1} parent=1 // pred_region
      _
    $region89: #{tpu_custom_call.1} parent=1 // pred_fallthru
      _
    // Predicated region
    $region90: #{tpu_custom_call.1} parent=1 // pred_check
      _
    $region91: #{tpu_custom_call.1} parent=1 // pred_check_branch
      %235 = sbr.rel (0) target = $region93
    $region92: #{tpu_custom_call.1} parent=1 // pred_region
      %236 = dma.done [#allocation3], 128
    $region93: #{tpu_custom_call.1} parent=1 // pred_fallthru
      _
    // Predicated region
    $region94: #{tpu_custom_call.1} parent=1 // pred_check
      _
    $region95: #{tpu_custom_call.1} parent=1 // pred_check_branch
      %238 = sbr.rel (0) target = $region97
    $region96: #{tpu_custom_call.1} parent=1 // pred_region
      %239 = dma.done [#allocation6], 25088
    $region97: #{tpu_custom_call.1} parent=1 // pred_fallthru
      _
    // Predicated region
    $region98: #{tpu_custom_call.1} parent=1 // pred_check
      _
    $region99: #{tpu_custom_call.1} parent=1 // pred_check_branch
      %241 = sbr.rel (0) target = $region101
    $region100: #{tpu_custom_call.1} parent=1 // pred_region
      %242 = dma.done [#allocation6], 64
    $region101: #{tpu_custom_call.1} parent=1 // pred_fallthru
      _
    // Predicated region
    $region102: #{tpu_custom_call.1} parent=1 // pred_check
      _
    $region103: #{tpu_custom_call.1} parent=1 // pred_check_branch
      %244 = sbr.rel (0) target = $region105
    $region104: #{tpu_custom_call.1} parent=1 // pred_region
      %245 = dma.done [#allocation9], 8192
    $region105: #{tpu_custom_call.1} parent=1 // pred_fallthru
      _
    // Predicated region
    $region106: #{tpu_custom_call.1} parent=1 // pred_check
      _
    $region107: #{tpu_custom_call.1} parent=1 // pred_check_branch
      %247 = sbr.rel (0) target = $region109
    $region108: #{tpu_custom_call.1} parent=1 // pred_region
      %248 = dma.done [#allocation9], 32
    $region109: #{tpu_custom_call.1} parent=1 // pred_fallthru
      _
    // Predicated region
    $region110: #{tpu_custom_call.1} parent=1 // pred_check
      _
    $region111: #{tpu_custom_call.1} parent=1 // pred_check_branch
      %250 = sbr.rel (0) target = $region113
    $region112: #{tpu_custom_call.1} parent=1 // pred_region
      %251 = dma.done [#allocation12], 2048
    $region113: #{tpu_custom_call.1} parent=1 // pred_fallthru
      _
    // Predicated region
    $region114: #{tpu_custom_call.1} parent=1 // pred_check
      _
    $region115: #{tpu_custom_call.1} parent=1 // pred_check_branch
      %253 = sbr.rel (0) target = $region117
    $region116: #{tpu_custom_call.1} parent=1 // pred_region
      %254 = dma.done [#allocation12], 16
    $region117: #{tpu_custom_call.1} parent=1 // pred_fallthru
      _
    // Predicated region
    $region118: #{tpu_custom_call.1} parent=1 // pred_check
      _
    $region119: #{tpu_custom_call.1} parent=1 // pred_check_branch
      %256 = sbr.rel (0) target = $region121
    $region120: #{tpu_custom_call.1} parent=1 // pred_region
      %257 = dma.done [#allocation15], 16
    $region121: #{tpu_custom_call.1} parent=1 // pred_fallthru
      _
    // Predicated region
    $region122: #{tpu_custom_call.1} parent=1 // pred_check
      _
    $region123: #{tpu_custom_call.1} parent=1 // pred_check_branch
      %259 = sbr.rel (0) target = $region125
    $region124: #{tpu_custom_call.1} parent=1 // pred_region
      %260 = dma.done [#allocation15], 16
    $region125: #{tpu_custom_call.1} parent=1 // pred_fallthru
      _
    // Predicated region
    $region126: #{tpu_custom_call.1} parent=1 // pred_check
      _
    $region127: #{tpu_custom_call.1} parent=1 // pred_check_branch
      %262 = sbr.rel (0) target = $region129
    $region128: #{tpu_custom_call.1} parent=1 // pred_region
      %263 = dma.done [#allocation18], 512
    $region129: #{tpu_custom_call.1} parent=1 // pred_fallthru
      _
    // Predicated region
    $region130: #{tpu_custom_call.1} parent=1 // pred_check
      _
    $region131: #{tpu_custom_call.1} parent=1 // pred_check_branch
      %265 = sbr.rel (0) target = $region133
    $region132: #{tpu_custom_call.1} parent=1 // pred_region
      %266 = dma.done [#allocation18], 16
    $region133: #{tpu_custom_call.1} parent=1 // pred_fallthru
      _
    // Predicated region
    $region134: #{tpu_custom_call.1} parent=1 // pred_check
      _
    $region135: #{tpu_custom_call.1} parent=1 // pred_check_branch
      %268 = sbr.rel (0) target = $region137
    $region136: #{tpu_custom_call.1} parent=1 // pred_region
      %269 = dma.done [#allocation21], 16
    $region137: #{tpu_custom_call.1} parent=1 // pred_fallthru
      _
    // Predicated region
    $region138: #{tpu_custom_call.1} parent=1 // pred_check
      _
    $region139: #{tpu_custom_call.1} parent=1 // pred_check_branch
      %271 = sbr.rel (0) target = $region141
    $region140: #{tpu_custom_call.1} parent=1 // pred_region
      %272 = dma.done [#allocation21], 2048
    $region141: #{tpu_custom_call.1} parent=1 // pred_fallthru
      _
    // Predicated region
    $region142: #{tpu_custom_call.1} parent=1 // pred_check
      _
    $region143: #{tpu_custom_call.1} parent=1 // pred_check_branch
      %274 = sbr.rel (0) target = $region145
    $region144: #{tpu_custom_call.1} parent=1 // pred_region
      %275 = dma.done [#allocation24], 32
    $region145: #{tpu_custom_call.1} parent=1 // pred_fallthru
      _
    // Predicated region
    $region146: #{tpu_custom_call.1} parent=1 // pred_check
      _
    $region147: #{tpu_custom_call.1} parent=1 // pred_check_branch
      %277 = sbr.rel (0) target = $region149
    $region148: #{tpu_custom_call.1} parent=1 // pred_region
      %278 = dma.done [#allocation24], 8192
    $region149: #{tpu_custom_call.1} parent=1 // pred_fallthru
      _
    // Predicated region
    $region150: #{tpu_custom_call.1} parent=1 // pred_check
      _
    $region151: #{tpu_custom_call.1} parent=1 // pred_check_branch
      %280 = sbr.rel (0) target = $region153
    $region152: #{tpu_custom_call.1} parent=1 // pred_region
      %281 = dma.done [#allocation27], 64
    $region153: #{tpu_custom_call.1} parent=1 // pred_fallthru
      _
    // Predicated region
    $region154: #{tpu_custom_call.1} parent=1 // pred_check
      _
    $region155: #{tpu_custom_call.1} parent=1 // pred_check_branch
      %283 = sbr.rel (0) target = $region157
    $region156: #{tpu_custom_call.1} parent=1 // pred_region
      %284 = dma.done [#allocation27], 28672
    $region157: #{tpu_custom_call.1} parent=1 // pred_fallthru
      _
    %v286 = vld [vmem:[%s0] sm:$0xff]
    %v287 = vld [vmem:[%s0 + $0x8] sm:$0xff]
    %v288 = vld [vmem:[%s0 + $0x10] sm:$0xff]
    %v289 = vld [vmem:[%s0 + $0x18] sm:$0xff]
    %v290 = vld [vmem:[%s0 + $0x20] sm:$0xff]
    %v291 = vld [vmem:[%s0 + $0x28] sm:$0xff]
    %v292 = vld [vmem:[%s0 + $0x30] sm:$0xff]
    %v293 = vpack.c.bf16 %v286, %v286
    %v294 = vpack.c.bf16 %v287, %v287
    %v295 = vpack.c.bf16 %v288, %v288
    %v296 = vpack.c.bf16 %v289, %v289
    %v297 = vpack.c.bf16 %v290, %v290
    %v298 = vpack.c.bf16 %v291, %v291
    %v299 = vpack.c.bf16 %v292, %v292
    %v300 = vld [vmem:[#allocation5] sm:$0xff]
    %v301 = vld [vmem:[#allocation5 + $0x8] sm:$0xff]
    %v302 = vld [vmem:[#allocation5 + $0x10] sm:$0xff]
    %v303 = vld [vmem:[#allocation5 + $0x18] sm:$0xff]
    %v304 = vld [vmem:[#allocation5 + $0x20] sm:$0xff]
    %v305 = vld [vmem:[#allocation5 + $0x28] sm:$0xff]
    %v306 = vld [vmem:[#allocation5 + $0x30] sm:$0xff]
    %v307 = vld [vmem:[#allocation5 + $0x38] sm:$0xff]
    %v308 = vld [vmem:[#allocation5 + $0x40] sm:$0xff]
    %v309 = vld [vmem:[#allocation5 + $0x48] sm:$0xff]
    %v310 = vld [vmem:[#allocation5 + $0x50] sm:$0xff]
    %v311 = vld [vmem:[#allocation5 + $0x58] sm:$0xff]
    %v312 = vld [vmem:[#allocation5 + $0x60] sm:$0xff]
    %v313 = vld [vmem:[#allocation5 + $0x68] sm:$0xff]
    %v314 = vld [vmem:[#allocation5 + $0x70] sm:$0xff]
    %v315 = vld [vmem:[#allocation5 + $0x78] sm:$0xff]
    %v316 = vld [vmem:[#allocation5 + $0x80] sm:$0xff]
    %v317 = vld [vmem:[#allocation5 + $0x88] sm:$0xff]
    %v318 = vld [vmem:[#allocation5 + $0x90] sm:$0xff]
    %v319 = vld [vmem:[#allocation5 + $0x98] sm:$0xff]
    %v320 = vld [vmem:[#allocation5 + $0xa0] sm:$0xff]
    %v321 = vld [vmem:[#allocation5 + $0xa8] sm:$0xff]
    %v322 = vld [vmem:[#allocation5 + $0xb0] sm:$0xff]
    %v323 = vld [vmem:[#allocation5 + $0xb8] sm:$0xff]
    %v324 = vld [vmem:[#allocation5 + $0xc0] sm:$0xff]
    %v325 = vld [vmem:[#allocation5 + $0xc8] sm:$0xff]
    %v326 = vld [vmem:[#allocation5 + $0xd0] sm:$0xff]
    %v327 = vld [vmem:[#allocation5 + $0xd8] sm:$0xff]
    %v328 = vld [vmem:[#allocation5 + $0xe0] sm:$0xff]
    %v329 = vld [vmem:[#allocation5 + $0xe8] sm:$0xff]
    %v330 = vld [vmem:[#allocation5 + $0xf0] sm:$0xff]
    %v331 = vld [vmem:[#allocation5 + $0xf8] sm:$0xff]
    %v332 = vld [vmem:[#allocation5 + $0x100] sm:$0xff]
    %v333 = vld [vmem:[#allocation5 + $0x108] sm:$0xff]
    %v334 = vld [vmem:[#allocation5 + $0x110] sm:$0xff]
    %v335 = vld [vmem:[#allocation5 + $0x118] sm:$0xff]
    %v336 = vld [vmem:[#allocation5 + $0x120] sm:$0xff]
    %v337 = vld [vmem:[#allocation5 + $0x128] sm:$0xff]
    %v338 = vld [vmem:[#allocation5 + $0x130] sm:$0xff]
    %v339 = vld [vmem:[#allocation5 + $0x138] sm:$0xff]
    %v340 = vld [vmem:[#allocation5 + $0x140] sm:$0xff]
    %v341 = vld [vmem:[#allocation5 + $0x148] sm:$0xff]
    %v342 = vld [vmem:[#allocation5 + $0x150] sm:$0xff]
    %v343 = vld [vmem:[#allocation5 + $0x158] sm:$0xff]
    %v344 = vld [vmem:[#allocation5 + $0x160] sm:$0xff]
    %v345 = vld [vmem:[#allocation5 + $0x168] sm:$0xff]
    %v346 = vld [vmem:[#allocation5 + $0x170] sm:$0xff]
    %v347 = vld [vmem:[#allocation5 + $0x178] sm:$0xff]
    %v348 = vld [vmem:[#allocation5 + $0x180] sm:$0xff]
    %v349 = vld [vmem:[#allocation5 + $0x188] sm:$0xff]
    %v350 = vld [vmem:[#allocation5 + $0x190] sm:$0xff]
    %v351 = vld [vmem:[#allocation5 + $0x198] sm:$0xff]
    %v352 = vld [vmem:[#allocation5 + $0x1a0] sm:$0xff]
    %v353 = vld [vmem:[#allocation5 + $0x1a8] sm:$0xff]
    %v354 = vld [vmem:[#allocation5 + $0x1b0] sm:$0xff]
    %v355 = vld [vmem:[#allocation5 + $0x1b8] sm:$0xff]
    %v356 = vld [vmem:[#allocation5 + $0x1c0] sm:$0xff]
    %v357 = vld [vmem:[#allocation5 + $0x1c8] sm:$0xff]
    %v358 = vld [vmem:[#allocation5 + $0x1d0] sm:$0xff]
    %v359 = vld [vmem:[#allocation5 + $0x1d8] sm:$0xff]
    %v360 = vld [vmem:[#allocation5 + $0x1e0] sm:$0xff]
    %v361 = vld [vmem:[#allocation5 + $0x1e8] sm:$0xff]
    %v362 = vld [vmem:[#allocation5 + $0x1f0] sm:$0xff]
    %v363 = vld [vmem:[#allocation5 + $0x1f8] sm:$0xff]
    %v364 = vld [vmem:[#allocation5 + $0x200] sm:$0xff]
    %v365 = vld [vmem:[#allocation5 + $0x208] sm:$0xff]
    %v366 = vld [vmem:[#allocation5 + $0x210] sm:$0xff]
    %v367 = vld [vmem:[#allocation5 + $0x218] sm:$0xff]
    %v368 = vld [vmem:[#allocation5 + $0x220] sm:$0xff]
    %v369 = vld [vmem:[#allocation5 + $0x228] sm:$0xff]
    %v370 = vld [vmem:[#allocation5 + $0x230] sm:$0xff]
    %v371 = vld [vmem:[#allocation5 + $0x238] sm:$0xff]
    %v372 = vld [vmem:[#allocation5 + $0x240] sm:$0xff]
    %v373 = vld [vmem:[#allocation5 + $0x248] sm:$0xff]
    %v374 = vld [vmem:[#allocation5 + $0x250] sm:$0xff]
    %v375 = vld [vmem:[#allocation5 + $0x258] sm:$0xff]
    %v376 = vld [vmem:[#allocation5 + $0x260] sm:$0xff]
    %v377 = vld [vmem:[#allocation5 + $0x268] sm:$0xff]
    %v378 = vld [vmem:[#allocation5 + $0x270] sm:$0xff]
    %v379 = vld [vmem:[#allocation5 + $0x278] sm:$0xff]
    %v380 = vld [vmem:[#allocation5 + $0x280] sm:$0xff]
    %v381 = vld [vmem:[#allocation5 + $0x288] sm:$0xff]
    %v382 = vld [vmem:[#allocation5 + $0x290] sm:$0xff]
    %v383 = vld [vmem:[#allocation5 + $0x298] sm:$0xff]
    %v384 = vld [vmem:[#allocation5 + $0x2a0] sm:$0xff]
    %v385 = vld [vmem:[#allocation5 + $0x2a8] sm:$0xff]
    %v386 = vld [vmem:[#allocation5 + $0x2b0] sm:$0xff]
    %v387 = vld [vmem:[#allocation5 + $0x2b8] sm:$0xff]
    %v388 = vld [vmem:[#allocation5 + $0x2c0] sm:$0xff]
    %v389 = vld [vmem:[#allocation5 + $0x2c8] sm:$0xff]
    %v390 = vld [vmem:[#allocation5 + $0x2d0] sm:$0xff]
    %v391 = vld [vmem:[#allocation5 + $0x2d8] sm:$0xff]
    %v392 = vld [vmem:[#allocation5 + $0x2e0] sm:$0xff]
    %v393 = vld [vmem:[#allocation5 + $0x2e8] sm:$0xff]
    %v394 = vld [vmem:[#allocation5 + $0x2f0] sm:$0xff]
    %v395 = vld [vmem:[#allocation5 + $0x2f8] sm:$0xff]
    %v396 = vld [vmem:[#allocation5 + $0x300] sm:$0xff]
    %v397 = vld [vmem:[#allocation5 + $0x308] sm:$0xff]
    %v398 = vld [vmem:[#allocation5 + $0x310] sm:$0xff]
    %v399 = vld [vmem:[#allocation5 + $0x318] sm:$0xff]
    %v400 = vld [vmem:[#allocation5 + $0x320] sm:$0xff]
    %v401 = vld [vmem:[#allocation5 + $0x328] sm:$0xff]
    %v402 = vld [vmem:[#allocation5 + $0x330] sm:$0xff]
    %v403 = vld [vmem:[#allocation5 + $0x338] sm:$0xff]
    %v404 = vld [vmem:[#allocation5 + $0x340] sm:$0xff]
    %v405 = vld [vmem:[#allocation5 + $0x348] sm:$0xff]
    %v406 = vld [vmem:[#allocation5 + $0x350] sm:$0xff]
    %v407 = vld [vmem:[#allocation5 + $0x358] sm:$0xff]
    %v408 = vld [vmem:[#allocation5 + $0x360] sm:$0xff]
    %v409 = vld [vmem:[#allocation5 + $0x368] sm:$0xff]
    %v410 = vld [vmem:[#allocation5 + $0x370] sm:$0xff]
    %v411 = vld [vmem:[#allocation5 + $0x378] sm:$0xff]
    %v412 = vld [vmem:[#allocation5 + $0x380] sm:$0xff]
    %v413 = vld [vmem:[#allocation5 + $0x388] sm:$0xff]
    %v414 = vld [vmem:[#allocation5 + $0x390] sm:$0xff]
    %v415 = vld [vmem:[#allocation5 + $0x398] sm:$0xff]
    %v416 = vld [vmem:[#allocation5 + $0x3a0] sm:$0xff]
    %v417 = vld [vmem:[#allocation5 + $0x3a8] sm:$0xff]
    %v418 = vld [vmem:[#allocation5 + $0x3b0] sm:$0xff]
    %v419 = vld [vmem:[#allocation5 + $0x3b8] sm:$0xff]
    %v420 = vld [vmem:[#allocation5 + $0x3c0] sm:$0xff]
    %v421 = vld [vmem:[#allocation5 + $0x3c8] sm:$0xff]
    %v422 = vld [vmem:[#allocation5 + $0x3d0] sm:$0xff]
    %v423 = vld [vmem:[#allocation5 + $0x3d8] sm:$0xff]
    %v424 = vld [vmem:[#allocation5 + $0x3e0] sm:$0xff]
    %v425 = vld [vmem:[#allocation5 + $0x3e8] sm:$0xff]
    %v426 = vld [vmem:[#allocation5 + $0x3f0] sm:$0xff]
    %v427 = vld [vmem:[#allocation5 + $0x3f8] sm:$0xff]
    %v428 = vld [vmem:[#allocation5 + $0x400] sm:$0xff]
    %v429 = vld [vmem:[#allocation5 + $0x408] sm:$0xff]
    %v430 = vld [vmem:[#allocation5 + $0x410] sm:$0xff]
    %v431 = vld [vmem:[#allocation5 + $0x418] sm:$0xff]
    %v432 = vld [vmem:[#allocation5 + $0x420] sm:$0xff]
    %v433 = vld [vmem:[#allocation5 + $0x428] sm:$0xff]
    %v434 = vld [vmem:[#allocation5 + $0x430] sm:$0xff]
    %v435 = vld [vmem:[#allocation5 + $0x438] sm:$0xff]
    %v436 = vld [vmem:[#allocation5 + $0x440] sm:$0xff]
    %v437 = vld [vmem:[#allocation5 + $0x448] sm:$0xff]
    %v438 = vld [vmem:[#allocation5 + $0x450] sm:$0xff]
    %v439 = vld [vmem:[#allocation5 + $0x458] sm:$0xff]
    %v440 = vld [vmem:[#allocation5 + $0x460] sm:$0xff]
    %v441 = vld [vmem:[#allocation5 + $0x468] sm:$0xff]
    %v442 = vld [vmem:[#allocation5 + $0x470] sm:$0xff]
    %v443 = vld [vmem:[#allocation5 + $0x478] sm:$0xff]
    %v444 = vld [vmem:[#allocation5 + $0x480] sm:$0xff]
    %v445 = vld [vmem:[#allocation5 + $0x488] sm:$0xff]
    %v446 = vld [vmem:[#allocation5 + $0x490] sm:$0xff]
    %v447 = vld [vmem:[#allocation5 + $0x498] sm:$0xff]
    %v448 = vld [vmem:[#allocation5 + $0x4a0] sm:$0xff]
    %v449 = vld [vmem:[#allocation5 + $0x4a8] sm:$0xff]
    %v450 = vld [vmem:[#allocation5 + $0x4b0] sm:$0xff]
    %v451 = vld [vmem:[#allocation5 + $0x4b8] sm:$0xff]
    %v452 = vld [vmem:[#allocation5 + $0x4c0] sm:$0xff]
    %v453 = vld [vmem:[#allocation5 + $0x4c8] sm:$0xff]
    %v454 = vld [vmem:[#allocation5 + $0x4d0] sm:$0xff]
    %v455 = vld [vmem:[#allocation5 + $0x4d8] sm:$0xff]
    %v456 = vld [vmem:[#allocation5 + $0x4e0] sm:$0xff]
    %v457 = vld [vmem:[#allocation5 + $0x4e8] sm:$0xff]
    %v458 = vld [vmem:[#allocation5 + $0x4f0] sm:$0xff]
    %v459 = vld [vmem:[#allocation5 + $0x4f8] sm:$0xff]
    %v460 = vld [vmem:[#allocation5 + $0x500] sm:$0xff]
    %v461 = vld [vmem:[#allocation5 + $0x508] sm:$0xff]
    %v462 = vld [vmem:[#allocation5 + $0x510] sm:$0xff]
    %v463 = vld [vmem:[#allocation5 + $0x518] sm:$0xff]
    %v464 = vld [vmem:[#allocation5 + $0x520] sm:$0xff]
    %v465 = vld [vmem:[#allocation5 + $0x528] sm:$0xff]
    %v466 = vld [vmem:[#allocation5 + $0x530] sm:$0xff]
    %v467 = vld [vmem:[#allocation5 + $0x538] sm:$0xff]
    %v468 = vld [vmem:[#allocation5 + $0x540] sm:$0xff]
    %v469 = vld [vmem:[#allocation5 + $0x548] sm:$0xff]
    %v470 = vld [vmem:[#allocation5 + $0x550] sm:$0xff]
    %v471 = vld [vmem:[#allocation5 + $0x558] sm:$0xff]
    %v472 = vld [vmem:[#allocation5 + $0x560] sm:$0xff]
    %v473 = vld [vmem:[#allocation5 + $0x568] sm:$0xff]
    %v474 = vld [vmem:[#allocation5 + $0x570] sm:$0xff]
    %v475 = vld [vmem:[#allocation5 + $0x578] sm:$0xff]
    %v476 = vld [vmem:[#allocation5 + $0x580] sm:$0xff]
    %v477 = vld [vmem:[#allocation5 + $0x588] sm:$0xff]
    %v478 = vld [vmem:[#allocation5 + $0x590] sm:$0xff]
    %v479 = vld [vmem:[#allocation5 + $0x598] sm:$0xff]
    %v480 = vld [vmem:[#allocation5 + $0x5a0] sm:$0xff]
    %v481 = vld [vmem:[#allocation5 + $0x5a8] sm:$0xff]
    %v482 = vld [vmem:[#allocation5 + $0x5b0] sm:$0xff]
    %v483 = vld [vmem:[#allocation5 + $0x5b8] sm:$0xff]
    %v484 = vld [vmem:[#allocation5 + $0x5c0] sm:$0xff]
    %v485 = vld [vmem:[#allocation5 + $0x5c8] sm:$0xff]
    %v486 = vld [vmem:[#allocation5 + $0x5d0] sm:$0xff]
    %v487 = vld [vmem:[#allocation5 + $0x5d8] sm:$0xff]
    %v488 = vld [vmem:[#allocation5 + $0x5e0] sm:$0xff]
    %v489 = vld [vmem:[#allocation5 + $0x5e8] sm:$0xff]
    %v490 = vld [vmem:[#allocation5 + $0x5f0] sm:$0xff]
    %v491 = vld [vmem:[#allocation5 + $0x5f8] sm:$0xff]
    %v492 = vld [vmem:[#allocation5 + $0x600] sm:$0xff]
    %v493 = vld [vmem:[#allocation5 + $0x608] sm:$0xff]
    %v494 = vld [vmem:[#allocation5 + $0x610] sm:$0xff]
    %v495 = vld [vmem:[#allocation5 + $0x618] sm:$0xff]
    %v496 = vld [vmem:[#allocation7] sm:$0xf]
    %v498 = vlaneseq
    %v499 = vshrl.u32 %v498, 7
    %v500 = vsub.s32 0, %v499
    %v501 = vrot.slane %v496, %v500
    %v502 = vlaneseq
    %v503 = vshrl.u32 %v502, 7
    %v504 = vsub.s32 1, %v503
    %v505 = vrot.slane %v496, %v504
    %v506 = vlaneseq
    %v507 = vshrl.u32 %v506, 7
    %v508 = vsub.s32 2, %v507
    %v509 = vrot.slane %v496, %v508
    %v510 = vlaneseq
    %v511 = vshrl.u32 %v510, 7
    %v512 = vsub.s32 3, %v511
    %v513 = vrot.slane %v496, %v512
    %v714 = vunpack.c.l.b16 %v300
    %v715 = vunpack.c.h.b16 %v300
    %v716 = vunpack.c.l.b16 %v301
    %v717 = vunpack.c.h.b16 %v301
    %v718 = vunpack.c.l.b16 %v302
    %v719 = vunpack.c.h.b16 %v302
    %v720 = vunpack.c.l.b16 %v303
    %v721 = vunpack.c.h.b16 %v303
    %v722 = vunpack.c.l.b16 %v304
    %v723 = vunpack.c.h.b16 %v304
    %v724 = vunpack.c.l.b16 %v305
    %v725 = vunpack.c.h.b16 %v305
    %v726 = vunpack.c.l.b16 %v306
    %v727 = vunpack.c.h.b16 %v306
    %v728 = vunpack.c.l.b16 %v307
    %v729 = vunpack.c.h.b16 %v307
    %v730 = vunpack.c.l.b16 %v308
    %v731 = vunpack.c.h.b16 %v308
    %v732 = vunpack.c.l.b16 %v309
    %v733 = vunpack.c.h.b16 %v309
    %v734 = vunpack.c.l.b16 %v310
    %v735 = vunpack.c.h.b16 %v310
    %v736 = vunpack.c.l.b16 %v311
    %v737 = vunpack.c.h.b16 %v311
    %v738 = vunpack.c.l.b16 %v312
    %v739 = vunpack.c.h.b16 %v312
    %v740 = vunpack.c.l.b16 %v313
    %v741 = vunpack.c.h.b16 %v313
    %v742 = vunpack.c.l.b16 %v314
    %v743 = vunpack.c.h.b16 %v314
    %v744 = vunpack.c.l.b16 %v315
    %v745 = vunpack.c.h.b16 %v315
    %v746 = vunpack.c.l.b16 %v316
    %v747 = vunpack.c.h.b16 %v316
    %v748 = vunpack.c.l.b16 %v317
    %v749 = vunpack.c.h.b16 %v317
    %v750 = vunpack.c.l.b16 %v318
    %v751 = vunpack.c.h.b16 %v318
    %v752 = vunpack.c.l.b16 %v319
    %v753 = vunpack.c.h.b16 %v319
    %v754 = vunpack.c.l.b16 %v320
    %v755 = vunpack.c.h.b16 %v320
    %v756 = vunpack.c.l.b16 %v321
    %v757 = vunpack.c.h.b16 %v321
    %v758 = vunpack.c.l.b16 %v322
    %v759 = vunpack.c.h.b16 %v322
    %v760 = vunpack.c.l.b16 %v323
    %v761 = vunpack.c.h.b16 %v323
    %v762 = vunpack.c.l.b16 %v324
    %v763 = vunpack.c.h.b16 %v324
    %v764 = vunpack.c.l.b16 %v325
    %v765 = vunpack.c.h.b16 %v325
    %v766 = vunpack.c.l.b16 %v326
    %v767 = vunpack.c.h.b16 %v326
    %v768 = vunpack.c.l.b16 %v327
    %v769 = vunpack.c.h.b16 %v327
    %v770 = vunpack.c.l.b16 %v328
    %v771 = vunpack.c.h.b16 %v328
    %v772 = vunpack.c.l.b16 %v329
    %v773 = vunpack.c.h.b16 %v329
    %v774 = vunpack.c.l.b16 %v330
    %v775 = vunpack.c.h.b16 %v330
    %v776 = vunpack.c.l.b16 %v331
    %v777 = vunpack.c.h.b16 %v331
    %v778 = vunpack.c.l.b16 %v332
    %v779 = vunpack.c.h.b16 %v332
    %v780 = vunpack.c.l.b16 %v333
    %v781 = vunpack.c.h.b16 %v333
    %v782 = vunpack.c.l.b16 %v334
    %v783 = vunpack.c.h.b16 %v334
    %v784 = vunpack.c.l.b16 %v335
    %v785 = vunpack.c.h.b16 %v335
    %v786 = vunpack.c.l.b16 %v336
    %v787 = vunpack.c.h.b16 %v336
    %v788 = vunpack.c.l.b16 %v337
    %v789 = vunpack.c.h.b16 %v337
    %v790 = vunpack.c.l.b16 %v338
    %v791 = vunpack.c.h.b16 %v338
    %v792 = vunpack.c.l.b16 %v339
    %v793 = vunpack.c.h.b16 %v339
    %v794 = vunpack.c.l.b16 %v340
    %v795 = vunpack.c.h.b16 %v340
    %v796 = vunpack.c.l.b16 %v341
    %v797 = vunpack.c.h.b16 %v341
    %v798 = vunpack.c.l.b16 %v342
    %v799 = vunpack.c.h.b16 %v342
    %v800 = vunpack.c.l.b16 %v343
    %v801 = vunpack.c.h.b16 %v343
    %v802 = vunpack.c.l.b16 %v344
    %v803 = vunpack.c.h.b16 %v344
    %v804 = vunpack.c.l.b16 %v345
    %v805 = vunpack.c.h.b16 %v345
    %v806 = vunpack.c.l.b16 %v346
    %v807 = vunpack.c.h.b16 %v346
    %v808 = vunpack.c.l.b16 %v347
    %v809 = vunpack.c.h.b16 %v347
    %v810 = vunpack.c.l.b16 %v348
    %v811 = vunpack.c.h.b16 %v348
    %v812 = vunpack.c.l.b16 %v349
    %v813 = vunpack.c.h.b16 %v349
    %v814 = vunpack.c.l.b16 %v350
    %v815 = vunpack.c.h.b16 %v350
    %v816 = vunpack.c.l.b16 %v351
    %v817 = vunpack.c.h.b16 %v351
    %v818 = vunpack.c.l.b16 %v352
    %v819 = vunpack.c.h.b16 %v352
    %v820 = vunpack.c.l.b16 %v353
    %v821 = vunpack.c.h.b16 %v353
    %v822 = vunpack.c.l.b16 %v354
    %v823 = vunpack.c.h.b16 %v354
    %v824 = vunpack.c.l.b16 %v355
    %v825 = vunpack.c.h.b16 %v355
    %v826 = vunpack.c.l.b16 %v356
    %v827 = vunpack.c.h.b16 %v356
    %v828 = vunpack.c.l.b16 %v357
    %v829 = vunpack.c.h.b16 %v357
    %v830 = vunpack.c.l.b16 %v358
    %v831 = vunpack.c.h.b16 %v358
    %v832 = vunpack.c.l.b16 %v359
    %v833 = vunpack.c.h.b16 %v359
    %v834 = vunpack.c.l.b16 %v360
    %v835 = vunpack.c.h.b16 %v360
    %v836 = vunpack.c.l.b16 %v361
    %v837 = vunpack.c.h.b16 %v361
    %v838 = vunpack.c.l.b16 %v362
    %v839 = vunpack.c.h.b16 %v362
    %v840 = vunpack.c.l.b16 %v363
    %v841 = vunpack.c.h.b16 %v363
    %v842 = vunpack.c.l.b16 %v364
    %v843 = vunpack.c.h.b16 %v364
    %v844 = vunpack.c.l.b16 %v365
    %v845 = vunpack.c.h.b16 %v365
    %v846 = vunpack.c.l.b16 %v366
    %v847 = vunpack.c.h.b16 %v366
    %v848 = vunpack.c.l.b16 %v367
    %v849 = vunpack.c.h.b16 %v367
    %v850 = vunpack.c.l.b16 %v368
    %v851 = vunpack.c.h.b16 %v368
    %v852 = vunpack.c.l.b16 %v369
    %v853 = vunpack.c.h.b16 %v369
    %v854 = vunpack.c.l.b16 %v370
    %v855 = vunpack.c.h.b16 %v370
    %v856 = vunpack.c.l.b16 %v371
    %v857 = vunpack.c.h.b16 %v371
    %v858 = vunpack.c.l.b16 %v372
    %v859 = vunpack.c.h.b16 %v372
    %v860 = vunpack.c.l.b16 %v373
    %v861 = vunpack.c.h.b16 %v373
    %v862 = vunpack.c.l.b16 %v374
    %v863 = vunpack.c.h.b16 %v374
    %v864 = vunpack.c.l.b16 %v375
    %v865 = vunpack.c.h.b16 %v375
    %v866 = vunpack.c.l.b16 %v376
    %v867 = vunpack.c.h.b16 %v376
    %v868 = vunpack.c.l.b16 %v377
    %v869 = vunpack.c.h.b16 %v377
    %v870 = vunpack.c.l.b16 %v378
    %v871 = vunpack.c.h.b16 %v378
    %v872 = vunpack.c.l.b16 %v379
    %v873 = vunpack.c.h.b16 %v379
    %v874 = vunpack.c.l.b16 %v380
    %v875 = vunpack.c.h.b16 %v380
    %v876 = vunpack.c.l.b16 %v381
    %v877 = vunpack.c.h.b16 %v381
    %v878 = vunpack.c.l.b16 %v382
    %v879 = vunpack.c.h.b16 %v382
    %v880 = vunpack.c.l.b16 %v383
    %v881 = vunpack.c.h.b16 %v383
    %v882 = vunpack.c.l.b16 %v384
    %v883 = vunpack.c.h.b16 %v384
    %v884 = vunpack.c.l.b16 %v385
    %v885 = vunpack.c.h.b16 %v385
    %v886 = vunpack.c.l.b16 %v386
    %v887 = vunpack.c.h.b16 %v386
    %v888 = vunpack.c.l.b16 %v387
    %v889 = vunpack.c.h.b16 %v387
    %v890 = vunpack.c.l.b16 %v388
    %v891 = vunpack.c.h.b16 %v388
    %v892 = vunpack.c.l.b16 %v389
    %v893 = vunpack.c.h.b16 %v389
    %v894 = vunpack.c.l.b16 %v390
    %v895 = vunpack.c.h.b16 %v390
    %v896 = vunpack.c.l.b16 %v391
    %v897 = vunpack.c.h.b16 %v391
    %v898 = vunpack.c.l.b16 %v392
    %v899 = vunpack.c.h.b16 %v392
    %v900 = vunpack.c.l.b16 %v393
    %v901 = vunpack.c.h.b16 %v393
    %v902 = vunpack.c.l.b16 %v394
    %v903 = vunpack.c.h.b16 %v394
    %v904 = vunpack.c.l.b16 %v395
    %v905 = vunpack.c.h.b16 %v395
    %v906 = vunpack.c.l.b16 %v396
    %v907 = vunpack.c.h.b16 %v396
    %v908 = vunpack.c.l.b16 %v397
    %v909 = vunpack.c.h.b16 %v397
    %v910 = vunpack.c.l.b16 %v398
    %v911 = vunpack.c.h.b16 %v398
    %v912 = vunpack.c.l.b16 %v399
    %v913 = vunpack.c.h.b16 %v399
    %v914 = vunpack.c.l.b16 %v400
    %v915 = vunpack.c.h.b16 %v400
    %v916 = vunpack.c.l.b16 %v401
    %v917 = vunpack.c.h.b16 %v401
    %v918 = vunpack.c.l.b16 %v402
    %v919 = vunpack.c.h.b16 %v402
    %v920 = vunpack.c.l.b16 %v403
    %v921 = vunpack.c.h.b16 %v403
    %v922 = vunpack.c.l.b16 %v404
    %v923 = vunpack.c.h.b16 %v404
    %v924 = vunpack.c.l.b16 %v405
    %v925 = vunpack.c.h.b16 %v405
    %v926 = vunpack.c.l.b16 %v406
    %v927 = vunpack.c.h.b16 %v406
    %v928 = vunpack.c.l.b16 %v407
    %v929 = vunpack.c.h.b16 %v407
    %v930 = vunpack.c.l.b16 %v408
    %v931 = vunpack.c.h.b16 %v408
    %v932 = vunpack.c.l.b16 %v409
    %v933 = vunpack.c.h.b16 %v409
    %v934 = vunpack.c.l.b16 %v410
    %v935 = vunpack.c.h.b16 %v410
    %v936 = vunpack.c.l.b16 %v411
    %v937 = vunpack.c.h.b16 %v411
    %v938 = vunpack.c.l.b16 %v412
    %v939 = vunpack.c.h.b16 %v412
    %v940 = vunpack.c.l.b16 %v413
    %v941 = vunpack.c.h.b16 %v413
    %v942 = vunpack.c.l.b16 %v414
    %v943 = vunpack.c.h.b16 %v414
    %v944 = vunpack.c.l.b16 %v415
    %v945 = vunpack.c.h.b16 %v415
    %v946 = vunpack.c.l.b16 %v416
    %v947 = vunpack.c.h.b16 %v416
    %v948 = vunpack.c.l.b16 %v417
    %v949 = vunpack.c.h.b16 %v417
    %v950 = vunpack.c.l.b16 %v418
    %v951 = vunpack.c.h.b16 %v418
    %v952 = vunpack.c.l.b16 %v419
    %v953 = vunpack.c.h.b16 %v419
    %v954 = vunpack.c.l.b16 %v420
    %v955 = vunpack.c.h.b16 %v420
    %v956 = vunpack.c.l.b16 %v421
    %v957 = vunpack.c.h.b16 %v421
    %v958 = vunpack.c.l.b16 %v422
    %v959 = vunpack.c.h.b16 %v422
    %v960 = vunpack.c.l.b16 %v423
    %v961 = vunpack.c.h.b16 %v423
    %v962 = vunpack.c.l.b16 %v424
    %v963 = vunpack.c.h.b16 %v424
    %v964 = vunpack.c.l.b16 %v425
    %v965 = vunpack.c.h.b16 %v425
    %v966 = vunpack.c.l.b16 %v426
    %v967 = vunpack.c.h.b16 %v426
    %v968 = vunpack.c.l.b16 %v427
    %v969 = vunpack.c.h.b16 %v427
    %v970 = vunpack.c.l.b16 %v428
    %v971 = vunpack.c.h.b16 %v428
    %v972 = vunpack.c.l.b16 %v429
    %v973 = vunpack.c.h.b16 %v429
    %v974 = vunpack.c.l.b16 %v430
    %v975 = vunpack.c.h.b16 %v430
    %v976 = vunpack.c.l.b16 %v431
    %v977 = vunpack.c.h.b16 %v431
    %v978 = vunpack.c.l.b16 %v432
    %v979 = vunpack.c.h.b16 %v432
    %v980 = vunpack.c.l.b16 %v433
    %v981 = vunpack.c.h.b16 %v433
    %v982 = vunpack.c.l.b16 %v434
    %v983 = vunpack.c.h.b16 %v434
    %v984 = vunpack.c.l.b16 %v435
    %v985 = vunpack.c.h.b16 %v435
    %v986 = vunpack.c.l.b16 %v436
    %v987 = vunpack.c.h.b16 %v436
    %v988 = vunpack.c.l.b16 %v437
    %v989 = vunpack.c.h.b16 %v437
    %v990 = vunpack.c.l.b16 %v438
    %v991 = vunpack.c.h.b16 %v438
    %v992 = vunpack.c.l.b16 %v439
    %v993 = vunpack.c.h.b16 %v439
    %v994 = vunpack.c.l.b16 %v440
    %v995 = vunpack.c.h.b16 %v440
    %v996 = vunpack.c.l.b16 %v441
    %v997 = vunpack.c.h.b16 %v441
    %v998 = vunpack.c.l.b16 %v442
    %v999 = vunpack.c.h.b16 %v442
    %v1000 = vunpack.c.l.b16 %v443
    %v1001 = vunpack.c.h.b16 %v443
    %v1002 = vunpack.c.l.b16 %v444
    %v1003 = vunpack.c.h.b16 %v444
    %v1004 = vunpack.c.l.b16 %v445
    %v1005 = vunpack.c.h.b16 %v445
    %v1006 = vunpack.c.l.b16 %v446
    %v1007 = vunpack.c.h.b16 %v446
    %v1008 = vunpack.c.l.b16 %v447
    %v1009 = vunpack.c.h.b16 %v447
    %v1010 = vunpack.c.l.b16 %v448
    %v1011 = vunpack.c.h.b16 %v448
    %v1012 = vunpack.c.l.b16 %v449
    %v1013 = vunpack.c.h.b16 %v449
    %v1014 = vunpack.c.l.b16 %v450
    %v1015 = vunpack.c.h.b16 %v450
    %v1016 = vunpack.c.l.b16 %v451
    %v1017 = vunpack.c.h.b16 %v451
    %v1018 = vunpack.c.l.b16 %v452
    %v1019 = vunpack.c.h.b16 %v452
    %v1020 = vunpack.c.l.b16 %v453
    %v1021 = vunpack.c.h.b16 %v453
    %v1022 = vunpack.c.l.b16 %v454
    %v1023 = vunpack.c.h.b16 %v454
    %v1024 = vunpack.c.l.b16 %v455
    %v1025 = vunpack.c.h.b16 %v455
    %v1026 = vunpack.c.l.b16 %v456
    %v1027 = vunpack.c.h.b16 %v456
    %v1028 = vunpack.c.l.b16 %v457
    %v1029 = vunpack.c.h.b16 %v457
    %v1030 = vunpack.c.l.b16 %v458
    %v1031 = vunpack.c.h.b16 %v458
    %v1032 = vunpack.c.l.b16 %v459
    %v1033 = vunpack.c.h.b16 %v459
    %v1034 = vunpack.c.l.b16 %v460
    %v1035 = vunpack.c.h.b16 %v460
    %v1036 = vunpack.c.l.b16 %v461
    %v1037 = vunpack.c.h.b16 %v461
    %v1038 = vunpack.c.l.b16 %v462
    %v1039 = vunpack.c.h.b16 %v462
    %v1040 = vunpack.c.l.b16 %v463
    %v1041 = vunpack.c.h.b16 %v463
    %v1042 = vunpack.c.l.b16 %v464
    %v1043 = vunpack.c.h.b16 %v464
    %v1044 = vunpack.c.l.b16 %v465
    %v1045 = vunpack.c.h.b16 %v465
    %v1046 = vunpack.c.l.b16 %v466
    %v1047 = vunpack.c.h.b16 %v466
    %v1048 = vunpack.c.l.b16 %v467
    %v1049 = vunpack.c.h.b16 %v467
    %v1050 = vunpack.c.l.b16 %v468
    %v1051 = vunpack.c.h.b16 %v468
    %v1052 = vunpack.c.l.b16 %v469
    %v1053 = vunpack.c.h.b16 %v469
    %v1054 = vunpack.c.l.b16 %v470
    %v1055 = vunpack.c.h.b16 %v470
    %v1056 = vunpack.c.l.b16 %v471
    %v1057 = vunpack.c.h.b16 %v471
    %v1058 = vunpack.c.l.b16 %v472
    %v1059 = vunpack.c.h.b16 %v472
    %v1060 = vunpack.c.l.b16 %v473
    %v1061 = vunpack.c.h.b16 %v473
    %v1062 = vunpack.c.l.b16 %v474
    %v1063 = vunpack.c.h.b16 %v474
    %v1064 = vunpack.c.l.b16 %v475
    %v1065 = vunpack.c.h.b16 %v475
    %v1066 = vunpack.c.l.b16 %v476
    %v1067 = vunpack.c.h.b16 %v476
    %v1068 = vunpack.c.l.b16 %v477
    %v1069 = vunpack.c.h.b16 %v477
    %v1070 = vunpack.c.l.b16 %v478
    %v1071 = vunpack.c.h.b16 %v478
    %v1072 = vunpack.c.l.b16 %v479
    %v1073 = vunpack.c.h.b16 %v479
    %v1074 = vunpack.c.l.b16 %v480
    %v1075 = vunpack.c.h.b16 %v480
    %v1076 = vunpack.c.l.b16 %v481
    %v1077 = vunpack.c.h.b16 %v481
    %v1078 = vunpack.c.l.b16 %v482
    %v1079 = vunpack.c.h.b16 %v482
    %v1080 = vunpack.c.l.b16 %v483
    %v1081 = vunpack.c.h.b16 %v483
    %v1082 = vunpack.c.l.b16 %v484
    %v1083 = vunpack.c.h.b16 %v484
    %v1084 = vunpack.c.l.b16 %v485
    %v1085 = vunpack.c.h.b16 %v485
    %v1086 = vunpack.c.l.b16 %v486
    %v1087 = vunpack.c.h.b16 %v486
    %v1088 = vunpack.c.l.b16 %v487
    %v1089 = vunpack.c.h.b16 %v487
    %v1090 = vunpack.c.l.b16 %v488
    %v1091 = vunpack.c.h.b16 %v488
    %v1092 = vunpack.c.l.b16 %v489
    %v1093 = vunpack.c.h.b16 %v489
    %v1094 = vunpack.c.l.b16 %v490
    %v1095 = vunpack.c.h.b16 %v490
    %v1096 = vunpack.c.l.b16 %v491
    %v1097 = vunpack.c.h.b16 %v491
    %v1098 = vunpack.c.l.b16 %v492
    %v1099 = vunpack.c.h.b16 %v492
    %v1100 = vunpack.c.l.b16 %v493
    %v1101 = vunpack.c.h.b16 %v493
    %v1102 = vunpack.c.l.b16 %v494
    %v1103 = vunpack.c.h.b16 %v494
    %v1104 = vunpack.c.l.b16 %v495
    %v1105 = vunpack.c.h.b16 %v495
    %v1106 = vpack.c.b16 %v718, %v714
    %v1107 = vpack.c.b16 %v719, %v715
    %v1108 = vpack.c.b16 %v720, %v716
    %v1109 = vpack.c.b16 %v721, %v717
    %v1110 = vpack.c.b16 %v726, %v722
    %v1111 = vpack.c.b16 %v727, %v723
    %v1112 = vpack.c.b16 %v728, %v724
    %v1113 = vpack.c.b16 %v729, %v725
    %v1114 = vpack.c.b16 %v734, %v730
    %v1115 = vpack.c.b16 %v735, %v731
    %v1116 = vpack.c.b16 %v736, %v732
    %v1117 = vpack.c.b16 %v737, %v733
    %v1118 = vpack.c.b16 %v742, %v738
    %v1119 = vpack.c.b16 %v743, %v739
    %v1120 = vpack.c.b16 %v744, %v740
    %v1121 = vpack.c.b16 %v745, %v741
    %v1122 = vpack.c.b16 %v750, %v746
    %v1123 = vpack.c.b16 %v751, %v747
    %v1124 = vpack.c.b16 %v752, %v748
    %v1125 = vpack.c.b16 %v753, %v749
    %v1126 = vpack.c.b16 %v758, %v754
    %v1127 = vpack.c.b16 %v759, %v755
    %v1128 = vpack.c.b16 %v760, %v756
    %v1129 = vpack.c.b16 %v761, %v757
    %v1130 = vpack.c.b16 %v766, %v762
    %v1131 = vpack.c.b16 %v767, %v763
    %v1132 = vpack.c.b16 %v768, %v764
    %v1133 = vpack.c.b16 %v769, %v765
    %v1134 = vpack.c.b16 %v774, %v770
    %v1135 = vpack.c.b16 %v775, %v771
    %v1136 = vpack.c.b16 %v776, %v772
    %v1137 = vpack.c.b16 %v777, %v773
    %v1138 = vpack.c.b16 %v782, %v778
    %v1139 = vpack.c.b16 %v783, %v779
    %v1140 = vpack.c.b16 %v784, %v780
    %v1141 = vpack.c.b16 %v785, %v781
    %v1142 = vpack.c.b16 %v790, %v786
    %v1143 = vpack.c.b16 %v791, %v787
    %v1144 = vpack.c.b16 %v792, %v788
    %v1145 = vpack.c.b16 %v793, %v789
    %v1146 = vpack.c.b16 %v798, %v794
    %v1147 = vpack.c.b16 %v799, %v795
    %v1148 = vpack.c.b16 %v800, %v796
    %v1149 = vpack.c.b16 %v801, %v797
    %v1150 = vpack.c.b16 %v806, %v802
    %v1151 = vpack.c.b16 %v807, %v803
    %v1152 = vpack.c.b16 %v808, %v804
    %v1153 = vpack.c.b16 %v809, %v805
    %v1154 = vpack.c.b16 %v814, %v810
    %v1155 = vpack.c.b16 %v815, %v811
    %v1156 = vpack.c.b16 %v816, %v812
    %v1157 = vpack.c.b16 %v817, %v813
    %v1158 = vpack.c.b16 %v822, %v818
    %v1159 = vpack.c.b16 %v823, %v819
    %v1160 = vpack.c.b16 %v824, %v820
    %v1161 = vpack.c.b16 %v825, %v821
    %v1162 = vpack.c.b16 %v830, %v826
    %v1163 = vpack.c.b16 %v831, %v827
    %v1164 = vpack.c.b16 %v832, %v828
    %v1165 = vpack.c.b16 %v833, %v829
    %v1166 = vpack.c.b16 %v838, %v834
    %v1167 = vpack.c.b16 %v839, %v835
    %v1168 = vpack.c.b16 %v840, %v836
    %v1169 = vpack.c.b16 %v841, %v837
    %v1170 = vpack.c.b16 %v846, %v842
    %v1171 = vpack.c.b16 %v847, %v843
    %v1172 = vpack.c.b16 %v848, %v844
    %v1173 = vpack.c.b16 %v849, %v845
    %v1174 = vpack.c.b16 %v854, %v850
    %v1175 = vpack.c.b16 %v855, %v851
    %v1176 = vpack.c.b16 %v856, %v852
    %v1177 = vpack.c.b16 %v857, %v853
    %v1178 = vpack.c.b16 %v862, %v858
    %v1179 = vpack.c.b16 %v863, %v859
    %v1180 = vpack.c.b16 %v864, %v860
    %v1181 = vpack.c.b16 %v865, %v861
    %v1182 = vpack.c.b16 %v870, %v866
    %v1183 = vpack.c.b16 %v871, %v867
    %v1184 = vpack.c.b16 %v872, %v868
    %v1185 = vpack.c.b16 %v873, %v869
    %v1186 = vpack.c.b16 %v878, %v874
    %v1187 = vpack.c.b16 %v879, %v875
    %v1188 = vpack.c.b16 %v880, %v876
    %v1189 = vpack.c.b16 %v881, %v877
    %v1190 = vpack.c.b16 %v886, %v882
    %v1191 = vpack.c.b16 %v887, %v883
    %v1192 = vpack.c.b16 %v888, %v884
    %v1193 = vpack.c.b16 %v889, %v885
    %v1194 = vpack.c.b16 %v894, %v890
    %v1195 = vpack.c.b16 %v895, %v891
    %v1196 = vpack.c.b16 %v896, %v892
    %v1197 = vpack.c.b16 %v897, %v893
    %v1198 = vpack.c.b16 %v902, %v898
    %v1199 = vpack.c.b16 %v903, %v899
    %v1200 = vpack.c.b16 %v904, %v900
    %v1201 = vpack.c.b16 %v905, %v901
    %v1202 = vpack.c.b16 %v910, %v906
    %v1203 = vpack.c.b16 %v911, %v907
    %v1204 = vpack.c.b16 %v912, %v908
    %v1205 = vpack.c.b16 %v913, %v909
    %v1206 = vpack.c.b16 %v918, %v914
    %v1207 = vpack.c.b16 %v919, %v915
    %v1208 = vpack.c.b16 %v920, %v916
    %v1209 = vpack.c.b16 %v921, %v917
    %v1210 = vpack.c.b16 %v926, %v922
    %v1211 = vpack.c.b16 %v927, %v923
    %v1212 = vpack.c.b16 %v928, %v924
    %v1213 = vpack.c.b16 %v929, %v925
    %v1214 = vpack.c.b16 %v934, %v930
    %v1215 = vpack.c.b16 %v935, %v931
    %v1216 = vpack.c.b16 %v936, %v932
    %v1217 = vpack.c.b16 %v937, %v933
    %v1218 = vpack.c.b16 %v942, %v938
    %v1219 = vpack.c.b16 %v943, %v939
    %v1220 = vpack.c.b16 %v944, %v940
    %v1221 = vpack.c.b16 %v945, %v941
    %v1222 = vpack.c.b16 %v950, %v946
    %v1223 = vpack.c.b16 %v951, %v947
    %v1224 = vpack.c.b16 %v952, %v948
    %v1225 = vpack.c.b16 %v953, %v949
    %v1226 = vpack.c.b16 %v958, %v954
    %v1227 = vpack.c.b16 %v959, %v955
    %v1228 = vpack.c.b16 %v960, %v956
    %v1229 = vpack.c.b16 %v961, %v957
    %v1230 = vpack.c.b16 %v966, %v962
    %v1231 = vpack.c.b16 %v967, %v963
    %v1232 = vpack.c.b16 %v968, %v964
    %v1233 = vpack.c.b16 %v969, %v965
    %v1234 = vpack.c.b16 %v974, %v970
    %v1235 = vpack.c.b16 %v975, %v971
    %v1236 = vpack.c.b16 %v976, %v972
    %v1237 = vpack.c.b16 %v977, %v973
    %v1238 = vpack.c.b16 %v982, %v978
    %v1239 = vpack.c.b16 %v983, %v979
    %v1240 = vpack.c.b16 %v984, %v980
    %v1241 = vpack.c.b16 %v985, %v981
    %v1242 = vpack.c.b16 %v990, %v986
    %v1243 = vpack.c.b16 %v991, %v987
    %v1244 = vpack.c.b16 %v992, %v988
    %v1245 = vpack.c.b16 %v993, %v989
    %v1246 = vpack.c.b16 %v998, %v994
    %v1247 = vpack.c.b16 %v999, %v995
    %v1248 = vpack.c.b16 %v1000, %v996
    %v1249 = vpack.c.b16 %v1001, %v997
    %v1250 = vpack.c.b16 %v1006, %v1002
    %v1251 = vpack.c.b16 %v1007, %v1003
    %v1252 = vpack.c.b16 %v1008, %v1004
    %v1253 = vpack.c.b16 %v1009, %v1005
    %v1254 = vpack.c.b16 %v1014, %v1010
    %v1255 = vpack.c.b16 %v1015, %v1011
    %v1256 = vpack.c.b16 %v1016, %v1012
    %v1257 = vpack.c.b16 %v1017, %v1013
    %v1258 = vpack.c.b16 %v1022, %v1018
    %v1259 = vpack.c.b16 %v1023, %v1019
    %v1260 = vpack.c.b16 %v1024, %v1020
    %v1261 = vpack.c.b16 %v1025, %v1021
    %v1262 = vpack.c.b16 %v1030, %v1026
    %v1263 = vpack.c.b16 %v1031, %v1027
    %v1264 = vpack.c.b16 %v1032, %v1028
    %v1265 = vpack.c.b16 %v1033, %v1029
    %v1266 = vpack.c.b16 %v1038, %v1034
    %v1267 = vpack.c.b16 %v1039, %v1035
    %v1268 = vpack.c.b16 %v1040, %v1036
    %v1269 = vpack.c.b16 %v1041, %v1037
    %v1270 = vpack.c.b16 %v1046, %v1042
    %v1271 = vpack.c.b16 %v1047, %v1043
    %v1272 = vpack.c.b16 %v1048, %v1044
    %v1273 = vpack.c.b16 %v1049, %v1045
    %v1274 = vpack.c.b16 %v1054, %v1050
    %v1275 = vpack.c.b16 %v1055, %v1051
    %v1276 = vpack.c.b16 %v1056, %v1052
    %v1277 = vpack.c.b16 %v1057, %v1053
    %v1278 = vpack.c.b16 %v1062, %v1058
    %v1279 = vpack.c.b16 %v1063, %v1059
    %v1280 = vpack.c.b16 %v1064, %v1060
    %v1281 = vpack.c.b16 %v1065, %v1061
    %v1282 = vpack.c.b16 %v1070, %v1066
    %v1283 = vpack.c.b16 %v1071, %v1067
    %v1284 = vpack.c.b16 %v1072, %v1068
    %v1285 = vpack.c.b16 %v1073, %v1069
    %v1286 = vpack.c.b16 %v1078, %v1074
    %v1287 = vpack.c.b16 %v1079, %v1075
    %v1288 = vpack.c.b16 %v1080, %v1076
    %v1289 = vpack.c.b16 %v1081, %v1077
    %v1290 = vpack.c.b16 %v1086, %v1082
    %v1291 = vpack.c.b16 %v1087, %v1083
    %v1292 = vpack.c.b16 %v1088, %v1084
    %v1293 = vpack.c.b16 %v1089, %v1085
    %v1294 = vpack.c.b16 %v1094, %v1090
    %v1295 = vpack.c.b16 %v1095, %v1091
    %v1296 = vpack.c.b16 %v1096, %v1092
    %v1297 = vpack.c.b16 %v1097, %v1093
    %v1298 = vpack.c.b16 %v1102, %v1098
    %v1299 = vpack.c.b16 %v1103, %v1099
    %v1300 = vpack.c.b16 %v1104, %v1100
    %v1301 = vpack.c.b16 %v1105, %v1101
    %vm1498 = vcmask 130048
    %v1500 = vsel %vm1498, %v299, 0
    %1502 = vmatprep.subr.bf16.mxu0 %v1135
    %1503 = vmatpush1.bf16.msra.mxu0 %v1134
    %1504 = vmatprep.subr.bf16.mxu0 %v1131
    %1505 = vmatpush1.bf16.msra.mxu0 %v1130
    %1506 = vmatprep.subr.bf16.mxu0 %v1127
    %1507 = vmatpush1.bf16.msra.mxu0 %v1126
    %1508 = vmatprep.subr.bf16.mxu0 %v1123
    %1509 = vmatpush1.bf16.msra.mxu0 %v1122
    %1510 = vmatprep.subr.bf16.mxu0 %v1119
    %1511 = vmatpush1.bf16.msra.mxu0 %v1118
    %1512 = vmatprep.subr.bf16.mxu0 %v1115
    %1513 = vmatpush1.bf16.msra.mxu0 %v1114
    %1514 = vmatprep.subr.bf16.mxu0 %v1111
    %1515 = vmatpush1.bf16.msra.mxu0 %v1110
    %1516 = vmatprep.subr.bf16.mxu0 %v1107
    %1517 = vmatpush1.bf16.msra.mxu0 %v1106
    %1518 = vmatprep.subr.bf16.mxu0 %v1167
    %1519 = vmatpush2.bf16.msra.mxu0 %v1166
    %1520 = vmatprep.subr.bf16.mxu0 %v1163
    %1521 = vmatpush2.bf16.msra.mxu0 %v1162
    %1522 = vmatprep.subr.bf16.mxu0 %v1159
    %1523 = vmatpush2.bf16.msra.mxu0 %v1158
    %1524 = vmatprep.subr.bf16.mxu0 %v1155
    %1525 = vmatpush2.bf16.msra.mxu0 %v1154
    %1526 = vmatprep.subr.bf16.mxu0 %v1151
    %1527 = vmatpush2.bf16.msra.mxu0 %v1150
    %1528 = vmatprep.subr.bf16.mxu0 %v1147
    %1529 = vmatpush2.bf16.msra.mxu0 %v1146
    %1530 = vmatprep.subr.bf16.mxu0 %v1143
    %1531 = vmatpush2.bf16.msra.mxu0 %v1142
    %1532 = vmatprep.subr.bf16.mxu0 %v1139
    %1533 = vmatpush2.bf16.msra.mxu0 %v1138
    %1534 = vmatprep.mubr.bf16.mxu0 %v294
    %1535 = vmatmul.mubr.bf16.gmra.mxu0 %v293
    %v1536 = vpop.f32.mrf.mxu0
    %v1537 = vadd.f32 %v501, %v1536
    %v1538 = vpop.f32.mrf.mxu0
    %v1539 = vadd.f32 %v505, %v1538
    %v1540 = vpop.f32.mrf.mxu0
    %v1541 = vpop.f32.mrf.mxu0
    %1542 = vdwg.mxu0
    %1543 = vmatprep.subr.bf16.mxu0 %v1199
    %1544 = vmatpush1.bf16.msra.mxu0 %v1198
    %1545 = vmatprep.subr.bf16.mxu0 %v1195
    %1546 = vmatpush1.bf16.msra.mxu0 %v1194
    %1547 = vmatprep.subr.bf16.mxu0 %v1191
    %1548 = vmatpush1.bf16.msra.mxu0 %v1190
    %1549 = vmatprep.subr.bf16.mxu0 %v1187
    %1550 = vmatpush1.bf16.msra.mxu0 %v1186
    %1551 = vmatprep.subr.bf16.mxu0 %v1183
    %1552 = vmatpush1.bf16.msra.mxu0 %v1182
    %1553 = vmatprep.subr.bf16.mxu0 %v1179
    %1554 = vmatpush1.bf16.msra.mxu0 %v1178
    %1555 = vmatprep.subr.bf16.mxu0 %v1175
    %1556 = vmatpush1.bf16.msra.mxu0 %v1174
    %1557 = vmatprep.subr.bf16.mxu0 %v1171
    %1558 = vmatpush1.bf16.msra.mxu0 %v1170
    %1559 = vmatprep.subr.bf16.mxu0 %v1231
    %1560 = vmatpush2.bf16.msra.mxu0 %v1230
    %1561 = vmatprep.subr.bf16.mxu0 %v1227
    %1562 = vmatpush2.bf16.msra.mxu0 %v1226
    %1563 = vmatprep.subr.bf16.mxu0 %v1223
    %1564 = vmatpush2.bf16.msra.mxu0 %v1222
    %1565 = vmatprep.subr.bf16.mxu0 %v1219
    %1566 = vmatpush2.bf16.msra.mxu0 %v1218
    %1567 = vmatprep.subr.bf16.mxu0 %v1215
    %1568 = vmatpush2.bf16.msra.mxu0 %v1214
    %1569 = vmatprep.subr.bf16.mxu0 %v1211
    %1570 = vmatpush2.bf16.msra.mxu0 %v1210
    %1571 = vmatprep.subr.bf16.mxu0 %v1207
    %1572 = vmatpush2.bf16.msra.mxu0 %v1206
    %1573 = vmatprep.subr.bf16.mxu0 %v1203
    %1574 = vmatpush2.bf16.msra.mxu0 %v1202
    %1575 = vmatprep.mubr.bf16.mxu0 %v296
    %1576 = vmatmul.mubr.bf16.gmra.mxu0 %v295
    %v1577 = vpop.f32.mrf.mxu0
    %v1578 = vadd.f32 %v1537, %v1577
    %v1579 = vpop.f32.mrf.mxu0
    %v1580 = vadd.f32 %v1539, %v1579
    %v1581 = vpop.f32.mrf.mxu0
    %v1582 = vpop.f32.mrf.mxu0
    %1583 = vdwg.mxu0
    %1584 = vmatprep.subr.bf16.mxu0 %v1263
    %1585 = vmatpush1.bf16.msra.mxu0 %v1262
    %1586 = vmatprep.subr.bf16.mxu0 %v1259
    %1587 = vmatpush1.bf16.msra.mxu0 %v1258
    %1588 = vmatprep.subr.bf16.mxu0 %v1255
    %1589 = vmatpush1.bf16.msra.mxu0 %v1254
    %1590 = vmatprep.subr.bf16.mxu0 %v1251
    %1591 = vmatpush1.bf16.msra.mxu0 %v1250
    %1592 = vmatprep.subr.bf16.mxu0 %v1247
    %1593 = vmatpush1.bf16.msra.mxu0 %v1246
    %1594 = vmatprep.subr.bf16.mxu0 %v1243
    %1595 = vmatpush1.bf16.msra.mxu0 %v1242
    %1596 = vmatprep.subr.bf16.mxu0 %v1239
    %1597 = vmatpush1.bf16.msra.mxu0 %v1238
    %1598 = vmatprep.subr.bf16.mxu0 %v1235
    %1599 = vmatpush1.bf16.msra.mxu0 %v1234
    %1600 = vmatprep.subr.bf16.mxu0 %v1295
    %1601 = vmatpush2.bf16.msra.mxu0 %v1294
    %1602 = vmatprep.subr.bf16.mxu0 %v1291
    %1603 = vmatpush2.bf16.msra.mxu0 %v1290
    %1604 = vmatprep.subr.bf16.mxu0 %v1287
    %1605 = vmatpush2.bf16.msra.mxu0 %v1286
    %1606 = vmatprep.subr.bf16.mxu0 %v1283
    %1607 = vmatpush2.bf16.msra.mxu0 %v1282
    %1608 = vmatprep.subr.bf16.mxu0 %v1279
    %1609 = vmatpush2.bf16.msra.mxu0 %v1278
    %1610 = vmatprep.subr.bf16.mxu0 %v1275
    %1611 = vmatpush2.bf16.msra.mxu0 %v1274
    %1612 = vmatprep.subr.bf16.mxu0 %v1271
    %1613 = vmatpush2.bf16.msra.mxu0 %v1270
    %1614 = vmatprep.subr.bf16.mxu0 %v1267
    %1615 = vmatpush2.bf16.msra.mxu0 %v1266
    %1616 = vmatprep.mubr.bf16.mxu0 %v298
    %1617 = vmatmul.mubr.bf16.gmra.mxu0 %v297
    %v1618 = vpop.f32.mrf.mxu0
    %v1619 = vadd.f32 %v1578, %v1618
    %v1620 = vpop.f32.mrf.mxu0
    %v1621 = vadd.f32 %v1580, %v1620
    %v1622 = vpop.f32.mrf.mxu0
    %v1623 = vpop.f32.mrf.mxu0
    %1624 = vdwg.mxu0
    %1625 = vmatprep.subr.bf16.mxu0 0
    %1626 = vmatpush1.bf16.msra.mxu0 0
    %1627 = vmatprep.subr.bf16.mxu0 0
    %1628 = vmatpush1.bf16.msra.mxu0 0
    %1629 = vmatprep.subr.bf16.mxu0 0
    %1630 = vmatpush1.bf16.msra.mxu0 0
    %1631 = vmatprep.subr.bf16.mxu0 0
    %1632 = vmatpush1.bf16.msra.mxu0 0
    %1633 = vmatprep.subr.bf16.mxu0 0
    %1634 = vmatpush1.bf16.msra.mxu0 0
    %1635 = vmatprep.subr.bf16.mxu0 0
    %1636 = vmatpush1.bf16.msra.mxu0 0
    %1637 = vmatprep.subr.bf16.mxu0 0
    %1638 = vmatpush1.bf16.msra.mxu0 0
    %1639 = vmatprep.subr.bf16.mxu0 %v1299
    %1640 = vmatpush1.bf16.msra.mxu0 %v1298
    %1641 = vmatprep.subr.bf16.mxu0 0
    %1642 = vmatpush2.bf16.msra.mxu0 0
    %1643 = vmatprep.subr.bf16.mxu0 0
    %1644 = vmatpush2.bf16.msra.mxu0 0
    %1645 = vmatprep.subr.bf16.mxu0 0
    %1646 = vmatpush2.bf16.msra.mxu0 0
    %1647 = vmatprep.subr.bf16.mxu0 0
    %1648 = vmatpush2.bf16.msra.mxu0 0
    %1649 = vmatprep.subr.bf16.mxu0 0
    %1650 = vmatpush2.bf16.msra.mxu0 0
    %1651 = vmatprep.subr.bf16.mxu0 0
    %1652 = vmatpush2.bf16.msra.mxu0 0
    %1653 = vmatprep.subr.bf16.mxu0 0
    %1654 = vmatpush2.bf16.msra.mxu0 0
    %1655 = vmatprep.subr.bf16.mxu0 0
    %1656 = vmatpush2.bf16.msra.mxu0 0
    %1657 = vmatprep.mubr.bf16.mxu0 0
    %1658 = vmatmul.mubr.bf16.gmra.mxu0 %v1500
    %v1659 = vpop.f32.mrf.mxu0
    %v1660 = vadd.f32 %v1619, %v1659
    %v1661 = vpop.f32.mrf.mxu0
    %v1662 = vadd.f32 %v1621, %v1661
    %v1663 = vpop.f32.mrf.mxu0
    %v1664 = vpop.f32.mrf.mxu0
    %1665 = vdwg.mxu0
    %1666 = vmatprep.subr.bf16.mxu0 %v1137
    %1667 = vmatpush1.bf16.msra.mxu0 %v1136
    %1668 = vmatprep.subr.bf16.mxu0 %v1133
    %1669 = vmatpush1.bf16.msra.mxu0 %v1132
    %1670 = vmatprep.subr.bf16.mxu0 %v1129
    %1671 = vmatpush1.bf16.msra.mxu0 %v1128
    %1672 = vmatprep.subr.bf16.mxu0 %v1125
    %1673 = vmatpush1.bf16.msra.mxu0 %v1124
    %1674 = vmatprep.subr.bf16.mxu0 %v1121
    %1675 = vmatpush1.bf16.msra.mxu0 %v1120
    %1676 = vmatprep.subr.bf16.mxu0 %v1117
    %1677 = vmatpush1.bf16.msra.mxu0 %v1116
    %1678 = vmatprep.subr.bf16.mxu0 %v1113
    %1679 = vmatpush1.bf16.msra.mxu0 %v1112
    %1680 = vmatprep.subr.bf16.mxu0 %v1109
    %1681 = vmatpush1.bf16.msra.mxu0 %v1108
    %1682 = vmatprep.subr.bf16.mxu0 %v1169
    %1683 = vmatpush2.bf16.msra.mxu0 %v1168
    %1684 = vmatprep.subr.bf16.mxu0 %v1165
    %1685 = vmatpush2.bf16.msra.mxu0 %v1164
    %1686 = vmatprep.subr.bf16.mxu0 %v1161
    %1687 = vmatpush2.bf16.msra.mxu0 %v1160
    %1688 = vmatprep.subr.bf16.mxu0 %v1157
    %1689 = vmatpush2.bf16.msra.mxu0 %v1156
    %1690 = vmatprep.subr.bf16.mxu0 %v1153
    %1691 = vmatpush2.bf16.msra.mxu0 %v1152
    %1692 = vmatprep.subr.bf16.mxu0 %v1149
    %1693 = vmatpush2.bf16.msra.mxu0 %v1148
    %1694 = vmatprep.subr.bf16.mxu0 %v1145
    %1695 = vmatpush2.bf16.msra.mxu0 %v1144
    %1696 = vmatprep.subr.bf16.mxu0 %v1141
    %1697 = vmatpush2.bf16.msra.mxu0 %v1140
    %1698 = vmatprep.mubr.bf16.mxu0 %v294
    %1699 = vmatmul.mubr.bf16.gmra.mxu0 %v293
    %v1700 = vpop.f32.mrf.mxu0
    %v1701 = vadd.f32 %v509, %v1700
    %v1702 = vpop.f32.mrf.mxu0
    %v1703 = vadd.f32 %v513, %v1702
    %v1704 = vpop.f32.mrf.mxu0
    %v1705 = vpop.f32.mrf.mxu0
    %1706 = vdwg.mxu0
    %1707 = vmatprep.subr.bf16.mxu0 %v1201
    %1708 = vmatpush1.bf16.msra.mxu0 %v1200
    %1709 = vmatprep.subr.bf16.mxu0 %v1197
    %1710 = vmatpush1.bf16.msra.mxu0 %v1196
    %1711 = vmatprep.subr.bf16.mxu0 %v1193
    %1712 = vmatpush1.bf16.msra.mxu0 %v1192
    %1713 = vmatprep.subr.bf16.mxu0 %v1189
    %1714 = vmatpush1.bf16.msra.mxu0 %v1188
    %1715 = vmatprep.subr.bf16.mxu0 %v1185
    %1716 = vmatpush1.bf16.msra.mxu0 %v1184
    %1717 = vmatprep.subr.bf16.mxu0 %v1181
    %1718 = vmatpush1.bf16.msra.mxu0 %v1180
    %1719 = vmatprep.subr.bf16.mxu0 %v1177
    %1720 = vmatpush1.bf16.msra.mxu0 %v1176
    %1721 = vmatprep.subr.bf16.mxu0 %v1173
    %1722 = vmatpush1.bf16.msra.mxu0 %v1172
    %1723 = vmatprep.subr.bf16.mxu0 %v1233
    %1724 = vmatpush2.bf16.msra.mxu0 %v1232
    %1725 = vmatprep.subr.bf16.mxu0 %v1229
    %1726 = vmatpush2.bf16.msra.mxu0 %v1228
    %1727 = vmatprep.subr.bf16.mxu0 %v1225
    %1728 = vmatpush2.bf16.msra.mxu0 %v1224
    %1729 = vmatprep.subr.bf16.mxu0 %v1221
    %1730 = vmatpush2.bf16.msra.mxu0 %v1220
    %1731 = vmatprep.subr.bf16.mxu0 %v1217
    %1732 = vmatpush2.bf16.msra.mxu0 %v1216
    %1733 = vmatprep.subr.bf16.mxu0 %v1213
    %1734 = vmatpush2.bf16.msra.mxu0 %v1212
    %1735 = vmatprep.subr.bf16.mxu0 %v1209
    %1736 = vmatpush2.bf16.msra.mxu0 %v1208
    %1737 = vmatprep.subr.bf16.mxu0 %v1205
    %1738 = vmatpush2.bf16.msra.mxu0 %v1204
    %1739 = vmatprep.mubr.bf16.mxu0 %v296
    %1740 = vmatmul.mubr.bf16.gmra.mxu0 %v295
    %v1741 = vpop.f32.mrf.mxu0
    %v1742 = vadd.f32 %v1701, %v1741
    %v1743 = vpop.f32.mrf.mxu0
    %v1744 = vadd.f32 %v1703, %v1743
    %v1745 = vpop.f32.mrf.mxu0
    %v1746 = vpop.f32.mrf.mxu0
    %1747 = vdwg.mxu0
    %1748 = vmatprep.subr.bf16.mxu0 %v1265
    %1749 = vmatpush1.bf16.msra.mxu0 %v1264
    %1750 = vmatprep.subr.bf16.mxu0 %v1261
    %1751 = vmatpush1.bf16.msra.mxu0 %v1260
    %1752 = vmatprep.subr.bf16.mxu0 %v1257
    %1753 = vmatpush1.bf16.msra.mxu0 %v1256
    %1754 = vmatprep.subr.bf16.mxu0 %v1253
    %1755 = vmatpush1.bf16.msra.mxu0 %v1252
    %1756 = vmatprep.subr.bf16.mxu0 %v1249
    %1757 = vmatpush1.bf16.msra.mxu0 %v1248
    %1758 = vmatprep.subr.bf16.mxu0 %v1245
    %1759 = vmatpush1.bf16.msra.mxu0 %v1244
    %1760 = vmatprep.subr.bf16.mxu0 %v1241
    %1761 = vmatpush1.bf16.msra.mxu0 %v1240
    %1762 = vmatprep.subr.bf16.mxu0 %v1237
    %1763 = vmatpush1.bf16.msra.mxu0 %v1236
    %1764 = vmatprep.subr.bf16.mxu0 %v1297
    %1765 = vmatpush2.bf16.msra.mxu0 %v1296
    %1766 = vmatprep.subr.bf16.mxu0 %v1293
    %1767 = vmatpush2.bf16.msra.mxu0 %v1292
    %1768 = vmatprep.subr.bf16.mxu0 %v1289
    %1769 = vmatpush2.bf16.msra.mxu0 %v1288
    %1770 = vmatprep.subr.bf16.mxu0 %v1285
    %1771 = vmatpush2.bf16.msra.mxu0 %v1284
    %1772 = vmatprep.subr.bf16.mxu0 %v1281
    %1773 = vmatpush2.bf16.msra.mxu0 %v1280
    %1774 = vmatprep.subr.bf16.mxu0 %v1277
    %1775 = vmatpush2.bf16.msra.mxu0 %v1276
    %1776 = vmatprep.subr.bf16.mxu0 %v1273
    %1777 = vmatpush2.bf16.msra.mxu0 %v1272
    %1778 = vmatprep.subr.bf16.mxu0 %v1269
    %1779 = vmatpush2.bf16.msra.mxu0 %v1268
    %1780 = vmatprep.mubr.bf16.mxu0 %v298
    %1781 = vmatmul.mubr.bf16.gmra.mxu0 %v297
    %v1782 = vpop.f32.mrf.mxu0
    %v1783 = vadd.f32 %v1742, %v1782
    %v1784 = vpop.f32.mrf.mxu0
    %v1785 = vadd.f32 %v1744, %v1784
    %v1786 = vpop.f32.mrf.mxu0
    %v1787 = vpop.f32.mrf.mxu0
    %1788 = vdwg.mxu0
    %1789 = vmatprep.subr.bf16.mxu0 0
    %1790 = vmatpush1.bf16.msra.mxu0 0
    %1791 = vmatprep.subr.bf16.mxu0 0
    %1792 = vmatpush1.bf16.msra.mxu0 0
    %1793 = vmatprep.subr.bf16.mxu0 0
    %1794 = vmatpush1.bf16.msra.mxu0 0
    %1795 = vmatprep.subr.bf16.mxu0 0
    %1796 = vmatpush1.bf16.msra.mxu0 0
    %1797 = vmatprep.subr.bf16.mxu0 0
    %1798 = vmatpush1.bf16.msra.mxu0 0
    %1799 = vmatprep.subr.bf16.mxu0 0
    %1800 = vmatpush1.bf16.msra.mxu0 0
    %1801 = vmatprep.subr.bf16.mxu0 0
    %1802 = vmatpush1.bf16.msra.mxu0 0
    %1803 = vmatprep.subr.bf16.mxu0 %v1301
    %1804 = vmatpush1.bf16.msra.mxu0 %v1300
    %1805 = vmatprep.subr.bf16.mxu0 0
    %1806 = vmatpush2.bf16.msra.mxu0 0
    %1807 = vmatprep.subr.bf16.mxu0 0
    %1808 = vmatpush2.bf16.msra.mxu0 0
    %1809 = vmatprep.subr.bf16.mxu0 0
    %1810 = vmatpush2.bf16.msra.mxu0 0
    %1811 = vmatprep.subr.bf16.mxu0 0
    %1812 = vmatpush2.bf16.msra.mxu0 0
    %1813 = vmatprep.subr.bf16.mxu0 0
    %1814 = vmatpush2.bf16.msra.mxu0 0
    %1815 = vmatprep.subr.bf16.mxu0 0
    %1816 = vmatpush2.bf16.msra.mxu0 0
    %1817 = vmatprep.subr.bf16.mxu0 0
    %1818 = vmatpush2.bf16.msra.mxu0 0
    %1819 = vmatprep.subr.bf16.mxu0 0
    %1820 = vmatpush2.bf16.msra.mxu0 0
    %1821 = vmatprep.mubr.bf16.mxu0 0
    %1822 = vmatmul.mubr.bf16.gmra.mxu0 %v1500
    %v1823 = vpop.f32.mrf.mxu0
    %v1824 = vadd.f32 %v1783, %v1823
    %v1825 = vpop.f32.mrf.mxu0
    %v1826 = vadd.f32 %v1785, %v1825
    %v1827 = vpop.f32.mrf.mxu0
    %v1828 = vpop.f32.mrf.mxu0
    %1829 = vdwg.mxu0
    %v1830 = vmax.f32 %v1660, 0.0
    %v1831 = vmax.f32 %v1662, 0.0
    %v1832 = vmax.f32 %v1824, 0.0
    %v1833 = vmax.f32 %v1826, 0.0
    %v1834 = vpack.c.bf16 %v1830, %v1830
    %v1835 = vpack.c.bf16 %v1831, %v1831
    %v1836 = vpack.c.bf16 %v1832, %v1832
    %v1837 = vpack.c.bf16 %v1833, %v1833
    %v1838 = vld [vmem:[#allocation8] sm:$0xff]
    %v1839 = vld [vmem:[#allocation8 + $0x8] sm:$0xff]
    %v1840 = vld [vmem:[#allocation8 + $0x10] sm:$0xff]
    %v1841 = vld [vmem:[#allocation8 + $0x18] sm:$0xff]
    %v1842 = vld [vmem:[#allocation8 + $0x20] sm:$0xff]
    %v1843 = vld [vmem:[#allocation8 + $0x28] sm:$0xff]
    %v1844 = vld [vmem:[#allocation8 + $0x30] sm:$0xff]
    %v1845 = vld [vmem:[#allocation8 + $0x38] sm:$0xff]
    %v1846 = vld [vmem:[#allocation8 + $0x40] sm:$0xff]
    %v1847 = vld [vmem:[#allocation8 + $0x48] sm:$0xff]
    %v1848 = vld [vmem:[#allocation8 + $0x50] sm:$0xff]
    %v1849 = vld [vmem:[#allocation8 + $0x58] sm:$0xff]
    %v1850 = vld [vmem:[#allocation8 + $0x60] sm:$0xff]
    %v1851 = vld [vmem:[#allocation8 + $0x68] sm:$0xff]
    %v1852 = vld [vmem:[#allocation8 + $0x70] sm:$0xff]
    %v1853 = vld [vmem:[#allocation8 + $0x78] sm:$0xff]
    %v1854 = vld [vmem:[#allocation8 + $0x80] sm:$0xff]
    %v1855 = vld [vmem:[#allocation8 + $0x88] sm:$0xff]
    %v1856 = vld [vmem:[#allocation8 + $0x90] sm:$0xff]
    %v1857 = vld [vmem:[#allocation8 + $0x98] sm:$0xff]
    %v1858 = vld [vmem:[#allocation8 + $0xa0] sm:$0xff]
    %v1859 = vld [vmem:[#allocation8 + $0xa8] sm:$0xff]
    %v1860 = vld [vmem:[#allocation8 + $0xb0] sm:$0xff]
    %v1861 = vld [vmem:[#allocation8 + $0xb8] sm:$0xff]
    %v1862 = vld [vmem:[#allocation8 + $0xc0] sm:$0xff]
    %v1863 = vld [vmem:[#allocation8 + $0xc8] sm:$0xff]
    %v1864 = vld [vmem:[#allocation8 + $0xd0] sm:$0xff]
    %v1865 = vld [vmem:[#allocation8 + $0xd8] sm:$0xff]
    %v1866 = vld [vmem:[#allocation8 + $0xe0] sm:$0xff]
    %v1867 = vld [vmem:[#allocation8 + $0xe8] sm:$0xff]
    %v1868 = vld [vmem:[#allocation8 + $0xf0] sm:$0xff]
    %v1869 = vld [vmem:[#allocation8 + $0xf8] sm:$0xff]
    %v1870 = vld [vmem:[#allocation8 + $0x100] sm:$0xff]
    %v1871 = vld [vmem:[#allocation8 + $0x108] sm:$0xff]
    %v1872 = vld [vmem:[#allocation8 + $0x110] sm:$0xff]
    %v1873 = vld [vmem:[#allocation8 + $0x118] sm:$0xff]
    %v1874 = vld [vmem:[#allocation8 + $0x120] sm:$0xff]
    %v1875 = vld [vmem:[#allocation8 + $0x128] sm:$0xff]
    %v1876 = vld [vmem:[#allocation8 + $0x130] sm:$0xff]
    %v1877 = vld [vmem:[#allocation8 + $0x138] sm:$0xff]
    %v1878 = vld [vmem:[#allocation8 + $0x140] sm:$0xff]
    %v1879 = vld [vmem:[#allocation8 + $0x148] sm:$0xff]
    %v1880 = vld [vmem:[#allocation8 + $0x150] sm:$0xff]
    %v1881 = vld [vmem:[#allocation8 + $0x158] sm:$0xff]
    %v1882 = vld [vmem:[#allocation8 + $0x160] sm:$0xff]
    %v1883 = vld [vmem:[#allocation8 + $0x168] sm:$0xff]
    %v1884 = vld [vmem:[#allocation8 + $0x170] sm:$0xff]
    %v1885 = vld [vmem:[#allocation8 + $0x178] sm:$0xff]
    %v1886 = vld [vmem:[#allocation8 + $0x180] sm:$0xff]
    %v1887 = vld [vmem:[#allocation8 + $0x188] sm:$0xff]
    %v1888 = vld [vmem:[#allocation8 + $0x190] sm:$0xff]
    %v1889 = vld [vmem:[#allocation8 + $0x198] sm:$0xff]
    %v1890 = vld [vmem:[#allocation8 + $0x1a0] sm:$0xff]
    %v1891 = vld [vmem:[#allocation8 + $0x1a8] sm:$0xff]
    %v1892 = vld [vmem:[#allocation8 + $0x1b0] sm:$0xff]
    %v1893 = vld [vmem:[#allocation8 + $0x1b8] sm:$0xff]
    %v1894 = vld [vmem:[#allocation8 + $0x1c0] sm:$0xff]
    %v1895 = vld [vmem:[#allocation8 + $0x1c8] sm:$0xff]
    %v1896 = vld [vmem:[#allocation8 + $0x1d0] sm:$0xff]
    %v1897 = vld [vmem:[#allocation8 + $0x1d8] sm:$0xff]
    %v1898 = vld [vmem:[#allocation8 + $0x1e0] sm:$0xff]
    %v1899 = vld [vmem:[#allocation8 + $0x1e8] sm:$0xff]
    %v1900 = vld [vmem:[#allocation8 + $0x1f0] sm:$0xff]
    %v1901 = vld [vmem:[#allocation8 + $0x1f8] sm:$0xff]
    %v1902 = vld [vmem:[#allocation10] sm:$0x3]
    %v1904 = vlaneseq
    %v1905 = vshrl.u32 %v1904, 7
    %v1906 = vsub.s32 0, %v1905
    %v1907 = vrot.slane %v1902, %v1906
    %v1908 = vlaneseq
    %v1909 = vshrl.u32 %v1908, 7
    %v1910 = vsub.s32 1, %v1909
    %v1911 = vrot.slane %v1902, %v1910
    %v1978 = vunpack.c.l.b16 %v1838
    %v1979 = vunpack.c.h.b16 %v1838
    %v1980 = vunpack.c.l.b16 %v1839
    %v1981 = vunpack.c.h.b16 %v1839
    %v1982 = vunpack.c.l.b16 %v1840
    %v1983 = vunpack.c.h.b16 %v1840
    %v1984 = vunpack.c.l.b16 %v1841
    %v1985 = vunpack.c.h.b16 %v1841
    %v1986 = vunpack.c.l.b16 %v1842
    %v1987 = vunpack.c.h.b16 %v1842
    %v1988 = vunpack.c.l.b16 %v1843
    %v1989 = vunpack.c.h.b16 %v1843
    %v1990 = vunpack.c.l.b16 %v1844
    %v1991 = vunpack.c.h.b16 %v1844
    %v1992 = vunpack.c.l.b16 %v1845
    %v1993 = vunpack.c.h.b16 %v1845
    %v1994 = vunpack.c.l.b16 %v1846
    %v1995 = vunpack.c.h.b16 %v1846
    %v1996 = vunpack.c.l.b16 %v1847
    %v1997 = vunpack.c.h.b16 %v1847
    %v1998 = vunpack.c.l.b16 %v1848
    %v1999 = vunpack.c.h.b16 %v1848
    %v2000 = vunpack.c.l.b16 %v1849
    %v2001 = vunpack.c.h.b16 %v1849
    %v2002 = vunpack.c.l.b16 %v1850
    %v2003 = vunpack.c.h.b16 %v1850
    %v2004 = vunpack.c.l.b16 %v1851
    %v2005 = vunpack.c.h.b16 %v1851
    %v2006 = vunpack.c.l.b16 %v1852
    %v2007 = vunpack.c.h.b16 %v1852
    %v2008 = vunpack.c.l.b16 %v1853
    %v2009 = vunpack.c.h.b16 %v1853
    %v2010 = vunpack.c.l.b16 %v1854
    %v2011 = vunpack.c.h.b16 %v1854
    %v2012 = vunpack.c.l.b16 %v1855
    %v2013 = vunpack.c.h.b16 %v1855
    %v2014 = vunpack.c.l.b16 %v1856
    %v2015 = vunpack.c.h.b16 %v1856
    %v2016 = vunpack.c.l.b16 %v1857
    %v2017 = vunpack.c.h.b16 %v1857
    %v2018 = vunpack.c.l.b16 %v1858
    %v2019 = vunpack.c.h.b16 %v1858
    %v2020 = vunpack.c.l.b16 %v1859
    %v2021 = vunpack.c.h.b16 %v1859
    %v2022 = vunpack.c.l.b16 %v1860
    %v2023 = vunpack.c.h.b16 %v1860
    %v2024 = vunpack.c.l.b16 %v1861
    %v2025 = vunpack.c.h.b16 %v1861
    %v2026 = vunpack.c.l.b16 %v1862
    %v2027 = vunpack.c.h.b16 %v1862
    %v2028 = vunpack.c.l.b16 %v1863
    %v2029 = vunpack.c.h.b16 %v1863
    %v2030 = vunpack.c.l.b16 %v1864
    %v2031 = vunpack.c.h.b16 %v1864
    %v2032 = vunpack.c.l.b16 %v1865
    %v2033 = vunpack.c.h.b16 %v1865
    %v2034 = vunpack.c.l.b16 %v1866
    %v2035 = vunpack.c.h.b16 %v1866
    %v2036 = vunpack.c.l.b16 %v1867
    %v2037 = vunpack.c.h.b16 %v1867
    %v2038 = vunpack.c.l.b16 %v1868
    %v2039 = vunpack.c.h.b16 %v1868
    %v2040 = vunpack.c.l.b16 %v1869
    %v2041 = vunpack.c.h.b16 %v1869
    %v2042 = vunpack.c.l.b16 %v1870
    %v2043 = vunpack.c.h.b16 %v1870
    %v2044 = vunpack.c.l.b16 %v1871
    %v2045 = vunpack.c.h.b16 %v1871
    %v2046 = vunpack.c.l.b16 %v1872
    %v2047 = vunpack.c.h.b16 %v1872
    %v2048 = vunpack.c.l.b16 %v1873
    %v2049 = vunpack.c.h.b16 %v1873
    %v2050 = vunpack.c.l.b16 %v1874
    %v2051 = vunpack.c.h.b16 %v1874
    %v2052 = vunpack.c.l.b16 %v1875
    %v2053 = vunpack.c.h.b16 %v1875
    %v2054 = vunpack.c.l.b16 %v1876
    %v2055 = vunpack.c.h.b16 %v1876
    %v2056 = vunpack.c.l.b16 %v1877
    %v2057 = vunpack.c.h.b16 %v1877
    %v2058 = vunpack.c.l.b16 %v1878
    %v2059 = vunpack.c.h.b16 %v1878
    %v2060 = vunpack.c.l.b16 %v1879
    %v2061 = vunpack.c.h.b16 %v1879
    %v2062 = vunpack.c.l.b16 %v1880
    %v2063 = vunpack.c.h.b16 %v1880
    %v2064 = vunpack.c.l.b16 %v1881
    %v2065 = vunpack.c.h.b16 %v1881
    %v2066 = vunpack.c.l.b16 %v1882
    %v2067 = vunpack.c.h.b16 %v1882
    %v2068 = vunpack.c.l.b16 %v1883
    %v2069 = vunpack.c.h.b16 %v1883
    %v2070 = vunpack.c.l.b16 %v1884
    %v2071 = vunpack.c.h.b16 %v1884
    %v2072 = vunpack.c.l.b16 %v1885
    %v2073 = vunpack.c.h.b16 %v1885
    %v2074 = vunpack.c.l.b16 %v1886
    %v2075 = vunpack.c.h.b16 %v1886
    %v2076 = vunpack.c.l.b16 %v1887
    %v2077 = vunpack.c.h.b16 %v1887
    %v2078 = vunpack.c.l.b16 %v1888
    %v2079 = vunpack.c.h.b16 %v1888
    %v2080 = vunpack.c.l.b16 %v1889
    %v2081 = vunpack.c.h.b16 %v1889
    %v2082 = vunpack.c.l.b16 %v1890
    %v2083 = vunpack.c.h.b16 %v1890
    %v2084 = vunpack.c.l.b16 %v1891
    %v2085 = vunpack.c.h.b16 %v1891
    %v2086 = vunpack.c.l.b16 %v1892
    %v2087 = vunpack.c.h.b16 %v1892
    %v2088 = vunpack.c.l.b16 %v1893
    %v2089 = vunpack.c.h.b16 %v1893
    %v2090 = vunpack.c.l.b16 %v1894
    %v2091 = vunpack.c.h.b16 %v1894
    %v2092 = vunpack.c.l.b16 %v1895
    %v2093 = vunpack.c.h.b16 %v1895
    %v2094 = vunpack.c.l.b16 %v1896
    %v2095 = vunpack.c.h.b16 %v1896
    %v2096 = vunpack.c.l.b16 %v1897
    %v2097 = vunpack.c.h.b16 %v1897
    %v2098 = vunpack.c.l.b16 %v1898
    %v2099 = vunpack.c.h.b16 %v1898
    %v2100 = vunpack.c.l.b16 %v1899
    %v2101 = vunpack.c.h.b16 %v1899
    %v2102 = vunpack.c.l.b16 %v1900
    %v2103 = vunpack.c.h.b16 %v1900
    %v2104 = vunpack.c.l.b16 %v1901
    %v2105 = vunpack.c.h.b16 %v1901
    %v2106 = vpack.c.b16 %v1980, %v1978
    %v2107 = vpack.c.b16 %v1981, %v1979
    %v2108 = vpack.c.b16 %v1984, %v1982
    %v2109 = vpack.c.b16 %v1985, %v1983
    %v2110 = vpack.c.b16 %v1988, %v1986
    %v2111 = vpack.c.b16 %v1989, %v1987
    %v2112 = vpack.c.b16 %v1992, %v1990
    %v2113 = vpack.c.b16 %v1993, %v1991
    %v2114 = vpack.c.b16 %v1996, %v1994
    %v2115 = vpack.c.b16 %v1997, %v1995
    %v2116 = vpack.c.b16 %v2000, %v1998
    %v2117 = vpack.c.b16 %v2001, %v1999
    %v2118 = vpack.c.b16 %v2004, %v2002
    %v2119 = vpack.c.b16 %v2005, %v2003
    %v2120 = vpack.c.b16 %v2008, %v2006
    %v2121 = vpack.c.b16 %v2009, %v2007
    %v2122 = vpack.c.b16 %v2012, %v2010
    %v2123 = vpack.c.b16 %v2013, %v2011
    %v2124 = vpack.c.b16 %v2016, %v2014
    %v2125 = vpack.c.b16 %v2017, %v2015
    %v2126 = vpack.c.b16 %v2020, %v2018
    %v2127 = vpack.c.b16 %v2021, %v2019
    %v2128 = vpack.c.b16 %v2024, %v2022
    %v2129 = vpack.c.b16 %v2025, %v2023
    %v2130 = vpack.c.b16 %v2028, %v2026
    %v2131 = vpack.c.b16 %v2029, %v2027
    %v2132 = vpack.c.b16 %v2032, %v2030
    %v2133 = vpack.c.b16 %v2033, %v2031
    %v2134 = vpack.c.b16 %v2036, %v2034
    %v2135 = vpack.c.b16 %v2037, %v2035
    %v2136 = vpack.c.b16 %v2040, %v2038
    %v2137 = vpack.c.b16 %v2041, %v2039
    %v2138 = vpack.c.b16 %v2044, %v2042
    %v2139 = vpack.c.b16 %v2045, %v2043
    %v2140 = vpack.c.b16 %v2048, %v2046
    %v2141 = vpack.c.b16 %v2049, %v2047
    %v2142 = vpack.c.b16 %v2052, %v2050
    %v2143 = vpack.c.b16 %v2053, %v2051
    %v2144 = vpack.c.b16 %v2056, %v2054
    %v2145 = vpack.c.b16 %v2057, %v2055
    %v2146 = vpack.c.b16 %v2060, %v2058
    %v2147 = vpack.c.b16 %v2061, %v2059
    %v2148 = vpack.c.b16 %v2064, %v2062
    %v2149 = vpack.c.b16 %v2065, %v2063
    %v2150 = vpack.c.b16 %v2068, %v2066
    %v2151 = vpack.c.b16 %v2069, %v2067
    %v2152 = vpack.c.b16 %v2072, %v2070
    %v2153 = vpack.c.b16 %v2073, %v2071
    %v2154 = vpack.c.b16 %v2076, %v2074
    %v2155 = vpack.c.b16 %v2077, %v2075
    %v2156 = vpack.c.b16 %v2080, %v2078
    %v2157 = vpack.c.b16 %v2081, %v2079
    %v2158 = vpack.c.b16 %v2084, %v2082
    %v2159 = vpack.c.b16 %v2085, %v2083
    %v2160 = vpack.c.b16 %v2088, %v2086
    %v2161 = vpack.c.b16 %v2089, %v2087
    %v2162 = vpack.c.b16 %v2092, %v2090
    %v2163 = vpack.c.b16 %v2093, %v2091
    %v2164 = vpack.c.b16 %v2096, %v2094
    %v2165 = vpack.c.b16 %v2097, %v2095
    %v2166 = vpack.c.b16 %v2100, %v2098
    %v2167 = vpack.c.b16 %v2101, %v2099
    %v2168 = vpack.c.b16 %v2104, %v2102
    %v2169 = vpack.c.b16 %v2105, %v2103
    %2234 = vmatprep.subr.bf16.mxu0 %v2121
    %2235 = vmatpush1.bf16.msra.mxu0 %v2120
    %2236 = vmatprep.subr.bf16.mxu0 %v2119
    %2237 = vmatpush1.bf16.msra.mxu0 %v2118
    %2238 = vmatprep.subr.bf16.mxu0 %v2117
    %2239 = vmatpush1.bf16.msra.mxu0 %v2116
    %2240 = vmatprep.subr.bf16.mxu0 %v2115
    %2241 = vmatpush1.bf16.msra.mxu0 %v2114
    %2242 = vmatprep.subr.bf16.mxu0 %v2113
    %2243 = vmatpush1.bf16.msra.mxu0 %v2112
    %2244 = vmatprep.subr.bf16.mxu0 %v2111
    %2245 = vmatpush1.bf16.msra.mxu0 %v2110
    %2246 = vmatprep.subr.bf16.mxu0 %v2109
    %2247 = vmatpush1.bf16.msra.mxu0 %v2108
    %2248 = vmatprep.subr.bf16.mxu0 %v2107
    %2249 = vmatpush1.bf16.msra.mxu0 %v2106
    %2250 = vmatprep.subr.bf16.mxu0 %v2137
    %2251 = vmatpush2.bf16.msra.mxu0 %v2136
    %2252 = vmatprep.subr.bf16.mxu0 %v2135
    %2253 = vmatpush2.bf16.msra.mxu0 %v2134
    %2254 = vmatprep.subr.bf16.mxu0 %v2133
    %2255 = vmatpush2.bf16.msra.mxu0 %v2132
    %2256 = vmatprep.subr.bf16.mxu0 %v2131
    %2257 = vmatpush2.bf16.msra.mxu0 %v2130
    %2258 = vmatprep.subr.bf16.mxu0 %v2129
    %2259 = vmatpush2.bf16.msra.mxu0 %v2128
    %2260 = vmatprep.subr.bf16.mxu0 %v2127
    %2261 = vmatpush2.bf16.msra.mxu0 %v2126
    %2262 = vmatprep.subr.bf16.mxu0 %v2125
    %2263 = vmatpush2.bf16.msra.mxu0 %v2124
    %2264 = vmatprep.subr.bf16.mxu0 %v2123
    %2265 = vmatpush2.bf16.msra.mxu0 %v2122
    %2266 = vmatprep.mubr.bf16.mxu0 %v1835
    %2267 = vmatmul.mubr.bf16.gmra.mxu0 %v1834
    %v2268 = vpop.f32.mrf.mxu0
    %v2269 = vadd.f32 %v1907, %v2268
    %v2270 = vpop.f32.mrf.mxu0
    %v2271 = vadd.f32 %v1911, %v2270
    %v2272 = vpop.f32.mrf.mxu0
    %v2273 = vpop.f32.mrf.mxu0
    %2274 = vdwg.mxu0
    %2275 = vmatprep.subr.bf16.mxu0 %v2153
    %2276 = vmatpush1.bf16.msra.mxu0 %v2152
    %2277 = vmatprep.subr.bf16.mxu0 %v2151
    %2278 = vmatpush1.bf16.msra.mxu0 %v2150
    %2279 = vmatprep.subr.bf16.mxu0 %v2149
    %2280 = vmatpush1.bf16.msra.mxu0 %v2148
    %2281 = vmatprep.subr.bf16.mxu0 %v2147
    %2282 = vmatpush1.bf16.msra.mxu0 %v2146
    %2283 = vmatprep.subr.bf16.mxu0 %v2145
    %2284 = vmatpush1.bf16.msra.mxu0 %v2144
    %2285 = vmatprep.subr.bf16.mxu0 %v2143
    %2286 = vmatpush1.bf16.msra.mxu0 %v2142
    %2287 = vmatprep.subr.bf16.mxu0 %v2141
    %2288 = vmatpush1.bf16.msra.mxu0 %v2140
    %2289 = vmatprep.subr.bf16.mxu0 %v2139
    %2290 = vmatpush1.bf16.msra.mxu0 %v2138
    %2291 = vmatprep.subr.bf16.mxu0 %v2169
    %2292 = vmatpush2.bf16.msra.mxu0 %v2168
    %2293 = vmatprep.subr.bf16.mxu0 %v2167
    %2294 = vmatpush2.bf16.msra.mxu0 %v2166
    %2295 = vmatprep.subr.bf16.mxu0 %v2165
    %2296 = vmatpush2.bf16.msra.mxu0 %v2164
    %2297 = vmatprep.subr.bf16.mxu0 %v2163
    %2298 = vmatpush2.bf16.msra.mxu0 %v2162
    %2299 = vmatprep.subr.bf16.mxu0 %v2161
    %2300 = vmatpush2.bf16.msra.mxu0 %v2160
    %2301 = vmatprep.subr.bf16.mxu0 %v2159
    %2302 = vmatpush2.bf16.msra.mxu0 %v2158
    %2303 = vmatprep.subr.bf16.mxu0 %v2157
    %2304 = vmatpush2.bf16.msra.mxu0 %v2156
    %2305 = vmatprep.subr.bf16.mxu0 %v2155
    %2306 = vmatpush2.bf16.msra.mxu0 %v2154
    %2307 = vmatprep.mubr.bf16.mxu0 %v1837
    %2308 = vmatmul.mubr.bf16.gmra.mxu0 %v1836
    %v2309 = vpop.f32.mrf.mxu0
    %v2310 = vadd.f32 %v2269, %v2309
    %v2311 = vpop.f32.mrf.mxu0
    %v2312 = vadd.f32 %v2271, %v2311
    %v2313 = vpop.f32.mrf.mxu0
    %v2314 = vpop.f32.mrf.mxu0
    %2315 = vdwg.mxu0
    %v2316 = vmax.f32 %v2310, 0.0
    %v2317 = vmax.f32 %v2312, 0.0
    %v2318 = vpack.c.bf16 %v2316, %v2316
    %v2319 = vpack.c.bf16 %v2317, %v2317
    %v2320 = vld [vmem:[#allocation11] sm:$0xf]
    %v2321 = vld [vmem:[#allocation11 + $0x4] sm:$0xf]
    %v2322 = vld [vmem:[#allocation11 + $0x8] sm:$0xf]
    %v2323 = vld [vmem:[#allocation11 + $0xc] sm:$0xf]
    %v2324 = vld [vmem:[#allocation11 + $0x10] sm:$0xf]
    %v2325 = vld [vmem:[#allocation11 + $0x14] sm:$0xf]
    %v2326 = vld [vmem:[#allocation11 + $0x18] sm:$0xf]
    %v2327 = vld [vmem:[#allocation11 + $0x1c] sm:$0xf]
    %v2328 = vld [vmem:[#allocation11 + $0x20] sm:$0xf]
    %v2329 = vld [vmem:[#allocation11 + $0x24] sm:$0xf]
    %v2330 = vld [vmem:[#allocation11 + $0x28] sm:$0xf]
    %v2331 = vld [vmem:[#allocation11 + $0x2c] sm:$0xf]
    %v2332 = vld [vmem:[#allocation11 + $0x30] sm:$0xf]
    %v2333 = vld [vmem:[#allocation11 + $0x34] sm:$0xf]
    %v2334 = vld [vmem:[#allocation11 + $0x38] sm:$0xf]
    %v2335 = vld [vmem:[#allocation11 + $0x3c] sm:$0xf]
    %v2336 = vld [vmem:[#allocation11 + $0x40] sm:$0xf]
    %v2337 = vld [vmem:[#allocation11 + $0x44] sm:$0xf]
    %v2338 = vld [vmem:[#allocation11 + $0x48] sm:$0xf]
    %v2339 = vld [vmem:[#allocation11 + $0x4c] sm:$0xf]
    %v2340 = vld [vmem:[#allocation11 + $0x50] sm:$0xf]
    %v2341 = vld [vmem:[#allocation11 + $0x54] sm:$0xf]
    %v2342 = vld [vmem:[#allocation11 + $0x58] sm:$0xf]
    %v2343 = vld [vmem:[#allocation11 + $0x5c] sm:$0xf]
    %v2344 = vld [vmem:[#allocation11 + $0x60] sm:$0xf]
    %v2345 = vld [vmem:[#allocation11 + $0x64] sm:$0xf]
    %v2346 = vld [vmem:[#allocation11 + $0x68] sm:$0xf]
    %v2347 = vld [vmem:[#allocation11 + $0x6c] sm:$0xf]
    %v2348 = vld [vmem:[#allocation11 + $0x70] sm:$0xf]
    %v2349 = vld [vmem:[#allocation11 + $0x74] sm:$0xf]
    %v2350 = vld [vmem:[#allocation11 + $0x78] sm:$0xf]
    %v2351 = vld [vmem:[#allocation11 + $0x7c] sm:$0xf]
    %v2352 = vld [vmem:[#allocation13] sm:$0x1]
    %v2354 = vlaneseq
    %v2355 = vshrl.u32 %v2354, 7
    %v2356 = vsub.s32 0, %v2355
    %v2357 = vrot.slane %v2352, %v2356
    %v2391 = vunpack.c.l.b16 %v2320
    %v2392 = vunpack.c.l.b16 %v2321
    %v2393 = vunpack.c.l.b16 %v2322
    %v2394 = vunpack.c.l.b16 %v2323
    %v2395 = vunpack.c.l.b16 %v2324
    %v2396 = vunpack.c.l.b16 %v2325
    %v2397 = vunpack.c.l.b16 %v2326
    %v2398 = vunpack.c.l.b16 %v2327
    %v2399 = vunpack.c.l.b16 %v2328
    %v2400 = vunpack.c.l.b16 %v2329
    %v2401 = vunpack.c.l.b16 %v2330
    %v2402 = vunpack.c.l.b16 %v2331
    %v2403 = vunpack.c.l.b16 %v2332
    %v2404 = vunpack.c.l.b16 %v2333
    %v2405 = vunpack.c.l.b16 %v2334
    %v2406 = vunpack.c.l.b16 %v2335
    %v2407 = vunpack.c.l.b16 %v2336
    %v2408 = vunpack.c.l.b16 %v2337
    %v2409 = vunpack.c.l.b16 %v2338
    %v2410 = vunpack.c.l.b16 %v2339
    %v2411 = vunpack.c.l.b16 %v2340
    %v2412 = vunpack.c.l.b16 %v2341
    %v2413 = vunpack.c.l.b16 %v2342
    %v2414 = vunpack.c.l.b16 %v2343
    %v2415 = vunpack.c.l.b16 %v2344
    %v2416 = vunpack.c.l.b16 %v2345
    %v2417 = vunpack.c.l.b16 %v2346
    %v2418 = vunpack.c.l.b16 %v2347
    %v2419 = vunpack.c.l.b16 %v2348
    %v2420 = vunpack.c.l.b16 %v2349
    %v2421 = vunpack.c.l.b16 %v2350
    %v2422 = vunpack.c.l.b16 %v2351
    %v2423 = vpack.c.b16 %v2392, %v2391
    %v2424 = vpack.c.b16 %v2394, %v2393
    %v2425 = vpack.c.b16 %v2396, %v2395
    %v2426 = vpack.c.b16 %v2398, %v2397
    %v2427 = vpack.c.b16 %v2400, %v2399
    %v2428 = vpack.c.b16 %v2402, %v2401
    %v2429 = vpack.c.b16 %v2404, %v2403
    %v2430 = vpack.c.b16 %v2406, %v2405
    %v2431 = vpack.c.b16 %v2408, %v2407
    %v2432 = vpack.c.b16 %v2410, %v2409
    %v2433 = vpack.c.b16 %v2412, %v2411
    %v2434 = vpack.c.b16 %v2414, %v2413
    %v2435 = vpack.c.b16 %v2416, %v2415
    %v2436 = vpack.c.b16 %v2418, %v2417
    %v2437 = vpack.c.b16 %v2420, %v2419
    %v2438 = vpack.c.b16 %v2422, %v2421
    %2455 = vmatprep.subr.bf16.mxu0 0
    %2456 = vmatpush1.bf16.msra.mxu0 %v2430
    %2457 = vmatprep.subr.bf16.mxu0 0
    %2458 = vmatpush1.bf16.msra.mxu0 %v2429
    %2459 = vmatprep.subr.bf16.mxu0 0
    %2460 = vmatpush1.bf16.msra.mxu0 %v2428
    %2461 = vmatprep.subr.bf16.mxu0 0
    %2462 = vmatpush1.bf16.msra.mxu0 %v2427
    %2463 = vmatprep.subr.bf16.mxu0 0
    %2464 = vmatpush1.bf16.msra.mxu0 %v2426
    %2465 = vmatprep.subr.bf16.mxu0 0
    %2466 = vmatpush1.bf16.msra.mxu0 %v2425
    %2467 = vmatprep.subr.bf16.mxu0 0
    %2468 = vmatpush1.bf16.msra.mxu0 %v2424
    %2469 = vmatprep.subr.bf16.mxu0 0
    %2470 = vmatpush1.bf16.msra.mxu0 %v2423
    %2471 = vmatprep.subr.bf16.mxu0 0
    %2472 = vmatpush2.bf16.msra.mxu0 %v2438
    %2473 = vmatprep.subr.bf16.mxu0 0
    %2474 = vmatpush2.bf16.msra.mxu0 %v2437
    %2475 = vmatprep.subr.bf16.mxu0 0
    %2476 = vmatpush2.bf16.msra.mxu0 %v2436
    %2477 = vmatprep.subr.bf16.mxu0 0
    %2478 = vmatpush2.bf16.msra.mxu0 %v2435
    %2479 = vmatprep.subr.bf16.mxu0 0
    %2480 = vmatpush2.bf16.msra.mxu0 %v2434
    %2481 = vmatprep.subr.bf16.mxu0 0
    %2482 = vmatpush2.bf16.msra.mxu0 %v2433
    %2483 = vmatprep.subr.bf16.mxu0 0
    %2484 = vmatpush2.bf16.msra.mxu0 %v2432
    %2485 = vmatprep.subr.bf16.mxu0 0
    %2486 = vmatpush2.bf16.msra.mxu0 %v2431
    %2487 = vmatprep.mubr.bf16.mxu0 %v2319
    %2488 = vmatmul.mubr.bf16.gmra.mxu0 %v2318
    %v2489 = vpop.f32.mrf.mxu0
    %v2490 = vadd.f32 %v2357, %v2489
    %v2491 = vpop.f32.mrf.mxu0
    %v2492 = vpop.f32.mrf.mxu0
    %v2493 = vpop.f32.mrf.mxu0
    %2494 = vdwg.mxu0
    %v2495 = vmax.f32 %v2490, 0.0
    %v2496 = vpack.c.bf16 %v2495, %v2495
    %v2497 = vld [vmem:[%s8] sm:$0xf]
    %v2498 = vld [vmem:[%s8 + $0x4] sm:$0xf]
    %v2499 = vld [vmem:[%s8 + $0x8] sm:$0xf]
    %v2500 = vld [vmem:[%s8 + $0xc] sm:$0xf]
    %v2501 = vld [vmem:[%s8 + $0x10] sm:$0xf]
    %v2502 = vld [vmem:[%s8 + $0x14] sm:$0xf]
    %v2503 = vld [vmem:[%s8 + $0x18] sm:$0xf]
    %v2504 = vld [vmem:[%s8 + $0x1c] sm:$0xf]
    %v2505 = vld [vmem:[%s8 + $0x20] sm:$0xf]
    %v2506 = vld [vmem:[%s8 + $0x24] sm:$0xf]
    %v2507 = vld [vmem:[%s8 + $0x28] sm:$0xf]
    %v2508 = vld [vmem:[%s8 + $0x2c] sm:$0xf]
    %v2509 = vld [vmem:[%s8 + $0x30] sm:$0xf]
    %v2510 = vld [vmem:[%s8 + $0x34] sm:$0xf]
    %v2511 = vld [vmem:[%s8 + $0x38] sm:$0xf]
    %v2512 = vld [vmem:[%s8 + $0x3c] sm:$0xf]
    %v2513 = vld [vmem:[#allocation14] sm:$0x1]
    %v2515 = vlaneseq
    %v2516 = vshrl.u32 %v2515, 7
    %v2517 = vsub.s32 0, %v2516
    %v2518 = vrot.slane %v2513, %v2517
    %v2536 = vunpack.c.l.b16 %v2497
    %v2537 = vunpack.c.l.b16 %v2498
    %v2538 = vunpack.c.l.b16 %v2499
    %v2539 = vunpack.c.l.b16 %v2500
    %v2540 = vunpack.c.l.b16 %v2501
    %v2541 = vunpack.c.l.b16 %v2502
    %v2542 = vunpack.c.l.b16 %v2503
    %v2543 = vunpack.c.l.b16 %v2504
    %v2544 = vunpack.c.l.b16 %v2505
    %v2545 = vunpack.c.l.b16 %v2506
    %v2546 = vunpack.c.l.b16 %v2507
    %v2547 = vunpack.c.l.b16 %v2508
    %v2548 = vunpack.c.l.b16 %v2509
    %v2549 = vunpack.c.l.b16 %v2510
    %v2550 = vunpack.c.l.b16 %v2511
    %v2551 = vunpack.c.l.b16 %v2512
    %v2552 = vpack.c.b16 %v2537, %v2536
    %v2553 = vpack.c.b16 %v2539, %v2538
    %v2554 = vpack.c.b16 %v2541, %v2540
    %v2555 = vpack.c.b16 %v2543, %v2542
    %v2556 = vpack.c.b16 %v2545, %v2544
    %v2557 = vpack.c.b16 %v2547, %v2546
    %v2558 = vpack.c.b16 %v2549, %v2548
    %v2559 = vpack.c.b16 %v2551, %v2550
    %2568 = vmatprep.subr.bf16.mxu0 0
    %2569 = vmatpush1.bf16.msra.mxu0 %v2559
    %2570 = vmatprep.subr.bf16.mxu0 0
    %2571 = vmatpush1.bf16.msra.mxu0 %v2558
    %2572 = vmatprep.subr.bf16.mxu0 0
    %2573 = vmatpush1.bf16.msra.mxu0 %v2557
    %2574 = vmatprep.subr.bf16.mxu0 0
    %2575 = vmatpush1.bf16.msra.mxu0 %v2556
    %2576 = vmatprep.subr.bf16.mxu0 0
    %2577 = vmatpush1.bf16.msra.mxu0 %v2555
    %2578 = vmatprep.subr.bf16.mxu0 0
    %2579 = vmatpush1.bf16.msra.mxu0 %v2554
    %2580 = vmatprep.subr.bf16.mxu0 0
    %2581 = vmatpush1.bf16.msra.mxu0 %v2553
    %2582 = vmatprep.subr.bf16.mxu0 0
    %2583 = vmatpush1.bf16.msra.mxu0 %v2552
    %2584 = vmatprep.subr.bf16.mxu0 0
    %2585 = vmatpush2.bf16.msra.mxu0 0
    %2586 = vmatprep.subr.bf16.mxu0 0
    %2587 = vmatpush2.bf16.msra.mxu0 0
    %2588 = vmatprep.subr.bf16.mxu0 0
    %2589 = vmatpush2.bf16.msra.mxu0 0
    %2590 = vmatprep.subr.bf16.mxu0 0
    %2591 = vmatpush2.bf16.msra.mxu0 0
    %2592 = vmatprep.subr.bf16.mxu0 0
    %2593 = vmatpush2.bf16.msra.mxu0 0
    %2594 = vmatprep.subr.bf16.mxu0 0
    %2595 = vmatpush2.bf16.msra.mxu0 0
    %2596 = vmatprep.subr.bf16.mxu0 0
    %2597 = vmatpush2.bf16.msra.mxu0 0
    %2598 = vmatprep.subr.bf16.mxu0 0
    %2599 = vmatpush2.bf16.msra.mxu0 0
    %2600 = vmatprep.mubr.bf16.mxu0 0
    %2601 = vmatmul.mubr.bf16.gmra.mxu0 %v2496
    %v2602 = vpop.f32.mrf.mxu0
    %v2603 = vadd.f32 %v2518, %v2602
    %v2604 = vpop.f32.mrf.mxu0
    %v2605 = vpop.f32.mrf.mxu0
    %v2606 = vpop.f32.mrf.mxu0
    %2607 = vdwg.mxu0
    %v2608 = vmax.f32 %v2603, 0.0
    %v2609 = vpack.c.bf16 %v2608, %v2608
    %v2610 = vld [vmem:[%s10] sm:$0xf]
    %v2611 = vld [vmem:[%s10 + $0x4] sm:$0xf]
    %v2612 = vld [vmem:[%s10 + $0x8] sm:$0xf]
    %v2613 = vld [vmem:[%s10 + $0xc] sm:$0xf]
    %v2614 = vld [vmem:[%s10 + $0x10] sm:$0xf]
    %v2615 = vld [vmem:[%s10 + $0x14] sm:$0xf]
    %v2616 = vld [vmem:[%s10 + $0x18] sm:$0xf]
    %v2617 = vld [vmem:[%s10 + $0x1c] sm:$0xf]
    %v2618 = vld [vmem:[#allocation16] sm:$0x1]
    %v2620 = vlaneseq
    %v2621 = vshrl.u32 %v2620, 7
    %v2622 = vsub.s32 0, %v2621
    %v2623 = vrot.slane %v2618, %v2622
    %v2633 = vunpack.c.l.b16 %v2610
    %v2634 = vunpack.c.l.b16 %v2611
    %v2635 = vunpack.c.l.b16 %v2612
    %v2636 = vunpack.c.l.b16 %v2613
    %v2637 = vunpack.c.l.b16 %v2614
    %v2638 = vunpack.c.l.b16 %v2615
    %v2639 = vunpack.c.l.b16 %v2616
    %v2640 = vunpack.c.l.b16 %v2617
    %v2641 = vpack.c.b16 %v2634, %v2633
    %v2642 = vpack.c.b16 %v2636, %v2635
    %v2643 = vpack.c.b16 %v2638, %v2637
    %v2644 = vpack.c.b16 %v2640, %v2639
    %vm2649 = vcmask 523264
    %v2651 = vsel %vm2649, %v2609, 0
    %2653 = vmatprep.subr.bf16.mxu0 0
    %2654 = vmatpush1.bf16.msra.mxu0 0
    %2655 = vmatprep.subr.bf16.mxu0 0
    %2656 = vmatpush1.bf16.msra.mxu0 0
    %2657 = vmatprep.subr.bf16.mxu0 0
    %2658 = vmatpush1.bf16.msra.mxu0 0
    %2659 = vmatprep.subr.bf16.mxu0 0
    %2660 = vmatpush1.bf16.msra.mxu0 0
    %2661 = vmatprep.subr.bf16.mxu0 0
    %2662 = vmatpush1.bf16.msra.mxu0 %v2644
    %2663 = vmatprep.subr.bf16.mxu0 0
    %2664 = vmatpush1.bf16.msra.mxu0 %v2643
    %2665 = vmatprep.subr.bf16.mxu0 0
    %2666 = vmatpush1.bf16.msra.mxu0 %v2642
    %2667 = vmatprep.subr.bf16.mxu0 0
    %2668 = vmatpush1.bf16.msra.mxu0 %v2641
    %2669 = vmatprep.subr.bf16.mxu0 0
    %2670 = vmatpush2.bf16.msra.mxu0 0
    %2671 = vmatprep.subr.bf16.mxu0 0
    %2672 = vmatpush2.bf16.msra.mxu0 0
    %2673 = vmatprep.subr.bf16.mxu0 0
    %2674 = vmatpush2.bf16.msra.mxu0 0
    %2675 = vmatprep.subr.bf16.mxu0 0
    %2676 = vmatpush2.bf16.msra.mxu0 0
    %2677 = vmatprep.subr.bf16.mxu0 0
    %2678 = vmatpush2.bf16.msra.mxu0 0
    %2679 = vmatprep.subr.bf16.mxu0 0
    %2680 = vmatpush2.bf16.msra.mxu0 0
    %2681 = vmatprep.subr.bf16.mxu0 0
    %2682 = vmatpush2.bf16.msra.mxu0 0
    %2683 = vmatprep.subr.bf16.mxu0 0
    %2684 = vmatpush2.bf16.msra.mxu0 0
    %2685 = vmatprep.mubr.bf16.mxu0 0
    %2686 = vmatmul.mubr.bf16.gmra.mxu0 %v2651
    %v2687 = vpop.f32.mrf.mxu0
    %v2688 = vadd.f32 %v2623, %v2687
    %v2689 = vpop.f32.mrf.mxu0
    %v2690 = vpop.f32.mrf.mxu0
    %v2691 = vpop.f32.mrf.mxu0
    %2692 = vdwg.mxu0
    %2693 = vst [vmem:[#allocation30] sm:$0xff] %v2688
    %v2694 = vld [vmem:[#allocation2] sm:$0xff]
    %v2695 = vmul.f32 %v2688, 0.5
    %v2696 = vmul.f32 %v2695, 1.442695
    %v2697 = vpow.pop %v2696
    %2699 = vrot.lane.b32.xlu0 %v2697, 64
    %v2700 = vpop.permute.xlu0 %2699
    %v2702 = vmul.f32 %v2694, %v2700
    %v2703 = vadd.f32 %v2702, %v2688
    %v2704 = vpack.c.bf16 %v2703, %v2703
    %v2705 = vld [vmem:[#allocation17] sm:$0xf]
    %v2706 = vld [vmem:[#allocation17 + $0x4] sm:$0xf]
    %v2707 = vld [vmem:[#allocation17 + $0x8] sm:$0xf]
    %v2708 = vld [vmem:[#allocation17 + $0xc] sm:$0xf]
    %v2709 = vld [vmem:[#allocation17 + $0x10] sm:$0xf]
    %v2710 = vld [vmem:[#allocation17 + $0x14] sm:$0xf]
    %v2711 = vld [vmem:[#allocation17 + $0x18] sm:$0xf]
    %v2712 = vld [vmem:[#allocation17 + $0x1c] sm:$0xf]
    %v2713 = vld [vmem:[#allocation19] sm:$0x1]
    %v2715 = vlaneseq
    %v2716 = vshrl.u32 %v2715, 7
    %v2717 = vsub.s32 0, %v2716
    %v2718 = vrot.slane %v2713, %v2717
    %v2728 = vunpack.c.l.b16 %v2705
    %v2729 = vunpack.c.l.b16 %v2706
    %v2730 = vunpack.c.l.b16 %v2707
    %v2731 = vunpack.c.l.b16 %v2708
    %v2732 = vunpack.c.l.b16 %v2709
    %v2733 = vunpack.c.l.b16 %v2710
    %v2734 = vunpack.c.l.b16 %v2711
    %v2735 = vunpack.c.l.b16 %v2712
    %v2736 = vpack.c.b16 %v2729, %v2728
    %v2737 = vpack.c.b16 %v2731, %v2730
    %v2738 = vpack.c.b16 %v2733, %v2732
    %v2739 = vpack.c.b16 %v2735, %v2734
    %v2745 = vsel %vm2649, %v2704, 0
    %2747 = vmatprep.subr.bf16.mxu0 0
    %2748 = vmatpush1.bf16.msra.mxu0 0
    %2749 = vmatprep.subr.bf16.mxu0 0
    %2750 = vmatpush1.bf16.msra.mxu0 0
    %2751 = vmatprep.subr.bf16.mxu0 0
    %2752 = vmatpush1.bf16.msra.mxu0 0
    %2753 = vmatprep.subr.bf16.mxu0 0
    %2754 = vmatpush1.bf16.msra.mxu0 0
    %2755 = vmatprep.subr.bf16.mxu0 0
    %2756 = vmatpush1.bf16.msra.mxu0 %v2739
    %2757 = vmatprep.subr.bf16.mxu0 0
    %2758 = vmatpush1.bf16.msra.mxu0 %v2738
    %2759 = vmatprep.subr.bf16.mxu0 0
    %2760 = vmatpush1.bf16.msra.mxu0 %v2737
    %2761 = vmatprep.subr.bf16.mxu0 0
    %2762 = vmatpush1.bf16.msra.mxu0 %v2736
    %2763 = vmatprep.subr.bf16.mxu0 0
    %2764 = vmatpush2.bf16.msra.mxu0 0
    %2765 = vmatprep.subr.bf16.mxu0 0
    %2766 = vmatpush2.bf16.msra.mxu0 0
    %2767 = vmatprep.subr.bf16.mxu0 0
    %2768 = vmatpush2.bf16.msra.mxu0 0
    %2769 = vmatprep.subr.bf16.mxu0 0
    %2770 = vmatpush2.bf16.msra.mxu0 0
    %2771 = vmatprep.subr.bf16.mxu0 0
    %2772 = vmatpush2.bf16.msra.mxu0 0
    %2773 = vmatprep.subr.bf16.mxu0 0
    %2774 = vmatpush2.bf16.msra.mxu0 0
    %2775 = vmatprep.subr.bf16.mxu0 0
    %2776 = vmatpush2.bf16.msra.mxu0 0
    %2777 = vmatprep.subr.bf16.mxu0 0
    %2778 = vmatpush2.bf16.msra.mxu0 0
    %2779 = vmatprep.mubr.bf16.mxu0 0
    %2780 = vmatmul.mubr.bf16.gmra.mxu0 %v2745
    %v2781 = vpop.f32.mrf.mxu0
    %v2782 = vadd.f32 %v2718, %v2781
    %v2783 = vpop.f32.mrf.mxu0
    %v2784 = vpop.f32.mrf.mxu0
    %v2785 = vpop.f32.mrf.mxu0
    %2786 = vdwg.mxu0
    %v2787 = vmax.f32 %v2782, 0.0
    %v2788 = vpack.c.bf16 %v2787, %v2787
    %v2789 = vld [vmem:[%s14] sm:$0xf]
    %v2790 = vld [vmem:[%s14 + $0x4] sm:$0xf]
    %v2791 = vld [vmem:[%s14 + $0x8] sm:$0xf]
    %v2792 = vld [vmem:[%s14 + $0xc] sm:$0xf]
    %v2793 = vld [vmem:[%s14 + $0x10] sm:$0xf]
    %v2794 = vld [vmem:[%s14 + $0x14] sm:$0xf]
    %v2795 = vld [vmem:[%s14 + $0x18] sm:$0xf]
    %v2796 = vld [vmem:[%s14 + $0x1c] sm:$0xf]
    %v2797 = vld [vmem:[#allocation20] sm:$0x1]
    %v2799 = vlaneseq
    %v2800 = vshrl.u32 %v2799, 7
    %v2801 = vsub.s32 0, %v2800
    %v2802 = vrot.slane %v2797, %v2801
    %v2812 = vunpack.c.l.b16 %v2789
    %v2813 = vunpack.c.l.b16 %v2790
    %v2814 = vunpack.c.l.b16 %v2791
    %v2815 = vunpack.c.l.b16 %v2792
    %v2816 = vunpack.c.l.b16 %v2793
    %v2817 = vunpack.c.l.b16 %v2794
    %v2818 = vunpack.c.l.b16 %v2795
    %v2819 = vunpack.c.l.b16 %v2796
    %v2820 = vpack.c.b16 %v2813, %v2812
    %v2821 = vpack.c.b16 %v2815, %v2814
    %v2822 = vpack.c.b16 %v2817, %v2816
    %v2823 = vpack.c.b16 %v2819, %v2818
    %v2829 = vsel %vm2649, %v2788, 0
    %2831 = vmatprep.subr.bf16.mxu0 0
    %2832 = vmatpush1.bf16.msra.mxu0 0
    %2833 = vmatprep.subr.bf16.mxu0 0
    %2834 = vmatpush1.bf16.msra.mxu0 0
    %2835 = vmatprep.subr.bf16.mxu0 0
    %2836 = vmatpush1.bf16.msra.mxu0 0
    %2837 = vmatprep.subr.bf16.mxu0 0
    %2838 = vmatpush1.bf16.msra.mxu0 0
    %2839 = vmatprep.subr.bf16.mxu0 0
    %2840 = vmatpush1.bf16.msra.mxu0 %v2823
    %2841 = vmatprep.subr.bf16.mxu0 0
    %2842 = vmatpush1.bf16.msra.mxu0 %v2822
    %2843 = vmatprep.subr.bf16.mxu0 0
    %2844 = vmatpush1.bf16.msra.mxu0 %v2821
    %2845 = vmatprep.subr.bf16.mxu0 0
    %2846 = vmatpush1.bf16.msra.mxu0 %v2820
    %2847 = vmatprep.subr.bf16.mxu0 0
    %2848 = vmatpush2.bf16.msra.mxu0 0
    %2849 = vmatprep.subr.bf16.mxu0 0
    %2850 = vmatpush2.bf16.msra.mxu0 0
    %2851 = vmatprep.subr.bf16.mxu0 0
    %2852 = vmatpush2.bf16.msra.mxu0 0
    %2853 = vmatprep.subr.bf16.mxu0 0
    %2854 = vmatpush2.bf16.msra.mxu0 0
    %2855 = vmatprep.subr.bf16.mxu0 0
    %2856 = vmatpush2.bf16.msra.mxu0 0
    %2857 = vmatprep.subr.bf16.mxu0 0
    %2858 = vmatpush2.bf16.msra.mxu0 0
    %2859 = vmatprep.subr.bf16.mxu0 0
    %2860 = vmatpush2.bf16.msra.mxu0 0
    %2861 = vmatprep.subr.bf16.mxu0 0
    %2862 = vmatpush2.bf16.msra.mxu0 0
    %2863 = vmatprep.mubr.bf16.mxu0 0
    %2864 = vmatmul.mubr.bf16.gmra.mxu0 %v2829
    %v2865 = vpop.f32.mrf.mxu0
    %v2866 = vadd.f32 %v2802, %v2865
    %v2867 = vpop.f32.mrf.mxu0
    %v2868 = vpop.f32.mrf.mxu0
    %v2869 = vpop.f32.mrf.mxu0
    %2870 = vdwg.mxu0
    %v2871 = vmax.f32 %v2866, 0.0
    %v2872 = vpack.c.bf16 %v2871, %v2871
    %v2873 = vld [vmem:[#allocation22] sm:$0xff]
    %v2874 = vld [vmem:[#allocation22 + $0x8] sm:$0xff]
    %v2875 = vld [vmem:[#allocation22 + $0x10] sm:$0xff]
    %v2876 = vld [vmem:[#allocation22 + $0x18] sm:$0xff]
    %v2877 = vld [vmem:[#allocation22 + $0x20] sm:$0xff]
    %v2878 = vld [vmem:[#allocation22 + $0x28] sm:$0xff]
    %v2879 = vld [vmem:[#allocation22 + $0x30] sm:$0xff]
    %v2880 = vld [vmem:[#allocation22 + $0x38] sm:$0xff]
    %v2881 = vld [vmem:[#allocation22 + $0x40] sm:$0xff]
    %v2882 = vld [vmem:[#allocation22 + $0x48] sm:$0xff]
    %v2883 = vld [vmem:[#allocation22 + $0x50] sm:$0xff]
    %v2884 = vld [vmem:[#allocation22 + $0x58] sm:$0xff]
    %v2885 = vld [vmem:[#allocation22 + $0x60] sm:$0xff]
    %v2886 = vld [vmem:[#allocation22 + $0x68] sm:$0xff]
    %v2887 = vld [vmem:[#allocation22 + $0x70] sm:$0xff]
    %v2888 = vld [vmem:[#allocation22 + $0x78] sm:$0xff]
    %v2889 = vld [vmem:[#allocation23] sm:$0x3]
    %v2891 = vlaneseq
    %v2892 = vshrl.u32 %v2891, 7
    %v2893 = vsub.s32 0, %v2892
    %v2894 = vrot.slane %v2889, %v2893
    %v2895 = vlaneseq
    %v2896 = vshrl.u32 %v2895, 7
    %v2897 = vsub.s32 1, %v2896
    %v2898 = vrot.slane %v2889, %v2897
    %v2917 = vunpack.c.l.b16 %v2873
    %v2918 = vunpack.c.h.b16 %v2873
    %v2919 = vunpack.c.l.b16 %v2874
    %v2920 = vunpack.c.h.b16 %v2874
    %v2921 = vunpack.c.l.b16 %v2875
    %v2922 = vunpack.c.h.b16 %v2875
    %v2923 = vunpack.c.l.b16 %v2876
    %v2924 = vunpack.c.h.b16 %v2876
    %v2925 = vunpack.c.l.b16 %v2877
    %v2926 = vunpack.c.h.b16 %v2877
    %v2927 = vunpack.c.l.b16 %v2878
    %v2928 = vunpack.c.h.b16 %v2878
    %v2929 = vunpack.c.l.b16 %v2879
    %v2930 = vunpack.c.h.b16 %v2879
    %v2931 = vunpack.c.l.b16 %v2880
    %v2932 = vunpack.c.h.b16 %v2880
    %v2933 = vunpack.c.l.b16 %v2881
    %v2934 = vunpack.c.h.b16 %v2881
    %v2935 = vunpack.c.l.b16 %v2882
    %v2936 = vunpack.c.h.b16 %v2882
    %v2937 = vunpack.c.l.b16 %v2883
    %v2938 = vunpack.c.h.b16 %v2883
    %v2939 = vunpack.c.l.b16 %v2884
    %v2940 = vunpack.c.h.b16 %v2884
    %v2941 = vunpack.c.l.b16 %v2885
    %v2942 = vunpack.c.h.b16 %v2885
    %v2943 = vunpack.c.l.b16 %v2886
    %v2944 = vunpack.c.h.b16 %v2886
    %v2945 = vunpack.c.l.b16 %v2887
    %v2946 = vunpack.c.h.b16 %v2887
    %v2947 = vunpack.c.l.b16 %v2888
    %v2948 = vunpack.c.h.b16 %v2888
    %v2949 = vpack.c.b16 %v2919, %v2917
    %v2950 = vpack.c.b16 %v2920, %v2918
    %v2951 = vpack.c.b16 %v2923, %v2921
    %v2952 = vpack.c.b16 %v2924, %v2922
    %v2953 = vpack.c.b16 %v2927, %v2925
    %v2954 = vpack.c.b16 %v2928, %v2926
    %v2955 = vpack.c.b16 %v2931, %v2929
    %v2956 = vpack.c.b16 %v2932, %v2930
    %v2957 = vpack.c.b16 %v2935, %v2933
    %v2958 = vpack.c.b16 %v2936, %v2934
    %v2959 = vpack.c.b16 %v2939, %v2937
    %v2960 = vpack.c.b16 %v2940, %v2938
    %v2961 = vpack.c.b16 %v2943, %v2941
    %v2962 = vpack.c.b16 %v2944, %v2942
    %v2963 = vpack.c.b16 %v2947, %v2945
    %v2964 = vpack.c.b16 %v2948, %v2946
    %2981 = vmatprep.subr.bf16.mxu0 %v2964
    %2982 = vmatpush1.bf16.msra.mxu0 %v2963
    %2983 = vmatprep.subr.bf16.mxu0 %v2962
    %2984 = vmatpush1.bf16.msra.mxu0 %v2961
    %2985 = vmatprep.subr.bf16.mxu0 %v2960
    %2986 = vmatpush1.bf16.msra.mxu0 %v2959
    %2987 = vmatprep.subr.bf16.mxu0 %v2958
    %2988 = vmatpush1.bf16.msra.mxu0 %v2957
    %2989 = vmatprep.subr.bf16.mxu0 %v2956
    %2990 = vmatpush1.bf16.msra.mxu0 %v2955
    %2991 = vmatprep.subr.bf16.mxu0 %v2954
    %2992 = vmatpush1.bf16.msra.mxu0 %v2953
    %2993 = vmatprep.subr.bf16.mxu0 %v2952
    %2994 = vmatpush1.bf16.msra.mxu0 %v2951
    %2995 = vmatprep.subr.bf16.mxu0 %v2950
    %2996 = vmatpush1.bf16.msra.mxu0 %v2949
    %2997 = vmatprep.subr.bf16.mxu0 0
    %2998 = vmatpush2.bf16.msra.mxu0 0
    %2999 = vmatprep.subr.bf16.mxu0 0
    %3000 = vmatpush2.bf16.msra.mxu0 0
    %3001 = vmatprep.subr.bf16.mxu0 0
    %3002 = vmatpush2.bf16.msra.mxu0 0
    %3003 = vmatprep.subr.bf16.mxu0 0
    %3004 = vmatpush2.bf16.msra.mxu0 0
    %3005 = vmatprep.subr.bf16.mxu0 0
    %3006 = vmatpush2.bf16.msra.mxu0 0
    %3007 = vmatprep.subr.bf16.mxu0 0
    %3008 = vmatpush2.bf16.msra.mxu0 0
    %3009 = vmatprep.subr.bf16.mxu0 0
    %3010 = vmatpush2.bf16.msra.mxu0 0
    %3011 = vmatprep.subr.bf16.mxu0 0
    %3012 = vmatpush2.bf16.msra.mxu0 0
    %3013 = vmatprep.mubr.bf16.mxu0 0
    %3014 = vmatmul.mubr.bf16.gmra.mxu0 %v2872
    %v3015 = vpop.f32.mrf.mxu0
    %v3016 = vadd.f32 %v2894, %v3015
    %v3017 = vpop.f32.mrf.mxu0
    %v3018 = vadd.f32 %v2898, %v3017
    %v3019 = vpop.f32.mrf.mxu0
    %v3020 = vpop.f32.mrf.mxu0
    %3021 = vdwg.mxu0
    %v3022 = vmax.f32 %v3016, 0.0
    %v3023 = vmax.f32 %v3018, 0.0
    %v3024 = vpack.c.bf16 %v3022, %v3022
    %v3025 = vpack.c.bf16 %v3023, %v3023
    %v3026 = vld [vmem:[#allocation25] sm:$0xff]
    %v3027 = vld [vmem:[#allocation25 + $0x8] sm:$0xff]
    %v3028 = vld [vmem:[#allocation25 + $0x10] sm:$0xff]
    %v3029 = vld [vmem:[#allocation25 + $0x18] sm:$0xff]
    %v3030 = vld [vmem:[#allocation25 + $0x20] sm:$0xff]
    %v3031 = vld [vmem:[#allocation25 + $0x28] sm:$0xff]
    %v3032 = vld [vmem:[#allocation25 + $0x30] sm:$0xff]
    %v3033 = vld [vmem:[#allocation25 + $0x38] sm:$0xff]
    %v3034 = vld [vmem:[#allocation25 + $0x40] sm:$0xff]
    %v3035 = vld [vmem:[#allocation25 + $0x48] sm:$0xff]
    %v3036 = vld [vmem:[#allocation25 + $0x50] sm:$0xff]
    %v3037 = vld [vmem:[#allocation25 + $0x58] sm:$0xff]
    %v3038 = vld [vmem:[#allocation25 + $0x60] sm:$0xff]
    %v3039 = vld [vmem:[#allocation25 + $0x68] sm:$0xff]
    %v3040 = vld [vmem:[#allocation25 + $0x70] sm:$0xff]
    %v3041 = vld [vmem:[#allocation25 + $0x78] sm:$0xff]
    %v3042 = vld [vmem:[#allocation25 + $0x80] sm:$0xff]
    %v3043 = vld [vmem:[#allocation25 + $0x88] sm:$0xff]
    %v3044 = vld [vmem:[#allocation25 + $0x90] sm:$0xff]
    %v3045 = vld [vmem:[#allocation25 + $0x98] sm:$0xff]
    %v3046 = vld [vmem:[#allocation25 + $0xa0] sm:$0xff]
    %v3047 = vld [vmem:[#allocation25 + $0xa8] sm:$0xff]
    %v3048 = vld [vmem:[#allocation25 + $0xb0] sm:$0xff]
    %v3049 = vld [vmem:[#allocation25 + $0xb8] sm:$0xff]
    %v3050 = vld [vmem:[#allocation25 + $0xc0] sm:$0xff]
    %v3051 = vld [vmem:[#allocation25 + $0xc8] sm:$0xff]
    %v3052 = vld [vmem:[#allocation25 + $0xd0] sm:$0xff]
    %v3053 = vld [vmem:[#allocation25 + $0xd8] sm:$0xff]
    %v3054 = vld [vmem:[#allocation25 + $0xe0] sm:$0xff]
    %v3055 = vld [vmem:[#allocation25 + $0xe8] sm:$0xff]
    %v3056 = vld [vmem:[#allocation25 + $0xf0] sm:$0xff]
    %v3057 = vld [vmem:[#allocation25 + $0xf8] sm:$0xff]
    %v3058 = vld [vmem:[#allocation25 + $0x100] sm:$0xff]
    %v3059 = vld [vmem:[#allocation25 + $0x108] sm:$0xff]
    %v3060 = vld [vmem:[#allocation25 + $0x110] sm:$0xff]
    %v3061 = vld [vmem:[#allocation25 + $0x118] sm:$0xff]
    %v3062 = vld [vmem:[#allocation25 + $0x120] sm:$0xff]
    %v3063 = vld [vmem:[#allocation25 + $0x128] sm:$0xff]
    %v3064 = vld [vmem:[#allocation25 + $0x130] sm:$0xff]
    %v3065 = vld [vmem:[#allocation25 + $0x138] sm:$0xff]
    %v3066 = vld [vmem:[#allocation25 + $0x140] sm:$0xff]
    %v3067 = vld [vmem:[#allocation25 + $0x148] sm:$0xff]
    %v3068 = vld [vmem:[#allocation25 + $0x150] sm:$0xff]
    %v3069 = vld [vmem:[#allocation25 + $0x158] sm:$0xff]
    %v3070 = vld [vmem:[#allocation25 + $0x160] sm:$0xff]
    %v3071 = vld [vmem:[#allocation25 + $0x168] sm:$0xff]
    %v3072 = vld [vmem:[#allocation25 + $0x170] sm:$0xff]
    %v3073 = vld [vmem:[#allocation25 + $0x178] sm:$0xff]
    %v3074 = vld [vmem:[#allocation25 + $0x180] sm:$0xff]
    %v3075 = vld [vmem:[#allocation25 + $0x188] sm:$0xff]
    %v3076 = vld [vmem:[#allocation25 + $0x190] sm:$0xff]
    %v3077 = vld [vmem:[#allocation25 + $0x198] sm:$0xff]
    %v3078 = vld [vmem:[#allocation25 + $0x1a0] sm:$0xff]
    %v3079 = vld [vmem:[#allocation25 + $0x1a8] sm:$0xff]
    %v3080 = vld [vmem:[#allocation25 + $0x1b0] sm:$0xff]
    %v3081 = vld [vmem:[#allocation25 + $0x1b8] sm:$0xff]
    %v3082 = vld [vmem:[#allocation25 + $0x1c0] sm:$0xff]
    %v3083 = vld [vmem:[#allocation25 + $0x1c8] sm:$0xff]
    %v3084 = vld [vmem:[#allocation25 + $0x1d0] sm:$0xff]
    %v3085 = vld [vmem:[#allocation25 + $0x1d8] sm:$0xff]
    %v3086 = vld [vmem:[#allocation25 + $0x1e0] sm:$0xff]
    %v3087 = vld [vmem:[#allocation25 + $0x1e8] sm:$0xff]
    %v3088 = vld [vmem:[#allocation25 + $0x1f0] sm:$0xff]
    %v3089 = vld [vmem:[#allocation25 + $0x1f8] sm:$0xff]
    %v3090 = vld [vmem:[#allocation26] sm:$0xf]
    %v3092 = vlaneseq
    %v3093 = vshrl.u32 %v3092, 7
    %v3094 = vsub.s32 0, %v3093
    %v3095 = vrot.slane %v3090, %v3094
    %v3096 = vlaneseq
    %v3097 = vshrl.u32 %v3096, 7
    %v3098 = vsub.s32 1, %v3097
    %v3099 = vrot.slane %v3090, %v3098
    %v3100 = vlaneseq
    %v3101 = vshrl.u32 %v3100, 7
    %v3102 = vsub.s32 2, %v3101
    %v3103 = vrot.slane %v3090, %v3102
    %v3104 = vlaneseq
    %v3105 = vshrl.u32 %v3104, 7
    %v3106 = vsub.s32 3, %v3105
    %v3107 = vrot.slane %v3090, %v3106
    %v3176 = vunpack.c.l.b16 %v3026
    %v3177 = vunpack.c.h.b16 %v3026
    %v3178 = vunpack.c.l.b16 %v3027
    %v3179 = vunpack.c.h.b16 %v3027
    %v3180 = vunpack.c.l.b16 %v3028
    %v3181 = vunpack.c.h.b16 %v3028
    %v3182 = vunpack.c.l.b16 %v3029
    %v3183 = vunpack.c.h.b16 %v3029
    %v3184 = vunpack.c.l.b16 %v3030
    %v3185 = vunpack.c.h.b16 %v3030
    %v3186 = vunpack.c.l.b16 %v3031
    %v3187 = vunpack.c.h.b16 %v3031
    %v3188 = vunpack.c.l.b16 %v3032
    %v3189 = vunpack.c.h.b16 %v3032
    %v3190 = vunpack.c.l.b16 %v3033
    %v3191 = vunpack.c.h.b16 %v3033
    %v3192 = vunpack.c.l.b16 %v3034
    %v3193 = vunpack.c.h.b16 %v3034
    %v3194 = vunpack.c.l.b16 %v3035
    %v3195 = vunpack.c.h.b16 %v3035
    %v3196 = vunpack.c.l.b16 %v3036
    %v3197 = vunpack.c.h.b16 %v3036
    %v3198 = vunpack.c.l.b16 %v3037
    %v3199 = vunpack.c.h.b16 %v3037
    %v3200 = vunpack.c.l.b16 %v3038
    %v3201 = vunpack.c.h.b16 %v3038
    %v3202 = vunpack.c.l.b16 %v3039
    %v3203 = vunpack.c.h.b16 %v3039
    %v3204 = vunpack.c.l.b16 %v3040
    %v3205 = vunpack.c.h.b16 %v3040
    %v3206 = vunpack.c.l.b16 %v3041
    %v3207 = vunpack.c.h.b16 %v3041
    %v3208 = vunpack.c.l.b16 %v3042
    %v3209 = vunpack.c.h.b16 %v3042
    %v3210 = vunpack.c.l.b16 %v3043
    %v3211 = vunpack.c.h.b16 %v3043
    %v3212 = vunpack.c.l.b16 %v3044
    %v3213 = vunpack.c.h.b16 %v3044
    %v3214 = vunpack.c.l.b16 %v3045
    %v3215 = vunpack.c.h.b16 %v3045
    %v3216 = vunpack.c.l.b16 %v3046
    %v3217 = vunpack.c.h.b16 %v3046
    %v3218 = vunpack.c.l.b16 %v3047
    %v3219 = vunpack.c.h.b16 %v3047
    %v3220 = vunpack.c.l.b16 %v3048
    %v3221 = vunpack.c.h.b16 %v3048
    %v3222 = vunpack.c.l.b16 %v3049
    %v3223 = vunpack.c.h.b16 %v3049
    %v3224 = vunpack.c.l.b16 %v3050
    %v3225 = vunpack.c.h.b16 %v3050
    %v3226 = vunpack.c.l.b16 %v3051
    %v3227 = vunpack.c.h.b16 %v3051
    %v3228 = vunpack.c.l.b16 %v3052
    %v3229 = vunpack.c.h.b16 %v3052
    %v3230 = vunpack.c.l.b16 %v3053
    %v3231 = vunpack.c.h.b16 %v3053
    %v3232 = vunpack.c.l.b16 %v3054
    %v3233 = vunpack.c.h.b16 %v3054
    %v3234 = vunpack.c.l.b16 %v3055
    %v3235 = vunpack.c.h.b16 %v3055
    %v3236 = vunpack.c.l.b16 %v3056
    %v3237 = vunpack.c.h.b16 %v3056
    %v3238 = vunpack.c.l.b16 %v3057
    %v3239 = vunpack.c.h.b16 %v3057
    %v3240 = vunpack.c.l.b16 %v3058
    %v3241 = vunpack.c.h.b16 %v3058
    %v3242 = vunpack.c.l.b16 %v3059
    %v3243 = vunpack.c.h.b16 %v3059
    %v3244 = vunpack.c.l.b16 %v3060
    %v3245 = vunpack.c.h.b16 %v3060
    %v3246 = vunpack.c.l.b16 %v3061
    %v3247 = vunpack.c.h.b16 %v3061
    %v3248 = vunpack.c.l.b16 %v3062
    %v3249 = vunpack.c.h.b16 %v3062
    %v3250 = vunpack.c.l.b16 %v3063
    %v3251 = vunpack.c.h.b16 %v3063
    %v3252 = vunpack.c.l.b16 %v3064
    %v3253 = vunpack.c.h.b16 %v3064
    %v3254 = vunpack.c.l.b16 %v3065
    %v3255 = vunpack.c.h.b16 %v3065
    %v3256 = vunpack.c.l.b16 %v3066
    %v3257 = vunpack.c.h.b16 %v3066
    %v3258 = vunpack.c.l.b16 %v3067
    %v3259 = vunpack.c.h.b16 %v3067
    %v3260 = vunpack.c.l.b16 %v3068
    %v3261 = vunpack.c.h.b16 %v3068
    %v3262 = vunpack.c.l.b16 %v3069
    %v3263 = vunpack.c.h.b16 %v3069
    %v3264 = vunpack.c.l.b16 %v3070
    %v3265 = vunpack.c.h.b16 %v3070
    %v3266 = vunpack.c.l.b16 %v3071
    %v3267 = vunpack.c.h.b16 %v3071
    %v3268 = vunpack.c.l.b16 %v3072
    %v3269 = vunpack.c.h.b16 %v3072
    %v3270 = vunpack.c.l.b16 %v3073
    %v3271 = vunpack.c.h.b16 %v3073
    %v3272 = vunpack.c.l.b16 %v3074
    %v3273 = vunpack.c.h.b16 %v3074
    %v3274 = vunpack.c.l.b16 %v3075
    %v3275 = vunpack.c.h.b16 %v3075
    %v3276 = vunpack.c.l.b16 %v3076
    %v3277 = vunpack.c.h.b16 %v3076
    %v3278 = vunpack.c.l.b16 %v3077
    %v3279 = vunpack.c.h.b16 %v3077
    %v3280 = vunpack.c.l.b16 %v3078
    %v3281 = vunpack.c.h.b16 %v3078
    %v3282 = vunpack.c.l.b16 %v3079
    %v3283 = vunpack.c.h.b16 %v3079
    %v3284 = vunpack.c.l.b16 %v3080
    %v3285 = vunpack.c.h.b16 %v3080
    %v3286 = vunpack.c.l.b16 %v3081
    %v3287 = vunpack.c.h.b16 %v3081
    %v3288 = vunpack.c.l.b16 %v3082
    %v3289 = vunpack.c.h.b16 %v3082
    %v3290 = vunpack.c.l.b16 %v3083
    %v3291 = vunpack.c.h.b16 %v3083
    %v3292 = vunpack.c.l.b16 %v3084
    %v3293 = vunpack.c.h.b16 %v3084
    %v3294 = vunpack.c.l.b16 %v3085
    %v3295 = vunpack.c.h.b16 %v3085
    %v3296 = vunpack.c.l.b16 %v3086
    %v3297 = vunpack.c.h.b16 %v3086
    %v3298 = vunpack.c.l.b16 %v3087
    %v3299 = vunpack.c.h.b16 %v3087
    %v3300 = vunpack.c.l.b16 %v3088
    %v3301 = vunpack.c.h.b16 %v3088
    %v3302 = vunpack.c.l.b16 %v3089
    %v3303 = vunpack.c.h.b16 %v3089
    %v3304 = vpack.c.b16 %v3180, %v3176
    %v3305 = vpack.c.b16 %v3181, %v3177
    %v3306 = vpack.c.b16 %v3182, %v3178
    %v3307 = vpack.c.b16 %v3183, %v3179
    %v3308 = vpack.c.b16 %v3188, %v3184
    %v3309 = vpack.c.b16 %v3189, %v3185
    %v3310 = vpack.c.b16 %v3190, %v3186
    %v3311 = vpack.c.b16 %v3191, %v3187
    %v3312 = vpack.c.b16 %v3196, %v3192
    %v3313 = vpack.c.b16 %v3197, %v3193
    %v3314 = vpack.c.b16 %v3198, %v3194
    %v3315 = vpack.c.b16 %v3199, %v3195
    %v3316 = vpack.c.b16 %v3204, %v3200
    %v3317 = vpack.c.b16 %v3205, %v3201
    %v3318 = vpack.c.b16 %v3206, %v3202
    %v3319 = vpack.c.b16 %v3207, %v3203
    %v3320 = vpack.c.b16 %v3212, %v3208
    %v3321 = vpack.c.b16 %v3213, %v3209
    %v3322 = vpack.c.b16 %v3214, %v3210
    %v3323 = vpack.c.b16 %v3215, %v3211
    %v3324 = vpack.c.b16 %v3220, %v3216
    %v3325 = vpack.c.b16 %v3221, %v3217
    %v3326 = vpack.c.b16 %v3222, %v3218
    %v3327 = vpack.c.b16 %v3223, %v3219
    %v3328 = vpack.c.b16 %v3228, %v3224
    %v3329 = vpack.c.b16 %v3229, %v3225
    %v3330 = vpack.c.b16 %v3230, %v3226
    %v3331 = vpack.c.b16 %v3231, %v3227
    %v3332 = vpack.c.b16 %v3236, %v3232
    %v3333 = vpack.c.b16 %v3237, %v3233
    %v3334 = vpack.c.b16 %v3238, %v3234
    %v3335 = vpack.c.b16 %v3239, %v3235
    %v3336 = vpack.c.b16 %v3244, %v3240
    %v3337 = vpack.c.b16 %v3245, %v3241
    %v3338 = vpack.c.b16 %v3246, %v3242
    %v3339 = vpack.c.b16 %v3247, %v3243
    %v3340 = vpack.c.b16 %v3252, %v3248
    %v3341 = vpack.c.b16 %v3253, %v3249
    %v3342 = vpack.c.b16 %v3254, %v3250
    %v3343 = vpack.c.b16 %v3255, %v3251
    %v3344 = vpack.c.b16 %v3260, %v3256
    %v3345 = vpack.c.b16 %v3261, %v3257
    %v3346 = vpack.c.b16 %v3262, %v3258
    %v3347 = vpack.c.b16 %v3263, %v3259
    %v3348 = vpack.c.b16 %v3268, %v3264
    %v3349 = vpack.c.b16 %v3269, %v3265
    %v3350 = vpack.c.b16 %v3270, %v3266
    %v3351 = vpack.c.b16 %v3271, %v3267
    %v3352 = vpack.c.b16 %v3276, %v3272
    %v3353 = vpack.c.b16 %v3277, %v3273
    %v3354 = vpack.c.b16 %v3278, %v3274
    %v3355 = vpack.c.b16 %v3279, %v3275
    %v3356 = vpack.c.b16 %v3284, %v3280
    %v3357 = vpack.c.b16 %v3285, %v3281
    %v3358 = vpack.c.b16 %v3286, %v3282
    %v3359 = vpack.c.b16 %v3287, %v3283
    %v3360 = vpack.c.b16 %v3292, %v3288
    %v3361 = vpack.c.b16 %v3293, %v3289
    %v3362 = vpack.c.b16 %v3294, %v3290
    %v3363 = vpack.c.b16 %v3295, %v3291
    %v3364 = vpack.c.b16 %v3300, %v3296
    %v3365 = vpack.c.b16 %v3301, %v3297
    %v3366 = vpack.c.b16 %v3302, %v3298
    %v3367 = vpack.c.b16 %v3303, %v3299
    %3432 = vmatprep.subr.bf16.mxu0 %v3333
    %3433 = vmatpush1.bf16.msra.mxu0 %v3332
    %3434 = vmatprep.subr.bf16.mxu0 %v3329
    %3435 = vmatpush1.bf16.msra.mxu0 %v3328
    %3436 = vmatprep.subr.bf16.mxu0 %v3325
    %3437 = vmatpush1.bf16.msra.mxu0 %v3324
    %3438 = vmatprep.subr.bf16.mxu0 %v3321
    %3439 = vmatpush1.bf16.msra.mxu0 %v3320
    %3440 = vmatprep.subr.bf16.mxu0 %v3317
    %3441 = vmatpush1.bf16.msra.mxu0 %v3316
    %3442 = vmatprep.subr.bf16.mxu0 %v3313
    %3443 = vmatpush1.bf16.msra.mxu0 %v3312
    %3444 = vmatprep.subr.bf16.mxu0 %v3309
    %3445 = vmatpush1.bf16.msra.mxu0 %v3308
    %3446 = vmatprep.subr.bf16.mxu0 %v3305
    %3447 = vmatpush1.bf16.msra.mxu0 %v3304
    %3448 = vmatprep.subr.bf16.mxu0 %v3365
    %3449 = vmatpush2.bf16.msra.mxu0 %v3364
    %3450 = vmatprep.subr.bf16.mxu0 %v3361
    %3451 = vmatpush2.bf16.msra.mxu0 %v3360
    %3452 = vmatprep.subr.bf16.mxu0 %v3357
    %3453 = vmatpush2.bf16.msra.mxu0 %v3356
    %3454 = vmatprep.subr.bf16.mxu0 %v3353
    %3455 = vmatpush2.bf16.msra.mxu0 %v3352
    %3456 = vmatprep.subr.bf16.mxu0 %v3349
    %3457 = vmatpush2.bf16.msra.mxu0 %v3348
    %3458 = vmatprep.subr.bf16.mxu0 %v3345
    %3459 = vmatpush2.bf16.msra.mxu0 %v3344
    %3460 = vmatprep.subr.bf16.mxu0 %v3341
    %3461 = vmatpush2.bf16.msra.mxu0 %v3340
    %3462 = vmatprep.subr.bf16.mxu0 %v3337
    %3463 = vmatpush2.bf16.msra.mxu0 %v3336
    %3464 = vmatprep.mubr.bf16.mxu0 %v3025
    %3465 = vmatmul.mubr.bf16.gmra.mxu0 %v3024
    %v3466 = vpop.f32.mrf.mxu0
    %v3467 = vadd.f32 %v3095, %v3466
    %v3468 = vpop.f32.mrf.mxu0
    %v3469 = vadd.f32 %v3099, %v3468
    %v3470 = vpop.f32.mrf.mxu0
    %v3471 = vpop.f32.mrf.mxu0
    %3472 = vdwg.mxu0
    %3473 = vmatprep.subr.bf16.mxu0 %v3335
    %3474 = vmatpush1.bf16.msra.mxu0 %v3334
    %3475 = vmatprep.subr.bf16.mxu0 %v3331
    %3476 = vmatpush1.bf16.msra.mxu0 %v3330
    %3477 = vmatprep.subr.bf16.mxu0 %v3327
    %3478 = vmatpush1.bf16.msra.mxu0 %v3326
    %3479 = vmatprep.subr.bf16.mxu0 %v3323
    %3480 = vmatpush1.bf16.msra.mxu0 %v3322
    %3481 = vmatprep.subr.bf16.mxu0 %v3319
    %3482 = vmatpush1.bf16.msra.mxu0 %v3318
    %3483 = vmatprep.subr.bf16.mxu0 %v3315
    %3484 = vmatpush1.bf16.msra.mxu0 %v3314
    %3485 = vmatprep.subr.bf16.mxu0 %v3311
    %3486 = vmatpush1.bf16.msra.mxu0 %v3310
    %3487 = vmatprep.subr.bf16.mxu0 %v3307
    %3488 = vmatpush1.bf16.msra.mxu0 %v3306
    %3489 = vmatprep.subr.bf16.mxu0 %v3367
    %3490 = vmatpush2.bf16.msra.mxu0 %v3366
    %3491 = vmatprep.subr.bf16.mxu0 %v3363
    %3492 = vmatpush2.bf16.msra.mxu0 %v3362
    %3493 = vmatprep.subr.bf16.mxu0 %v3359
    %3494 = vmatpush2.bf16.msra.mxu0 %v3358
    %3495 = vmatprep.subr.bf16.mxu0 %v3355
    %3496 = vmatpush2.bf16.msra.mxu0 %v3354
    %3497 = vmatprep.subr.bf16.mxu0 %v3351
    %3498 = vmatpush2.bf16.msra.mxu0 %v3350
    %3499 = vmatprep.subr.bf16.mxu0 %v3347
    %3500 = vmatpush2.bf16.msra.mxu0 %v3346
    %3501 = vmatprep.subr.bf16.mxu0 %v3343
    %3502 = vmatpush2.bf16.msra.mxu0 %v3342
    %3503 = vmatprep.subr.bf16.mxu0 %v3339
    %3504 = vmatpush2.bf16.msra.mxu0 %v3338
    %3505 = vmatprep.mubr.bf16.mxu0 %v3025
    %3506 = vmatmul.mubr.bf16.gmra.mxu0 %v3024
    %v3507 = vpop.f32.mrf.mxu0
    %v3508 = vadd.f32 %v3103, %v3507
    %v3509 = vpop.f32.mrf.mxu0
    %v3510 = vadd.f32 %v3107, %v3509
    %v3511 = vpop.f32.mrf.mxu0
    %v3512 = vpop.f32.mrf.mxu0
    %3513 = vdwg.mxu0
    %v3514 = vmax.f32 %v3467, 0.0
    %v3515 = vmax.f32 %v3469, 0.0
    %v3516 = vmax.f32 %v3508, 0.0
    %v3517 = vmax.f32 %v3510, 0.0
    %v3518 = vpack.c.bf16 %v3514, %v3514
    %v3519 = vpack.c.bf16 %v3515, %v3515
    %v3520 = vpack.c.bf16 %v3516, %v3516
    %v3521 = vpack.c.bf16 %v3517, %v3517
    %v3522 = vld [vmem:[#allocation28] sm:$0xff]
    %v3523 = vld [vmem:[#allocation28 + $0x8] sm:$0xff]
    %v3524 = vld [vmem:[#allocation28 + $0x10] sm:$0xff]
    %v3525 = vld [vmem:[#allocation28 + $0x18] sm:$0xf]
    %v3526 = vld [vmem:[#allocation28 + $0x1c] sm:$0xff]
    %v3527 = vld [vmem:[#allocation28 + $0x24] sm:$0xff]
    %v3528 = vld [vmem:[#allocation28 + $0x2c] sm:$0xff]
    %v3529 = vld [vmem:[#allocation28 + $0x34] sm:$0xf]
    %v3530 = vld [vmem:[#allocation28 + $0x38] sm:$0xff]
    %v3531 = vld [vmem:[#allocation28 + $0x40] sm:$0xff]
    %v3532 = vld [vmem:[#allocation28 + $0x48] sm:$0xff]
    %v3533 = vld [vmem:[#allocation28 + $0x50] sm:$0xf]
    %v3534 = vld [vmem:[#allocation28 + $0x54] sm:$0xff]
    %v3535 = vld [vmem:[#allocation28 + $0x5c] sm:$0xff]
    %v3536 = vld [vmem:[#allocation28 + $0x64] sm:$0xff]
    %v3537 = vld [vmem:[#allocation28 + $0x6c] sm:$0xf]
    %v3538 = vld [vmem:[#allocation28 + $0x70] sm:$0xff]
    %v3539 = vld [vmem:[#allocation28 + $0x78] sm:$0xff]
    %v3540 = vld [vmem:[#allocation28 + $0x80] sm:$0xff]
    %v3541 = vld [vmem:[#allocation28 + $0x88] sm:$0xf]
    %v3542 = vld [vmem:[#allocation28 + $0x8c] sm:$0xff]
    %v3543 = vld [vmem:[#allocation28 + $0x94] sm:$0xff]
    %v3544 = vld [vmem:[#allocation28 + $0x9c] sm:$0xff]
    %v3545 = vld [vmem:[#allocation28 + $0xa4] sm:$0xf]
    %v3546 = vld [vmem:[#allocation28 + $0xa8] sm:$0xff]
    %v3547 = vld [vmem:[#allocation28 + $0xb0] sm:$0xff]
    %v3548 = vld [vmem:[#allocation28 + $0xb8] sm:$0xff]
    %v3549 = vld [vmem:[#allocation28 + $0xc0] sm:$0xf]
    %v3550 = vld [vmem:[#allocation28 + $0xc4] sm:$0xff]
    %v3551 = vld [vmem:[#allocation28 + $0xcc] sm:$0xff]
    %v3552 = vld [vmem:[#allocation28 + $0xd4] sm:$0xff]
    %v3553 = vld [vmem:[#allocation28 + $0xdc] sm:$0xf]
    %v3554 = vld [vmem:[#allocation28 + $0xe0] sm:$0xff]
    %v3555 = vld [vmem:[#allocation28 + $0xe8] sm:$0xff]
    %v3556 = vld [vmem:[#allocation28 + $0xf0] sm:$0xff]
    %v3557 = vld [vmem:[#allocation28 + $0xf8] sm:$0xf]
    %v3558 = vld [vmem:[#allocation28 + $0xfc] sm:$0xff]
    %v3559 = vld [vmem:[#allocation28 + $0x104] sm:$0xff]
    %v3560 = vld [vmem:[#allocation28 + $0x10c] sm:$0xff]
    %v3561 = vld [vmem:[#allocation28 + $0x114] sm:$0xf]
    %v3562 = vld [vmem:[#allocation28 + $0x118] sm:$0xff]
    %v3563 = vld [vmem:[#allocation28 + $0x120] sm:$0xff]
    %v3564 = vld [vmem:[#allocation28 + $0x128] sm:$0xff]
    %v3565 = vld [vmem:[#allocation28 + $0x130] sm:$0xf]
    %v3566 = vld [vmem:[#allocation28 + $0x134] sm:$0xff]
    %v3567 = vld [vmem:[#allocation28 + $0x13c] sm:$0xff]
    %v3568 = vld [vmem:[#allocation28 + $0x144] sm:$0xff]
    %v3569 = vld [vmem:[#allocation28 + $0x14c] sm:$0xf]
    %v3570 = vld [vmem:[#allocation28 + $0x150] sm:$0xff]
    %v3571 = vld [vmem:[#allocation28 + $0x158] sm:$0xff]
    %v3572 = vld [vmem:[#allocation28 + $0x160] sm:$0xff]
    %v3573 = vld [vmem:[#allocation28 + $0x168] sm:$0xf]
    %v3574 = vld [vmem:[#allocation28 + $0x16c] sm:$0xff]
    %v3575 = vld [vmem:[#allocation28 + $0x174] sm:$0xff]
    %v3576 = vld [vmem:[#allocation28 + $0x17c] sm:$0xff]
    %v3577 = vld [vmem:[#allocation28 + $0x184] sm:$0xf]
    %v3578 = vld [vmem:[#allocation28 + $0x188] sm:$0xff]
    %v3579 = vld [vmem:[#allocation28 + $0x190] sm:$0xff]
    %v3580 = vld [vmem:[#allocation28 + $0x198] sm:$0xff]
    %v3581 = vld [vmem:[#allocation28 + $0x1a0] sm:$0xf]
    %v3582 = vld [vmem:[#allocation28 + $0x1a4] sm:$0xff]
    %v3583 = vld [vmem:[#allocation28 + $0x1ac] sm:$0xff]
    %v3584 = vld [vmem:[#allocation28 + $0x1b4] sm:$0xff]
    %v3585 = vld [vmem:[#allocation28 + $0x1bc] sm:$0xf]
    %v3586 = vld [vmem:[#allocation28 + $0x1c0] sm:$0xff]
    %v3587 = vld [vmem:[#allocation28 + $0x1c8] sm:$0xff]
    %v3588 = vld [vmem:[#allocation28 + $0x1d0] sm:$0xff]
    %v3589 = vld [vmem:[#allocation28 + $0x1d8] sm:$0xf]
    %v3590 = vld [vmem:[#allocation28 + $0x1dc] sm:$0xff]
    %v3591 = vld [vmem:[#allocation28 + $0x1e4] sm:$0xff]
    %v3592 = vld [vmem:[#allocation28 + $0x1ec] sm:$0xff]
    %v3593 = vld [vmem:[#allocation28 + $0x1f4] sm:$0xf]
    %v3594 = vld [vmem:[#allocation28 + $0x1f8] sm:$0xff]
    %v3595 = vld [vmem:[#allocation28 + $0x200] sm:$0xff]
    %v3596 = vld [vmem:[#allocation28 + $0x208] sm:$0xff]
    %v3597 = vld [vmem:[#allocation28 + $0x210] sm:$0xf]
    %v3598 = vld [vmem:[#allocation28 + $0x214] sm:$0xff]
    %v3599 = vld [vmem:[#allocation28 + $0x21c] sm:$0xff]
    %v3600 = vld [vmem:[#allocation28 + $0x224] sm:$0xff]
    %v3601 = vld [vmem:[#allocation28 + $0x22c] sm:$0xf]
    %v3602 = vld [vmem:[#allocation28 + $0x230] sm:$0xff]
    %v3603 = vld [vmem:[#allocation28 + $0x238] sm:$0xff]
    %v3604 = vld [vmem:[#allocation28 + $0x240] sm:$0xff]
    %v3605 = vld [vmem:[#allocation28 + $0x248] sm:$0xf]
    %v3606 = vld [vmem:[#allocation28 + $0x24c] sm:$0xff]
    %v3607 = vld [vmem:[#allocation28 + $0x254] sm:$0xff]
    %v3608 = vld [vmem:[#allocation28 + $0x25c] sm:$0xff]
    %v3609 = vld [vmem:[#allocation28 + $0x264] sm:$0xf]
    %v3610 = vld [vmem:[#allocation28 + $0x268] sm:$0xff]
    %v3611 = vld [vmem:[#allocation28 + $0x270] sm:$0xff]
    %v3612 = vld [vmem:[#allocation28 + $0x278] sm:$0xff]
    %v3613 = vld [vmem:[#allocation28 + $0x280] sm:$0xf]
    %v3614 = vld [vmem:[#allocation28 + $0x284] sm:$0xff]
    %v3615 = vld [vmem:[#allocation28 + $0x28c] sm:$0xff]
    %v3616 = vld [vmem:[#allocation28 + $0x294] sm:$0xff]
    %v3617 = vld [vmem:[#allocation28 + $0x29c] sm:$0xf]
    %v3618 = vld [vmem:[#allocation28 + $0x2a0] sm:$0xff]
    %v3619 = vld [vmem:[#allocation28 + $0x2a8] sm:$0xff]
    %v3620 = vld [vmem:[#allocation28 + $0x2b0] sm:$0xff]
    %v3621 = vld [vmem:[#allocation28 + $0x2b8] sm:$0xf]
    %v3622 = vld [vmem:[#allocation28 + $0x2bc] sm:$0xff]
    %v3623 = vld [vmem:[#allocation28 + $0x2c4] sm:$0xff]
    %v3624 = vld [vmem:[#allocation28 + $0x2cc] sm:$0xff]
    %v3625 = vld [vmem:[#allocation28 + $0x2d4] sm:$0xf]
    %v3626 = vld [vmem:[#allocation28 + $0x2d8] sm:$0xff]
    %v3627 = vld [vmem:[#allocation28 + $0x2e0] sm:$0xff]
    %v3628 = vld [vmem:[#allocation28 + $0x2e8] sm:$0xff]
    %v3629 = vld [vmem:[#allocation28 + $0x2f0] sm:$0xf]
    %v3630 = vld [vmem:[#allocation28 + $0x2f4] sm:$0xff]
    %v3631 = vld [vmem:[#allocation28 + $0x2fc] sm:$0xff]
    %v3632 = vld [vmem:[#allocation28 + $0x304] sm:$0xff]
    %v3633 = vld [vmem:[#allocation28 + $0x30c] sm:$0xf]
    %v3634 = vld [vmem:[#allocation28 + $0x310] sm:$0xff]
    %v3635 = vld [vmem:[#allocation28 + $0x318] sm:$0xff]
    %v3636 = vld [vmem:[#allocation28 + $0x320] sm:$0xff]
    %v3637 = vld [vmem:[#allocation28 + $0x328] sm:$0xf]
    %v3638 = vld [vmem:[#allocation28 + $0x32c] sm:$0xff]
    %v3639 = vld [vmem:[#allocation28 + $0x334] sm:$0xff]
    %v3640 = vld [vmem:[#allocation28 + $0x33c] sm:$0xff]
    %v3641 = vld [vmem:[#allocation28 + $0x344] sm:$0xf]
    %v3642 = vld [vmem:[#allocation28 + $0x348] sm:$0xff]
    %v3643 = vld [vmem:[#allocation28 + $0x350] sm:$0xff]
    %v3644 = vld [vmem:[#allocation28 + $0x358] sm:$0xff]
    %v3645 = vld [vmem:[#allocation28 + $0x360] sm:$0xf]
    %v3646 = vld [vmem:[#allocation28 + $0x364] sm:$0xff]
    %v3647 = vld [vmem:[#allocation28 + $0x36c] sm:$0xff]
    %v3648 = vld [vmem:[#allocation28 + $0x374] sm:$0xff]
    %v3649 = vld [vmem:[#allocation28 + $0x37c] sm:$0xf]
    %v3650 = vld [vmem:[#allocation28 + $0x380] sm:$0xff]
    %v3651 = vld [vmem:[#allocation28 + $0x388] sm:$0xff]
    %v3652 = vld [vmem:[#allocation28 + $0x390] sm:$0xff]
    %v3653 = vld [vmem:[#allocation28 + $0x398] sm:$0xf]
    %v3654 = vld [vmem:[#allocation28 + $0x39c] sm:$0xff]
    %v3655 = vld [vmem:[#allocation28 + $0x3a4] sm:$0xff]
    %v3656 = vld [vmem:[#allocation28 + $0x3ac] sm:$0xff]
    %v3657 = vld [vmem:[#allocation28 + $0x3b4] sm:$0xf]
    %v3658 = vld [vmem:[#allocation28 + $0x3b8] sm:$0xff]
    %v3659 = vld [vmem:[#allocation28 + $0x3c0] sm:$0xff]
    %v3660 = vld [vmem:[#allocation28 + $0x3c8] sm:$0xff]
    %v3661 = vld [vmem:[#allocation28 + $0x3d0] sm:$0xf]
    %v3662 = vld [vmem:[#allocation28 + $0x3d4] sm:$0xff]
    %v3663 = vld [vmem:[#allocation28 + $0x3dc] sm:$0xff]
    %v3664 = vld [vmem:[#allocation28 + $0x3e4] sm:$0xff]
    %v3665 = vld [vmem:[#allocation28 + $0x3ec] sm:$0xf]
    %v3666 = vld [vmem:[#allocation28 + $0x3f0] sm:$0xff]
    %v3667 = vld [vmem:[#allocation28 + $0x3f8] sm:$0xff]
    %v3668 = vld [vmem:[#allocation28 + $0x400] sm:$0xff]
    %v3669 = vld [vmem:[#allocation28 + $0x408] sm:$0xf]
    %v3670 = vld [vmem:[#allocation28 + $0x40c] sm:$0xff]
    %v3671 = vld [vmem:[#allocation28 + $0x414] sm:$0xff]
    %v3672 = vld [vmem:[#allocation28 + $0x41c] sm:$0xff]
    %v3673 = vld [vmem:[#allocation28 + $0x424] sm:$0xf]
    %v3674 = vld [vmem:[#allocation28 + $0x428] sm:$0xff]
    %v3675 = vld [vmem:[#allocation28 + $0x430] sm:$0xff]
    %v3676 = vld [vmem:[#allocation28 + $0x438] sm:$0xff]
    %v3677 = vld [vmem:[#allocation28 + $0x440] sm:$0xf]
    %v3678 = vld [vmem:[#allocation28 + $0x444] sm:$0xff]
    %v3679 = vld [vmem:[#allocation28 + $0x44c] sm:$0xff]
    %v3680 = vld [vmem:[#allocation28 + $0x454] sm:$0xff]
    %v3681 = vld [vmem:[#allocation28 + $0x45c] sm:$0xf]
    %v3682 = vld [vmem:[#allocation28 + $0x460] sm:$0xff]
    %v3683 = vld [vmem:[#allocation28 + $0x468] sm:$0xff]
    %v3684 = vld [vmem:[#allocation28 + $0x470] sm:$0xff]
    %v3685 = vld [vmem:[#allocation28 + $0x478] sm:$0xf]
    %v3686 = vld [vmem:[#allocation28 + $0x47c] sm:$0xff]
    %v3687 = vld [vmem:[#allocation28 + $0x484] sm:$0xff]
    %v3688 = vld [vmem:[#allocation28 + $0x48c] sm:$0xff]
    %v3689 = vld [vmem:[#allocation28 + $0x494] sm:$0xf]
    %v3690 = vld [vmem:[#allocation28 + $0x498] sm:$0xff]
    %v3691 = vld [vmem:[#allocation28 + $0x4a0] sm:$0xff]
    %v3692 = vld [vmem:[#allocation28 + $0x4a8] sm:$0xff]
    %v3693 = vld [vmem:[#allocation28 + $0x4b0] sm:$0xf]
    %v3694 = vld [vmem:[#allocation28 + $0x4b4] sm:$0xff]
    %v3695 = vld [vmem:[#allocation28 + $0x4bc] sm:$0xff]
    %v3696 = vld [vmem:[#allocation28 + $0x4c4] sm:$0xff]
    %v3697 = vld [vmem:[#allocation28 + $0x4cc] sm:$0xf]
    %v3698 = vld [vmem:[#allocation28 + $0x4d0] sm:$0xff]
    %v3699 = vld [vmem:[#allocation28 + $0x4d8] sm:$0xff]
    %v3700 = vld [vmem:[#allocation28 + $0x4e0] sm:$0xff]
    %v3701 = vld [vmem:[#allocation28 + $0x4e8] sm:$0xf]
    %v3702 = vld [vmem:[#allocation28 + $0x4ec] sm:$0xff]
    %v3703 = vld [vmem:[#allocation28 + $0x4f4] sm:$0xff]
    %v3704 = vld [vmem:[#allocation28 + $0x4fc] sm:$0xff]
    %v3705 = vld [vmem:[#allocation28 + $0x504] sm:$0xf]
    %v3706 = vld [vmem:[#allocation28 + $0x508] sm:$0xff]
    %v3707 = vld [vmem:[#allocation28 + $0x510] sm:$0xff]
    %v3708 = vld [vmem:[#allocation28 + $0x518] sm:$0xff]
    %v3709 = vld [vmem:[#allocation28 + $0x520] sm:$0xf]
    %v3710 = vld [vmem:[#allocation28 + $0x524] sm:$0xff]
    %v3711 = vld [vmem:[#allocation28 + $0x52c] sm:$0xff]
    %v3712 = vld [vmem:[#allocation28 + $0x534] sm:$0xff]
    %v3713 = vld [vmem:[#allocation28 + $0x53c] sm:$0xf]
    %v3714 = vld [vmem:[#allocation28 + $0x540] sm:$0xff]
    %v3715 = vld [vmem:[#allocation28 + $0x548] sm:$0xff]
    %v3716 = vld [vmem:[#allocation28 + $0x550] sm:$0xff]
    %v3717 = vld [vmem:[#allocation28 + $0x558] sm:$0xf]
    %v3718 = vld [vmem:[#allocation28 + $0x55c] sm:$0xff]
    %v3719 = vld [vmem:[#allocation28 + $0x564] sm:$0xff]
    %v3720 = vld [vmem:[#allocation28 + $0x56c] sm:$0xff]
    %v3721 = vld [vmem:[#allocation28 + $0x574] sm:$0xf]
    %v3722 = vld [vmem:[#allocation28 + $0x578] sm:$0xff]
    %v3723 = vld [vmem:[#allocation28 + $0x580] sm:$0xff]
    %v3724 = vld [vmem:[#allocation28 + $0x588] sm:$0xff]
    %v3725 = vld [vmem:[#allocation28 + $0x590] sm:$0xf]
    %v3726 = vld [vmem:[#allocation28 + $0x594] sm:$0xff]
    %v3727 = vld [vmem:[#allocation28 + $0x59c] sm:$0xff]
    %v3728 = vld [vmem:[#allocation28 + $0x5a4] sm:$0xff]
    %v3729 = vld [vmem:[#allocation28 + $0x5ac] sm:$0xf]
    %v3730 = vld [vmem:[#allocation28 + $0x5b0] sm:$0xff]
    %v3731 = vld [vmem:[#allocation28 + $0x5b8] sm:$0xff]
    %v3732 = vld [vmem:[#allocation28 + $0x5c0] sm:$0xff]
    %v3733 = vld [vmem:[#allocation28 + $0x5c8] sm:$0xf]
    %v3734 = vld [vmem:[#allocation28 + $0x5cc] sm:$0xff]
    %v3735 = vld [vmem:[#allocation28 + $0x5d4] sm:$0xff]
    %v3736 = vld [vmem:[#allocation28 + $0x5dc] sm:$0xff]
    %v3737 = vld [vmem:[#allocation28 + $0x5e4] sm:$0xf]
    %v3738 = vld [vmem:[#allocation28 + $0x5e8] sm:$0xff]
    %v3739 = vld [vmem:[#allocation28 + $0x5f0] sm:$0xff]
    %v3740 = vld [vmem:[#allocation28 + $0x5f8] sm:$0xff]
    %v3741 = vld [vmem:[#allocation28 + $0x600] sm:$0xf]
    %v3742 = vld [vmem:[#allocation28 + $0x604] sm:$0xff]
    %v3743 = vld [vmem:[#allocation28 + $0x60c] sm:$0xff]
    %v3744 = vld [vmem:[#allocation28 + $0x614] sm:$0xff]
    %v3745 = vld [vmem:[#allocation28 + $0x61c] sm:$0xf]
    %v3746 = vld [vmem:[#allocation28 + $0x620] sm:$0xff]
    %v3747 = vld [vmem:[#allocation28 + $0x628] sm:$0xff]
    %v3748 = vld [vmem:[#allocation28 + $0x630] sm:$0xff]
    %v3749 = vld [vmem:[#allocation28 + $0x638] sm:$0xf]
    %v3750 = vld [vmem:[#allocation28 + $0x63c] sm:$0xff]
    %v3751 = vld [vmem:[#allocation28 + $0x644] sm:$0xff]
    %v3752 = vld [vmem:[#allocation28 + $0x64c] sm:$0xff]
    %v3753 = vld [vmem:[#allocation28 + $0x654] sm:$0xf]
    %v3754 = vld [vmem:[#allocation28 + $0x658] sm:$0xff]
    %v3755 = vld [vmem:[#allocation28 + $0x660] sm:$0xff]
    %v3756 = vld [vmem:[#allocation28 + $0x668] sm:$0xff]
    %v3757 = vld [vmem:[#allocation28 + $0x670] sm:$0xf]
    %v3758 = vld [vmem:[#allocation28 + $0x674] sm:$0xff]
    %v3759 = vld [vmem:[#allocation28 + $0x67c] sm:$0xff]
    %v3760 = vld [vmem:[#allocation28 + $0x684] sm:$0xff]
    %v3761 = vld [vmem:[#allocation28 + $0x68c] sm:$0xf]
    %v3762 = vld [vmem:[#allocation28 + $0x690] sm:$0xff]
    %v3763 = vld [vmem:[#allocation28 + $0x698] sm:$0xff]
    %v3764 = vld [vmem:[#allocation28 + $0x6a0] sm:$0xff]
    %v3765 = vld [vmem:[#allocation28 + $0x6a8] sm:$0xf]
    %v3766 = vld [vmem:[#allocation28 + $0x6ac] sm:$0xff]
    %v3767 = vld [vmem:[#allocation28 + $0x6b4] sm:$0xff]
    %v3768 = vld [vmem:[#allocation28 + $0x6bc] sm:$0xff]
    %v3769 = vld [vmem:[#allocation28 + $0x6c4] sm:$0xf]
    %v3770 = vld [vmem:[#allocation28 + $0x6c8] sm:$0xff]
    %v3771 = vld [vmem:[#allocation28 + $0x6d0] sm:$0xff]
    %v3772 = vld [vmem:[#allocation28 + $0x6d8] sm:$0xff]
    %v3773 = vld [vmem:[#allocation28 + $0x6e0] sm:$0xf]
    %v3774 = vld [vmem:[#allocation28 + $0x6e4] sm:$0xff]
    %v3775 = vld [vmem:[#allocation28 + $0x6ec] sm:$0xff]
    %v3776 = vld [vmem:[#allocation28 + $0x6f4] sm:$0xff]
    %v3777 = vld [vmem:[#allocation28 + $0x6fc] sm:$0xf]
    %v3778 = vld [vmem:[%s21] sm:$0xff]
    %v3780 = vlaneseq
    %v3781 = vshrl.u32 %v3780, 7
    %v3782 = vsub.s32 0, %v3781
    %v3783 = vrot.slane %v3778, %v3782
    %v3784 = vlaneseq
    %v3785 = vshrl.u32 %v3784, 7
    %v3786 = vsub.s32 1, %v3785
    %v3787 = vrot.slane %v3778, %v3786
    %v3788 = vlaneseq
    %v3789 = vshrl.u32 %v3788, 7
    %v3790 = vsub.s32 2, %v3789
    %v3791 = vrot.slane %v3778, %v3790
    %v3792 = vlaneseq
    %v3793 = vshrl.u32 %v3792, 7
    %v3794 = vsub.s32 3, %v3793
    %v3795 = vrot.slane %v3778, %v3794
    %v3796 = vlaneseq
    %v3797 = vshrl.u32 %v3796, 7
    %v3798 = vsub.s32 4, %v3797
    %v3799 = vrot.slane %v3778, %v3798
    %v3800 = vlaneseq
    %v3801 = vshrl.u32 %v3800, 7
    %v3802 = vsub.s32 5, %v3801
    %v3803 = vrot.slane %v3778, %v3802
    %v3804 = vlaneseq
    %v3805 = vshrl.u32 %v3804, 7
    %v3806 = vsub.s32 6, %v3805
    %v3807 = vrot.slane %v3778, %v3806
    %v4071 = vunpack.c.l.b16 %v3522
    %v4072 = vunpack.c.h.b16 %v3522
    %v4073 = vunpack.c.l.b16 %v3523
    %v4074 = vunpack.c.h.b16 %v3523
    %v4075 = vunpack.c.l.b16 %v3524
    %v4076 = vunpack.c.h.b16 %v3524
    %v4077 = vunpack.c.l.b16 %v3525
    %v4078 = vunpack.c.l.b16 %v3526
    %v4079 = vunpack.c.h.b16 %v3526
    %v4080 = vunpack.c.l.b16 %v3527
    %v4081 = vunpack.c.h.b16 %v3527
    %v4082 = vunpack.c.l.b16 %v3528
    %v4083 = vunpack.c.h.b16 %v3528
    %v4084 = vunpack.c.l.b16 %v3529
    %v4085 = vunpack.c.l.b16 %v3530
    %v4086 = vunpack.c.h.b16 %v3530
    %v4087 = vunpack.c.l.b16 %v3531
    %v4088 = vunpack.c.h.b16 %v3531
    %v4089 = vunpack.c.l.b16 %v3532
    %v4090 = vunpack.c.h.b16 %v3532
    %v4091 = vunpack.c.l.b16 %v3533
    %v4092 = vunpack.c.l.b16 %v3534
    %v4093 = vunpack.c.h.b16 %v3534
    %v4094 = vunpack.c.l.b16 %v3535
    %v4095 = vunpack.c.h.b16 %v3535
    %v4096 = vunpack.c.l.b16 %v3536
    %v4097 = vunpack.c.h.b16 %v3536
    %v4098 = vunpack.c.l.b16 %v3537
    %v4099 = vunpack.c.l.b16 %v3538
    %v4100 = vunpack.c.h.b16 %v3538
    %v4101 = vunpack.c.l.b16 %v3539
    %v4102 = vunpack.c.h.b16 %v3539
    %v4103 = vunpack.c.l.b16 %v3540
    %v4104 = vunpack.c.h.b16 %v3540
    %v4105 = vunpack.c.l.b16 %v3541
    %v4106 = vunpack.c.l.b16 %v3542
    %v4107 = vunpack.c.h.b16 %v3542
    %v4108 = vunpack.c.l.b16 %v3543
    %v4109 = vunpack.c.h.b16 %v3543
    %v4110 = vunpack.c.l.b16 %v3544
    %v4111 = vunpack.c.h.b16 %v3544
    %v4112 = vunpack.c.l.b16 %v3545
    %v4113 = vunpack.c.l.b16 %v3546
    %v4114 = vunpack.c.h.b16 %v3546
    %v4115 = vunpack.c.l.b16 %v3547
    %v4116 = vunpack.c.h.b16 %v3547
    %v4117 = vunpack.c.l.b16 %v3548
    %v4118 = vunpack.c.h.b16 %v3548
    %v4119 = vunpack.c.l.b16 %v3549
    %v4120 = vunpack.c.l.b16 %v3550
    %v4121 = vunpack.c.h.b16 %v3550
    %v4122 = vunpack.c.l.b16 %v3551
    %v4123 = vunpack.c.h.b16 %v3551
    %v4124 = vunpack.c.l.b16 %v3552
    %v4125 = vunpack.c.h.b16 %v3552
    %v4126 = vunpack.c.l.b16 %v3553
    %v4127 = vunpack.c.l.b16 %v3554
    %v4128 = vunpack.c.h.b16 %v3554
    %v4129 = vunpack.c.l.b16 %v3555
    %v4130 = vunpack.c.h.b16 %v3555
    %v4131 = vunpack.c.l.b16 %v3556
    %v4132 = vunpack.c.h.b16 %v3556
    %v4133 = vunpack.c.l.b16 %v3557
    %v4134 = vunpack.c.l.b16 %v3558
    %v4135 = vunpack.c.h.b16 %v3558
    %v4136 = vunpack.c.l.b16 %v3559
    %v4137 = vunpack.c.h.b16 %v3559
    %v4138 = vunpack.c.l.b16 %v3560
    %v4139 = vunpack.c.h.b16 %v3560
    %v4140 = vunpack.c.l.b16 %v3561
    %v4141 = vunpack.c.l.b16 %v3562
    %v4142 = vunpack.c.h.b16 %v3562
    %v4143 = vunpack.c.l.b16 %v3563
    %v4144 = vunpack.c.h.b16 %v3563
    %v4145 = vunpack.c.l.b16 %v3564
    %v4146 = vunpack.c.h.b16 %v3564
    %v4147 = vunpack.c.l.b16 %v3565
    %v4148 = vunpack.c.l.b16 %v3566
    %v4149 = vunpack.c.h.b16 %v3566
    %v4150 = vunpack.c.l.b16 %v3567
    %v4151 = vunpack.c.h.b16 %v3567
    %v4152 = vunpack.c.l.b16 %v3568
    %v4153 = vunpack.c.h.b16 %v3568
    %v4154 = vunpack.c.l.b16 %v3569
    %v4155 = vunpack.c.l.b16 %v3570
    %v4156 = vunpack.c.h.b16 %v3570
    %v4157 = vunpack.c.l.b16 %v3571
    %v4158 = vunpack.c.h.b16 %v3571
    %v4159 = vunpack.c.l.b16 %v3572
    %v4160 = vunpack.c.h.b16 %v3572
    %v4161 = vunpack.c.l.b16 %v3573
    %v4162 = vunpack.c.l.b16 %v3574
    %v4163 = vunpack.c.h.b16 %v3574
    %v4164 = vunpack.c.l.b16 %v3575
    %v4165 = vunpack.c.h.b16 %v3575
    %v4166 = vunpack.c.l.b16 %v3576
    %v4167 = vunpack.c.h.b16 %v3576
    %v4168 = vunpack.c.l.b16 %v3577
    %v4169 = vunpack.c.l.b16 %v3578
    %v4170 = vunpack.c.h.b16 %v3578
    %v4171 = vunpack.c.l.b16 %v3579
    %v4172 = vunpack.c.h.b16 %v3579
    %v4173 = vunpack.c.l.b16 %v3580
    %v4174 = vunpack.c.h.b16 %v3580
    %v4175 = vunpack.c.l.b16 %v3581
    %v4176 = vunpack.c.l.b16 %v3582
    %v4177 = vunpack.c.h.b16 %v3582
    %v4178 = vunpack.c.l.b16 %v3583
    %v4179 = vunpack.c.h.b16 %v3583
    %v4180 = vunpack.c.l.b16 %v3584
    %v4181 = vunpack.c.h.b16 %v3584
    %v4182 = vunpack.c.l.b16 %v3585
    %v4183 = vunpack.c.l.b16 %v3586
    %v4184 = vunpack.c.h.b16 %v3586
    %v4185 = vunpack.c.l.b16 %v3587
    %v4186 = vunpack.c.h.b16 %v3587
    %v4187 = vunpack.c.l.b16 %v3588
    %v4188 = vunpack.c.h.b16 %v3588
    %v4189 = vunpack.c.l.b16 %v3589
    %v4190 = vunpack.c.l.b16 %v3590
    %v4191 = vunpack.c.h.b16 %v3590
    %v4192 = vunpack.c.l.b16 %v3591
    %v4193 = vunpack.c.h.b16 %v3591
    %v4194 = vunpack.c.l.b16 %v3592
    %v4195 = vunpack.c.h.b16 %v3592
    %v4196 = vunpack.c.l.b16 %v3593
    %v4197 = vunpack.c.l.b16 %v3594
    %v4198 = vunpack.c.h.b16 %v3594
    %v4199 = vunpack.c.l.b16 %v3595
    %v4200 = vunpack.c.h.b16 %v3595
    %v4201 = vunpack.c.l.b16 %v3596
    %v4202 = vunpack.c.h.b16 %v3596
    %v4203 = vunpack.c.l.b16 %v3597
    %v4204 = vunpack.c.l.b16 %v3598
    %v4205 = vunpack.c.h.b16 %v3598
    %v4206 = vunpack.c.l.b16 %v3599
    %v4207 = vunpack.c.h.b16 %v3599
    %v4208 = vunpack.c.l.b16 %v3600
    %v4209 = vunpack.c.h.b16 %v3600
    %v4210 = vunpack.c.l.b16 %v3601
    %v4211 = vunpack.c.l.b16 %v3602
    %v4212 = vunpack.c.h.b16 %v3602
    %v4213 = vunpack.c.l.b16 %v3603
    %v4214 = vunpack.c.h.b16 %v3603
    %v4215 = vunpack.c.l.b16 %v3604
    %v4216 = vunpack.c.h.b16 %v3604
    %v4217 = vunpack.c.l.b16 %v3605
    %v4218 = vunpack.c.l.b16 %v3606
    %v4219 = vunpack.c.h.b16 %v3606
    %v4220 = vunpack.c.l.b16 %v3607
    %v4221 = vunpack.c.h.b16 %v3607
    %v4222 = vunpack.c.l.b16 %v3608
    %v4223 = vunpack.c.h.b16 %v3608
    %v4224 = vunpack.c.l.b16 %v3609
    %v4225 = vunpack.c.l.b16 %v3610
    %v4226 = vunpack.c.h.b16 %v3610
    %v4227 = vunpack.c.l.b16 %v3611
    %v4228 = vunpack.c.h.b16 %v3611
    %v4229 = vunpack.c.l.b16 %v3612
    %v4230 = vunpack.c.h.b16 %v3612
    %v4231 = vunpack.c.l.b16 %v3613
    %v4232 = vunpack.c.l.b16 %v3614
    %v4233 = vunpack.c.h.b16 %v3614
    %v4234 = vunpack.c.l.b16 %v3615
    %v4235 = vunpack.c.h.b16 %v3615
    %v4236 = vunpack.c.l.b16 %v3616
    %v4237 = vunpack.c.h.b16 %v3616
    %v4238 = vunpack.c.l.b16 %v3617
    %v4239 = vunpack.c.l.b16 %v3618
    %v4240 = vunpack.c.h.b16 %v3618
    %v4241 = vunpack.c.l.b16 %v3619
    %v4242 = vunpack.c.h.b16 %v3619
    %v4243 = vunpack.c.l.b16 %v3620
    %v4244 = vunpack.c.h.b16 %v3620
    %v4245 = vunpack.c.l.b16 %v3621
    %v4246 = vunpack.c.l.b16 %v3622
    %v4247 = vunpack.c.h.b16 %v3622
    %v4248 = vunpack.c.l.b16 %v3623
    %v4249 = vunpack.c.h.b16 %v3623
    %v4250 = vunpack.c.l.b16 %v3624
    %v4251 = vunpack.c.h.b16 %v3624
    %v4252 = vunpack.c.l.b16 %v3625
    %v4253 = vunpack.c.l.b16 %v3626
    %v4254 = vunpack.c.h.b16 %v3626
    %v4255 = vunpack.c.l.b16 %v3627
    %v4256 = vunpack.c.h.b16 %v3627
    %v4257 = vunpack.c.l.b16 %v3628
    %v4258 = vunpack.c.h.b16 %v3628
    %v4259 = vunpack.c.l.b16 %v3629
    %v4260 = vunpack.c.l.b16 %v3630
    %v4261 = vunpack.c.h.b16 %v3630
    %v4262 = vunpack.c.l.b16 %v3631
    %v4263 = vunpack.c.h.b16 %v3631
    %v4264 = vunpack.c.l.b16 %v3632
    %v4265 = vunpack.c.h.b16 %v3632
    %v4266 = vunpack.c.l.b16 %v3633
    %v4267 = vunpack.c.l.b16 %v3634
    %v4268 = vunpack.c.h.b16 %v3634
    %v4269 = vunpack.c.l.b16 %v3635
    %v4270 = vunpack.c.h.b16 %v3635
    %v4271 = vunpack.c.l.b16 %v3636
    %v4272 = vunpack.c.h.b16 %v3636
    %v4273 = vunpack.c.l.b16 %v3637
    %v4274 = vunpack.c.l.b16 %v3638
    %v4275 = vunpack.c.h.b16 %v3638
    %v4276 = vunpack.c.l.b16 %v3639
    %v4277 = vunpack.c.h.b16 %v3639
    %v4278 = vunpack.c.l.b16 %v3640
    %v4279 = vunpack.c.h.b16 %v3640
    %v4280 = vunpack.c.l.b16 %v3641
    %v4281 = vunpack.c.l.b16 %v3642
    %v4282 = vunpack.c.h.b16 %v3642
    %v4283 = vunpack.c.l.b16 %v3643
    %v4284 = vunpack.c.h.b16 %v3643
    %v4285 = vunpack.c.l.b16 %v3644
    %v4286 = vunpack.c.h.b16 %v3644
    %v4287 = vunpack.c.l.b16 %v3645
    %v4288 = vunpack.c.l.b16 %v3646
    %v4289 = vunpack.c.h.b16 %v3646
    %v4290 = vunpack.c.l.b16 %v3647
    %v4291 = vunpack.c.h.b16 %v3647
    %v4292 = vunpack.c.l.b16 %v3648
    %v4293 = vunpack.c.h.b16 %v3648
    %v4294 = vunpack.c.l.b16 %v3649
    %v4295 = vunpack.c.l.b16 %v3650
    %v4296 = vunpack.c.h.b16 %v3650
    %v4297 = vunpack.c.l.b16 %v3651
    %v4298 = vunpack.c.h.b16 %v3651
    %v4299 = vunpack.c.l.b16 %v3652
    %v4300 = vunpack.c.h.b16 %v3652
    %v4301 = vunpack.c.l.b16 %v3653
    %v4302 = vunpack.c.l.b16 %v3654
    %v4303 = vunpack.c.h.b16 %v3654
    %v4304 = vunpack.c.l.b16 %v3655
    %v4305 = vunpack.c.h.b16 %v3655
    %v4306 = vunpack.c.l.b16 %v3656
    %v4307 = vunpack.c.h.b16 %v3656
    %v4308 = vunpack.c.l.b16 %v3657
    %v4309 = vunpack.c.l.b16 %v3658
    %v4310 = vunpack.c.h.b16 %v3658
    %v4311 = vunpack.c.l.b16 %v3659
    %v4312 = vunpack.c.h.b16 %v3659
    %v4313 = vunpack.c.l.b16 %v3660
    %v4314 = vunpack.c.h.b16 %v3660
    %v4315 = vunpack.c.l.b16 %v3661
    %v4316 = vunpack.c.l.b16 %v3662
    %v4317 = vunpack.c.h.b16 %v3662
    %v4318 = vunpack.c.l.b16 %v3663
    %v4319 = vunpack.c.h.b16 %v3663
    %v4320 = vunpack.c.l.b16 %v3664
    %v4321 = vunpack.c.h.b16 %v3664
    %v4322 = vunpack.c.l.b16 %v3665
    %v4323 = vunpack.c.l.b16 %v3666
    %v4324 = vunpack.c.h.b16 %v3666
    %v4325 = vunpack.c.l.b16 %v3667
    %v4326 = vunpack.c.h.b16 %v3667
    %v4327 = vunpack.c.l.b16 %v3668
    %v4328 = vunpack.c.h.b16 %v3668
    %v4329 = vunpack.c.l.b16 %v3669
    %v4330 = vunpack.c.l.b16 %v3670
    %v4331 = vunpack.c.h.b16 %v3670
    %v4332 = vunpack.c.l.b16 %v3671
    %v4333 = vunpack.c.h.b16 %v3671
    %v4334 = vunpack.c.l.b16 %v3672
    %v4335 = vunpack.c.h.b16 %v3672
    %v4336 = vunpack.c.l.b16 %v3673
    %v4337 = vunpack.c.l.b16 %v3674
    %v4338 = vunpack.c.h.b16 %v3674
    %v4339 = vunpack.c.l.b16 %v3675
    %v4340 = vunpack.c.h.b16 %v3675
    %v4341 = vunpack.c.l.b16 %v3676
    %v4342 = vunpack.c.h.b16 %v3676
    %v4343 = vunpack.c.l.b16 %v3677
    %v4344 = vunpack.c.l.b16 %v3678
    %v4345 = vunpack.c.h.b16 %v3678
    %v4346 = vunpack.c.l.b16 %v3679
    %v4347 = vunpack.c.h.b16 %v3679
    %v4348 = vunpack.c.l.b16 %v3680
    %v4349 = vunpack.c.h.b16 %v3680
    %v4350 = vunpack.c.l.b16 %v3681
    %v4351 = vunpack.c.l.b16 %v3682
    %v4352 = vunpack.c.h.b16 %v3682
    %v4353 = vunpack.c.l.b16 %v3683
    %v4354 = vunpack.c.h.b16 %v3683
    %v4355 = vunpack.c.l.b16 %v3684
    %v4356 = vunpack.c.h.b16 %v3684
    %v4357 = vunpack.c.l.b16 %v3685
    %v4358 = vunpack.c.l.b16 %v3686
    %v4359 = vunpack.c.h.b16 %v3686
    %v4360 = vunpack.c.l.b16 %v3687
    %v4361 = vunpack.c.h.b16 %v3687
    %v4362 = vunpack.c.l.b16 %v3688
    %v4363 = vunpack.c.h.b16 %v3688
    %v4364 = vunpack.c.l.b16 %v3689
    %v4365 = vunpack.c.l.b16 %v3690
    %v4366 = vunpack.c.h.b16 %v3690
    %v4367 = vunpack.c.l.b16 %v3691
    %v4368 = vunpack.c.h.b16 %v3691
    %v4369 = vunpack.c.l.b16 %v3692
    %v4370 = vunpack.c.h.b16 %v3692
    %v4371 = vunpack.c.l.b16 %v3693
    %v4372 = vunpack.c.l.b16 %v3694
    %v4373 = vunpack.c.h.b16 %v3694
    %v4374 = vunpack.c.l.b16 %v3695
    %v4375 = vunpack.c.h.b16 %v3695
    %v4376 = vunpack.c.l.b16 %v3696
    %v4377 = vunpack.c.h.b16 %v3696
    %v4378 = vunpack.c.l.b16 %v3697
    %v4379 = vunpack.c.l.b16 %v3698
    %v4380 = vunpack.c.h.b16 %v3698
    %v4381 = vunpack.c.l.b16 %v3699
    %v4382 = vunpack.c.h.b16 %v3699
    %v4383 = vunpack.c.l.b16 %v3700
    %v4384 = vunpack.c.h.b16 %v3700
    %v4385 = vunpack.c.l.b16 %v3701
    %v4386 = vunpack.c.l.b16 %v3702
    %v4387 = vunpack.c.h.b16 %v3702
    %v4388 = vunpack.c.l.b16 %v3703
    %v4389 = vunpack.c.h.b16 %v3703
    %v4390 = vunpack.c.l.b16 %v3704
    %v4391 = vunpack.c.h.b16 %v3704
    %v4392 = vunpack.c.l.b16 %v3705
    %v4393 = vunpack.c.l.b16 %v3706
    %v4394 = vunpack.c.h.b16 %v3706
    %v4395 = vunpack.c.l.b16 %v3707
    %v4396 = vunpack.c.h.b16 %v3707
    %v4397 = vunpack.c.l.b16 %v3708
    %v4398 = vunpack.c.h.b16 %v3708
    %v4399 = vunpack.c.l.b16 %v3709
    %v4400 = vunpack.c.l.b16 %v3710
    %v4401 = vunpack.c.h.b16 %v3710
    %v4402 = vunpack.c.l.b16 %v3711
    %v4403 = vunpack.c.h.b16 %v3711
    %v4404 = vunpack.c.l.b16 %v3712
    %v4405 = vunpack.c.h.b16 %v3712
    %v4406 = vunpack.c.l.b16 %v3713
    %v4407 = vunpack.c.l.b16 %v3714
    %v4408 = vunpack.c.h.b16 %v3714
    %v4409 = vunpack.c.l.b16 %v3715
    %v4410 = vunpack.c.h.b16 %v3715
    %v4411 = vunpack.c.l.b16 %v3716
    %v4412 = vunpack.c.h.b16 %v3716
    %v4413 = vunpack.c.l.b16 %v3717
    %v4414 = vunpack.c.l.b16 %v3718
    %v4415 = vunpack.c.h.b16 %v3718
    %v4416 = vunpack.c.l.b16 %v3719
    %v4417 = vunpack.c.h.b16 %v3719
    %v4418 = vunpack.c.l.b16 %v3720
    %v4419 = vunpack.c.h.b16 %v3720
    %v4420 = vunpack.c.l.b16 %v3721
    %v4421 = vunpack.c.l.b16 %v3722
    %v4422 = vunpack.c.h.b16 %v3722
    %v4423 = vunpack.c.l.b16 %v3723
    %v4424 = vunpack.c.h.b16 %v3723
    %v4425 = vunpack.c.l.b16 %v3724
    %v4426 = vunpack.c.h.b16 %v3724
    %v4427 = vunpack.c.l.b16 %v3725
    %v4428 = vunpack.c.l.b16 %v3726
    %v4429 = vunpack.c.h.b16 %v3726
    %v4430 = vunpack.c.l.b16 %v3727
    %v4431 = vunpack.c.h.b16 %v3727
    %v4432 = vunpack.c.l.b16 %v3728
    %v4433 = vunpack.c.h.b16 %v3728
    %v4434 = vunpack.c.l.b16 %v3729
    %v4435 = vunpack.c.l.b16 %v3730
    %v4436 = vunpack.c.h.b16 %v3730
    %v4437 = vunpack.c.l.b16 %v3731
    %v4438 = vunpack.c.h.b16 %v3731
    %v4439 = vunpack.c.l.b16 %v3732
    %v4440 = vunpack.c.h.b16 %v3732
    %v4441 = vunpack.c.l.b16 %v3733
    %v4442 = vunpack.c.l.b16 %v3734
    %v4443 = vunpack.c.h.b16 %v3734
    %v4444 = vunpack.c.l.b16 %v3735
    %v4445 = vunpack.c.h.b16 %v3735
    %v4446 = vunpack.c.l.b16 %v3736
    %v4447 = vunpack.c.h.b16 %v3736
    %v4448 = vunpack.c.l.b16 %v3737
    %v4449 = vunpack.c.l.b16 %v3738
    %v4450 = vunpack.c.h.b16 %v3738
    %v4451 = vunpack.c.l.b16 %v3739
    %v4452 = vunpack.c.h.b16 %v3739
    %v4453 = vunpack.c.l.b16 %v3740
    %v4454 = vunpack.c.h.b16 %v3740
    %v4455 = vunpack.c.l.b16 %v3741
    %v4456 = vunpack.c.l.b16 %v3742
    %v4457 = vunpack.c.h.b16 %v3742
    %v4458 = vunpack.c.l.b16 %v3743
    %v4459 = vunpack.c.h.b16 %v3743
    %v4460 = vunpack.c.l.b16 %v3744
    %v4461 = vunpack.c.h.b16 %v3744
    %v4462 = vunpack.c.l.b16 %v3745
    %v4463 = vunpack.c.l.b16 %v3746
    %v4464 = vunpack.c.h.b16 %v3746
    %v4465 = vunpack.c.l.b16 %v3747
    %v4466 = vunpack.c.h.b16 %v3747
    %v4467 = vunpack.c.l.b16 %v3748
    %v4468 = vunpack.c.h.b16 %v3748
    %v4469 = vunpack.c.l.b16 %v3749
    %v4470 = vunpack.c.l.b16 %v3750
    %v4471 = vunpack.c.h.b16 %v3750
    %v4472 = vunpack.c.l.b16 %v3751
    %v4473 = vunpack.c.h.b16 %v3751
    %v4474 = vunpack.c.l.b16 %v3752
    %v4475 = vunpack.c.h.b16 %v3752
    %v4476 = vunpack.c.l.b16 %v3753
    %v4477 = vunpack.c.l.b16 %v3754
    %v4478 = vunpack.c.h.b16 %v3754
    %v4479 = vunpack.c.l.b16 %v3755
    %v4480 = vunpack.c.h.b16 %v3755
    %v4481 = vunpack.c.l.b16 %v3756
    %v4482 = vunpack.c.h.b16 %v3756
    %v4483 = vunpack.c.l.b16 %v3757
    %v4484 = vunpack.c.l.b16 %v3758
    %v4485 = vunpack.c.h.b16 %v3758
    %v4486 = vunpack.c.l.b16 %v3759
    %v4487 = vunpack.c.h.b16 %v3759
    %v4488 = vunpack.c.l.b16 %v3760
    %v4489 = vunpack.c.h.b16 %v3760
    %v4490 = vunpack.c.l.b16 %v3761
    %v4491 = vunpack.c.l.b16 %v3762
    %v4492 = vunpack.c.h.b16 %v3762
    %v4493 = vunpack.c.l.b16 %v3763
    %v4494 = vunpack.c.h.b16 %v3763
    %v4495 = vunpack.c.l.b16 %v3764
    %v4496 = vunpack.c.h.b16 %v3764
    %v4497 = vunpack.c.l.b16 %v3765
    %v4498 = vunpack.c.l.b16 %v3766
    %v4499 = vunpack.c.h.b16 %v3766
    %v4500 = vunpack.c.l.b16 %v3767
    %v4501 = vunpack.c.h.b16 %v3767
    %v4502 = vunpack.c.l.b16 %v3768
    %v4503 = vunpack.c.h.b16 %v3768
    %v4504 = vunpack.c.l.b16 %v3769
    %v4505 = vunpack.c.l.b16 %v3770
    %v4506 = vunpack.c.h.b16 %v3770
    %v4507 = vunpack.c.l.b16 %v3771
    %v4508 = vunpack.c.h.b16 %v3771
    %v4509 = vunpack.c.l.b16 %v3772
    %v4510 = vunpack.c.h.b16 %v3772
    %v4511 = vunpack.c.l.b16 %v3773
    %v4512 = vunpack.c.l.b16 %v3774
    %v4513 = vunpack.c.h.b16 %v3774
    %v4514 = vunpack.c.l.b16 %v3775
    %v4515 = vunpack.c.h.b16 %v3775
    %v4516 = vunpack.c.l.b16 %v3776
    %v4517 = vunpack.c.h.b16 %v3776
    %v4518 = vunpack.c.l.b16 %v3777
    %v4519 = vpack.c.b16 %v4078, %v4071
    %v4520 = vpack.c.b16 %v4079, %v4072
    %v4521 = vpack.c.b16 %v4080, %v4073
    %v4522 = vpack.c.b16 %v4081, %v4074
    %v4523 = vpack.c.b16 %v4082, %v4075
    %v4524 = vpack.c.b16 %v4083, %v4076
    %v4525 = vpack.c.b16 %v4084, %v4077
    %v4526 = vpack.c.b16 %v4092, %v4085
    %v4527 = vpack.c.b16 %v4093, %v4086
    %v4528 = vpack.c.b16 %v4094, %v4087
    %v4529 = vpack.c.b16 %v4095, %v4088
    %v4530 = vpack.c.b16 %v4096, %v4089
    %v4531 = vpack.c.b16 %v4097, %v4090
    %v4532 = vpack.c.b16 %v4098, %v4091
    %v4533 = vpack.c.b16 %v4106, %v4099
    %v4534 = vpack.c.b16 %v4107, %v4100
    %v4535 = vpack.c.b16 %v4108, %v4101
    %v4536 = vpack.c.b16 %v4109, %v4102
    %v4537 = vpack.c.b16 %v4110, %v4103
    %v4538 = vpack.c.b16 %v4111, %v4104
    %v4539 = vpack.c.b16 %v4112, %v4105
    %v4540 = vpack.c.b16 %v4120, %v4113
    %v4541 = vpack.c.b16 %v4121, %v4114
    %v4542 = vpack.c.b16 %v4122, %v4115
    %v4543 = vpack.c.b16 %v4123, %v4116
    %v4544 = vpack.c.b16 %v4124, %v4117
    %v4545 = vpack.c.b16 %v4125, %v4118
    %v4546 = vpack.c.b16 %v4126, %v4119
    %v4547 = vpack.c.b16 %v4134, %v4127
    %v4548 = vpack.c.b16 %v4135, %v4128
    %v4549 = vpack.c.b16 %v4136, %v4129
    %v4550 = vpack.c.b16 %v4137, %v4130
    %v4551 = vpack.c.b16 %v4138, %v4131
    %v4552 = vpack.c.b16 %v4139, %v4132
    %v4553 = vpack.c.b16 %v4140, %v4133
    %v4554 = vpack.c.b16 %v4148, %v4141
    %v4555 = vpack.c.b16 %v4149, %v4142
    %v4556 = vpack.c.b16 %v4150, %v4143
    %v4557 = vpack.c.b16 %v4151, %v4144
    %v4558 = vpack.c.b16 %v4152, %v4145
    %v4559 = vpack.c.b16 %v4153, %v4146
    %v4560 = vpack.c.b16 %v4154, %v4147
    %v4561 = vpack.c.b16 %v4162, %v4155
    %v4562 = vpack.c.b16 %v4163, %v4156
    %v4563 = vpack.c.b16 %v4164, %v4157
    %v4564 = vpack.c.b16 %v4165, %v4158
    %v4565 = vpack.c.b16 %v4166, %v4159
    %v4566 = vpack.c.b16 %v4167, %v4160
    %v4567 = vpack.c.b16 %v4168, %v4161
    %v4568 = vpack.c.b16 %v4176, %v4169
    %v4569 = vpack.c.b16 %v4177, %v4170
    %v4570 = vpack.c.b16 %v4178, %v4171
    %v4571 = vpack.c.b16 %v4179, %v4172
    %v4572 = vpack.c.b16 %v4180, %v4173
    %v4573 = vpack.c.b16 %v4181, %v4174
    %v4574 = vpack.c.b16 %v4182, %v4175
    %v4575 = vpack.c.b16 %v4190, %v4183
    %v4576 = vpack.c.b16 %v4191, %v4184
    %v4577 = vpack.c.b16 %v4192, %v4185
    %v4578 = vpack.c.b16 %v4193, %v4186
    %v4579 = vpack.c.b16 %v4194, %v4187
    %v4580 = vpack.c.b16 %v4195, %v4188
    %v4581 = vpack.c.b16 %v4196, %v4189
    %v4582 = vpack.c.b16 %v4204, %v4197
    %v4583 = vpack.c.b16 %v4205, %v4198
    %v4584 = vpack.c.b16 %v4206, %v4199
    %v4585 = vpack.c.b16 %v4207, %v4200
    %v4586 = vpack.c.b16 %v4208, %v4201
    %v4587 = vpack.c.b16 %v4209, %v4202
    %v4588 = vpack.c.b16 %v4210, %v4203
    %v4589 = vpack.c.b16 %v4218, %v4211
    %v4590 = vpack.c.b16 %v4219, %v4212
    %v4591 = vpack.c.b16 %v4220, %v4213
    %v4592 = vpack.c.b16 %v4221, %v4214
    %v4593 = vpack.c.b16 %v4222, %v4215
    %v4594 = vpack.c.b16 %v4223, %v4216
    %v4595 = vpack.c.b16 %v4224, %v4217
    %v4596 = vpack.c.b16 %v4232, %v4225
    %v4597 = vpack.c.b16 %v4233, %v4226
    %v4598 = vpack.c.b16 %v4234, %v4227
    %v4599 = vpack.c.b16 %v4235, %v4228
    %v4600 = vpack.c.b16 %v4236, %v4229
    %v4601 = vpack.c.b16 %v4237, %v4230
    %v4602 = vpack.c.b16 %v4238, %v4231
    %v4603 = vpack.c.b16 %v4246, %v4239
    %v4604 = vpack.c.b16 %v4247, %v4240
    %v4605 = vpack.c.b16 %v4248, %v4241
    %v4606 = vpack.c.b16 %v4249, %v4242
    %v4607 = vpack.c.b16 %v4250, %v4243
    %v4608 = vpack.c.b16 %v4251, %v4244
    %v4609 = vpack.c.b16 %v4252, %v4245
    %v4610 = vpack.c.b16 %v4260, %v4253
    %v4611 = vpack.c.b16 %v4261, %v4254
    %v4612 = vpack.c.b16 %v4262, %v4255
    %v4613 = vpack.c.b16 %v4263, %v4256
    %v4614 = vpack.c.b16 %v4264, %v4257
    %v4615 = vpack.c.b16 %v4265, %v4258
    %v4616 = vpack.c.b16 %v4266, %v4259
    %v4617 = vpack.c.b16 %v4274, %v4267
    %v4618 = vpack.c.b16 %v4275, %v4268
    %v4619 = vpack.c.b16 %v4276, %v4269
    %v4620 = vpack.c.b16 %v4277, %v4270
    %v4621 = vpack.c.b16 %v4278, %v4271
    %v4622 = vpack.c.b16 %v4279, %v4272
    %v4623 = vpack.c.b16 %v4280, %v4273
    %v4624 = vpack.c.b16 %v4288, %v4281
    %v4625 = vpack.c.b16 %v4289, %v4282
    %v4626 = vpack.c.b16 %v4290, %v4283
    %v4627 = vpack.c.b16 %v4291, %v4284
    %v4628 = vpack.c.b16 %v4292, %v4285
    %v4629 = vpack.c.b16 %v4293, %v4286
    %v4630 = vpack.c.b16 %v4294, %v4287
    %v4631 = vpack.c.b16 %v4302, %v4295
    %v4632 = vpack.c.b16 %v4303, %v4296
    %v4633 = vpack.c.b16 %v4304, %v4297
    %v4634 = vpack.c.b16 %v4305, %v4298
    %v4635 = vpack.c.b16 %v4306, %v4299
    %v4636 = vpack.c.b16 %v4307, %v4300
    %v4637 = vpack.c.b16 %v4308, %v4301
    %v4638 = vpack.c.b16 %v4316, %v4309
    %v4639 = vpack.c.b16 %v4317, %v4310
    %v4640 = vpack.c.b16 %v4318, %v4311
    %v4641 = vpack.c.b16 %v4319, %v4312
    %v4642 = vpack.c.b16 %v4320, %v4313
    %v4643 = vpack.c.b16 %v4321, %v4314
    %v4644 = vpack.c.b16 %v4322, %v4315
    %v4645 = vpack.c.b16 %v4330, %v4323
    %v4646 = vpack.c.b16 %v4331, %v4324
    %v4647 = vpack.c.b16 %v4332, %v4325
    %v4648 = vpack.c.b16 %v4333, %v4326
    %v4649 = vpack.c.b16 %v4334, %v4327
    %v4650 = vpack.c.b16 %v4335, %v4328
    %v4651 = vpack.c.b16 %v4336, %v4329
    %v4652 = vpack.c.b16 %v4344, %v4337
    %v4653 = vpack.c.b16 %v4345, %v4338
    %v4654 = vpack.c.b16 %v4346, %v4339
    %v4655 = vpack.c.b16 %v4347, %v4340
    %v4656 = vpack.c.b16 %v4348, %v4341
    %v4657 = vpack.c.b16 %v4349, %v4342
    %v4658 = vpack.c.b16 %v4350, %v4343
    %v4659 = vpack.c.b16 %v4358, %v4351
    %v4660 = vpack.c.b16 %v4359, %v4352
    %v4661 = vpack.c.b16 %v4360, %v4353
    %v4662 = vpack.c.b16 %v4361, %v4354
    %v4663 = vpack.c.b16 %v4362, %v4355
    %v4664 = vpack.c.b16 %v4363, %v4356
    %v4665 = vpack.c.b16 %v4364, %v4357
    %v4666 = vpack.c.b16 %v4372, %v4365
    %v4667 = vpack.c.b16 %v4373, %v4366
    %v4668 = vpack.c.b16 %v4374, %v4367
    %v4669 = vpack.c.b16 %v4375, %v4368
    %v4670 = vpack.c.b16 %v4376, %v4369
    %v4671 = vpack.c.b16 %v4377, %v4370
    %v4672 = vpack.c.b16 %v4378, %v4371
    %v4673 = vpack.c.b16 %v4386, %v4379
    %v4674 = vpack.c.b16 %v4387, %v4380
    %v4675 = vpack.c.b16 %v4388, %v4381
    %v4676 = vpack.c.b16 %v4389, %v4382
    %v4677 = vpack.c.b16 %v4390, %v4383
    %v4678 = vpack.c.b16 %v4391, %v4384
    %v4679 = vpack.c.b16 %v4392, %v4385
    %v4680 = vpack.c.b16 %v4400, %v4393
    %v4681 = vpack.c.b16 %v4401, %v4394
    %v4682 = vpack.c.b16 %v4402, %v4395
    %v4683 = vpack.c.b16 %v4403, %v4396
    %v4684 = vpack.c.b16 %v4404, %v4397
    %v4685 = vpack.c.b16 %v4405, %v4398
    %v4686 = vpack.c.b16 %v4406, %v4399
    %v4687 = vpack.c.b16 %v4414, %v4407
    %v4688 = vpack.c.b16 %v4415, %v4408
    %v4689 = vpack.c.b16 %v4416, %v4409
    %v4690 = vpack.c.b16 %v4417, %v4410
    %v4691 = vpack.c.b16 %v4418, %v4411
    %v4692 = vpack.c.b16 %v4419, %v4412
    %v4693 = vpack.c.b16 %v4420, %v4413
    %v4694 = vpack.c.b16 %v4428, %v4421
    %v4695 = vpack.c.b16 %v4429, %v4422
    %v4696 = vpack.c.b16 %v4430, %v4423
    %v4697 = vpack.c.b16 %v4431, %v4424
    %v4698 = vpack.c.b16 %v4432, %v4425
    %v4699 = vpack.c.b16 %v4433, %v4426
    %v4700 = vpack.c.b16 %v4434, %v4427
    %v4701 = vpack.c.b16 %v4442, %v4435
    %v4702 = vpack.c.b16 %v4443, %v4436
    %v4703 = vpack.c.b16 %v4444, %v4437
    %v4704 = vpack.c.b16 %v4445, %v4438
    %v4705 = vpack.c.b16 %v4446, %v4439
    %v4706 = vpack.c.b16 %v4447, %v4440
    %v4707 = vpack.c.b16 %v4448, %v4441
    %v4708 = vpack.c.b16 %v4456, %v4449
    %v4709 = vpack.c.b16 %v4457, %v4450
    %v4710 = vpack.c.b16 %v4458, %v4451
    %v4711 = vpack.c.b16 %v4459, %v4452
    %v4712 = vpack.c.b16 %v4460, %v4453
    %v4713 = vpack.c.b16 %v4461, %v4454
    %v4714 = vpack.c.b16 %v4462, %v4455
    %v4715 = vpack.c.b16 %v4470, %v4463
    %v4716 = vpack.c.b16 %v4471, %v4464
    %v4717 = vpack.c.b16 %v4472, %v4465
    %v4718 = vpack.c.b16 %v4473, %v4466
    %v4719 = vpack.c.b16 %v4474, %v4467
    %v4720 = vpack.c.b16 %v4475, %v4468
    %v4721 = vpack.c.b16 %v4476, %v4469
    %v4722 = vpack.c.b16 %v4484, %v4477
    %v4723 = vpack.c.b16 %v4485, %v4478
    %v4724 = vpack.c.b16 %v4486, %v4479
    %v4725 = vpack.c.b16 %v4487, %v4480
    %v4726 = vpack.c.b16 %v4488, %v4481
    %v4727 = vpack.c.b16 %v4489, %v4482
    %v4728 = vpack.c.b16 %v4490, %v4483
    %v4729 = vpack.c.b16 %v4498, %v4491
    %v4730 = vpack.c.b16 %v4499, %v4492
    %v4731 = vpack.c.b16 %v4500, %v4493
    %v4732 = vpack.c.b16 %v4501, %v4494
    %v4733 = vpack.c.b16 %v4502, %v4495
    %v4734 = vpack.c.b16 %v4503, %v4496
    %v4735 = vpack.c.b16 %v4504, %v4497
    %v4736 = vpack.c.b16 %v4512, %v4505
    %v4737 = vpack.c.b16 %v4513, %v4506
    %v4738 = vpack.c.b16 %v4514, %v4507
    %v4739 = vpack.c.b16 %v4515, %v4508
    %v4740 = vpack.c.b16 %v4516, %v4509
    %v4741 = vpack.c.b16 %v4517, %v4510
    %v4742 = vpack.c.b16 %v4518, %v4511
    %4967 = vmatprep.subr.bf16.mxu0 %v4569
    %4968 = vmatpush1.bf16.msra.mxu0 %v4568
    %4969 = vmatprep.subr.bf16.mxu0 %v4562
    %4970 = vmatpush1.bf16.msra.mxu0 %v4561
    %4971 = vmatprep.subr.bf16.mxu0 %v4555
    %4972 = vmatpush1.bf16.msra.mxu0 %v4554
    %4973 = vmatprep.subr.bf16.mxu0 %v4548
    %4974 = vmatpush1.bf16.msra.mxu0 %v4547
    %4975 = vmatprep.subr.bf16.mxu0 %v4541
    %4976 = vmatpush1.bf16.msra.mxu0 %v4540
    %4977 = vmatprep.subr.bf16.mxu0 %v4534
    %4978 = vmatpush1.bf16.msra.mxu0 %v4533
    %4979 = vmatprep.subr.bf16.mxu0 %v4527
    %4980 = vmatpush1.bf16.msra.mxu0 %v4526
    %4981 = vmatprep.subr.bf16.mxu0 %v4520
    %4982 = vmatpush1.bf16.msra.mxu0 %v4519
    %4983 = vmatprep.subr.bf16.mxu0 %v4625
    %4984 = vmatpush2.bf16.msra.mxu0 %v4624
    %4985 = vmatprep.subr.bf16.mxu0 %v4618
    %4986 = vmatpush2.bf16.msra.mxu0 %v4617
    %4987 = vmatprep.subr.bf16.mxu0 %v4611
    %4988 = vmatpush2.bf16.msra.mxu0 %v4610
    %4989 = vmatprep.subr.bf16.mxu0 %v4604
    %4990 = vmatpush2.bf16.msra.mxu0 %v4603
    %4991 = vmatprep.subr.bf16.mxu0 %v4597
    %4992 = vmatpush2.bf16.msra.mxu0 %v4596
    %4993 = vmatprep.subr.bf16.mxu0 %v4590
    %4994 = vmatpush2.bf16.msra.mxu0 %v4589
    %4995 = vmatprep.subr.bf16.mxu0 %v4583
    %4996 = vmatpush2.bf16.msra.mxu0 %v4582
    %4997 = vmatprep.subr.bf16.mxu0 %v4576
    %4998 = vmatpush2.bf16.msra.mxu0 %v4575
    %4999 = vmatprep.mubr.bf16.mxu0 %v3519
    %5000 = vmatmul.mubr.bf16.gmra.mxu0 %v3518
    %v5001 = vpop.f32.mrf.mxu0
    %v5002 = vadd.f32 %v3783, %v5001
    %v5003 = vpop.f32.mrf.mxu0
    %v5004 = vadd.f32 %v3787, %v5003
    %v5005 = vpop.f32.mrf.mxu0
    %v5006 = vpop.f32.mrf.mxu0
    %5007 = vdwg.mxu0
    %5008 = vmatprep.subr.bf16.mxu0 %v4681
    %5009 = vmatpush1.bf16.msra.mxu0 %v4680
    %5010 = vmatprep.subr.bf16.mxu0 %v4674
    %5011 = vmatpush1.bf16.msra.mxu0 %v4673
    %5012 = vmatprep.subr.bf16.mxu0 %v4667
    %5013 = vmatpush1.bf16.msra.mxu0 %v4666
    %5014 = vmatprep.subr.bf16.mxu0 %v4660
    %5015 = vmatpush1.bf16.msra.mxu0 %v4659
    %5016 = vmatprep.subr.bf16.mxu0 %v4653
    %5017 = vmatpush1.bf16.msra.mxu0 %v4652
    %5018 = vmatprep.subr.bf16.mxu0 %v4646
    %5019 = vmatpush1.bf16.msra.mxu0 %v4645
    %5020 = vmatprep.subr.bf16.mxu0 %v4639
    %5021 = vmatpush1.bf16.msra.mxu0 %v4638
    %5022 = vmatprep.subr.bf16.mxu0 %v4632
    %5023 = vmatpush1.bf16.msra.mxu0 %v4631
    %5024 = vmatprep.subr.bf16.mxu0 %v4737
    %5025 = vmatpush2.bf16.msra.mxu0 %v4736
    %5026 = vmatprep.subr.bf16.mxu0 %v4730
    %5027 = vmatpush2.bf16.msra.mxu0 %v4729
    %5028 = vmatprep.subr.bf16.mxu0 %v4723
    %5029 = vmatpush2.bf16.msra.mxu0 %v4722
    %5030 = vmatprep.subr.bf16.mxu0 %v4716
    %5031 = vmatpush2.bf16.msra.mxu0 %v4715
    %5032 = vmatprep.subr.bf16.mxu0 %v4709
    %5033 = vmatpush2.bf16.msra.mxu0 %v4708
    %5034 = vmatprep.subr.bf16.mxu0 %v4702
    %5035 = vmatpush2.bf16.msra.mxu0 %v4701
    %5036 = vmatprep.subr.bf16.mxu0 %v4695
    %5037 = vmatpush2.bf16.msra.mxu0 %v4694
    %5038 = vmatprep.subr.bf16.mxu0 %v4688
    %5039 = vmatpush2.bf16.msra.mxu0 %v4687
    %5040 = vmatprep.mubr.bf16.mxu0 %v3521
    %5041 = vmatmul.mubr.bf16.gmra.mxu0 %v3520
    %v5042 = vpop.f32.mrf.mxu0
    %v5043 = vadd.f32 %v5002, %v5042
    %v5044 = vpop.f32.mrf.mxu0
    %v5045 = vadd.f32 %v5004, %v5044
    %v5046 = vpop.f32.mrf.mxu0
    %v5047 = vpop.f32.mrf.mxu0
    %5048 = vdwg.mxu0
    %5049 = vmatprep.subr.bf16.mxu0 %v4571
    %5050 = vmatpush1.bf16.msra.mxu0 %v4570
    %5051 = vmatprep.subr.bf16.mxu0 %v4564
    %5052 = vmatpush1.bf16.msra.mxu0 %v4563
    %5053 = vmatprep.subr.bf16.mxu0 %v4557
    %5054 = vmatpush1.bf16.msra.mxu0 %v4556
    %5055 = vmatprep.subr.bf16.mxu0 %v4550
    %5056 = vmatpush1.bf16.msra.mxu0 %v4549
    %5057 = vmatprep.subr.bf16.mxu0 %v4543
    %5058 = vmatpush1.bf16.msra.mxu0 %v4542
    %5059 = vmatprep.subr.bf16.mxu0 %v4536
    %5060 = vmatpush1.bf16.msra.mxu0 %v4535
    %5061 = vmatprep.subr.bf16.mxu0 %v4529
    %5062 = vmatpush1.bf16.msra.mxu0 %v4528
    %5063 = vmatprep.subr.bf16.mxu0 %v4522
    %5064 = vmatpush1.bf16.msra.mxu0 %v4521
    %5065 = vmatprep.subr.bf16.mxu0 %v4627
    %5066 = vmatpush2.bf16.msra.mxu0 %v4626
    %5067 = vmatprep.subr.bf16.mxu0 %v4620
    %5068 = vmatpush2.bf16.msra.mxu0 %v4619
    %5069 = vmatprep.subr.bf16.mxu0 %v4613
    %5070 = vmatpush2.bf16.msra.mxu0 %v4612
    %5071 = vmatprep.subr.bf16.mxu0 %v4606
    %5072 = vmatpush2.bf16.msra.mxu0 %v4605
    %5073 = vmatprep.subr.bf16.mxu0 %v4599
    %5074 = vmatpush2.bf16.msra.mxu0 %v4598
    %5075 = vmatprep.subr.bf16.mxu0 %v4592
    %5076 = vmatpush2.bf16.msra.mxu0 %v4591
    %5077 = vmatprep.subr.bf16.mxu0 %v4585
    %5078 = vmatpush2.bf16.msra.mxu0 %v4584
    %5079 = vmatprep.subr.bf16.mxu0 %v4578
    %5080 = vmatpush2.bf16.msra.mxu0 %v4577
    %5081 = vmatprep.mubr.bf16.mxu0 %v3519
    %5082 = vmatmul.mubr.bf16.gmra.mxu0 %v3518
    %v5083 = vpop.f32.mrf.mxu0
    %v5084 = vadd.f32 %v3791, %v5083
    %v5085 = vpop.f32.mrf.mxu0
    %v5086 = vadd.f32 %v3795, %v5085
    %v5087 = vpop.f32.mrf.mxu0
    %v5088 = vpop.f32.mrf.mxu0
    %5089 = vdwg.mxu0
    %5090 = vmatprep.subr.bf16.mxu0 %v4683
    %5091 = vmatpush1.bf16.msra.mxu0 %v4682
    %5092 = vmatprep.subr.bf16.mxu0 %v4676
    %5093 = vmatpush1.bf16.msra.mxu0 %v4675
    %5094 = vmatprep.subr.bf16.mxu0 %v4669
    %5095 = vmatpush1.bf16.msra.mxu0 %v4668
    %5096 = vmatprep.subr.bf16.mxu0 %v4662
    %5097 = vmatpush1.bf16.msra.mxu0 %v4661
    %5098 = vmatprep.subr.bf16.mxu0 %v4655
    %5099 = vmatpush1.bf16.msra.mxu0 %v4654
    %5100 = vmatprep.subr.bf16.mxu0 %v4648
    %5101 = vmatpush1.bf16.msra.mxu0 %v4647
    %5102 = vmatprep.subr.bf16.mxu0 %v4641
    %5103 = vmatpush1.bf16.msra.mxu0 %v4640
    %5104 = vmatprep.subr.bf16.mxu0 %v4634
    %5105 = vmatpush1.bf16.msra.mxu0 %v4633
    %5106 = vmatprep.subr.bf16.mxu0 %v4739
    %5107 = vmatpush2.bf16.msra.mxu0 %v4738
    %5108 = vmatprep.subr.bf16.mxu0 %v4732
    %5109 = vmatpush2.bf16.msra.mxu0 %v4731
    %5110 = vmatprep.subr.bf16.mxu0 %v4725
    %5111 = vmatpush2.bf16.msra.mxu0 %v4724
    %5112 = vmatprep.subr.bf16.mxu0 %v4718
    %5113 = vmatpush2.bf16.msra.mxu0 %v4717
    %5114 = vmatprep.subr.bf16.mxu0 %v4711
    %5115 = vmatpush2.bf16.msra.mxu0 %v4710
    %5116 = vmatprep.subr.bf16.mxu0 %v4704
    %5117 = vmatpush2.bf16.msra.mxu0 %v4703
    %5118 = vmatprep.subr.bf16.mxu0 %v4697
    %5119 = vmatpush2.bf16.msra.mxu0 %v4696
    %5120 = vmatprep.subr.bf16.mxu0 %v4690
    %5121 = vmatpush2.bf16.msra.mxu0 %v4689
    %5122 = vmatprep.mubr.bf16.mxu0 %v3521
    %5123 = vmatmul.mubr.bf16.gmra.mxu0 %v3520
    %v5124 = vpop.f32.mrf.mxu0
    %v5125 = vadd.f32 %v5084, %v5124
    %v5126 = vpop.f32.mrf.mxu0
    %v5127 = vadd.f32 %v5086, %v5126
    %v5128 = vpop.f32.mrf.mxu0
    %v5129 = vpop.f32.mrf.mxu0
    %5130 = vdwg.mxu0
    %5131 = vmatprep.subr.bf16.mxu0 %v4573
    %5132 = vmatpush1.bf16.msra.mxu0 %v4572
    %5133 = vmatprep.subr.bf16.mxu0 %v4566
    %5134 = vmatpush1.bf16.msra.mxu0 %v4565
    %5135 = vmatprep.subr.bf16.mxu0 %v4559
    %5136 = vmatpush1.bf16.msra.mxu0 %v4558
    %5137 = vmatprep.subr.bf16.mxu0 %v4552
    %5138 = vmatpush1.bf16.msra.mxu0 %v4551
    %5139 = vmatprep.subr.bf16.mxu0 %v4545
    %5140 = vmatpush1.bf16.msra.mxu0 %v4544
    %5141 = vmatprep.subr.bf16.mxu0 %v4538
    %5142 = vmatpush1.bf16.msra.mxu0 %v4537
    %5143 = vmatprep.subr.bf16.mxu0 %v4531
    %5144 = vmatpush1.bf16.msra.mxu0 %v4530
    %5145 = vmatprep.subr.bf16.mxu0 %v4524
    %5146 = vmatpush1.bf16.msra.mxu0 %v4523
    %5147 = vmatprep.subr.bf16.mxu0 %v4629
    %5148 = vmatpush2.bf16.msra.mxu0 %v4628
    %5149 = vmatprep.subr.bf16.mxu0 %v4622
    %5150 = vmatpush2.bf16.msra.mxu0 %v4621
    %5151 = vmatprep.subr.bf16.mxu0 %v4615
    %5152 = vmatpush2.bf16.msra.mxu0 %v4614
    %5153 = vmatprep.subr.bf16.mxu0 %v4608
    %5154 = vmatpush2.bf16.msra.mxu0 %v4607
    %5155 = vmatprep.subr.bf16.mxu0 %v4601
    %5156 = vmatpush2.bf16.msra.mxu0 %v4600
    %5157 = vmatprep.subr.bf16.mxu0 %v4594
    %5158 = vmatpush2.bf16.msra.mxu0 %v4593
    %5159 = vmatprep.subr.bf16.mxu0 %v4587
    %5160 = vmatpush2.bf16.msra.mxu0 %v4586
    %5161 = vmatprep.subr.bf16.mxu0 %v4580
    %5162 = vmatpush2.bf16.msra.mxu0 %v4579
    %5163 = vmatprep.mubr.bf16.mxu0 %v3519
    %5164 = vmatmul.mubr.bf16.gmra.mxu0 %v3518
    %v5165 = vpop.f32.mrf.mxu0
    %v5166 = vadd.f32 %v3799, %v5165
    %v5167 = vpop.f32.mrf.mxu0
    %v5168 = vadd.f32 %v3803, %v5167
    %v5169 = vpop.f32.mrf.mxu0
    %v5170 = vpop.f32.mrf.mxu0
    %5171 = vdwg.mxu0
    %5172 = vmatprep.subr.bf16.mxu0 %v4685
    %5173 = vmatpush1.bf16.msra.mxu0 %v4684
    %5174 = vmatprep.subr.bf16.mxu0 %v4678
    %5175 = vmatpush1.bf16.msra.mxu0 %v4677
    %5176 = vmatprep.subr.bf16.mxu0 %v4671
    %5177 = vmatpush1.bf16.msra.mxu0 %v4670
    %5178 = vmatprep.subr.bf16.mxu0 %v4664
    %5179 = vmatpush1.bf16.msra.mxu0 %v4663
    %5180 = vmatprep.subr.bf16.mxu0 %v4657
    %5181 = vmatpush1.bf16.msra.mxu0 %v4656
    %5182 = vmatprep.subr.bf16.mxu0 %v4650
    %5183 = vmatpush1.bf16.msra.mxu0 %v4649
    %5184 = vmatprep.subr.bf16.mxu0 %v4643
    %5185 = vmatpush1.bf16.msra.mxu0 %v4642
    %5186 = vmatprep.subr.bf16.mxu0 %v4636
    %5187 = vmatpush1.bf16.msra.mxu0 %v4635
    %5188 = vmatprep.subr.bf16.mxu0 %v4741
    %5189 = vmatpush2.bf16.msra.mxu0 %v4740
    %5190 = vmatprep.subr.bf16.mxu0 %v4734
    %5191 = vmatpush2.bf16.msra.mxu0 %v4733
    %5192 = vmatprep.subr.bf16.mxu0 %v4727
    %5193 = vmatpush2.bf16.msra.mxu0 %v4726
    %5194 = vmatprep.subr.bf16.mxu0 %v4720
    %5195 = vmatpush2.bf16.msra.mxu0 %v4719
    %5196 = vmatprep.subr.bf16.mxu0 %v4713
    %5197 = vmatpush2.bf16.msra.mxu0 %v4712
    %5198 = vmatprep.subr.bf16.mxu0 %v4706
    %5199 = vmatpush2.bf16.msra.mxu0 %v4705
    %5200 = vmatprep.subr.bf16.mxu0 %v4699
    %5201 = vmatpush2.bf16.msra.mxu0 %v4698
    %5202 = vmatprep.subr.bf16.mxu0 %v4692
    %5203 = vmatpush2.bf16.msra.mxu0 %v4691
    %5204 = vmatprep.mubr.bf16.mxu0 %v3521
    %5205 = vmatmul.mubr.bf16.gmra.mxu0 %v3520
    %v5206 = vpop.f32.mrf.mxu0
    %v5207 = vadd.f32 %v5166, %v5206
    %v5208 = vpop.f32.mrf.mxu0
    %v5209 = vadd.f32 %v5168, %v5208
    %v5210 = vpop.f32.mrf.mxu0
    %v5211 = vpop.f32.mrf.mxu0
    %5212 = vdwg.mxu0
    %5213 = vmatprep.subr.bf16.mxu0 0
    %5214 = vmatpush1.bf16.msra.mxu0 %v4574
    %5215 = vmatprep.subr.bf16.mxu0 0
    %5216 = vmatpush1.bf16.msra.mxu0 %v4567
    %5217 = vmatprep.subr.bf16.mxu0 0
    %5218 = vmatpush1.bf16.msra.mxu0 %v4560
    %5219 = vmatprep.subr.bf16.mxu0 0
    %5220 = vmatpush1.bf16.msra.mxu0 %v4553
    %5221 = vmatprep.subr.bf16.mxu0 0
    %5222 = vmatpush1.bf16.msra.mxu0 %v4546
    %5223 = vmatprep.subr.bf16.mxu0 0
    %5224 = vmatpush1.bf16.msra.mxu0 %v4539
    %5225 = vmatprep.subr.bf16.mxu0 0
    %5226 = vmatpush1.bf16.msra.mxu0 %v4532
    %5227 = vmatprep.subr.bf16.mxu0 0
    %5228 = vmatpush1.bf16.msra.mxu0 %v4525
    %5229 = vmatprep.subr.bf16.mxu0 0
    %5230 = vmatpush2.bf16.msra.mxu0 %v4630
    %5231 = vmatprep.subr.bf16.mxu0 0
    %5232 = vmatpush2.bf16.msra.mxu0 %v4623
    %5233 = vmatprep.subr.bf16.mxu0 0
    %5234 = vmatpush2.bf16.msra.mxu0 %v4616
    %5235 = vmatprep.subr.bf16.mxu0 0
    %5236 = vmatpush2.bf16.msra.mxu0 %v4609
    %5237 = vmatprep.subr.bf16.mxu0 0
    %5238 = vmatpush2.bf16.msra.mxu0 %v4602
    %5239 = vmatprep.subr.bf16.mxu0 0
    %5240 = vmatpush2.bf16.msra.mxu0 %v4595
    %5241 = vmatprep.subr.bf16.mxu0 0
    %5242 = vmatpush2.bf16.msra.mxu0 %v4588
    %5243 = vmatprep.subr.bf16.mxu0 0
    %5244 = vmatpush2.bf16.msra.mxu0 %v4581
    %5245 = vmatprep.mubr.bf16.mxu0 %v3519
    %5246 = vmatmul.mubr.bf16.gmra.mxu0 %v3518
    %v5247 = vpop.f32.mrf.mxu0
    %v5248 = vadd.f32 %v3807, %v5247
    %v5249 = vpop.f32.mrf.mxu0
    %v5250 = vpop.f32.mrf.mxu0
    %v5251 = vpop.f32.mrf.mxu0
    %5252 = vdwg.mxu0
    %5253 = vmatprep.subr.bf16.mxu0 0
    %5254 = vmatpush1.bf16.msra.mxu0 %v4686
    %5255 = vmatprep.subr.bf16.mxu0 0
    %5256 = vmatpush1.bf16.msra.mxu0 %v4679
    %5257 = vmatprep.subr.bf16.mxu0 0
    %5258 = vmatpush1.bf16.msra.mxu0 %v4672
    %5259 = vmatprep.subr.bf16.mxu0 0
    %5260 = vmatpush1.bf16.msra.mxu0 %v4665
    %5261 = vmatprep.subr.bf16.mxu0 0
    %5262 = vmatpush1.bf16.msra.mxu0 %v4658
    %5263 = vmatprep.subr.bf16.mxu0 0
    %5264 = vmatpush1.bf16.msra.mxu0 %v4651
    %5265 = vmatprep.subr.bf16.mxu0 0
    %5266 = vmatpush1.bf16.msra.mxu0 %v4644
    %5267 = vmatprep.subr.bf16.mxu0 0
    %5268 = vmatpush1.bf16.msra.mxu0 %v4637
    %5269 = vmatprep.subr.bf16.mxu0 0
    %5270 = vmatpush2.bf16.msra.mxu0 %v4742
    %5271 = vmatprep.subr.bf16.mxu0 0
    %5272 = vmatpush2.bf16.msra.mxu0 %v4735
    %5273 = vmatprep.subr.bf16.mxu0 0
    %5274 = vmatpush2.bf16.msra.mxu0 %v4728
    %5275 = vmatprep.subr.bf16.mxu0 0
    %5276 = vmatpush2.bf16.msra.mxu0 %v4721
    %5277 = vmatprep.subr.bf16.mxu0 0
    %5278 = vmatpush2.bf16.msra.mxu0 %v4714
    %5279 = vmatprep.subr.bf16.mxu0 0
    %5280 = vmatpush2.bf16.msra.mxu0 %v4707
    %5281 = vmatprep.subr.bf16.mxu0 0
    %5282 = vmatpush2.bf16.msra.mxu0 %v4700
    %5283 = vmatprep.subr.bf16.mxu0 0
    %5284 = vmatpush2.bf16.msra.mxu0 %v4693
    %5285 = vmatprep.mubr.bf16.mxu0 %v3521
    %5286 = vmatmul.mubr.bf16.gmra.mxu0 %v3520
    %v5287 = vpop.f32.mrf.mxu0
    %v5288 = vadd.f32 %v5248, %v5287
    %v5289 = vpop.f32.mrf.mxu0
    %v5290 = vpop.f32.mrf.mxu0
    %v5291 = vpop.f32.mrf.mxu0
    %5292 = vdwg.mxu0
    %v5293 = vmax.f32 %v5043, 0.0
    %v5294 = vmax.f32 %v5045, 0.0
    %v5295 = vmax.f32 %v5125, 0.0
    %v5296 = vmax.f32 %v5127, 0.0
    %v5297 = vmax.f32 %v5207, 0.0
    %v5298 = vmax.f32 %v5209, 0.0
    %v5299 = vmax.f32 %v5288, 0.0
    %5300 = vst [vmem:[#allocation29] sm:$0xff] %v5293
    %5301 = vst [vmem:[#allocation29 + $0x8] sm:$0xff] %v5294
    %5302 = vst [vmem:[#allocation29 + $0x10] sm:$0xff] %v5295
    %5303 = vst [vmem:[#allocation29 + $0x18] sm:$0xff] %v5296
    %5304 = vst [vmem:[#allocation29 + $0x20] sm:$0xff] %v5297
    %5305 = vst [vmem:[#allocation29 + $0x28] sm:$0xff] %v5298
    %5306 = vst [vmem:[#allocation29 + $0x30] sm:$0xff] %v5299
    // Predicated region
    $region158: #{tpu_custom_call.1} parent=1 // pred_check
      _
    $region159: #{tpu_custom_call.1} parent=1 // pred_check_branch
      %5308 = sbr.rel (0) target = $region161
    $region160: #{tpu_custom_call.1} parent=1 // pred_region
      %s5310 = ssub.s32 896, 896
      %5311 = vsyncadd [#allocation4], %s5310
      %s5313 = sshll.u32 [#allocation29], 4
      %s5314 = int_to_ptr.vmem [resolvable:$true] %s5313
      %5316 = dma.vmem_to_hbm [thread:$0]  %s5314, 896, %s22, [#allocation4]
    $region161: #{tpu_custom_call.1} parent=1 // pred_fallthru
      _
    // Predicated region
    $region162: #{tpu_custom_call.1} parent=1 // pred_check
      _
    $region163: #{tpu_custom_call.1} parent=1 // pred_check_branch
      %5318 = sbr.rel (0) target = $region165
    $region164: #{tpu_custom_call.1} parent=1 // pred_region
      %s5320 = ssub.s32 128, 128
      %5321 = vsyncadd [#allocation31], %s5320
      %s5323 = sshll.u32 [#allocation30], 4
      %s5324 = int_to_ptr.vmem [resolvable:$true] %s5323
      %5326 = dma.vmem_to_hbm [thread:$0]  %s5324, 128, %s23, [#allocation31]
    $region165: #{tpu_custom_call.1} parent=1 // pred_fallthru
      _
    // Predicated region
    $region166: #{tpu_custom_call.1} parent=1 // pred_check
      _
    $region167: #{tpu_custom_call.1} parent=1 // pred_check_branch
      %5328 = sbr.rel (0) target = $region169
    $region168: #{tpu_custom_call.1} parent=1 // pred_region
      %5329 = dma.done [#allocation4], 896
    $region169: #{tpu_custom_call.1} parent=1 // pred_fallthru
      _
    // Predicated region
    $region170: #{tpu_custom_call.1} parent=1 // pred_check
      _
    $region171: #{tpu_custom_call.1} parent=1 // pred_check_branch
      %5331 = sbr.rel (0) target = $region173
    $region172: #{tpu_custom_call.1} parent=1 // pred_region
      %5332 = dma.done [#allocation31], 128
    $region173: #{tpu_custom_call.1} parent=1 // pred_fallthru
      _
    %5333 = vsyncpa [#allocation3], 1
    %5334 = vsyncpa [#allocation6], 1
    %5335 = vsyncpa [#allocation9], 1
    %5336 = vsyncpa [#allocation12], 1
    %5337 = vsyncpa [#allocation15], 1
    %5338 = vsyncpa [#allocation18], 1
    %5339 = vsyncpa [#allocation21], 1
    %5340 = vsyncpa [#allocation24], 1
    %5341 = vsyncpa [#allocation27], 1
    %5342 = vsyncpa [#allocation4], 1
    %5343 = vsyncpa [#allocation31], 1

</llo_original>
